<compile_context>
chip_gen: v7x
topology: tpu7x:2x2x1
jax: 0.10.0
libtpu: 0.0.40
codegen_flags: <defaults>
</compile_context>

<pallas_src>
import math

import jax
import jax.numpy as jnp
from jax import lax
from jax.experimental import pallas as pl
from jax.experimental.pallas import tpu as pltpu

BN_EPS = 1e-5
G_TAP = 16          # taps folded per MXU pass -> bf16 contraction = G_TAP * 64 = 1024


# --------------------------------------------------------------------------- #
# Small helpers
# --------------------------------------------------------------------------- #
def _round8(n):
    return (n + 7) // 8 * 8


def _round16(n):
    return (n + 15) // 16 * 16


def _vmem_specs(n):
    return [pl.BlockSpec(memory_space=pltpu.MemorySpace.VMEM) for _ in range(n)]


def _compiler_params(est_bytes):
    """Raise the scoped VMEM limit only when the whole-array footprint exceeds the
    32 MiB default.  Ceiling = physical VMEM of this generation (64 MiB on v7x,
    128 MiB on v5e/v6e) minus headroom for compiler-internal scratch/IO staging."""
    limit = int(est_bytes * 1.5) + (4 << 20)
    if limit <= (32 << 20):
        return None
    try:
        phys = int(pltpu.get_tpu_info().vmem_capacity_bytes)
    except Exception:
        phys = None
    cap = (phys - (12 << 20)) if phys else (48 << 20)
    cap = max(cap, 32 << 20)
    return pltpu.CompilerParams(vmem_limit_bytes=min(limit, cap))


def _bn_affine(s, sq, gamma, beta, count):
    """Training-mode BatchNorm1d affine params from one-pass f32 sums (biased var)."""
    mean = s / count
    var = jnp.maximum(sq / count - mean * mean, 0.0)
    scale = gamma * lax.rsqrt(var + BN_EPS)
    shift = beta - mean * scale
    return scale, shift


# --------------------------------------------------------------------------- #
# Kernels
# --------------------------------------------------------------------------- #
def _make_init_kernel(n_batch, l1, l2, k2, c_out):
    """Fused init block:
       conv1 (host-side im2col -> one matmul, contraction K1*Cin) + BN + ReLU
       conv2 (in-VMEM im2col   -> one matmul, contraction K2*C)   + BN + ReLU.
    Matmul inputs bf16, accumulation / BN statistics f32."""

    def kernel(xcol_ref, w1_ref, b1_ref, ga1_ref, be1_ref,
               w2_ref, b2_ref, ga2_ref, be2_ref,
               o_ref, h_ref, gcol_ref):
        # ---- conv1: (l1, K1*Cin)bf16 @ (K1*Cin, C)bf16 per batch element ----
        s1 = jnp.zeros((1, c_out), jnp.float32)
        sq1 = jnp.zeros((1, c_out), jnp.float32)
        for nb in range(n_batch):
            y = jnp.dot(xcol_ref[nb], w1_ref[...],
                        preferred_element_type=jnp.float32) + b1_ref[...]
            h_ref[nb] = y
            s1 = s1 + jnp.sum(y, axis=0, keepdims=True)
            sq1 = sq1 + jnp.sum(y * y, axis=0, keepdims=True)
        sc1, sh1 = _bn_affine(s1, sq1, ga1_ref[...], be1_ref[...],
                              float(n_batch * l1))

        # ---- conv2: build (l2, K2*C) bf16 im2col in VMEM, one matmul per batch ----
        s2 = jnp.zeros((1, c_out), jnp.float32)
        sq2 = jnp.zeros((1, c_out), jnp.float32)
        for nb in range(n_batch):
            h1 = jnp.maximum(h_ref[nb] * sc1 + sh1, 0.0)               # (l1, C) f32
            # TODO(synk): pair taps into 128-lane stores like the module kernel;
            # negligible here (K2=3, single init block).
            for j in range(k2):
                gcol_ref[pl.ds(0, l2), pl.ds(c_out * j, c_out)] = (
                    h1[j:j + l2, :].astype(jnp.bfloat16))
            y2 = jnp.dot(gcol_ref[pl.ds(0, l2), :], w2_ref[...],
                         preferred_element_type=jnp.float32) + b2_ref[...]
            h_ref[nb, pl.ds(0, l2), :] = y2
            s2 = s2 + jnp.sum(y2, axis=0, keepdims=True)
            sq2 = sq2 + jnp.sum(y2 * y2, axis=0, keepdims=True)
        sc2, sh2 = _bn_affine(s2, sq2, ga2_ref[...], be2_ref[...],
                              float(n_batch * l2))

        # TODO(synk): fold AvgPool1d(2) here (strided pl.ds reads) to save one
        # activation HBM round trip; kept in the JAX wrapper for now.
        for nb in range(n_batch):
            o_ref[nb] = jnp.maximum(h_ref[nb, pl.ds(0, l2), :] * sc2 + sh2, 0.0)

    return kernel


def _make_module_kernel(n_batch, l_len, c, n_groups, pad_l, g_tap, lg):
    """Fused residual module: conv1d('same', K=50) + BN + ReLU, conv + BN + ReLU, +id.

    Per conv / batch element:
      * the input is scattered once into a grouped-im2col bf16 scratch
            gcol[r, c*j + ch] = x[r - pad_l + j, ch],   j < g_tap
        with taps paired so every store is a lane-dense (L+2, 128) slab at an EVEN
        (bf16 sublane-pair aligned) row offset,
      * the K taps collapse into ONE bf16 MXU pass
            (L + g_tap*(n_groups-1), g_tap*C) @ (g_tap*C, n_groups*C) -> f32
        (contraction 1024, full 256-wide output: 4 tap-group weight blocks packed
        side by side in the RHS),
      * the per-group partials are recovered as 16-row / 64-lane shifted slices of
        the result and summed on the VPU.
    BN statistics: one-pass f32 sums of the f32 accumulator (training mode)."""

    lrows = l_len + g_tap * (n_groups - 1)          # matmul LHS row count

    def kernel(x_ref, w1_ref, b1_ref, ga1_ref, be1_ref,
               w2_ref, b2_ref, ga2_ref, be2_ref,
               o_ref, h_ref, gcol_ref, y_ref):
        count = float(n_batch * l_len)

        # Zero only the 'same'-padding rows (top) and the right-pad / unread tail
        # (bottom); the data region is fully rewritten on every use.
        gcol_ref[pl.ds(0, pad_l), :] = jnp.zeros((pad_l, g_tap * c), jnp.bfloat16)
        gcol_ref[pl.ds(l_len, lg - l_len), :] = jnp.zeros(
            (lg - l_len, g_tap * c), jnp.bfloat16)

        def grouped_conv(src_fn, w_ref, b_ref):
            s = jnp.zeros((1, c), jnp.float32)
            sq = jnp.zeros((1, c), jnp.float32)
            z1 = jnp.zeros((1, c), jnp.float32)
            z2 = jnp.zeros((2, c), jnp.float32)
            for nb in range(n_batch):
                xv = src_fn(nb)                                        # (L, C) f32
                # taps 2m / 2m+1 paired into one lane-dense slab:
                #   pair[s, :C] = x[s-2],  pair[s, C:] = x[s-1]   (zeros off the ends)
                pair = jnp.concatenate(
                    [jnp.concatenate([z2, xv], axis=0),
                     jnp.concatenate([z1, xv, z1], axis=0)],
                    axis=1).astype(jnp.bfloat16)                       # (L+2, 2C)
                for m in range(g_tap // 2):
                    gcol_ref[pl.ds(pad_l - 2 * m - 2, l_len + 2),
                             pl.ds(2 * c * m, 2 * c)] = pair
                # one full-width MXU pass: bf16 x bf16 -> f32
                y_ref[pl.ds(0, lrows), :] = jnp.dot(
                    gcol_ref[pl.ds(0, lrows), :], w_ref[...],
                    preferred_element_type=jnp.float32)
                # recover the n_groups partials (16-row / 64-lane shifts) on the VPU
                acc = b_ref[...]
                for g in range(n_groups):
                    acc = acc + y_ref[pl.ds(g_tap * g, l_len), pl.ds(c * g, c)]
                h_ref[nb] = acc
                s = s + jnp.sum(acc, axis=0, keepdims=True)
                sq = sq + jnp.sum(acc * acc, axis=0, keepdims=True)
            return s, sq

        # conv1 + BN1
        s1, sq1 = grouped_conv(lambda nb: x_ref[nb], w1_ref, b1_ref)
        sc1, sh1 = _bn_affine(s1, sq1, ga1_ref[...], be1_ref[...], count)

        # conv2 (input = ReLU(BN1(conv1))) + BN2
        s2, sq2 = grouped_conv(
            lambda nb: jnp.maximum(h_ref[nb] * sc1 + sh1, 0.0), w2_ref, b2_ref)
        sc2, sh2 = _bn_affine(s2, sq2, ga2_ref[...], be2_ref[...], count)

        # ReLU(BN2) + identity
        for nb in range(n_batch):
            o_ref[nb] = jnp.maximum(h_ref[nb] * sc2 + sh2, 0.0) + x_ref[nb]

    return kernel


# --------------------------------------------------------------------------- #
# Wrappers
# --------------------------------------------------------------------------- #
def init_block(x_nlc, p1, p2):
    n, l, c_in = x_nlc.shape
    k1, _, c_out = p1["w"].shape
    k2 = p2["w"].shape[0]
    l1 = l - k1 + 1
    l2 = l1 - k2 + 1

    # host-side im2col for conv1 (K1=8, Cin=8 -> contraction 64); tiny, bf16.
    xcol = jnp.concatenate([x_nlc[:, k:k + l1, :] for k in range(k1)],
                           axis=-1).astype(jnp.bfloat16)
    w1s = p1["w"].reshape(k1 * c_in, c_out).astype(jnp.bfloat16)
    w2s = p2["w"].reshape(k2 * c_out, c_out).astype(jnp.bfloat16)

    est = (2 * n * l1 * (k1 * c_in) + 4 * 2 * n * l1 * c_out
           + 2 * _round8(l2) * k2 * c_out + 2 * (w1s.size + w2s.size)
           + 4 * 8 * c_out)
    return pl.pallas_call(
        _make_init_kernel(n, l1, l2, k2, c_out),
        out_shape=jax.ShapeDtypeStruct((n, l2, c_out), jnp.float32),
        in_specs=_vmem_specs(9),
        out_specs=pl.BlockSpec(memory_space=pltpu.MemorySpace.VMEM),
        scratch_shapes=[pltpu.VMEM((n, l1, c_out), jnp.float32),
                        pltpu.VMEM((_round8(l2), k2 * c_out), jnp.bfloat16)],
        compiler_params=_compiler_params(est),
    )(xcol, w1s, p1["b"], p1["gamma"], p1["beta"],
      w2s, p2["b"], p2["gamma"], p2["beta"])


def res_module(x_nlc, blk):
    n, l, c = x_nlc.shape
    k = blk["c1"]["w"].shape[0]                       # 50
    n_groups = pl.cdiv(k, G_TAP)                      # 4
    pad_l = (k - 1) // 2                              # PyTorch 'same': 24 left, 25 right
    assert G_TAP % 2 == 0 and pad_l >= G_TAP          # even-offset paired scatter
    lrows = l + G_TAP * (n_groups - 1)
    lg = _round16(max(lrows, l + pad_l))

    def gw(w):  # (K, Cin, Cout) -> wide bf16 RHS (G_TAP*Cin, n_groups*Cout)
        kk, ci, co = w.shape
        wp = jnp.pad(w, ((0, n_groups * G_TAP - kk), (0, 0), (0, 0)))
        wg = wp.reshape(n_groups, G_TAP * ci, co)
        return jnp.concatenate([wg[g] for g in range(n_groups)],
                               axis=1).astype(jnp.bfloat16)

    w1g, w2g = gw(blk["c1"]["w"]), gw(blk["c2"]["w"])
    est = (4 * (3 * n * l * c)                        # x, out, h   (f32)
           + 2 * lg * G_TAP * c                       # gcol        (bf16)
           + 4 * _round8(lrows) * n_groups * c        # y           (f32)
           + 2 * (w1g.size + w2g.size)                # wide weights(bf16)
           + 4 * 8 * c)
    # TODO(synk): v7x - add an L-tiled 'parallel' grid (with a (K-1)-row halo and a
    # cross-tile BN-stat reduction) so the second TensorCore is used; on v5e/v6e the
    # fused single-HBM-round-trip structure below is already the right shape.
    return pl.pallas_call(
        _make_module_kernel(n, l, c, n_groups, pad_l, G_TAP, lg),
        out_shape=jax.ShapeDtypeStruct((n, l, c), jnp.float32),
        in_specs=_vmem_specs(9),
        out_specs=pl.BlockSpec(memory_space=pltpu.MemorySpace.VMEM),
        scratch_shapes=[pltpu.VMEM((n, l, c), jnp.float32),
                        pltpu.VMEM((lg, G_TAP * c), jnp.bfloat16),
                        pltpu.VMEM((_round8(lrows), n_groups * c), jnp.float32)],
        compiler_params=_compiler_params(est),
    )(x_nlc, w1g, blk["c1"]["b"], blk["c1"]["gamma"], blk["c1"]["beta"],
      w2g, blk["c2"]["b"], blk["c2"]["gamma"], blk["c2"]["beta"])


def kan_res_wide_x2(x_ncl, params):
    """Forward pass. x_ncl: (N, C_in, L) like PyTorch NCL."""
    x = jnp.transpose(x_ncl, (0, 2, 1)).astype(jnp.float32)    # (N, L, C)

    # init block (conv+BN+ReLU x2), fused into one kernel
    x = init_block(x, params["init1"], params["init2"])

    # AvgPool1d(kernel_size=2): strided add (no O(L^2) matmul).
    lp = (x.shape[1] - 2) // 2 + 1
    x = 0.5 * (x[:, 0:2 * lp:2, :] + x[:, 1:2 * lp:2, :])

    # 8 residual modules, each fused into one kernel
    for blk in params["modules"]:
        x = res_module(x, blk)

    # AdaptiveAvgPool1d(1) + flatten + Linear(64, out): trivial, plain JAX.
    feat = jnp.mean(x, axis=1)                                  # (N, 64)
    return feat @ params["fc_w"] + params["fc_b"]


# --------------------------------------------------------------------------- #
# Deterministic parameter initialization (shapes per the module __init__)
# --------------------------------------------------------------------------- #
def _init_conv_bn(key, c_in, c_out, k):
    kw, kb = jax.random.split(key)
    scale = 1.0 / math.sqrt(c_in * k)
    return {
        "w": jax.random.uniform(kw, (k, c_in, c_out), jnp.float32, -scale, scale),
        "b": jax.random.uniform(kb, (1, c_out), jnp.float32, -scale, scale),
        "gamma": jnp.ones((1, c_out), jnp.float32),   # BatchNorm1d default init
        "beta": jnp.zeros((1, c_out), jnp.float32),
    }


def init_params(key, c_in=8, width=64, out_size=1, n_modules=8):
    keys = jax.random.split(key, 3 + 2 * n_modules)
    params = {
        "init1": _init_conv_bn(keys[0], c_in, width, 8),
        "init2": _init_conv_bn(keys[1], width, width, 3),
        "modules": [],
    }
    for i in range(n_modules):
        params["modules"].append({
            "c1": _init_conv_bn(keys[2 + 2 * i], width, width, 50),
            "c2": _init_conv_bn(keys[3 + 2 * i], width, width, 50),
        })
    kf1, kf2 = jax.random.split(keys[-1])
    s = 1.0 / math.sqrt(width)
    params["fc_w"] = jax.random.uniform(kf1, (width, out_size), jnp.float32, -s, s)
    params["fc_b"] = jax.random.uniform(kf2, (1, out_size), jnp.float32, -s, s)
    return params


# --------------------------------------------------------------------------- #
if __name__ == "__main__":
    key = jax.random.PRNGKey(0)
    kx, kp = jax.random.split(key)

    # Small shapes consistent with the module: in_channels=8 (input_shape[0]),
    # batch=2, sequence length 128 (original is 5000).
    x = jax.random.normal(kx, (2, 8, 128), jnp.float32)     # (N, C, L), PyTorch NCL
    params = init_params(kp, c_in=8, width=64, out_size=1, n_modules=8)

    fwd = jax.jit(kan_res_wide_x2)
    out = fwd(x, params)
    out = jax.block_until_ready(out)

    assert out.shape == (2, 1), out.shape
    assert bool(jnp.all(jnp.isfinite(out)))
    print("KERNEL_OK")
</pallas_src>

<mosaic_0001>
module attributes {stable_mosaic.version = 11 : i64} {
  func.func @kernel(%arg0: memref<2x121x64xbf16, #tpu.memory_space<vmem>>, %arg1: memref<64x64xbf16, #tpu.memory_space<vmem>>, %arg2: memref<1x64xf32, #tpu.memory_space<vmem>>, %arg3: memref<1x64xf32, #tpu.memory_space<vmem>>, %arg4: memref<1x64xf32, #tpu.memory_space<vmem>>, %arg5: memref<192x64xbf16, #tpu.memory_space<vmem>>, %arg6: memref<1x64xf32, #tpu.memory_space<vmem>>, %arg7: memref<1x64xf32, #tpu.memory_space<vmem>>, %arg8: memref<1x64xf32, #tpu.memory_space<vmem>>, %arg9: memref<2x119x64xf32, #tpu.memory_space<vmem>>, %arg10: memref<2x121x64xf32, #tpu.memory_space<vmem>>, %arg11: memref<120x192xbf16, #tpu.memory_space<vmem>>) attributes {dimension_semantics = [], scalar_prefetch = 0 : i64, scratch_operands = 2 : i64, tpu.core_type = #tpu.core_type<tc>} {
    %cst = arith.constant 0.000000e+00 : f32
    %0 = vector.broadcast %cst : f32 to vector<1x64xf32>
    %cst_0 = arith.constant 0.000000e+00 : f32
    %1 = vector.broadcast %cst_0 : f32 to vector<1x64xf32>
    %c0 = arith.constant 0 : index
    %c0_1 = arith.constant 0 : index
    %c0_2 = arith.constant 0 : index
    %2 = vector.load %arg0[%c0, %c0_1, %c0_2] : memref<2x121x64xbf16, #tpu.memory_space<vmem>>, vector<1x121x64xbf16>
    %3 = vector.shape_cast %2 : vector<1x121x64xbf16> to vector<121x64xbf16>
    %c0_3 = arith.constant 0 : index
    %c0_4 = arith.constant 0 : index
    %4 = vector.load %arg1[%c0_3, %c0_4] : memref<64x64xbf16, #tpu.memory_space<vmem>>, vector<64x64xbf16>
    %cst_5 = arith.constant dense<0.000000e+00> : vector<121x64xf32>
    %5 = tpu.matmul %3, %4, %cst_5 {dimension_numbers = #tpu.dot_dimension_numbers<[1], [0], [0], [1], [0, 0, 1, 1], [], []>} : vector<121x64xbf16>, vector<64x64xbf16>, vector<121x64xf32> -> vector<121x64xf32>
    %c0_6 = arith.constant 0 : index
    %c0_7 = arith.constant 0 : index
    %6 = vector.load %arg2[%c0_6, %c0_7] : memref<1x64xf32, #tpu.memory_space<vmem>>, vector<1x64xf32>
    %7 = vector.broadcast %6 : vector<1x64xf32> to vector<121x64xf32>
    %8 = arith.addf %5, %7 : vector<121x64xf32>
    %c0_8 = arith.constant 0 : index
    %c0_9 = arith.constant 0 : index
    %c0_10 = arith.constant 0 : index
    %9 = vector.load %arg10[%c0_8, %c0_9, %c0_10] : memref<2x121x64xf32, #tpu.memory_space<vmem>>, vector<1x121x64xf32>
    %10 = vector.shape_cast %9 : vector<1x121x64xf32> to vector<121x64xf32>
    %11 = vector.shape_cast %8 : vector<121x64xf32> to vector<1x121x64xf32>
    tpu.vector_store %arg10[%c0_8, %c0_9, %c0_10], %11 {strides = array<i32>} : memref<2x121x64xf32, #tpu.memory_space<vmem>>, vector<1x121x64xf32>,
    %cst_11 = arith.constant dense<0.000000e+00> : vector<64xf32>
    %12 = vector.multi_reduction <add>, %8, %cst_11 [0] : vector<121x64xf32> to vector<64xf32>
    %13 = vector.shape_cast %12 : vector<64xf32> to vector<1x64xf32>
    %14 = arith.addf %0, %13 : vector<1x64xf32>
    %15 = arith.mulf %8, %8 : vector<121x64xf32>
    %cst_12 = arith.constant dense<0.000000e+00> : vector<64xf32>
    %16 = vector.multi_reduction <add>, %15, %cst_12 [0] : vector<121x64xf32> to vector<64xf32>
    %17 = vector.shape_cast %16 : vector<64xf32> to vector<1x64xf32>
    %18 = arith.addf %1, %17 : vector<1x64xf32>
    %c1 = arith.constant 1 : index
    %c0_13 = arith.constant 0 : index
    %c0_14 = arith.constant 0 : index
    %19 = vector.load %arg0[%c1, %c0_13, %c0_14] : memref<2x121x64xbf16, #tpu.memory_space<vmem>>, vector<1x121x64xbf16>
    %20 = vector.shape_cast %19 : vector<1x121x64xbf16> to vector<121x64xbf16>
    %c0_15 = arith.constant 0 : index
    %c0_16 = arith.constant 0 : index
    %21 = vector.load %arg1[%c0_15, %c0_16] : memref<64x64xbf16, #tpu.memory_space<vmem>>, vector<64x64xbf16>
    %cst_17 = arith.constant dense<0.000000e+00> : vector<121x64xf32>
    %22 = tpu.matmul %20, %21, %cst_17 {dimension_numbers = #tpu.dot_dimension_numbers<[1], [0], [0], [1], [0, 0, 1, 1], [], []>} : vector<121x64xbf16>, vector<64x64xbf16>, vector<121x64xf32> -> vector<121x64xf32>
    %c0_18 = arith.constant 0 : index
    %c0_19 = arith.constant 0 : index
    %23 = vector.load %arg2[%c0_18, %c0_19] : memref<1x64xf32, #tpu.memory_space<vmem>>, vector<1x64xf32>
    %24 = vector.broadcast %23 : vector<1x64xf32> to vector<121x64xf32>
    %25 = arith.addf %22, %24 : vector<121x64xf32>
    %c1_20 = arith.constant 1 : index
    %c0_21 = arith.constant 0 : index
    %c0_22 = arith.constant 0 : index
    %26 = vector.load %arg10[%c1_20, %c0_21, %c0_22] : memref<2x121x64xf32, #tpu.memory_space<vmem>>, vector<1x121x64xf32>
    %27 = vector.shape_cast %26 : vector<1x121x64xf32> to vector<121x64xf32>
    %28 = vector.shape_cast %25 : vector<121x64xf32> to vector<1x121x64xf32>
    tpu.vector_store %arg10[%c1_20, %c0_21, %c0_22], %28 {strides = array<i32>} : memref<2x121x64xf32, #tpu.memory_space<vmem>>, vector<1x121x64xf32>,
    %cst_23 = arith.constant dense<0.000000e+00> : vector<64xf32>
    %29 = vector.multi_reduction <add>, %25, %cst_23 [0] : vector<121x64xf32> to vector<64xf32>
    %30 = vector.shape_cast %29 : vector<64xf32> to vector<1x64xf32>
    %31 = arith.addf %14, %30 : vector<1x64xf32>
    %32 = arith.mulf %25, %25 : vector<121x64xf32>
    %cst_24 = arith.constant dense<0.000000e+00> : vector<64xf32>
    %33 = vector.multi_reduction <add>, %32, %cst_24 [0] : vector<121x64xf32> to vector<64xf32>
    %34 = vector.shape_cast %33 : vector<64xf32> to vector<1x64xf32>
    %35 = arith.addf %18, %34 : vector<1x64xf32>
    %c0_25 = arith.constant 0 : index
    %c0_26 = arith.constant 0 : index
    %36 = vector.load %arg3[%c0_25, %c0_26] : memref<1x64xf32, #tpu.memory_space<vmem>>, vector<1x64xf32>
    %c0_27 = arith.constant 0 : index
    %c0_28 = arith.constant 0 : index
    %37 = vector.load %arg4[%c0_27, %c0_28] : memref<1x64xf32, #tpu.memory_space<vmem>>, vector<1x64xf32>
    %cst_29 = arith.constant 2.420000e+02 : f32
    %38 = vector.broadcast %cst_29 : f32 to vector<1x64xf32>
    %39 = arith.divf %31, %38 : vector<1x64xf32>
    %cst_30 = arith.constant 2.420000e+02 : f32
    %40 = vector.broadcast %cst_30 : f32 to vector<1x64xf32>
    %41 = arith.divf %35, %40 : vector<1x64xf32>
    %42 = arith.mulf %39, %39 : vector<1x64xf32>
    %43 = arith.subf %41, %42 : vector<1x64xf32>
    %cst_31 = arith.constant 0.000000e+00 : f32
    %44 = vector.broadcast %cst_31 : f32 to vector<1x64xf32>
    %45 = arith.maximumf %43, %44 : vector<1x64xf32>
    %cst_32 = arith.constant 9.99999974E-6 : f32
    %46 = vector.broadcast %cst_32 : f32 to vector<1x64xf32>
    %47 = arith.addf %45, %46 : vector<1x64xf32>
    %48 = math.rsqrt %47 : vector<1x64xf32>
    %49 = arith.mulf %36, %48 : vector<1x64xf32>
    %50 = arith.mulf %39, %49 : vector<1x64xf32>
    %51 = arith.subf %37, %50 : vector<1x64xf32>
    %cst_33 = arith.constant 0.000000e+00 : f32
    %52 = vector.broadcast %cst_33 : f32 to vector<1x64xf32>
    %cst_34 = arith.constant 0.000000e+00 : f32
    %53 = vector.broadcast %cst_34 : f32 to vector<1x64xf32>
    %c0_35 = arith.constant 0 : index
    %c0_36 = arith.constant 0 : index
    %c0_37 = arith.constant 0 : index
    %54 = vector.load %arg10[%c0_35, %c0_36, %c0_37] : memref<2x121x64xf32, #tpu.memory_space<vmem>>, vector<1x121x64xf32>
    %55 = vector.shape_cast %54 : vector<1x121x64xf32> to vector<121x64xf32>
    %56 = vector.broadcast %49 : vector<1x64xf32> to vector<121x64xf32>
    %57 = arith.mulf %55, %56 : vector<121x64xf32>
    %58 = vector.broadcast %51 : vector<1x64xf32> to vector<121x64xf32>
    %59 = arith.addf %57, %58 : vector<121x64xf32>
    %cst_38 = arith.constant 0.000000e+00 : f32
    %60 = vector.broadcast %cst_38 : f32 to vector<121x64xf32>
    %61 = arith.maximumf %59, %60 : vector<121x64xf32>
    %62 = vector.extract_strided_slice %61 {offsets = [0, 0], sizes = [119, 64], strides = [1, 1]} : vector<121x64xf32> to vector<119x64xf32>
    %63 = arith.truncf %62 : vector<119x64xf32> to vector<119x64xbf16>
    %c0_39 = arith.constant 0 : index
    %c0_40 = arith.constant 0 : index
    %64 = vector.load %arg11[%c0_39, %c0_40] : memref<120x192xbf16, #tpu.memory_space<vmem>>, vector<119x64xbf16>
    tpu.vector_store %arg11[%c0_39, %c0_40], %63 {strides = array<i32>} : memref<120x192xbf16, #tpu.memory_space<vmem>>, vector<119x64xbf16>,
    %65 = vector.extract_strided_slice %61 {offsets = [1, 0], sizes = [119, 64], strides = [1, 1]} : vector<121x64xf32> to vector<119x64xf32>
    %66 = arith.truncf %65 : vector<119x64xf32> to vector<119x64xbf16>
    %c0_41 = arith.constant 0 : index
    %c64 = arith.constant 64 : index
    %67 = vector.load %arg11[%c0_41, %c64] : memref<120x192xbf16, #tpu.memory_space<vmem>>, vector<119x64xbf16>
    tpu.vector_store %arg11[%c0_41, %c64], %66 {strides = array<i32>} : memref<120x192xbf16, #tpu.memory_space<vmem>>, vector<119x64xbf16>,
    %68 = vector.extract_strided_slice %61 {offsets = [2, 0], sizes = [119, 64], strides = [1, 1]} : vector<121x64xf32> to vector<119x64xf32>
    %69 = arith.truncf %68 : vector<119x64xf32> to vector<119x64xbf16>
    %c0_42 = arith.constant 0 : index
    %c128 = arith.constant 128 : index
    %70 = vector.load %arg11[%c0_42, %c128] : memref<120x192xbf16, #tpu.memory_space<vmem>>, vector<119x64xbf16>
    tpu.vector_store %arg11[%c0_42, %c128], %69 {strides = array<i32>} : memref<120x192xbf16, #tpu.memory_space<vmem>>, vector<119x64xbf16>,
    %c0_43 = arith.constant 0 : index
    %c0_44 = arith.constant 0 : index
    %71 = vector.load %arg11[%c0_43, %c0_44] : memref<120x192xbf16, #tpu.memory_space<vmem>>, vector<119x192xbf16>
    %c0_45 = arith.constant 0 : index
    %c0_46 = arith.constant 0 : index
    %72 = vector.load %arg5[%c0_45, %c0_46] : memref<192x64xbf16, #tpu.memory_space<vmem>>, vector<192x64xbf16>
    %cst_47 = arith.constant dense<0.000000e+00> : vector<119x64xf32>
    %73 = tpu.matmul %71, %72, %cst_47 {dimension_numbers = #tpu.dot_dimension_numbers<[1], [0], [0], [1], [0, 0, 1, 1], [], []>} : vector<119x192xbf16>, vector<192x64xbf16>, vector<119x64xf32> -> vector<119x64xf32>
    %c0_48 = arith.constant 0 : index
    %c0_49 = arith.constant 0 : index
    %74 = vector.load %arg6[%c0_48, %c0_49] : memref<1x64xf32, #tpu.memory_space<vmem>>, vector<1x64xf32>
    %75 = vector.broadcast %74 : vector<1x64xf32> to vector<119x64xf32>
    %76 = arith.addf %73, %75 : vector<119x64xf32>
    %c0_50 = arith.constant 0 : index
    %c0_51 = arith.constant 0 : index
    %c0_52 = arith.constant 0 : index
    %77 = vector.load %arg10[%c0_50, %c0_51, %c0_52] : memref<2x121x64xf32, #tpu.memory_space<vmem>>, vector<1x119x64xf32>
    %78 = vector.shape_cast %77 : vector<1x119x64xf32> to vector<119x64xf32>
    %79 = vector.shape_cast %76 : vector<119x64xf32> to vector<1x119x64xf32>
    tpu.vector_store %arg10[%c0_50, %c0_51, %c0_52], %79 {strides = array<i32>} : memref<2x121x64xf32, #tpu.memory_space<vmem>>, vector<1x119x64xf32>,
    %cst_53 = arith.constant dense<0.000000e+00> : vector<64xf32>
    %80 = vector.multi_reduction <add>, %76, %cst_53 [0] : vector<119x64xf32> to vector<64xf32>
    %81 = vector.shape_cast %80 : vector<64xf32> to vector<1x64xf32>
    %82 = arith.addf %52, %81 : vector<1x64xf32>
    %83 = arith.mulf %76, %76 : vector<119x64xf32>
    %cst_54 = arith.constant dense<0.000000e+00> : vector<64xf32>
    %84 = vector.multi_reduction <add>, %83, %cst_54 [0] : vector<119x64xf32> to vector<64xf32>
    %85 = vector.shape_cast %84 : vector<64xf32> to vector<1x64xf32>
    %86 = arith.addf %53, %85 : vector<1x64xf32>
    %c1_55 = arith.constant 1 : index
    %c0_56 = arith.constant 0 : index
    %c0_57 = arith.constant 0 : index
    %87 = vector.load %arg10[%c1_55, %c0_56, %c0_57] : memref<2x121x64xf32, #tpu.memory_space<vmem>>, vector<1x121x64xf32>
    %88 = vector.shape_cast %87 : vector<1x121x64xf32> to vector<121x64xf32>
    %89 = vector.broadcast %49 : vector<1x64xf32> to vector<121x64xf32>
    %90 = arith.mulf %88, %89 : vector<121x64xf32>
    %91 = vector.broadcast %51 : vector<1x64xf32> to vector<121x64xf32>
    %92 = arith.addf %90, %91 : vector<121x64xf32>
    %cst_58 = arith.constant 0.000000e+00 : f32
    %93 = vector.broadcast %cst_58 : f32 to vector<121x64xf32>
    %94 = arith.maximumf %92, %93 : vector<121x64xf32>
    %95 = vector.extract_strided_slice %94 {offsets = [0, 0], sizes = [119, 64], strides = [1, 1]} : vector<121x64xf32> to vector<119x64xf32>
    %96 = arith.truncf %95 : vector<119x64xf32> to vector<119x64xbf16>
    %c0_59 = arith.constant 0 : index
    %c0_60 = arith.constant 0 : index
    %97 = vector.load %arg11[%c0_59, %c0_60] : memref<120x192xbf16, #tpu.memory_space<vmem>>, vector<119x64xbf16>
    tpu.vector_store %arg11[%c0_59, %c0_60], %96 {strides = array<i32>} : memref<120x192xbf16, #tpu.memory_space<vmem>>, vector<119x64xbf16>,
    %98 = vector.extract_strided_slice %94 {offsets = [1, 0], sizes = [119, 64], strides = [1, 1]} : vector<121x64xf32> to vector<119x64xf32>
    %99 = arith.truncf %98 : vector<119x64xf32> to vector<119x64xbf16>
    %c0_61 = arith.constant 0 : index
    %c64_62 = arith.constant 64 : index
    %100 = vector.load %arg11[%c0_61, %c64_62] : memref<120x192xbf16, #tpu.memory_space<vmem>>, vector<119x64xbf16>
    tpu.vector_store %arg11[%c0_61, %c64_62], %99 {strides = array<i32>} : memref<120x192xbf16, #tpu.memory_space<vmem>>, vector<119x64xbf16>,
    %101 = vector.extract_strided_slice %94 {offsets = [2, 0], sizes = [119, 64], strides = [1, 1]} : vector<121x64xf32> to vector<119x64xf32>
    %102 = arith.truncf %101 : vector<119x64xf32> to vector<119x64xbf16>
    %c0_63 = arith.constant 0 : index
    %c128_64 = arith.constant 128 : index
    %103 = vector.load %arg11[%c0_63, %c128_64] : memref<120x192xbf16, #tpu.memory_space<vmem>>, vector<119x64xbf16>
    tpu.vector_store %arg11[%c0_63, %c128_64], %102 {strides = array<i32>} : memref<120x192xbf16, #tpu.memory_space<vmem>>, vector<119x64xbf16>,
    %c0_65 = arith.constant 0 : index
    %c0_66 = arith.constant 0 : index
    %104 = vector.load %arg11[%c0_65, %c0_66] : memref<120x192xbf16, #tpu.memory_space<vmem>>, vector<119x192xbf16>
    %c0_67 = arith.constant 0 : index
    %c0_68 = arith.constant 0 : index
    %105 = vector.load %arg5[%c0_67, %c0_68] : memref<192x64xbf16, #tpu.memory_space<vmem>>, vector<192x64xbf16>
    %cst_69 = arith.constant dense<0.000000e+00> : vector<119x64xf32>
    %106 = tpu.matmul %104, %105, %cst_69 {dimension_numbers = #tpu.dot_dimension_numbers<[1], [0], [0], [1], [0, 0, 1, 1], [], []>} : vector<119x192xbf16>, vector<192x64xbf16>, vector<119x64xf32> -> vector<119x64xf32>
    %c0_70 = arith.constant 0 : index
    %c0_71 = arith.constant 0 : index
    %107 = vector.load %arg6[%c0_70, %c0_71] : memref<1x64xf32, #tpu.memory_space<vmem>>, vector<1x64xf32>
    %108 = vector.broadcast %107 : vector<1x64xf32> to vector<119x64xf32>
    %109 = arith.addf %106, %108 : vector<119x64xf32>
    %c1_72 = arith.constant 1 : index
    %c0_73 = arith.constant 0 : index
    %c0_74 = arith.constant 0 : index
    %110 = vector.load %arg10[%c1_72, %c0_73, %c0_74] : memref<2x121x64xf32, #tpu.memory_space<vmem>>, vector<1x119x64xf32>
    %111 = vector.shape_cast %110 : vector<1x119x64xf32> to vector<119x64xf32>
    %112 = vector.shape_cast %109 : vector<119x64xf32> to vector<1x119x64xf32>
    tpu.vector_store %arg10[%c1_72, %c0_73, %c0_74], %112 {strides = array<i32>} : memref<2x121x64xf32, #tpu.memory_space<vmem>>, vector<1x119x64xf32>,
    %cst_75 = arith.constant dense<0.000000e+00> : vector<64xf32>
    %113 = vector.multi_reduction <add>, %109, %cst_75 [0] : vector<119x64xf32> to vector<64xf32>
    %114 = vector.shape_cast %113 : vector<64xf32> to vector<1x64xf32>
    %115 = arith.addf %82, %114 : vector<1x64xf32>
    %116 = arith.mulf %109, %109 : vector<119x64xf32>
    %cst_76 = arith.constant dense<0.000000e+00> : vector<64xf32>
    %117 = vector.multi_reduction <add>, %116, %cst_76 [0] : vector<119x64xf32> to vector<64xf32>
    %118 = vector.shape_cast %117 : vector<64xf32> to vector<1x64xf32>
    %119 = arith.addf %86, %118 : vector<1x64xf32>
    %c0_77 = arith.constant 0 : index
    %c0_78 = arith.constant 0 : index
    %120 = vector.load %arg7[%c0_77, %c0_78] : memref<1x64xf32, #tpu.memory_space<vmem>>, vector<1x64xf32>
    %c0_79 = arith.constant 0 : index
    %c0_80 = arith.constant 0 : index
    %121 = vector.load %arg8[%c0_79, %c0_80] : memref<1x64xf32, #tpu.memory_space<vmem>>, vector<1x64xf32>
    %cst_81 = arith.constant 2.380000e+02 : f32
    %122 = vector.broadcast %cst_81 : f32 to vector<1x64xf32>
    %123 = arith.divf %115, %122 : vector<1x64xf32>
    %cst_82 = arith.constant 2.380000e+02 : f32
    %124 = vector.broadcast %cst_82 : f32 to vector<1x64xf32>
    %125 = arith.divf %119, %124 : vector<1x64xf32>
    %126 = arith.mulf %123, %123 : vector<1x64xf32>
    %127 = arith.subf %125, %126 : vector<1x64xf32>
    %cst_83 = arith.constant 0.000000e+00 : f32
    %128 = vector.broadcast %cst_83 : f32 to vector<1x64xf32>
    %129 = arith.maximumf %127, %128 : vector<1x64xf32>
    %cst_84 = arith.constant 9.99999974E-6 : f32
    %130 = vector.broadcast %cst_84 : f32 to vector<1x64xf32>
    %131 = arith.addf %129, %130 : vector<1x64xf32>
    %132 = math.rsqrt %131 : vector<1x64xf32>
    %133 = arith.mulf %120, %132 : vector<1x64xf32>
    %134 = arith.mulf %123, %133 : vector<1x64xf32>
    %135 = arith.subf %121, %134 : vector<1x64xf32>
    %c0_85 = arith.constant 0 : index
    %c0_86 = arith.constant 0 : index
    %c0_87 = arith.constant 0 : index
    %136 = vector.load %arg10[%c0_85, %c0_86, %c0_87] : memref<2x121x64xf32, #tpu.memory_space<vmem>>, vector<1x119x64xf32>
    %137 = vector.shape_cast %136 : vector<1x119x64xf32> to vector<119x64xf32>
    %138 = vector.broadcast %133 : vector<1x64xf32> to vector<119x64xf32>
    %139 = arith.mulf %137, %138 : vector<119x64xf32>
    %140 = vector.broadcast %135 : vector<1x64xf32> to vector<119x64xf32>
    %141 = arith.addf %139, %140 : vector<119x64xf32>
    %cst_88 = arith.constant 0.000000e+00 : f32
    %142 = vector.broadcast %cst_88 : f32 to vector<119x64xf32>
    %143 = arith.maximumf %141, %142 : vector<119x64xf32>
    %c0_89 = arith.constant 0 : index
    %c0_90 = arith.constant 0 : index
    %c0_91 = arith.constant 0 : index
    %144 = vector.load %arg9[%c0_89, %c0_90, %c0_91] : memref<2x119x64xf32, #tpu.memory_space<vmem>>, vector<1x119x64xf32>
    %145 = vector.shape_cast %144 : vector<1x119x64xf32> to vector<119x64xf32>
    %146 = vector.shape_cast %143 : vector<119x64xf32> to vector<1x119x64xf32>
    tpu.vector_store %arg9[%c0_89, %c0_90, %c0_91], %146 {strides = array<i32>} : memref<2x119x64xf32, #tpu.memory_space<vmem>>, vector<1x119x64xf32>,
    %c1_92 = arith.constant 1 : index
    %c0_93 = arith.constant 0 : index
    %c0_94 = arith.constant 0 : index
    %147 = vector.load %arg10[%c1_92, %c0_93, %c0_94] : memref<2x121x64xf32, #tpu.memory_space<vmem>>, vector<1x119x64xf32>
    %148 = vector.shape_cast %147 : vector<1x119x64xf32> to vector<119x64xf32>
    %149 = vector.broadcast %133 : vector<1x64xf32> to vector<119x64xf32>
    %150 = arith.mulf %148, %149 : vector<119x64xf32>
    %151 = vector.broadcast %135 : vector<1x64xf32> to vector<119x64xf32>
    %152 = arith.addf %150, %151 : vector<119x64xf32>
    %cst_95 = arith.constant 0.000000e+00 : f32
    %153 = vector.broadcast %cst_95 : f32 to vector<119x64xf32>
    %154 = arith.maximumf %152, %153 : vector<119x64xf32>
    %c1_96 = arith.constant 1 : index
    %c0_97 = arith.constant 0 : index
    %c0_98 = arith.constant 0 : index
    %155 = vector.load %arg9[%c1_96, %c0_97, %c0_98] : memref<2x119x64xf32, #tpu.memory_space<vmem>>, vector<1x119x64xf32>
    %156 = vector.shape_cast %155 : vector<1x119x64xf32> to vector<119x64xf32>
    %157 = vector.shape_cast %154 : vector<119x64xf32> to vector<1x119x64xf32>
    tpu.vector_store %arg9[%c1_96, %c0_97, %c0_98], %157 {strides = array<i32>} : memref<2x119x64xf32, #tpu.memory_space<vmem>>, vector<1x119x64xf32>,
    return
  }
}

module attributes {stable_mosaic.version = 11 : i64} {
  func.func @kernel(%arg0: memref<2x59x64xf32, #tpu.memory_space<vmem>>, %arg1: memref<1024x256xbf16, #tpu.memory_space<vmem>>, %arg2: memref<1x64xf32, #tpu.memory_space<vmem>>, %arg3: memref<1x64xf32, #tpu.memory_space<vmem>>, %arg4: memref<1x64xf32, #tpu.memory_space<vmem>>, %arg5: memref<1024x256xbf16, #tpu.memory_space<vmem>>, %arg6: memref<1x64xf32, #tpu.memory_space<vmem>>, %arg7: memref<1x64xf32, #tpu.memory_space<vmem>>, %arg8: memref<1x64xf32, #tpu.memory_space<vmem>>, %arg9: memref<2x59x64xf32, #tpu.memory_space<vmem>>, %arg10: memref<2x59x64xf32, #tpu.memory_space<vmem>>, %arg11: memref<112x1024xbf16, #tpu.memory_space<vmem>>, %arg12: memref<112x256xf32, #tpu.memory_space<vmem>>) attributes {dimension_semantics = [], scalar_prefetch = 0 : i64, scratch_operands = 3 : i64, tpu.core_type = #tpu.core_type<tc>} {
    %cst = arith.constant 0.000000e+00 : bf16
    %0 = vector.broadcast %cst : bf16 to vector<24x1024xbf16>
    %c0 = arith.constant 0 : index
    %c0_0 = arith.constant 0 : index
    %1 = vector.load %arg11[%c0, %c0_0] : memref<112x1024xbf16, #tpu.memory_space<vmem>>, vector<24x1024xbf16>
    tpu.vector_store %arg11[%c0, %c0_0], %0 {strides = array<i32>} : memref<112x1024xbf16, #tpu.memory_space<vmem>>, vector<24x1024xbf16>,
    %cst_1 = arith.constant 0.000000e+00 : bf16
    %2 = vector.broadcast %cst_1 : bf16 to vector<53x1024xbf16>
    %c59 = arith.constant 59 : index
    %c0_2 = arith.constant 0 : index
    %3 = vector.load %arg11[%c59, %c0_2] : memref<112x1024xbf16, #tpu.memory_space<vmem>>, vector<53x1024xbf16>
    tpu.vector_store %arg11[%c59, %c0_2], %2 {strides = array<i32>} : memref<112x1024xbf16, #tpu.memory_space<vmem>>, vector<53x1024xbf16>,
    %cst_3 = arith.constant 0.000000e+00 : f32
    %4 = vector.broadcast %cst_3 : f32 to vector<1x64xf32>
    %cst_4 = arith.constant 0.000000e+00 : f32
    %5 = vector.broadcast %cst_4 : f32 to vector<1x64xf32>
    %cst_5 = arith.constant 0.000000e+00 : f32
    %6 = vector.broadcast %cst_5 : f32 to vector<1x64xf32>
    %cst_6 = arith.constant 0.000000e+00 : f32
    %7 = vector.broadcast %cst_6 : f32 to vector<2x64xf32>
    %c0_7 = arith.constant 0 : index
    %c0_8 = arith.constant 0 : index
    %c0_9 = arith.constant 0 : index
    %8 = vector.load %arg0[%c0_7, %c0_8, %c0_9] : memref<2x59x64xf32, #tpu.memory_space<vmem>>, vector<1x59x64xf32>
    %9 = vector.shape_cast %8 : vector<1x59x64xf32> to vector<59x64xf32>
    %10 = tpu.concatenate %7, %9 in 0 : vector<2x64xf32>, vector<59x64xf32> -> vector<61x64xf32>
    %11 = tpu.concatenate %6, %9, %6 in 0 : vector<1x64xf32>, vector<59x64xf32>, vector<1x64xf32> -> vector<61x64xf32>
    %12 = tpu.concatenate %10, %11 in 1 : vector<61x64xf32>, vector<61x64xf32> -> vector<61x128xf32>
    %13 = arith.truncf %12 : vector<61x128xf32> to vector<61x128xbf16>
    %c22 = arith.constant 22 : index
    %c0_10 = arith.constant 0 : index
    %14 = vector.load %arg11[%c22, %c0_10] : memref<112x1024xbf16, #tpu.memory_space<vmem>>, vector<61x128xbf16>
    tpu.vector_store %arg11[%c22, %c0_10], %13 {strides = array<i32>} : memref<112x1024xbf16, #tpu.memory_space<vmem>>, vector<61x128xbf16>,
    %c20 = arith.constant 20 : index
    %c128 = arith.constant 128 : index
    %15 = vector.load %arg11[%c20, %c128] : memref<112x1024xbf16, #tpu.memory_space<vmem>>, vector<61x128xbf16>
    tpu.vector_store %arg11[%c20, %c128], %13 {strides = array<i32>} : memref<112x1024xbf16, #tpu.memory_space<vmem>>, vector<61x128xbf16>,
    %c18 = arith.constant 18 : index
    %c256 = arith.constant 256 : index
    %16 = vector.load %arg11[%c18, %c256] : memref<112x1024xbf16, #tpu.memory_space<vmem>>, vector<61x128xbf16>
    tpu.vector_store %arg11[%c18, %c256], %13 {strides = array<i32>} : memref<112x1024xbf16, #tpu.memory_space<vmem>>, vector<61x128xbf16>,
    %c16 = arith.constant 16 : index
    %c384 = arith.constant 384 : index
    %17 = vector.load %arg11[%c16, %c384] : memref<112x1024xbf16, #tpu.memory_space<vmem>>, vector<61x128xbf16>
    tpu.vector_store %arg11[%c16, %c384], %13 {strides = array<i32>} : memref<112x1024xbf16, #tpu.memory_space<vmem>>, vector<61x128xbf16>,
    %c14 = arith.constant 14 : index
    %c512 = arith.constant 512 : index
    %18 = vector.load %arg11[%c14, %c512] : memref<112x1024xbf16, #tpu.memory_space<vmem>>, vector<61x128xbf16>
    tpu.vector_store %arg11[%c14, %c512], %13 {strides = array<i32>} : memref<112x1024xbf16, #tpu.memory_space<vmem>>, vector<61x128xbf16>,
    %c12 = arith.constant 12 : index
    %c640 = arith.constant 640 : index
    %19 = vector.load %arg11[%c12, %c640] : memref<112x1024xbf16, #tpu.memory_space<vmem>>, vector<61x128xbf16>
    tpu.vector_store %arg11[%c12, %c640], %13 {strides = array<i32>} : memref<112x1024xbf16, #tpu.memory_space<vmem>>, vector<61x128xbf16>,
    %c10 = arith.constant 10 : index
    %c768 = arith.constant 768 : index
    %20 = vector.load %arg11[%c10, %c768] : memref<112x1024xbf16, #tpu.memory_space<vmem>>, vector<61x128xbf16>
    tpu.vector_store %arg11[%c10, %c768], %13 {strides = array<i32>} : memref<112x1024xbf16, #tpu.memory_space<vmem>>, vector<61x128xbf16>,
    %c8 = arith.constant 8 : index
    %c896 = arith.constant 896 : index
    %21 = vector.load %arg11[%c8, %c896] : memref<112x1024xbf16, #tpu.memory_space<vmem>>, vector<61x128xbf16>
    tpu.vector_store %arg11[%c8, %c896], %13 {strides = array<i32>} : memref<112x1024xbf16, #tpu.memory_space<vmem>>, vector<61x128xbf16>,
    %c0_11 = arith.constant 0 : index
    %c0_12 = arith.constant 0 : index
    %22 = vector.load %arg11[%c0_11, %c0_12] : memref<112x1024xbf16, #tpu.memory_space<vmem>>, vector<107x1024xbf16>
    %c0_13 = arith.constant 0 : index
    %c0_14 = arith.constant 0 : index
    %23 = vector.load %arg1[%c0_13, %c0_14] : memref<1024x256xbf16, #tpu.memory_space<vmem>>, vector<1024x256xbf16>
    %cst_15 = arith.constant dense<0.000000e+00> : vector<107x256xf32>
    %24 = tpu.matmul %22, %23, %cst_15 {dimension_numbers = #tpu.dot_dimension_numbers<[1], [0], [0], [1], [0, 0, 1, 1], [], []>} : vector<107x1024xbf16>, vector<1024x256xbf16>, vector<107x256xf32> -> vector<107x256xf32>
    %c0_16 = arith.constant 0 : index
    %c0_17 = arith.constant 0 : index
    %25 = vector.load %arg12[%c0_16, %c0_17] : memref<112x256xf32, #tpu.memory_space<vmem>>, vector<107x256xf32>
    tpu.vector_store %arg12[%c0_16, %c0_17], %24 {strides = array<i32>} : memref<112x256xf32, #tpu.memory_space<vmem>>, vector<107x256xf32>,
    %c0_18 = arith.constant 0 : index
    %c0_19 = arith.constant 0 : index
    %26 = vector.load %arg2[%c0_18, %c0_19] : memref<1x64xf32, #tpu.memory_space<vmem>>, vector<1x64xf32>
    %c0_20 = arith.constant 0 : index
    %c0_21 = arith.constant 0 : index
    %27 = vector.load %arg12[%c0_20, %c0_21] : memref<112x256xf32, #tpu.memory_space<vmem>>, vector<59x64xf32>
    %28 = vector.broadcast %26 : vector<1x64xf32> to vector<59x64xf32>
    %29 = arith.addf %28, %27 : vector<59x64xf32>
    %c16_22 = arith.constant 16 : index
    %c64 = arith.constant 64 : index
    %30 = vector.load %arg12[%c16_22, %c64] : memref<112x256xf32, #tpu.memory_space<vmem>>, vector<59x64xf32>
    %31 = arith.addf %29, %30 : vector<59x64xf32>
    %c32 = arith.constant 32 : index
    %c128_23 = arith.constant 128 : index
    %32 = vector.load %arg12[%c32, %c128_23] : memref<112x256xf32, #tpu.memory_space<vmem>>, vector<59x64xf32>
    %33 = arith.addf %31, %32 : vector<59x64xf32>
    %c48 = arith.constant 48 : index
    %c192 = arith.constant 192 : index
    %34 = vector.load %arg12[%c48, %c192] : memref<112x256xf32, #tpu.memory_space<vmem>>, vector<59x64xf32>
    %35 = arith.addf %33, %34 : vector<59x64xf32>
    %c0_24 = arith.constant 0 : index
    %c0_25 = arith.constant 0 : index
    %c0_26 = arith.constant 0 : index
    %36 = vector.load %arg10[%c0_24, %c0_25, %c0_26] : memref<2x59x64xf32, #tpu.memory_space<vmem>>, vector<1x59x64xf32>
    %37 = vector.shape_cast %36 : vector<1x59x64xf32> to vector<59x64xf32>
    %38 = vector.shape_cast %35 : vector<59x64xf32> to vector<1x59x64xf32>
    tpu.vector_store %arg10[%c0_24, %c0_25, %c0_26], %38 {strides = array<i32>} : memref<2x59x64xf32, #tpu.memory_space<vmem>>, vector<1x59x64xf32>,
    %cst_27 = arith.constant dense<0.000000e+00> : vector<64xf32>
    %39 = vector.multi_reduction <add>, %35, %cst_27 [0] : vector<59x64xf32> to vector<64xf32>
    %40 = vector.shape_cast %39 : vector<64xf32> to vector<1x64xf32>
    %41 = arith.addf %4, %40 : vector<1x64xf32>
    %42 = arith.mulf %35, %35 : vector<59x64xf32>
    %cst_28 = arith.constant dense<0.000000e+00> : vector<64xf32>
    %43 = vector.multi_reduction <add>, %42, %cst_28 [0] : vector<59x64xf32> to vector<64xf32>
    %44 = vector.shape_cast %43 : vector<64xf32> to vector<1x64xf32>
    %45 = arith.addf %5, %44 : vector<1x64xf32>
    %c1 = arith.constant 1 : index
    %c0_29 = arith.constant 0 : index
    %c0_30 = arith.constant 0 : index
    %46 = vector.load %arg0[%c1, %c0_29, %c0_30] : memref<2x59x64xf32, #tpu.memory_space<vmem>>, vector<1x59x64xf32>
    %47 = vector.shape_cast %46 : vector<1x59x64xf32> to vector<59x64xf32>
    %48 = tpu.concatenate %7, %47 in 0 : vector<2x64xf32>, vector<59x64xf32> -> vector<61x64xf32>
    %49 = tpu.concatenate %6, %47, %6 in 0 : vector<1x64xf32>, vector<59x64xf32>, vector<1x64xf32> -> vector<61x64xf32>
    %50 = tpu.concatenate %48, %49 in 1 : vector<61x64xf32>, vector<61x64xf32> -> vector<61x128xf32>
    %51 = arith.truncf %50 : vector<61x128xf32> to vector<61x128xbf16>
    %c22_31 = arith.constant 22 : index
    %c0_32 = arith.constant 0 : index
    %52 = vector.load %arg11[%c22_31, %c0_32] : memref<112x1024xbf16, #tpu.memory_space<vmem>>, vector<61x128xbf16>
    tpu.vector_store %arg11[%c22_31, %c0_32], %51 {strides = array<i32>} : memref<112x1024xbf16, #tpu.memory_space<vmem>>, vector<61x128xbf16>,
    %c20_33 = arith.constant 20 : index
    %c128_34 = arith.constant 128 : index
    %53 = vector.load %arg11[%c20_33, %c128_34] : memref<112x1024xbf16, #tpu.memory_space<vmem>>, vector<61x128xbf16>
    tpu.vector_store %arg11[%c20_33, %c128_34], %51 {strides = array<i32>} : memref<112x1024xbf16, #tpu.memory_space<vmem>>, vector<61x128xbf16>,
    %c18_35 = arith.constant 18 : index
    %c256_36 = arith.constant 256 : index
    %54 = vector.load %arg11[%c18_35, %c256_36] : memref<112x1024xbf16, #tpu.memory_space<vmem>>, vector<61x128xbf16>
    tpu.vector_store %arg11[%c18_35, %c256_36], %51 {strides = array<i32>} : memref<112x1024xbf16, #tpu.memory_space<vmem>>, vector<61x128xbf16>,
    %c16_37 = arith.constant 16 : index
    %c384_38 = arith.constant 384 : index
    %55 = vector.load %arg11[%c16_37, %c384_38] : memref<112x1024xbf16, #tpu.memory_space<vmem>>, vector<61x128xbf16>
    tpu.vector_store %arg11[%c16_37, %c384_38], %51 {strides = array<i32>} : memref<112x1024xbf16, #tpu.memory_space<vmem>>, vector<61x128xbf16>,
    %c14_39 = arith.constant 14 : index
    %c512_40 = arith.constant 512 : index
    %56 = vector.load %arg11[%c14_39, %c512_40] : memref<112x1024xbf16, #tpu.memory_space<vmem>>, vector<61x128xbf16>
    tpu.vector_store %arg11[%c14_39, %c512_40], %51 {strides = array<i32>} : memref<112x1024xbf16, #tpu.memory_space<vmem>>, vector<61x128xbf16>,
    %c12_41 = arith.constant 12 : index
    %c640_42 = arith.constant 640 : index
    %57 = vector.load %arg11[%c12_41, %c640_42] : memref<112x1024xbf16, #tpu.memory_space<vmem>>, vector<61x128xbf16>
    tpu.vector_store %arg11[%c12_41, %c640_42], %51 {strides = array<i32>} : memref<112x1024xbf16, #tpu.memory_space<vmem>>, vector<61x128xbf16>,
    %c10_43 = arith.constant 10 : index
    %c768_44 = arith.constant 768 : index
    %58 = vector.load %arg11[%c10_43, %c768_44] : memref<112x1024xbf16, #tpu.memory_space<vmem>>, vector<61x128xbf16>
    tpu.vector_store %arg11[%c10_43, %c768_44], %51 {strides = array<i32>} : memref<112x1024xbf16, #tpu.memory_space<vmem>>, vector<61x128xbf16>,
    %c8_45 = arith.constant 8 : index
    %c896_46 = arith.constant 896 : index
    %59 = vector.load %arg11[%c8_45, %c896_46] : memref<112x1024xbf16, #tpu.memory_space<vmem>>, vector<61x128xbf16>
    tpu.vector_store %arg11[%c8_45, %c896_46], %51 {strides = array<i32>} : memref<112x1024xbf16, #tpu.memory_space<vmem>>, vector<61x128xbf16>,
    %c0_47 = arith.constant 0 : index
    %c0_48 = arith.constant 0 : index
    %60 = vector.load %arg11[%c0_47, %c0_48] : memref<112x1024xbf16, #tpu.memory_space<vmem>>, vector<107x1024xbf16>
    %c0_49 = arith.constant 0 : index
    %c0_50 = arith.constant 0 : index
    %61 = vector.load %arg1[%c0_49, %c0_50] : memref<1024x256xbf16, #tpu.memory_space<vmem>>, vector<1024x256xbf16>
    %cst_51 = arith.constant dense<0.000000e+00> : vector<107x256xf32>
    %62 = tpu.matmul %60, %61, %cst_51 {dimension_numbers = #tpu.dot_dimension_numbers<[1], [0], [0], [1], [0, 0, 1, 1], [], []>} : vector<107x1024xbf16>, vector<1024x256xbf16>, vector<107x256xf32> -> vector<107x256xf32>
    %c0_52 = arith.constant 0 : index
    %c0_53 = arith.constant 0 : index
    %63 = vector.load %arg12[%c0_52, %c0_53] : memref<112x256xf32, #tpu.memory_space<vmem>>, vector<107x256xf32>
    tpu.vector_store %arg12[%c0_52, %c0_53], %62 {strides = array<i32>} : memref<112x256xf32, #tpu.memory_space<vmem>>, vector<107x256xf32>,
    %c0_54 = arith.constant 0 : index
    %c0_55 = arith.constant 0 : index
    %64 = vector.load %arg2[%c0_54, %c0_55] : memref<1x64xf32, #tpu.memory_space<vmem>>, vector<1x64xf32>
    %c0_56 = arith.constant 0 : index
    %c0_57 = arith.constant 0 : index
    %65 = vector.load %arg12[%c0_56, %c0_57] : memref<112x256xf32, #tpu.memory_space<vmem>>, vector<59x64xf32>
    %66 = vector.broadcast %64 : vector<1x64xf32> to vector<59x64xf32>
    %67 = arith.addf %66, %65 : vector<59x64xf32>
    %c16_58 = arith.constant 16 : index
    %c64_59 = arith.constant 64 : index
    %68 = vector.load %arg12[%c16_58, %c64_59] : memref<112x256xf32, #tpu.memory_space<vmem>>, vector<59x64xf32>
    %69 = arith.addf %67, %68 : vector<59x64xf32>
    %c32_60 = arith.constant 32 : index
    %c128_61 = arith.constant 128 : index
    %70 = vector.load %arg12[%c32_60, %c128_61] : memref<112x256xf32, #tpu.memory_space<vmem>>, vector<59x64xf32>
    %71 = arith.addf %69, %70 : vector<59x64xf32>
    %c48_62 = arith.constant 48 : index
    %c192_63 = arith.constant 192 : index
    %72 = vector.load %arg12[%c48_62, %c192_63] : memref<112x256xf32, #tpu.memory_space<vmem>>, vector<59x64xf32>
    %73 = arith.addf %71, %72 : vector<59x64xf32>
    %c1_64 = arith.constant 1 : index
    %c0_65 = arith.constant 0 : index
    %c0_66 = arith.constant 0 : index
    %74 = vector.load %arg10[%c1_64, %c0_65, %c0_66] : memref<2x59x64xf32, #tpu.memory_space<vmem>>, vector<1x59x64xf32>
    %75 = vector.shape_cast %74 : vector<1x59x64xf32> to vector<59x64xf32>
    %76 = vector.shape_cast %73 : vector<59x64xf32> to vector<1x59x64xf32>
    tpu.vector_store %arg10[%c1_64, %c0_65, %c0_66], %76 {strides = array<i32>} : memref<2x59x64xf32, #tpu.memory_space<vmem>>, vector<1x59x64xf32>,
    %cst_67 = arith.constant dense<0.000000e+00> : vector<64xf32>
    %77 = vector.multi_reduction <add>, %73, %cst_67 [0] : vector<59x64xf32> to vector<64xf32>
    %78 = vector.shape_cast %77 : vector<64xf32> to vector<1x64xf32>
    %79 = arith.addf %41, %78 : vector<1x64xf32>
    %80 = arith.mulf %73, %73 : vector<59x64xf32>
    %cst_68 = arith.constant dense<0.000000e+00> : vector<64xf32>
    %81 = vector.multi_reduction <add>, %80, %cst_68 [0] : vector<59x64xf32> to vector<64xf32>
    %82 = vector.shape_cast %81 : vector<64xf32> to vector<1x64xf32>
    %83 = arith.addf %45, %82 : vector<1x64xf32>
    %c0_69 = arith.constant 0 : index
    %c0_70 = arith.constant 0 : index
    %84 = vector.load %arg3[%c0_69, %c0_70] : memref<1x64xf32, #tpu.memory_space<vmem>>, vector<1x64xf32>
    %c0_71 = arith.constant 0 : index
    %c0_72 = arith.constant 0 : index
    %85 = vector.load %arg4[%c0_71, %c0_72] : memref<1x64xf32, #tpu.memory_space<vmem>>, vector<1x64xf32>
    %cst_73 = arith.constant 1.180000e+02 : f32
    %86 = vector.broadcast %cst_73 : f32 to vector<1x64xf32>
    %87 = arith.divf %79, %86 : vector<1x64xf32>
    %cst_74 = arith.constant 1.180000e+02 : f32
    %88 = vector.broadcast %cst_74 : f32 to vector<1x64xf32>
    %89 = arith.divf %83, %88 : vector<1x64xf32>
    %90 = arith.mulf %87, %87 : vector<1x64xf32>
    %91 = arith.subf %89, %90 : vector<1x64xf32>
    %cst_75 = arith.constant 0.000000e+00 : f32
    %92 = vector.broadcast %cst_75 : f32 to vector<1x64xf32>
    %93 = arith.maximumf %91, %92 : vector<1x64xf32>
    %cst_76 = arith.constant 9.99999974E-6 : f32
    %94 = vector.broadcast %cst_76 : f32 to vector<1x64xf32>
    %95 = arith.addf %93, %94 : vector<1x64xf32>
    %96 = math.rsqrt %95 : vector<1x64xf32>
    %97 = arith.mulf %84, %96 : vector<1x64xf32>
    %98 = arith.mulf %87, %97 : vector<1x64xf32>
    %99 = arith.subf %85, %98 : vector<1x64xf32>
    %cst_77 = arith.constant 0.000000e+00 : f32
    %100 = vector.broadcast %cst_77 : f32 to vector<1x64xf32>
    %cst_78 = arith.constant 0.000000e+00 : f32
    %101 = vector.broadcast %cst_78 : f32 to vector<1x64xf32>
    %cst_79 = arith.constant 0.000000e+00 : f32
    %102 = vector.broadcast %cst_79 : f32 to vector<1x64xf32>
    %cst_80 = arith.constant 0.000000e+00 : f32
    %103 = vector.broadcast %cst_80 : f32 to vector<2x64xf32>
    %c0_81 = arith.constant 0 : index
    %c0_82 = arith.constant 0 : index
    %c0_83 = arith.constant 0 : index
    %104 = vector.load %arg10[%c0_81, %c0_82, %c0_83] : memref<2x59x64xf32, #tpu.memory_space<vmem>>, vector<1x59x64xf32>
    %105 = vector.shape_cast %104 : vector<1x59x64xf32> to vector<59x64xf32>
    %106 = vector.broadcast %97 : vector<1x64xf32> to vector<59x64xf32>
    %107 = arith.mulf %105, %106 : vector<59x64xf32>
    %108 = vector.broadcast %99 : vector<1x64xf32> to vector<59x64xf32>
    %109 = arith.addf %107, %108 : vector<59x64xf32>
    %cst_84 = arith.constant 0.000000e+00 : f32
    %110 = vector.broadcast %cst_84 : f32 to vector<59x64xf32>
    %111 = arith.maximumf %109, %110 : vector<59x64xf32>
    %112 = tpu.concatenate %103, %111 in 0 : vector<2x64xf32>, vector<59x64xf32> -> vector<61x64xf32>
    %113 = tpu.concatenate %102, %111, %102 in 0 : vector<1x64xf32>, vector<59x64xf32>, vector<1x64xf32> -> vector<61x64xf32>
    %114 = tpu.concatenate %112, %113 in 1 : vector<61x64xf32>, vector<61x64xf32> -> vector<61x128xf32>
    %115 = arith.truncf %114 : vector<61x128xf32> to vector<61x128xbf16>
    %c22_85 = arith.constant 22 : index
    %c0_86 = arith.constant 0 : index
    %116 = vector.load %arg11[%c22_85, %c0_86] : memref<112x1024xbf16, #tpu.memory_space<vmem>>, vector<61x128xbf16>
    tpu.vector_store %arg11[%c22_85, %c0_86], %115 {strides = array<i32>} : memref<112x1024xbf16, #tpu.memory_space<vmem>>, vector<61x128xbf16>,
    %c20_87 = arith.constant 20 : index
    %c128_88 = arith.constant 128 : index
    %117 = vector.load %arg11[%c20_87, %c128_88] : memref<112x1024xbf16, #tpu.memory_space<vmem>>, vector<61x128xbf16>
    tpu.vector_store %arg11[%c20_87, %c128_88], %115 {strides = array<i32>} : memref<112x1024xbf16, #tpu.memory_space<vmem>>, vector<61x128xbf16>,
    %c18_89 = arith.constant 18 : index
    %c256_90 = arith.constant 256 : index
    %118 = vector.load %arg11[%c18_89, %c256_90] : memref<112x1024xbf16, #tpu.memory_space<vmem>>, vector<61x128xbf16>
    tpu.vector_store %arg11[%c18_89, %c256_90], %115 {strides = array<i32>} : memref<112x1024xbf16, #tpu.memory_space<vmem>>, vector<61x128xbf16>,
    %c16_91 = arith.constant 16 : index
    %c384_92 = arith.constant 384 : index
    %119 = vector.load %arg11[%c16_91, %c384_92] : memref<112x1024xbf16, #tpu.memory_space<vmem>>, vector<61x128xbf16>
    tpu.vector_store %arg11[%c16_91, %c384_92], %115 {strides = array<i32>} : memref<112x1024xbf16, #tpu.memory_space<vmem>>, vector<61x128xbf16>,
    %c14_93 = arith.constant 14 : index
    %c512_94 = arith.constant 512 : index
    %120 = vector.load %arg11[%c14_93, %c512_94] : memref<112x1024xbf16, #tpu.memory_space<vmem>>, vector<61x128xbf16>
    tpu.vector_store %arg11[%c14_93, %c512_94], %115 {strides = array<i32>} : memref<112x1024xbf16, #tpu.memory_space<vmem>>, vector<61x128xbf16>,
    %c12_95 = arith.constant 12 : index
    %c640_96 = arith.constant 640 : index
    %121 = vector.load %arg11[%c12_95, %c640_96] : memref<112x1024xbf16, #tpu.memory_space<vmem>>, vector<61x128xbf16>
    tpu.vector_store %arg11[%c12_95, %c640_96], %115 {strides = array<i32>} : memref<112x1024xbf16, #tpu.memory_space<vmem>>, vector<61x128xbf16>,
    %c10_97 = arith.constant 10 : index
    %c768_98 = arith.constant 768 : index
    %122 = vector.load %arg11[%c10_97, %c768_98] : memref<112x1024xbf16, #tpu.memory_space<vmem>>, vector<61x128xbf16>
    tpu.vector_store %arg11[%c10_97, %c768_98], %115 {strides = array<i32>} : memref<112x1024xbf16, #tpu.memory_space<vmem>>, vector<61x128xbf16>,
    %c8_99 = arith.constant 8 : index
    %c896_100 = arith.constant 896 : index
    %123 = vector.load %arg11[%c8_99, %c896_100] : memref<112x1024xbf16, #tpu.memory_space<vmem>>, vector<61x128xbf16>
    tpu.vector_store %arg11[%c8_99, %c896_100], %115 {strides = array<i32>} : memref<112x1024xbf16, #tpu.memory_space<vmem>>, vector<61x128xbf16>,
    %c0_101 = arith.constant 0 : index
    %c0_102 = arith.constant 0 : index
    %124 = vector.load %arg11[%c0_101, %c0_102] : memref<112x1024xbf16, #tpu.memory_space<vmem>>, vector<107x1024xbf16>
    %c0_103 = arith.constant 0 : index
    %c0_104 = arith.constant 0 : index
    %125 = vector.load %arg5[%c0_103, %c0_104] : memref<1024x256xbf16, #tpu.memory_space<vmem>>, vector<1024x256xbf16>
    %cst_105 = arith.constant dense<0.000000e+00> : vector<107x256xf32>
    %126 = tpu.matmul %124, %125, %cst_105 {dimension_numbers = #tpu.dot_dimension_numbers<[1], [0], [0], [1], [0, 0, 1, 1], [], []>} : vector<107x1024xbf16>, vector<1024x256xbf16>, vector<107x256xf32> -> vector<107x256xf32>
    %c0_106 = arith.constant 0 : index
    %c0_107 = arith.constant 0 : index
    %127 = vector.load %arg12[%c0_106, %c0_107] : memref<112x256xf32, #tpu.memory_space<vmem>>, vector<107x256xf32>
    tpu.vector_store %arg12[%c0_106, %c0_107], %126 {strides = array<i32>} : memref<112x256xf32, #tpu.memory_space<vmem>>, vector<107x256xf32>,
    %c0_108 = arith.constant 0 : index
    %c0_109 = arith.constant 0 : index
    %128 = vector.load %arg6[%c0_108, %c0_109] : memref<1x64xf32, #tpu.memory_space<vmem>>, vector<1x64xf32>
    %c0_110 = arith.constant 0 : index
    %c0_111 = arith.constant 0 : index
    %129 = vector.load %arg12[%c0_110, %c0_111] : memref<112x256xf32, #tpu.memory_space<vmem>>, vector<59x64xf32>
    %130 = vector.broadcast %128 : vector<1x64xf32> to vector<59x64xf32>
    %131 = arith.addf %130, %129 : vector<59x64xf32>
    %c16_112 = arith.constant 16 : index
    %c64_113 = arith.constant 64 : index
    %132 = vector.load %arg12[%c16_112, %c64_113] : memref<112x256xf32, #tpu.memory_space<vmem>>, vector<59x64xf32>
    %133 = arith.addf %131, %132 : vector<59x64xf32>
    %c32_114 = arith.constant 32 : index
    %c128_115 = arith.constant 128 : index
    %134 = vector.load %arg12[%c32_114, %c128_115] : memref<112x256xf32, #tpu.memory_space<vmem>>, vector<59x64xf32>
    %135 = arith.addf %133, %134 : vector<59x64xf32>
    %c48_116 = arith.constant 48 : index
    %c192_117 = arith.constant 192 : index
    %136 = vector.load %arg12[%c48_116, %c192_117] : memref<112x256xf32, #tpu.memory_space<vmem>>, vector<59x64xf32>
    %137 = arith.addf %135, %136 : vector<59x64xf32>
    %c0_118 = arith.constant 0 : index
    %c0_119 = arith.constant 0 : index
    %c0_120 = arith.constant 0 : index
    %138 = vector.load %arg10[%c0_118, %c0_119, %c0_120] : memref<2x59x64xf32, #tpu.memory_space<vmem>>, vector<1x59x64xf32>
    %139 = vector.shape_cast %138 : vector<1x59x64xf32> to vector<59x64xf32>
    %140 = vector.shape_cast %137 : vector<59x64xf32> to vector<1x59x64xf32>
    tpu.vector_store %arg10[%c0_118, %c0_119, %c0_120], %140 {strides = array<i32>} : memref<2x59x64xf32, #tpu.memory_space<vmem>>, vector<1x59x64xf32>,
    %cst_121 = arith.constant dense<0.000000e+00> : vector<64xf32>
    %141 = vector.multi_reduction <add>, %137, %cst_121 [0] : vector<59x64xf32> to vector<64xf32>
    %142 = vector.shape_cast %141 : vector<64xf32> to vector<1x64xf32>
    %143 = arith.addf %100, %142 : vector<1x64xf32>
    %144 = arith.mulf %137, %137 : vector<59x64xf32>
    %cst_122 = arith.constant dense<0.000000e+00> : vector<64xf32>
    %145 = vector.multi_reduction <add>, %144, %cst_122 [0] : vector<59x64xf32> to vector<64xf32>
    %146 = vector.shape_cast %145 : vector<64xf32> to vector<1x64xf32>
    %147 = arith.addf %101, %146 : vector<1x64xf32>
    %c1_123 = arith.constant 1 : index
    %c0_124 = arith.constant 0 : index
    %c0_125 = arith.constant 0 : index
    %148 = vector.load %arg10[%c1_123, %c0_124, %c0_125] : memref<2x59x64xf32, #tpu.memory_space<vmem>>, vector<1x59x64xf32>
    %149 = vector.shape_cast %148 : vector<1x59x64xf32> to vector<59x64xf32>
    %150 = vector.broadcast %97 : vector<1x64xf32> to vector<59x64xf32>
    %151 = arith.mulf %149, %150 : vector<59x64xf32>
    %152 = vector.broadcast %99 : vector<1x64xf32> to vector<59x64xf32>
    %153 = arith.addf %151, %152 : vector<59x64xf32>
    %cst_126 = arith.constant 0.000000e+00 : f32
    %154 = vector.broadcast %cst_126 : f32 to vector<59x64xf32>
    %155 = arith.maximumf %153, %154 : vector<59x64xf32>
    %156 = tpu.concatenate %103, %155 in 0 : vector<2x64xf32>, vector<59x64xf32> -> vector<61x64xf32>
    %157 = tpu.concatenate %102, %155, %102 in 0 : vector<1x64xf32>, vector<59x64xf32>, vector<1x64xf32> -> vector<61x64xf32>
    %158 = tpu.concatenate %156, %157 in 1 : vector<61x64xf32>, vector<61x64xf32> -> vector<61x128xf32>
    %159 = arith.truncf %158 : vector<61x128xf32> to vector<61x128xbf16>
    %c22_127 = arith.constant 22 : index
    %c0_128 = arith.constant 0 : index
    %160 = vector.load %arg11[%c22_127, %c0_128] : memref<112x1024xbf16, #tpu.memory_space<vmem>>, vector<61x128xbf16>
    tpu.vector_store %arg11[%c22_127, %c0_128], %159 {strides = array<i32>} : memref<112x1024xbf16, #tpu.memory_space<vmem>>, vector<61x128xbf16>,
    %c20_129 = arith.constant 20 : index
    %c128_130 = arith.constant 128 : index
    %161 = vector.load %arg11[%c20_129, %c128_130] : memref<112x1024xbf16, #tpu.memory_space<vmem>>, vector<61x128xbf16>
    tpu.vector_store %arg11[%c20_129, %c128_130], %159 {strides = array<i32>} : memref<112x1024xbf16, #tpu.memory_space<vmem>>, vector<61x128xbf16>,
    %c18_131 = arith.constant 18 : index
    %c256_132 = arith.constant 256 : index
    %162 = vector.load %arg11[%c18_131, %c256_132] : memref<112x1024xbf16, #tpu.memory_space<vmem>>, vector<61x128xbf16>
    tpu.vector_store %arg11[%c18_131, %c256_132], %159 {strides = array<i32>} : memref<112x1024xbf16, #tpu.memory_space<vmem>>, vector<61x128xbf16>,
    %c16_133 = arith.constant 16 : index
    %c384_134 = arith.constant 384 : index
    %163 = vector.load %arg11[%c16_133, %c384_134] : memref<112x1024xbf16, #tpu.memory_space<vmem>>, vector<61x128xbf16>
    tpu.vector_store %arg11[%c16_133, %c384_134], %159 {strides = array<i32>} : memref<112x1024xbf16, #tpu.memory_space<vmem>>, vector<61x128xbf16>,
    %c14_135 = arith.constant 14 : index
    %c512_136 = arith.constant 512 : index
    %164 = vector.load %arg11[%c14_135, %c512_136] : memref<112x1024xbf16, #tpu.memory_space<vmem>>, vector<61x128xbf16>
    tpu.vector_store %arg11[%c14_135, %c512_136], %159 {strides = array<i32>} : memref<112x1024xbf16, #tpu.memory_space<vmem>>, vector<61x128xbf16>,
    %c12_137 = arith.constant 12 : index
    %c640_138 = arith.constant 640 : index
    %165 = vector.load %arg11[%c12_137, %c640_138] : memref<112x1024xbf16, #tpu.memory_space<vmem>>, vector<61x128xbf16>
    tpu.vector_store %arg11[%c12_137, %c640_138], %159 {strides = array<i32>} : memref<112x1024xbf16, #tpu.memory_space<vmem>>, vector<61x128xbf16>,
    %c10_139 = arith.constant 10 : index
    %c768_140 = arith.constant 768 : index
    %166 = vector.load %arg11[%c10_139, %c768_140] : memref<112x1024xbf16, #tpu.memory_space<vmem>>, vector<61x128xbf16>
    tpu.vector_store %arg11[%c10_139, %c768_140], %159 {strides = array<i32>} : memref<112x1024xbf16, #tpu.memory_space<vmem>>, vector<61x128xbf16>,
    %c8_141 = arith.constant 8 : index
    %c896_142 = arith.constant 896 : index
    %167 = vector.load %arg11[%c8_141, %c896_142] : memref<112x1024xbf16, #tpu.memory_space<vmem>>, vector<61x128xbf16>
    tpu.vector_store %arg11[%c8_141, %c896_142], %159 {strides = array<i32>} : memref<112x1024xbf16, #tpu.memory_space<vmem>>, vector<61x128xbf16>,
    %c0_143 = arith.constant 0 : index
    %c0_144 = arith.constant 0 : index
    %168 = vector.load %arg11[%c0_143, %c0_144] : memref<112x1024xbf16, #tpu.memory_space<vmem>>, vector<107x1024xbf16>
    %c0_145 = arith.constant 0 : index
    %c0_146 = arith.constant 0 : index
    %169 = vector.load %arg5[%c0_145, %c0_146] : memref<1024x256xbf16, #tpu.memory_space<vmem>>, vector<1024x256xbf16>
    %cst_147 = arith.constant dense<0.000000e+00> : vector<107x256xf32>
    %170 = tpu.matmul %168, %169, %cst_147 {dimension_numbers = #tpu.dot_dimension_numbers<[1], [0], [0], [1], [0, 0, 1, 1], [], []>} : vector<107x1024xbf16>, vector<1024x256xbf16>, vector<107x256xf32> -> vector<107x256xf32>
    %c0_148 = arith.constant 0 : index
    %c0_149 = arith.constant 0 : index
    %171 = vector.load %arg12[%c0_148, %c0_149] : memref<112x256xf32, #tpu.memory_space<vmem>>, vector<107x256xf32>
    tpu.vector_store %arg12[%c0_148, %c0_149], %170 {strides = array<i32>} : memref<112x256xf32, #tpu.memory_space<vmem>>, vector<107x256xf32>,
    %c0_150 = arith.constant 0 : index
    %c0_151 = arith.constant 0 : index
    %172 = vector.load %arg6[%c0_150, %c0_151] : memref<1x64xf32, #tpu.memory_space<vmem>>, vector<1x64xf32>
    %c0_152 = arith.constant 0 : index
    %c0_153 = arith.constant 0 : index
    %173 = vector.load %arg12[%c0_152, %c0_153] : memref<112x256xf32, #tpu.memory_space<vmem>>, vector<59x64xf32>
    %174 = vector.broadcast %172 : vector<1x64xf32> to vector<59x64xf32>
    %175 = arith.addf %174, %173 : vector<59x64xf32>
    %c16_154 = arith.constant 16 : index
    %c64_155 = arith.constant 64 : index
    %176 = vector.load %arg12[%c16_154, %c64_155] : memref<112x256xf32, #tpu.memory_space<vmem>>, vector<59x64xf32>
    %177 = arith.addf %175, %176 : vector<59x64xf32>
    %c32_156 = arith.constant 32 : index
    %c128_157 = arith.constant 128 : index
    %178 = vector.load %arg12[%c32_156, %c128_157] : memref<112x256xf32, #tpu.memory_space<vmem>>, vector<59x64xf32>
    %179 = arith.addf %177, %178 : vector<59x64xf32>
    %c48_158 = arith.constant 48 : index
    %c192_159 = arith.constant 192 : index
    %180 = vector.load %arg12[%c48_158, %c192_159] : memref<112x256xf32, #tpu.memory_space<vmem>>, vector<59x64xf32>
    %181 = arith.addf %179, %180 : vector<59x64xf32>
    %c1_160 = arith.constant 1 : index
    %c0_161 = arith.constant 0 : index
    %c0_162 = arith.constant 0 : index
    %182 = vector.load %arg10[%c1_160, %c0_161, %c0_162] : memref<2x59x64xf32, #tpu.memory_space<vmem>>, vector<1x59x64xf32>
    %183 = vector.shape_cast %182 : vector<1x59x64xf32> to vector<59x64xf32>
    %184 = vector.shape_cast %181 : vector<59x64xf32> to vector<1x59x64xf32>
    tpu.vector_store %arg10[%c1_160, %c0_161, %c0_162], %184 {strides = array<i32>} : memref<2x59x64xf32, #tpu.memory_space<vmem>>, vector<1x59x64xf32>,
    %cst_163 = arith.constant dense<0.000000e+00> : vector<64xf32>
    %185 = vector.multi_reduction <add>, %181, %cst_163 [0] : vector<59x64xf32> to vector<64xf32>
    %186 = vector.shape_cast %185 : vector<64xf32> to vector<1x64xf32>
    %187 = arith.addf %143, %186 : vector<1x64xf32>
    %188 = arith.mulf %181, %181 : vector<59x64xf32>
    %cst_164 = arith.constant dense<0.000000e+00> : vector<64xf32>
    %189 = vector.multi_reduction <add>, %188, %cst_164 [0] : vector<59x64xf32> to vector<64xf32>
    %190 = vector.shape_cast %189 : vector<64xf32> to vector<1x64xf32>
    %191 = arith.addf %147, %190 : vector<1x64xf32>
    %c0_165 = arith.constant 0 : index
    %c0_166 = arith.constant 0 : index
    %192 = vector.load %arg7[%c0_165, %c0_166] : memref<1x64xf32, #tpu.memory_space<vmem>>, vector<1x64xf32>
    %c0_167 = arith.constant 0 : index
    %c0_168 = arith.constant 0 : index
    %193 = vector.load %arg8[%c0_167, %c0_168] : memref<1x64xf32, #tpu.memory_space<vmem>>, vector<1x64xf32>
    %cst_169 = arith.constant 1.180000e+02 : f32
    %194 = vector.broadcast %cst_169 : f32 to vector<1x64xf32>
    %195 = arith.divf %187, %194 : vector<1x64xf32>
    %cst_170 = arith.constant 1.180000e+02 : f32
    %196 = vector.broadcast %cst_170 : f32 to vector<1x64xf32>
    %197 = arith.divf %191, %196 : vector<1x64xf32>
    %198 = arith.mulf %195, %195 : vector<1x64xf32>
    %199 = arith.subf %197, %198 : vector<1x64xf32>
    %cst_171 = arith.constant 0.000000e+00 : f32
    %200 = vector.broadcast %cst_171 : f32 to vector<1x64xf32>
    %201 = arith.maximumf %199, %200 : vector<1x64xf32>
    %cst_172 = arith.constant 9.99999974E-6 : f32
    %202 = vector.broadcast %cst_172 : f32 to vector<1x64xf32>
    %203 = arith.addf %201, %202 : vector<1x64xf32>
    %204 = math.rsqrt %203 : vector<1x64xf32>
    %205 = arith.mulf %192, %204 : vector<1x64xf32>
    %206 = arith.mulf %195, %205 : vector<1x64xf32>
    %207 = arith.subf %193, %206 : vector<1x64xf32>
    %c0_173 = arith.constant 0 : index
    %c0_174 = arith.constant 0 : index
    %c0_175 = arith.constant 0 : index
    %208 = vector.load %arg10[%c0_173, %c0_174, %c0_175] : memref<2x59x64xf32, #tpu.memory_space<vmem>>, vector<1x59x64xf32>
    %209 = vector.shape_cast %208 : vector<1x59x64xf32> to vector<59x64xf32>
    %210 = vector.broadcast %205 : vector<1x64xf32> to vector<59x64xf32>
    %211 = arith.mulf %209, %210 : vector<59x64xf32>
    %212 = vector.broadcast %207 : vector<1x64xf32> to vector<59x64xf32>
    %213 = arith.addf %211, %212 : vector<59x64xf32>
    %cst_176 = arith.constant 0.000000e+00 : f32
    %214 = vector.broadcast %cst_176 : f32 to vector<59x64xf32>
    %215 = arith.maximumf %213, %214 : vector<59x64xf32>
    %c0_177 = arith.constant 0 : index
    %c0_178 = arith.constant 0 : index
    %c0_179 = arith.constant 0 : index
    %216 = vector.load %arg0[%c0_177, %c0_178, %c0_179] : memref<2x59x64xf32, #tpu.memory_space<vmem>>, vector<1x59x64xf32>
    %217 = vector.shape_cast %216 : vector<1x59x64xf32> to vector<59x64xf32>
    %218 = arith.addf %215, %217 : vector<59x64xf32>
    %c0_180 = arith.constant 0 : index
    %c0_181 = arith.constant 0 : index
    %c0_182 = arith.constant 0 : index
    %219 = vector.load %arg9[%c0_180, %c0_181, %c0_182] : memref<2x59x64xf32, #tpu.memory_space<vmem>>, vector<1x59x64xf32>
    %220 = vector.shape_cast %219 : vector<1x59x64xf32> to vector<59x64xf32>
    %221 = vector.shape_cast %218 : vector<59x64xf32> to vector<1x59x64xf32>
    tpu.vector_store %arg9[%c0_180, %c0_181, %c0_182], %221 {strides = array<i32>} : memref<2x59x64xf32, #tpu.memory_space<vmem>>, vector<1x59x64xf32>,
    %c1_183 = arith.constant 1 : index
    %c0_184 = arith.constant 0 : index
    %c0_185 = arith.constant 0 : index
    %222 = vector.load %arg10[%c1_183, %c0_184, %c0_185] : memref<2x59x64xf32, #tpu.memory_space<vmem>>, vector<1x59x64xf32>
    %223 = vector.shape_cast %222 : vector<1x59x64xf32> to vector<59x64xf32>
    %224 = vector.broadcast %205 : vector<1x64xf32> to vector<59x64xf32>
    %225 = arith.mulf %223, %224 : vector<59x64xf32>
    %226 = vector.broadcast %207 : vector<1x64xf32> to vector<59x64xf32>
    %227 = arith.addf %225, %226 : vector<59x64xf32>
    %cst_186 = arith.constant 0.000000e+00 : f32
    %228 = vector.broadcast %cst_186 : f32 to vector<59x64xf32>
    %229 = arith.maximumf %227, %228 : vector<59x64xf32>
    %c1_187 = arith.constant 1 : index
    %c0_188 = arith.constant 0 : index
    %c0_189 = arith.constant 0 : index
    %230 = vector.load %arg0[%c1_187, %c0_188, %c0_189] : memref<2x59x64xf32, #tpu.memory_space<vmem>>, vector<1x59x64xf32>
    %231 = vector.shape_cast %230 : vector<1x59x64xf32> to vector<59x64xf32>
    %232 = arith.addf %229, %231 : vector<59x64xf32>
    %c1_190 = arith.constant 1 : index
    %c0_191 = arith.constant 0 : index
    %c0_192 = arith.constant 0 : index
    %233 = vector.load %arg9[%c1_190, %c0_191, %c0_192] : memref<2x59x64xf32, #tpu.memory_space<vmem>>, vector<1x59x64xf32>
    %234 = vector.shape_cast %233 : vector<1x59x64xf32> to vector<59x64xf32>
    %235 = vector.shape_cast %232 : vector<59x64xf32> to vector<1x59x64xf32>
    tpu.vector_store %arg9[%c1_190, %c0_191, %c0_192], %235 {strides = array<i32>} : memref<2x59x64xf32, #tpu.memory_space<vmem>>, vector<1x59x64xf32>,
    return
  }
}

</mosaic_0001>

<llo_original>
// kernel: kan_res_wide_x2.9
$region0: #{kan_res_wide_x2.9}
  #allocation0 [shape = 'u32[]', space=smem, size = 0x4, offset = 0x4, fixed_abs, tag = 'smem constant byte address 0x4 - core index']
  #allocation1 [shape = 'u32[144,128]{1,0:T(1,128)}', space=vmem, size = 0x12000, scoped, tag = 'internal scratch']
  #allocation2 [shape = 'f32[2,121,64]{2,1,0:T(8,128)}', space=vmem, size = 0x20000, scoped, tag = 'scratch operand']
  #allocation3 [shape = 'bf16[120,192]{1,0:T(8,128)(2,1)}', space=vmem, size = 0xf000, scoped, tag = 'scratch operand']
  %s0 = inlined_call_operand.vmem [shape: bf16[2,121,64], index: 0, kind: input, shape index: {}]
  %s1 = inlined_call_operand.vmem [shape: bf16[64,64], index: 1, kind: input, shape index: {}]
  %s2 = inlined_call_operand.vmem [shape: f32[1,64], index: 2, kind: input, shape index: {}]
  %s3 = inlined_call_operand.vmem [shape: f32[1,64], index: 3, kind: input, shape index: {}]
  %s4 = inlined_call_operand.vmem [shape: f32[1,64], index: 4, kind: input, shape index: {}]
  %s5 = inlined_call_operand.vmem [shape: bf16[192,64], index: 5, kind: input, shape index: {}]
  %s6 = inlined_call_operand.vmem [shape: f32[1,64], index: 6, kind: input, shape index: {}]
  %s7 = inlined_call_operand.vmem [shape: f32[1,64], index: 7, kind: input, shape index: {}]
  %s8 = inlined_call_operand.vmem [shape: f32[1,64], index: 8, kind: input, shape index: {}]
  %s9 = inlined_call_operand.vmem [shape: f32[2,119,64], index: 9, kind: output, shape index: {}]
  %s10 = sld [smem:[#allocation0]]
  $region46: #{kan_res_wide_x2.9} parent=0
    _
  %s12 = ssub.s32 1, %s10
  %s13 = scalar_select 0, %s12, %s10
  // Predicated region
  $region2: #{kan_res_wide_x2.9} parent=0 // pred_check
    _
  $region3: #{kan_res_wide_x2.9} parent=0 // pred_check_branch
    %15 = sbr.rel (0) target = $region5
  $region4: #{kan_res_wide_x2.9} parent=0 // pred_region
    _
  $region5: #{kan_res_wide_x2.9} parent=0 // pred_fallthru
    _
  // Predicated region
  $region6: #{kan_res_wide_x2.9} parent=0 // pred_check
    _
  $region7: #{kan_res_wide_x2.9} parent=0 // pred_check_branch
    %17 = sbr.rel (0) target = $region9
  $region8: #{kan_res_wide_x2.9} parent=0 // pred_region
    _
  $region9: #{kan_res_wide_x2.9} parent=0 // pred_fallthru
    _
  // Predicated region
  $region10: #{kan_res_wide_x2.9} parent=0 // pred_check
    _
  $region11: #{kan_res_wide_x2.9} parent=0 // pred_check_branch
    %19 = sbr.rel (0) target = $region13
  $region12: #{kan_res_wide_x2.9} parent=0 // pred_region
    _
  $region13: #{kan_res_wide_x2.9} parent=0 // pred_fallthru
    _
  // Predicated region
  $region14: #{kan_res_wide_x2.9} parent=0 // pred_check
    _
  $region15: #{kan_res_wide_x2.9} parent=0 // pred_check_branch
    %21 = sbr.rel (0) target = $region17
  $region16: #{kan_res_wide_x2.9} parent=0 // pred_region
    _
  $region17: #{kan_res_wide_x2.9} parent=0 // pred_fallthru
    _
  // Predicated region
  $region18: #{kan_res_wide_x2.9} parent=0 // pred_check
    _
  $region19: #{kan_res_wide_x2.9} parent=0 // pred_check_branch
    %23 = sbr.rel (0) target = $region21
  $region20: #{kan_res_wide_x2.9} parent=0 // pred_region
    _
  $region21: #{kan_res_wide_x2.9} parent=0 // pred_fallthru
    _
  // Predicated region
  $region22: #{kan_res_wide_x2.9} parent=0 // pred_check
    _
  $region23: #{kan_res_wide_x2.9} parent=0 // pred_check_branch
    %25 = sbr.rel (0) target = $region25
  $region24: #{kan_res_wide_x2.9} parent=0 // pred_region
    _
  $region25: #{kan_res_wide_x2.9} parent=0 // pred_fallthru
    _
  // Predicated region
  $region26: #{kan_res_wide_x2.9} parent=0 // pred_check
    _
  $region27: #{kan_res_wide_x2.9} parent=0 // pred_check_branch
    %27 = sbr.rel (0) target = $region29
  $region28: #{kan_res_wide_x2.9} parent=0 // pred_region
    _
  $region29: #{kan_res_wide_x2.9} parent=0 // pred_fallthru
    _
  // Predicated region
  $region30: #{kan_res_wide_x2.9} parent=0 // pred_check
    _
  $region31: #{kan_res_wide_x2.9} parent=0 // pred_check_branch
    %29 = sbr.rel (0) target = $region33
  $region32: #{kan_res_wide_x2.9} parent=0 // pred_region
    _
  $region33: #{kan_res_wide_x2.9} parent=0 // pred_fallthru
    _
  // Predicated region
  $region34: #{kan_res_wide_x2.9} parent=0 // pred_check
    _
  $region35: #{kan_res_wide_x2.9} parent=0 // pred_check_branch
    %31 = sbr.rel (0) target = $region37
  $region36: #{kan_res_wide_x2.9} parent=0 // pred_region
    _
  $region37: #{kan_res_wide_x2.9} parent=0 // pred_fallthru
    _
  %v33 = vld [vmem:[%s0] sm:$0xf]
  %v34 = vld [vmem:[%s0 + $0x4] sm:$0xf]
  %v35 = vld [vmem:[%s0 + $0x8] sm:$0xf]
  %v36 = vld [vmem:[%s0 + $0xc] sm:$0xf]
  %v37 = vld [vmem:[%s0 + $0x10] sm:$0xf]
  %v38 = vld [vmem:[%s0 + $0x14] sm:$0xf]
  %v39 = vld [vmem:[%s0 + $0x18] sm:$0xf]
  %v40 = vld [vmem:[%s0 + $0x1c] sm:$0xf]
  %v41 = vld [vmem:[%s0 + $0x20] sm:$0xf]
  %v42 = vld [vmem:[%s0 + $0x24] sm:$0xf]
  %v43 = vld [vmem:[%s0 + $0x28] sm:$0xf]
  %v44 = vld [vmem:[%s0 + $0x2c] sm:$0xf]
  %v45 = vld [vmem:[%s0 + $0x30] sm:$0xf]
  %v46 = vld [vmem:[%s0 + $0x34] sm:$0xf]
  %v47 = vld [vmem:[%s0 + $0x38] sm:$0xf]
  %v48 = vld [vmem:[%s0 + $0x3c] sm:$0x1]
  %v49 = vld [vmem:[%s1] sm:$0xf]
  %v50 = vld [vmem:[%s1 + $0x4] sm:$0xf]
  %v51 = vld [vmem:[%s1 + $0x8] sm:$0xf]
  %v52 = vld [vmem:[%s1 + $0xc] sm:$0xf]
  %v53 = vld [vmem:[%s1 + $0x10] sm:$0xf]
  %v54 = vld [vmem:[%s1 + $0x14] sm:$0xf]
  %v55 = vld [vmem:[%s1 + $0x18] sm:$0xf]
  %v56 = vld [vmem:[%s1 + $0x1c] sm:$0xf]
  %v57 = vld [vmem:[%s2] sm:$0x1]
  %v59 = vlaneseq
  %v60 = vshrl.u32 %v59, 7
  %v61 = vsub.s32 0, %v60
  %v62 = vrot.slane %v57, %v61
  %v80 = vunpack.c.l.b16 %v33
  %v81 = vunpack.c.l.b16 %v34
  %v82 = vunpack.c.l.b16 %v35
  %v83 = vunpack.c.l.b16 %v36
  %v84 = vunpack.c.l.b16 %v37
  %v85 = vunpack.c.l.b16 %v38
  %v86 = vunpack.c.l.b16 %v39
  %v87 = vunpack.c.l.b16 %v40
  %v88 = vunpack.c.l.b16 %v41
  %v89 = vunpack.c.l.b16 %v42
  %v90 = vunpack.c.l.b16 %v43
  %v91 = vunpack.c.l.b16 %v44
  %v92 = vunpack.c.l.b16 %v45
  %v93 = vunpack.c.l.b16 %v46
  %v94 = vunpack.c.l.b16 %v47
  %v95 = vunpack.c.l.b16 %v48
  %v96 = vpack.c.b16 %v81, %v80
  %v97 = vpack.c.b16 %v83, %v82
  %v98 = vpack.c.b16 %v85, %v84
  %v99 = vpack.c.b16 %v87, %v86
  %v100 = vpack.c.b16 %v89, %v88
  %v101 = vpack.c.b16 %v91, %v90
  %v102 = vpack.c.b16 %v93, %v92
  %v103 = vpack.c.b16 %v95, %v94
  %v112 = vunpack.c.l.b16 %v49
  %v113 = vunpack.c.l.b16 %v50
  %v114 = vunpack.c.l.b16 %v51
  %v115 = vunpack.c.l.b16 %v52
  %v116 = vunpack.c.l.b16 %v53
  %v117 = vunpack.c.l.b16 %v54
  %v118 = vunpack.c.l.b16 %v55
  %v119 = vunpack.c.l.b16 %v56
  %v120 = vpack.c.b16 %v113, %v112
  %v121 = vpack.c.b16 %v115, %v114
  %v122 = vpack.c.b16 %v117, %v116
  %v123 = vpack.c.b16 %v119, %v118
  %vm128 = vcmask 523264
  %v130 = vsel %vm128, %v96, 0
  %v133 = vsel %vm128, %v97, 0
  %v136 = vsel %vm128, %v98, 0
  %v139 = vsel %vm128, %v99, 0
  %v142 = vsel %vm128, %v100, 0
  %v145 = vsel %vm128, %v101, 0
  %v148 = vsel %vm128, %v102, 0
  %v151 = vsel %vm128, %v103, 0
  %153 = vmatprep.subr.bf16.mxu0 0
  %154 = vmatpush1.bf16.msra.mxu0 %v120
  %155 = vmatprep.subr.bf16.mxu0 0
  %156 = vmatpush1.bf16.msra.mxu0 %v121
  %157 = vmatprep.subr.bf16.mxu0 0
  %158 = vmatpush1.bf16.msra.mxu0 %v122
  %159 = vmatprep.subr.bf16.mxu0 0
  %160 = vmatpush1.bf16.msra.mxu0 %v123
  %161 = vmatprep.subr.bf16.mxu0 0
  %162 = vmatpush1.bf16.msra.mxu0 0
  %163 = vmatprep.subr.bf16.mxu0 0
  %164 = vmatpush1.bf16.msra.mxu0 0
  %165 = vmatprep.subr.bf16.mxu0 0
  %166 = vmatpush1.bf16.msra.mxu0 0
  %167 = vmatprep.subr.bf16.mxu0 0
  %168 = vmatpush1.bf16.msra.mxu0 0
  %169 = vmatprep.subr.bf16.mxu0 0
  %170 = vmatpush1.bf16.msra.mxu0 0
  %171 = vmatprep.subr.bf16.mxu0 0
  %172 = vmatpush1.bf16.msra.mxu0 0
  %173 = vmatprep.subr.bf16.mxu0 0
  %174 = vmatpush1.bf16.msra.mxu0 0
  %175 = vmatprep.subr.bf16.mxu0 0
  %176 = vmatpush1.bf16.msra.mxu0 0
  %177 = vmatprep.subr.bf16.mxu0 0
  %178 = vmatpush1.bf16.msra.mxu0 0
  %179 = vmatprep.subr.bf16.mxu0 0
  %180 = vmatpush1.bf16.msra.mxu0 0
  %181 = vmatprep.subr.bf16.mxu0 0
  %182 = vmatpush1.bf16.msra.mxu0 0
  %183 = vmatprep.subr.bf16.mxu0 0
  %184 = vmatpush1.bf16.msra.mxu0 0
  %185 = vmatprep.mubr.bf16.mxu0 0
  %186 = vmatmul.mubr.bf16.gmra.mrb[0].mxu0 %v130
  %v187 = vpop.f32.mrb[0].mxu0
  %v188 = vadd.f32 %v62, %v187
  %v189 = vpop.f32.mrb[0].mxu0
  %v190 = vpop.f32.mrb[0].mxu0
  %v191 = vadd.f32 %v62, %v190
  %v192 = vpop.f32.mrb[0].mxu0
  %193 = vmatprep.mubr.bf16.mxu0 0
  %194 = vmatmul.mubr.bf16.gmra.mrb[0].mxu0 %v133
  %v195 = vpop.f32.mrb[0].mxu0
  %v196 = vadd.f32 %v62, %v195
  %v197 = vpop.f32.mrb[0].mxu0
  %v198 = vpop.f32.mrb[0].mxu0
  %v199 = vadd.f32 %v62, %v198
  %v200 = vpop.f32.mrb[0].mxu0
  %201 = vmatprep.mubr.bf16.mxu0 0
  %202 = vmatmul.mubr.bf16.gmra.mrb[0].mxu0 %v136
  %v203 = vpop.f32.mrb[0].mxu0
  %v204 = vadd.f32 %v62, %v203
  %v205 = vpop.f32.mrb[0].mxu0
  %v206 = vpop.f32.mrb[0].mxu0
  %v207 = vadd.f32 %v62, %v206
  %v208 = vpop.f32.mrb[0].mxu0
  %209 = vmatprep.mubr.bf16.mxu0 0
  %210 = vmatmul.mubr.bf16.gmra.mrb[0].mxu0 %v139
  %v211 = vpop.f32.mrb[0].mxu0
  %v212 = vadd.f32 %v62, %v211
  %v213 = vpop.f32.mrb[0].mxu0
  %v214 = vpop.f32.mrb[0].mxu0
  %v215 = vadd.f32 %v62, %v214
  %v216 = vpop.f32.mrb[0].mxu0
  %217 = vmatprep.mubr.bf16.mxu0 0
  %218 = vmatmul.mubr.bf16.gmra.mrb[0].mxu0 %v142
  %v219 = vpop.f32.mrb[0].mxu0
  %v220 = vadd.f32 %v62, %v219
  %v221 = vpop.f32.mrb[0].mxu0
  %v222 = vpop.f32.mrb[0].mxu0
  %v223 = vadd.f32 %v62, %v222
  %v224 = vpop.f32.mrb[0].mxu0
  %225 = vmatprep.mubr.bf16.mxu0 0
  %226 = vmatmul.mubr.bf16.gmra.mrb[0].mxu0 %v145
  %v227 = vpop.f32.mrb[0].mxu0
  %v228 = vadd.f32 %v62, %v227
  %v229 = vpop.f32.mrb[0].mxu0
  %v230 = vpop.f32.mrb[0].mxu0
  %v231 = vadd.f32 %v62, %v230
  %v232 = vpop.f32.mrb[0].mxu0
  %233 = vmatprep.mubr.bf16.mxu0 0
  %234 = vmatmul.mubr.bf16.gmra.mrb[0].mxu0 %v148
  %v235 = vpop.f32.mrb[0].mxu0
  %v236 = vadd.f32 %v62, %v235
  %v237 = vpop.f32.mrb[0].mxu0
  %v238 = vpop.f32.mrb[0].mxu0
  %v239 = vadd.f32 %v62, %v238
  %v240 = vpop.f32.mrb[0].mxu0
  %241 = vmatprep.mubr.bf16.mxu0 0
  %242 = vmatmul.mubr.bf16.gmra.mrb[0].mxu0 %v151
  %v243 = vpop.f32.mrb[0].mxu0
  %v244 = vadd.f32 %v62, %v243
  %v245 = vpop.f32.mrb[0].mxu0
  %v246 = vpop.f32.mrb[0].mxu0
  %v247 = vadd.f32 %v62, %v246
  %v248 = vpop.f32.mrb[0].mxu0
  %249 = vdwg.mxu0
  %250 = vst.msk [vmem:[#allocation2] sm:$0xff] %vm128, %v188
  %251 = vst.msk [vmem:[#allocation2 + $0x8] sm:$0xff] %vm128, %v191
  %252 = vst.msk [vmem:[#allocation2 + $0x10] sm:$0xff] %vm128, %v196
  %253 = vst.msk [vmem:[#allocation2 + $0x18] sm:$0xff] %vm128, %v199
  %254 = vst.msk [vmem:[#allocation2 + $0x20] sm:$0xff] %vm128, %v204
  %255 = vst.msk [vmem:[#allocation2 + $0x28] sm:$0xff] %vm128, %v207
  %256 = vst.msk [vmem:[#allocation2 + $0x30] sm:$0xff] %vm128, %v212
  %257 = vst.msk [vmem:[#allocation2 + $0x38] sm:$0xff] %vm128, %v215
  %258 = vst.msk [vmem:[#allocation2 + $0x40] sm:$0xff] %vm128, %v220
  %259 = vst.msk [vmem:[#allocation2 + $0x48] sm:$0xff] %vm128, %v223
  %260 = vst.msk [vmem:[#allocation2 + $0x50] sm:$0xff] %vm128, %v228
  %261 = vst.msk [vmem:[#allocation2 + $0x58] sm:$0xff] %vm128, %v231
  %262 = vst.msk [vmem:[#allocation2 + $0x60] sm:$0xff] %vm128, %v236
  %263 = vst.msk [vmem:[#allocation2 + $0x68] sm:$0xff] %vm128, %v239
  %264 = vst.msk [vmem:[#allocation2 + $0x70] sm:$0xff] %vm128, %v244
  %vm265 = vcmask 516096
  %266 = vst.msk [vmem:[#allocation2 + $0x78] sm:$0x1] %vm265, %v247
  %v267 = vsel %vm128, %v188, 0.0
  %v268 = vsel %vm128, %v191, 0.0
  %v269 = vadd.f32 %v267, %v268
  %v270 = vsel %vm128, %v196, 0.0
  %v271 = vadd.f32 %v269, %v270
  %v272 = vsel %vm128, %v199, 0.0
  %v273 = vadd.f32 %v271, %v272
  %v274 = vsel %vm128, %v204, 0.0
  %v275 = vadd.f32 %v273, %v274
  %v276 = vsel %vm128, %v207, 0.0
  %v277 = vadd.f32 %v275, %v276
  %v278 = vsel %vm128, %v212, 0.0
  %v279 = vadd.f32 %v277, %v278
  %v280 = vsel %vm128, %v215, 0.0
  %v281 = vadd.f32 %v279, %v280
  %v282 = vsel %vm128, %v220, 0.0
  %v283 = vadd.f32 %v281, %v282
  %v284 = vsel %vm128, %v223, 0.0
  %v285 = vadd.f32 %v283, %v284
  %v286 = vsel %vm128, %v228, 0.0
  %v287 = vadd.f32 %v285, %v286
  %v288 = vsel %vm128, %v231, 0.0
  %v289 = vadd.f32 %v287, %v288
  %v290 = vsel %vm128, %v236, 0.0
  %v291 = vadd.f32 %v289, %v290
  %v292 = vsel %vm128, %v239, 0.0
  %v293 = vadd.f32 %v291, %v292
  %v294 = vsel %vm128, %v244, 0.0
  %v295 = vadd.f32 %v293, %v294
  %v296 = vsel %vm265, %v247, 0.0
  %v297 = vadd.f32 %v295, %v296
  %v298 = vrot.slane %v297, 4
  %v299 = vadd.f32 %v297, %v298
  %v300 = vrot.slane %v299, 2
  %v301 = vadd.f32 %v299, %v300
  %v302 = vrot.slane %v301, 1
  %v303 = vadd.f32 %v301, %v302
  %v304 = vadd.f32 %v303, 0.0
  %v305 = vmul.f32 %v188, %v188
  %v306 = vmul.f32 %v191, %v191
  %v307 = vmul.f32 %v196, %v196
  %v308 = vmul.f32 %v199, %v199
  %v309 = vmul.f32 %v204, %v204
  %v310 = vmul.f32 %v207, %v207
  %v311 = vmul.f32 %v212, %v212
  %v312 = vmul.f32 %v215, %v215
  %v313 = vmul.f32 %v220, %v220
  %v314 = vmul.f32 %v223, %v223
  %v315 = vmul.f32 %v228, %v228
  %v316 = vmul.f32 %v231, %v231
  %v317 = vmul.f32 %v236, %v236
  %v318 = vmul.f32 %v239, %v239
  %v319 = vmul.f32 %v244, %v244
  %v320 = vmul.f32 %v247, %v247
  %v321 = vsel %vm128, %v305, 0.0
  %v322 = vsel %vm128, %v306, 0.0
  %v323 = vadd.f32 %v321, %v322
  %v324 = vsel %vm128, %v307, 0.0
  %v325 = vadd.f32 %v323, %v324
  %v326 = vsel %vm128, %v308, 0.0
  %v327 = vadd.f32 %v325, %v326
  %v328 = vsel %vm128, %v309, 0.0
  %v329 = vadd.f32 %v327, %v328
  %v330 = vsel %vm128, %v310, 0.0
  %v331 = vadd.f32 %v329, %v330
  %v332 = vsel %vm128, %v311, 0.0
  %v333 = vadd.f32 %v331, %v332
  %v334 = vsel %vm128, %v312, 0.0
  %v335 = vadd.f32 %v333, %v334
  %v336 = vsel %vm128, %v313, 0.0
  %v337 = vadd.f32 %v335, %v336
  %v338 = vsel %vm128, %v314, 0.0
  %v339 = vadd.f32 %v337, %v338
  %v340 = vsel %vm128, %v315, 0.0
  %v341 = vadd.f32 %v339, %v340
  %v342 = vsel %vm128, %v316, 0.0
  %v343 = vadd.f32 %v341, %v342
  %v344 = vsel %vm128, %v317, 0.0
  %v345 = vadd.f32 %v343, %v344
  %v346 = vsel %vm128, %v318, 0.0
  %v347 = vadd.f32 %v345, %v346
  %v348 = vsel %vm128, %v319, 0.0
  %v349 = vadd.f32 %v347, %v348
  %v350 = vsel %vm265, %v320, 0.0
  %v351 = vadd.f32 %v349, %v350
  %v352 = vrot.slane %v351, 4
  %v353 = vadd.f32 %v351, %v352
  %v354 = vrot.slane %v353, 2
  %v355 = vadd.f32 %v353, %v354
  %v356 = vrot.slane %v355, 1
  %v357 = vadd.f32 %v355, %v356
  %v358 = vadd.f32 %v357, 0.0
  %s359 = scalar_lea.vmem %s0, 64
  %v360 = vld [vmem:[%s359] sm:$0xf]
  %v361 = vld [vmem:[%s359 + $0x4] sm:$0xf]
  %v362 = vld [vmem:[%s359 + $0x8] sm:$0xf]
  %v363 = vld [vmem:[%s359 + $0xc] sm:$0xf]
  %v364 = vld [vmem:[%s359 + $0x10] sm:$0xf]
  %v365 = vld [vmem:[%s359 + $0x14] sm:$0xf]
  %v366 = vld [vmem:[%s359 + $0x18] sm:$0xf]
  %v367 = vld [vmem:[%s359 + $0x1c] sm:$0xf]
  %v368 = vld [vmem:[%s359 + $0x20] sm:$0xf]
  %v369 = vld [vmem:[%s359 + $0x24] sm:$0xf]
  %v370 = vld [vmem:[%s359 + $0x28] sm:$0xf]
  %v371 = vld [vmem:[%s359 + $0x2c] sm:$0xf]
  %v372 = vld [vmem:[%s359 + $0x30] sm:$0xf]
  %v373 = vld [vmem:[%s359 + $0x34] sm:$0xf]
  %v374 = vld [vmem:[%s359 + $0x38] sm:$0xf]
  %v375 = vld [vmem:[%s359 + $0x3c] sm:$0x1]
  %v376 = vld [vmem:[%s1] sm:$0xf]
  %v377 = vld [vmem:[%s1 + $0x4] sm:$0xf]
  %v378 = vld [vmem:[%s1 + $0x8] sm:$0xf]
  %v379 = vld [vmem:[%s1 + $0xc] sm:$0xf]
  %v380 = vld [vmem:[%s1 + $0x10] sm:$0xf]
  %v381 = vld [vmem:[%s1 + $0x14] sm:$0xf]
  %v382 = vld [vmem:[%s1 + $0x18] sm:$0xf]
  %v383 = vld [vmem:[%s1 + $0x1c] sm:$0xf]
  %v384 = vld [vmem:[%s2] sm:$0x1]
  %v386 = vlaneseq
  %v387 = vshrl.u32 %v386, 7
  %v388 = vsub.s32 0, %v387
  %v389 = vrot.slane %v384, %v388
  %v407 = vunpack.c.l.b16 %v360
  %v408 = vunpack.c.l.b16 %v361
  %v409 = vunpack.c.l.b16 %v362
  %v410 = vunpack.c.l.b16 %v363
  %v411 = vunpack.c.l.b16 %v364
  %v412 = vunpack.c.l.b16 %v365
  %v413 = vunpack.c.l.b16 %v366
  %v414 = vunpack.c.l.b16 %v367
  %v415 = vunpack.c.l.b16 %v368
  %v416 = vunpack.c.l.b16 %v369
  %v417 = vunpack.c.l.b16 %v370
  %v418 = vunpack.c.l.b16 %v371
  %v419 = vunpack.c.l.b16 %v372
  %v420 = vunpack.c.l.b16 %v373
  %v421 = vunpack.c.l.b16 %v374
  %v422 = vunpack.c.l.b16 %v375
  %v423 = vpack.c.b16 %v408, %v407
  %v424 = vpack.c.b16 %v410, %v409
  %v425 = vpack.c.b16 %v412, %v411
  %v426 = vpack.c.b16 %v414, %v413
  %v427 = vpack.c.b16 %v416, %v415
  %v428 = vpack.c.b16 %v418, %v417
  %v429 = vpack.c.b16 %v420, %v419
  %v430 = vpack.c.b16 %v422, %v421
  %v439 = vunpack.c.l.b16 %v376
  %v440 = vunpack.c.l.b16 %v377
  %v441 = vunpack.c.l.b16 %v378
  %v442 = vunpack.c.l.b16 %v379
  %v443 = vunpack.c.l.b16 %v380
  %v444 = vunpack.c.l.b16 %v381
  %v445 = vunpack.c.l.b16 %v382
  %v446 = vunpack.c.l.b16 %v383
  %v447 = vpack.c.b16 %v440, %v439
  %v448 = vpack.c.b16 %v442, %v441
  %v449 = vpack.c.b16 %v444, %v443
  %v450 = vpack.c.b16 %v446, %v445
  %v456 = vsel %vm128, %v423, 0
  %v459 = vsel %vm128, %v424, 0
  %v462 = vsel %vm128, %v425, 0
  %v465 = vsel %vm128, %v426, 0
  %v468 = vsel %vm128, %v427, 0
  %v471 = vsel %vm128, %v428, 0
  %v474 = vsel %vm128, %v429, 0
  %v477 = vsel %vm128, %v430, 0
  %479 = vmatprep.subr.bf16.mxu0 0
  %480 = vmatpush1.bf16.msra.mxu0 %v447
  %481 = vmatprep.subr.bf16.mxu0 0
  %482 = vmatpush1.bf16.msra.mxu0 %v448
  %483 = vmatprep.subr.bf16.mxu0 0
  %484 = vmatpush1.bf16.msra.mxu0 %v449
  %485 = vmatprep.subr.bf16.mxu0 0
  %486 = vmatpush1.bf16.msra.mxu0 %v450
  %487 = vmatprep.subr.bf16.mxu0 0
  %488 = vmatpush1.bf16.msra.mxu0 0
  %489 = vmatprep.subr.bf16.mxu0 0
  %490 = vmatpush1.bf16.msra.mxu0 0
  %491 = vmatprep.subr.bf16.mxu0 0
  %492 = vmatpush1.bf16.msra.mxu0 0
  %493 = vmatprep.subr.bf16.mxu0 0
  %494 = vmatpush1.bf16.msra.mxu0 0
  %495 = vmatprep.subr.bf16.mxu0 0
  %496 = vmatpush1.bf16.msra.mxu0 0
  %497 = vmatprep.subr.bf16.mxu0 0
  %498 = vmatpush1.bf16.msra.mxu0 0
  %499 = vmatprep.subr.bf16.mxu0 0
  %500 = vmatpush1.bf16.msra.mxu0 0
  %501 = vmatprep.subr.bf16.mxu0 0
  %502 = vmatpush1.bf16.msra.mxu0 0
  %503 = vmatprep.subr.bf16.mxu0 0
  %504 = vmatpush1.bf16.msra.mxu0 0
  %505 = vmatprep.subr.bf16.mxu0 0
  %506 = vmatpush1.bf16.msra.mxu0 0
  %507 = vmatprep.subr.bf16.mxu0 0
  %508 = vmatpush1.bf16.msra.mxu0 0
  %509 = vmatprep.subr.bf16.mxu0 0
  %510 = vmatpush1.bf16.msra.mxu0 0
  %511 = vmatprep.mubr.bf16.mxu0 0
  %512 = vmatmul.mubr.bf16.gmra.mrb[0].mxu0 %v456
  %v513 = vpop.f32.mrb[0].mxu0
  %v514 = vadd.f32 %v389, %v513
  %v515 = vpop.f32.mrb[0].mxu0
  %v516 = vpop.f32.mrb[0].mxu0
  %v517 = vadd.f32 %v389, %v516
  %v518 = vpop.f32.mrb[0].mxu0
  %519 = vmatprep.mubr.bf16.mxu0 0
  %520 = vmatmul.mubr.bf16.gmra.mrb[0].mxu0 %v459
  %v521 = vpop.f32.mrb[0].mxu0
  %v522 = vadd.f32 %v389, %v521
  %v523 = vpop.f32.mrb[0].mxu0
  %v524 = vpop.f32.mrb[0].mxu0
  %v525 = vadd.f32 %v389, %v524
  %v526 = vpop.f32.mrb[0].mxu0
  %527 = vmatprep.mubr.bf16.mxu0 0
  %528 = vmatmul.mubr.bf16.gmra.mrb[0].mxu0 %v462
  %v529 = vpop.f32.mrb[0].mxu0
  %v530 = vadd.f32 %v389, %v529
  %v531 = vpop.f32.mrb[0].mxu0
  %v532 = vpop.f32.mrb[0].mxu0
  %v533 = vadd.f32 %v389, %v532
  %v534 = vpop.f32.mrb[0].mxu0
  %535 = vmatprep.mubr.bf16.mxu0 0
  %536 = vmatmul.mubr.bf16.gmra.mrb[0].mxu0 %v465
  %v537 = vpop.f32.mrb[0].mxu0
  %v538 = vadd.f32 %v389, %v537
  %v539 = vpop.f32.mrb[0].mxu0
  %v540 = vpop.f32.mrb[0].mxu0
  %v541 = vadd.f32 %v389, %v540
  %v542 = vpop.f32.mrb[0].mxu0
  %543 = vmatprep.mubr.bf16.mxu0 0
  %544 = vmatmul.mubr.bf16.gmra.mrb[0].mxu0 %v468
  %v545 = vpop.f32.mrb[0].mxu0
  %v546 = vadd.f32 %v389, %v545
  %v547 = vpop.f32.mrb[0].mxu0
  %v548 = vpop.f32.mrb[0].mxu0
  %v549 = vadd.f32 %v389, %v548
  %v550 = vpop.f32.mrb[0].mxu0
  %551 = vmatprep.mubr.bf16.mxu0 0
  %552 = vmatmul.mubr.bf16.gmra.mrb[0].mxu0 %v471
  %v553 = vpop.f32.mrb[0].mxu0
  %v554 = vadd.f32 %v389, %v553
  %v555 = vpop.f32.mrb[0].mxu0
  %v556 = vpop.f32.mrb[0].mxu0
  %v557 = vadd.f32 %v389, %v556
  %v558 = vpop.f32.mrb[0].mxu0
  %559 = vmatprep.mubr.bf16.mxu0 0
  %560 = vmatmul.mubr.bf16.gmra.mrb[0].mxu0 %v474
  %v561 = vpop.f32.mrb[0].mxu0
  %v562 = vadd.f32 %v389, %v561
  %v563 = vpop.f32.mrb[0].mxu0
  %v564 = vpop.f32.mrb[0].mxu0
  %v565 = vadd.f32 %v389, %v564
  %v566 = vpop.f32.mrb[0].mxu0
  %567 = vmatprep.mubr.bf16.mxu0 0
  %568 = vmatmul.mubr.bf16.gmra.mrb[0].mxu0 %v477
  %v569 = vpop.f32.mrb[0].mxu0
  %v570 = vadd.f32 %v389, %v569
  %v571 = vpop.f32.mrb[0].mxu0
  %v572 = vpop.f32.mrb[0].mxu0
  %v573 = vadd.f32 %v389, %v572
  %v574 = vpop.f32.mrb[0].mxu0
  %575 = vdwg.mxu0
  %s576 = scalar_lea.vmem [#allocation2], 128
  %577 = vst.msk [vmem:[%s576] sm:$0xff] %vm128, %v514
  %578 = vst.msk [vmem:[%s576 + $0x8] sm:$0xff] %vm128, %v517
  %579 = vst.msk [vmem:[%s576 + $0x10] sm:$0xff] %vm128, %v522
  %580 = vst.msk [vmem:[%s576 + $0x18] sm:$0xff] %vm128, %v525
  %581 = vst.msk [vmem:[%s576 + $0x20] sm:$0xff] %vm128, %v530
  %582 = vst.msk [vmem:[%s576 + $0x28] sm:$0xff] %vm128, %v533
  %583 = vst.msk [vmem:[%s576 + $0x30] sm:$0xff] %vm128, %v538
  %584 = vst.msk [vmem:[%s576 + $0x38] sm:$0xff] %vm128, %v541
  %585 = vst.msk [vmem:[%s576 + $0x40] sm:$0xff] %vm128, %v546
  %586 = vst.msk [vmem:[%s576 + $0x48] sm:$0xff] %vm128, %v549
  %587 = vst.msk [vmem:[%s576 + $0x50] sm:$0xff] %vm128, %v554
  %588 = vst.msk [vmem:[%s576 + $0x58] sm:$0xff] %vm128, %v557
  %589 = vst.msk [vmem:[%s576 + $0x60] sm:$0xff] %vm128, %v562
  %590 = vst.msk [vmem:[%s576 + $0x68] sm:$0xff] %vm128, %v565
  %591 = vst.msk [vmem:[%s576 + $0x70] sm:$0xff] %vm128, %v570
  %592 = vst.msk [vmem:[%s576 + $0x78] sm:$0x1] %vm265, %v573
  %v593 = vsel %vm128, %v514, 0.0
  %v594 = vsel %vm128, %v517, 0.0
  %v595 = vadd.f32 %v593, %v594
  %v596 = vsel %vm128, %v522, 0.0
  %v597 = vadd.f32 %v595, %v596
  %v598 = vsel %vm128, %v525, 0.0
  %v599 = vadd.f32 %v597, %v598
  %v600 = vsel %vm128, %v530, 0.0
  %v601 = vadd.f32 %v599, %v600
  %v602 = vsel %vm128, %v533, 0.0
  %v603 = vadd.f32 %v601, %v602
  %v604 = vsel %vm128, %v538, 0.0
  %v605 = vadd.f32 %v603, %v604
  %v606 = vsel %vm128, %v541, 0.0
  %v607 = vadd.f32 %v605, %v606
  %v608 = vsel %vm128, %v546, 0.0
  %v609 = vadd.f32 %v607, %v608
  %v610 = vsel %vm128, %v549, 0.0
  %v611 = vadd.f32 %v609, %v610
  %v612 = vsel %vm128, %v554, 0.0
  %v613 = vadd.f32 %v611, %v612
  %v614 = vsel %vm128, %v557, 0.0
  %v615 = vadd.f32 %v613, %v614
  %v616 = vsel %vm128, %v562, 0.0
  %v617 = vadd.f32 %v615, %v616
  %v618 = vsel %vm128, %v565, 0.0
  %v619 = vadd.f32 %v617, %v618
  %v620 = vsel %vm128, %v570, 0.0
  %v621 = vadd.f32 %v619, %v620
  %v622 = vsel %vm265, %v573, 0.0
  %v623 = vadd.f32 %v621, %v622
  %v624 = vrot.slane %v623, 4
  %v625 = vadd.f32 %v623, %v624
  %v626 = vrot.slane %v625, 2
  %v627 = vadd.f32 %v625, %v626
  %v628 = vrot.slane %v627, 1
  %v629 = vadd.f32 %v627, %v628
  %v630 = vadd.f32 %v304, %v629
  %v631 = vmul.f32 %v514, %v514
  %v632 = vmul.f32 %v517, %v517
  %v633 = vmul.f32 %v522, %v522
  %v634 = vmul.f32 %v525, %v525
  %v635 = vmul.f32 %v530, %v530
  %v636 = vmul.f32 %v533, %v533
  %v637 = vmul.f32 %v538, %v538
  %v638 = vmul.f32 %v541, %v541
  %v639 = vmul.f32 %v546, %v546
  %v640 = vmul.f32 %v549, %v549
  %v641 = vmul.f32 %v554, %v554
  %v642 = vmul.f32 %v557, %v557
  %v643 = vmul.f32 %v562, %v562
  %v644 = vmul.f32 %v565, %v565
  %v645 = vmul.f32 %v570, %v570
  %v646 = vmul.f32 %v573, %v573
  %v647 = vsel %vm128, %v631, 0.0
  %v648 = vsel %vm128, %v632, 0.0
  %v649 = vadd.f32 %v647, %v648
  %v650 = vsel %vm128, %v633, 0.0
  %v651 = vadd.f32 %v649, %v650
  %v652 = vsel %vm128, %v634, 0.0
  %v653 = vadd.f32 %v651, %v652
  %v654 = vsel %vm128, %v635, 0.0
  %v655 = vadd.f32 %v653, %v654
  %v656 = vsel %vm128, %v636, 0.0
  %v657 = vadd.f32 %v655, %v656
  %v658 = vsel %vm128, %v637, 0.0
  %v659 = vadd.f32 %v657, %v658
  %v660 = vsel %vm128, %v638, 0.0
  %v661 = vadd.f32 %v659, %v660
  %v662 = vsel %vm128, %v639, 0.0
  %v663 = vadd.f32 %v661, %v662
  %v664 = vsel %vm128, %v640, 0.0
  %v665 = vadd.f32 %v663, %v664
  %v666 = vsel %vm128, %v641, 0.0
  %v667 = vadd.f32 %v665, %v666
  %v668 = vsel %vm128, %v642, 0.0
  %v669 = vadd.f32 %v667, %v668
  %v670 = vsel %vm128, %v643, 0.0
  %v671 = vadd.f32 %v669, %v670
  %v672 = vsel %vm128, %v644, 0.0
  %v673 = vadd.f32 %v671, %v672
  %v674 = vsel %vm128, %v645, 0.0
  %v675 = vadd.f32 %v673, %v674
  %v676 = vsel %vm265, %v646, 0.0
  %v677 = vadd.f32 %v675, %v676
  %v678 = vrot.slane %v677, 4
  %v679 = vadd.f32 %v677, %v678
  %v680 = vrot.slane %v679, 2
  %v681 = vadd.f32 %v679, %v680
  %v682 = vrot.slane %v681, 1
  %v683 = vadd.f32 %v681, %v682
  %v684 = vadd.f32 %v358, %v683
  %v685 = vld [vmem:[%s3] sm:$0x1]
  %v686 = vld [vmem:[%s4] sm:$0x1]
  %v687 = vrcp.pop 242.0
  %v688 = vmul.f32 %v630, %v687
  %v689 = vmul.f32 %v684, %v687
  %v690 = vmul.f32 %v688, %v688
  %v691 = vsub.f32 %v689, %v690
  %v692 = vmax.f32 %v691, 0.0
  %v693 = vadd.f32 %v692, 1e-05
  %v694 = vrsqrt.pop %v693
  %v695 = vmul.f32 %v685, %v694
  %v696 = vmul.f32 %v688, %v695
  %v697 = vsub.f32 %v686, %v696
  %v698 = vld [vmem:[#allocation2] sm:$0xff]
  %v699 = vld [vmem:[#allocation2 + $0x8] sm:$0xff]
  %v700 = vld [vmem:[#allocation2 + $0x10] sm:$0xff]
  %v701 = vld [vmem:[#allocation2 + $0x18] sm:$0xff]
  %v702 = vld [vmem:[#allocation2 + $0x20] sm:$0xff]
  %v703 = vld [vmem:[#allocation2 + $0x28] sm:$0xff]
  %v704 = vld [vmem:[#allocation2 + $0x30] sm:$0xff]
  %v705 = vld [vmem:[#allocation2 + $0x38] sm:$0xff]
  %v706 = vld [vmem:[#allocation2 + $0x40] sm:$0xff]
  %v707 = vld [vmem:[#allocation2 + $0x48] sm:$0xff]
  %v708 = vld [vmem:[#allocation2 + $0x50] sm:$0xff]
  %v709 = vld [vmem:[#allocation2 + $0x58] sm:$0xff]
  %v710 = vld [vmem:[#allocation2 + $0x60] sm:$0xff]
  %v711 = vld [vmem:[#allocation2 + $0x68] sm:$0xff]
  %v712 = vld [vmem:[#allocation2 + $0x70] sm:$0xff]
  %v713 = vld [vmem:[#allocation2 + $0x78] sm:$0x1]
  %v715 = vlaneseq
  %v716 = vshrl.u32 %v715, 7
  %v717 = vsub.s32 0, %v716
  %v718 = vrot.slane %v695, %v717
  %v720 = vmul.f32 %v698, %v718
  %v721 = vmul.f32 %v699, %v718
  %v722 = vmul.f32 %v700, %v718
  %v723 = vmul.f32 %v701, %v718
  %v724 = vmul.f32 %v702, %v718
  %v725 = vmul.f32 %v703, %v718
  %v726 = vmul.f32 %v704, %v718
  %v727 = vmul.f32 %v705, %v718
  %v728 = vmul.f32 %v706, %v718
  %v729 = vmul.f32 %v707, %v718
  %v730 = vmul.f32 %v708, %v718
  %v731 = vmul.f32 %v709, %v718
  %v732 = vmul.f32 %v710, %v718
  %v733 = vmul.f32 %v711, %v718
  %v734 = vmul.f32 %v712, %v718
  %v735 = vmul.f32 %v713, %v718
  %v737 = vlaneseq
  %v738 = vshrl.u32 %v737, 7
  %v739 = vsub.s32 0, %v738
  %v740 = vrot.slane %v697, %v739
  %v742 = vadd.f32 %v720, %v740
  %v743 = vadd.f32 %v721, %v740
  %v744 = vadd.f32 %v722, %v740
  %v745 = vadd.f32 %v723, %v740
  %v746 = vadd.f32 %v724, %v740
  %v747 = vadd.f32 %v725, %v740
  %v748 = vadd.f32 %v726, %v740
  %v749 = vadd.f32 %v727, %v740
  %v750 = vadd.f32 %v728, %v740
  %v751 = vadd.f32 %v729, %v740
  %v752 = vadd.f32 %v730, %v740
  %v753 = vadd.f32 %v731, %v740
  %v754 = vadd.f32 %v732, %v740
  %v755 = vadd.f32 %v733, %v740
  %v756 = vadd.f32 %v734, %v740
  %v757 = vadd.f32 %v735, %v740
  %v758 = vmax.f32 %v742, 0.0
  %v759 = vmax.f32 %v743, 0.0
  %v760 = vmax.f32 %v744, 0.0
  %v761 = vmax.f32 %v745, 0.0
  %v762 = vmax.f32 %v746, 0.0
  %v763 = vmax.f32 %v747, 0.0
  %v764 = vmax.f32 %v748, 0.0
  %v765 = vmax.f32 %v749, 0.0
  %v766 = vmax.f32 %v750, 0.0
  %v767 = vmax.f32 %v751, 0.0
  %v768 = vmax.f32 %v752, 0.0
  %v769 = vmax.f32 %v753, 0.0
  %v770 = vmax.f32 %v754, 0.0
  %v771 = vmax.f32 %v755, 0.0
  %v772 = vmax.f32 %v756, 0.0
  %v773 = vmax.f32 %v757, 0.0
  %v774 = vpack.c.bf16 %v759, %v758
  %v775 = vpack.c.bf16 %v761, %v760
  %v776 = vpack.c.bf16 %v763, %v762
  %v777 = vpack.c.bf16 %v765, %v764
  %v778 = vpack.c.bf16 %v767, %v766
  %v779 = vpack.c.bf16 %v769, %v768
  %v780 = vpack.c.bf16 %v771, %v770
  %v781 = vpack.c.bf16 %v772, %v772
  %v790 = vunpack.c.l.b16 %v774
  %v791 = vunpack.c.h.b16 %v774
  %v792 = vunpack.c.l.b16 %v775
  %v793 = vunpack.c.h.b16 %v775
  %v794 = vunpack.c.l.b16 %v776
  %v795 = vunpack.c.h.b16 %v776
  %v796 = vunpack.c.l.b16 %v777
  %v797 = vunpack.c.h.b16 %v777
  %v798 = vunpack.c.l.b16 %v778
  %v799 = vunpack.c.h.b16 %v778
  %v800 = vunpack.c.l.b16 %v779
  %v801 = vunpack.c.h.b16 %v779
  %v802 = vunpack.c.l.b16 %v780
  %v803 = vunpack.c.h.b16 %v780
  %v804 = vunpack.c.l.b16 %v781
  %v805 = vpack.c.b16 %v790, %v790
  %v806 = vpack.c.b16 %v791, %v791
  %v807 = vpack.c.b16 %v792, %v792
  %v808 = vpack.c.b16 %v793, %v793
  %v809 = vpack.c.b16 %v794, %v794
  %v810 = vpack.c.b16 %v795, %v795
  %v811 = vpack.c.b16 %v796, %v796
  %v812 = vpack.c.b16 %v797, %v797
  %v813 = vpack.c.b16 %v798, %v798
  %v814 = vpack.c.b16 %v799, %v799
  %v815 = vpack.c.b16 %v800, %v800
  %v816 = vpack.c.b16 %v801, %v801
  %v817 = vpack.c.b16 %v802, %v802
  %v818 = vpack.c.b16 %v803, %v803
  %v819 = vpack.c.b16 %v804, %v804
  %vm835 = vcmask 519168
  %836 = vst.msk [vmem:[#allocation3] sm:$0xf] %vm835, %v805
  %837 = vst.msk [vmem:[#allocation3 + $0x8] sm:$0xf] %vm835, %v806
  %838 = vst.msk [vmem:[#allocation3 + $0x10] sm:$0xf] %vm835, %v807
  %839 = vst.msk [vmem:[#allocation3 + $0x18] sm:$0xf] %vm835, %v808
  %840 = vst.msk [vmem:[#allocation3 + $0x20] sm:$0xf] %vm835, %v809
  %841 = vst.msk [vmem:[#allocation3 + $0x28] sm:$0xf] %vm835, %v810
  %842 = vst.msk [vmem:[#allocation3 + $0x30] sm:$0xf] %vm835, %v811
  %843 = vst.msk [vmem:[#allocation3 + $0x38] sm:$0xf] %vm835, %v812
  %844 = vst.msk [vmem:[#allocation3 + $0x40] sm:$0xf] %vm835, %v813
  %845 = vst.msk [vmem:[#allocation3 + $0x48] sm:$0xf] %vm835, %v814
  %846 = vst.msk [vmem:[#allocation3 + $0x50] sm:$0xf] %vm835, %v815
  %847 = vst.msk [vmem:[#allocation3 + $0x58] sm:$0xf] %vm835, %v816
  %848 = vst.msk [vmem:[#allocation3 + $0x60] sm:$0xf] %vm835, %v817
  %849 = vst.msk [vmem:[#allocation3 + $0x68] sm:$0xf] %vm835, %v818
  %vm850 = vcmask 519168
  %vm851 = vsmask.f32 3328
  %vm852 = vmand %vm850, %vm851
  %v853 = vld [vmem:[#allocation3 + $0x70] sm:$0xf]
  %v854 = vsel %vm852, %v819, %v853
  %855 = vst [vmem:[#allocation3 + $0x70] sm:$0xf] %v854
  %vm856 = vsmask.f32 7440
  %vm857 = vmor %vm851, %vm856
  %v859 = vshrl.u32 %v805, 16
  %v861 = vrot.slane %v859, 4
  %v862 = vshll.u32 %v805, 16
  %v864 = vrot.slane %v862, 5
  %v865 = vor.u32 %v861, %v864
  %v866 = vrot.slane %v865, 4
  %v868 = vshll.u32 %v806, 16
  %v870 = vrot.slane %v868, 5
  %v871 = vsel %vm857, %v866, %v870
  %v872 = vshrl.u32 %v806, 16
  %v874 = vrot.slane %v872, 4
  %v875 = vor.u32 %v874, %v870
  %v876 = vrot.slane %v875, 4
  %v878 = vshll.u32 %v807, 16
  %v880 = vrot.slane %v878, 5
  %v881 = vsel %vm857, %v876, %v880
  %v882 = vshrl.u32 %v807, 16
  %v884 = vrot.slane %v882, 4
  %v885 = vor.u32 %v884, %v880
  %v886 = vrot.slane %v885, 4
  %v888 = vshll.u32 %v808, 16
  %v890 = vrot.slane %v888, 5
  %v891 = vsel %vm857, %v886, %v890
  %v892 = vshrl.u32 %v808, 16
  %v894 = vrot.slane %v892, 4
  %v895 = vor.u32 %v894, %v890
  %v896 = vrot.slane %v895, 4
  %v898 = vshll.u32 %v809, 16
  %v900 = vrot.slane %v898, 5
  %v901 = vsel %vm857, %v896, %v900
  %v902 = vshrl.u32 %v809, 16
  %v904 = vrot.slane %v902, 4
  %v905 = vor.u32 %v904, %v900
  %v906 = vrot.slane %v905, 4
  %v908 = vshll.u32 %v810, 16
  %v910 = vrot.slane %v908, 5
  %v911 = vsel %vm857, %v906, %v910
  %v912 = vshrl.u32 %v810, 16
  %v914 = vrot.slane %v912, 4
  %v915 = vor.u32 %v914, %v910
  %v916 = vrot.slane %v915, 4
  %v918 = vshll.u32 %v811, 16
  %v920 = vrot.slane %v918, 5
  %v921 = vsel %vm857, %v916, %v920
  %v922 = vshrl.u32 %v811, 16
  %v924 = vrot.slane %v922, 4
  %v925 = vor.u32 %v924, %v920
  %v926 = vrot.slane %v925, 4
  %v928 = vshll.u32 %v812, 16
  %v930 = vrot.slane %v928, 5
  %v931 = vsel %vm857, %v926, %v930
  %v932 = vshrl.u32 %v812, 16
  %v934 = vrot.slane %v932, 4
  %v935 = vor.u32 %v934, %v930
  %v936 = vrot.slane %v935, 4
  %v938 = vshll.u32 %v813, 16
  %v940 = vrot.slane %v938, 5
  %v941 = vsel %vm857, %v936, %v940
  %v942 = vshrl.u32 %v813, 16
  %v944 = vrot.slane %v942, 4
  %v945 = vor.u32 %v944, %v940
  %v946 = vrot.slane %v945, 4
  %v948 = vshll.u32 %v814, 16
  %v950 = vrot.slane %v948, 5
  %v951 = vsel %vm857, %v946, %v950
  %v952 = vshrl.u32 %v814, 16
  %v954 = vrot.slane %v952, 4
  %v955 = vor.u32 %v954, %v950
  %v956 = vrot.slane %v955, 4
  %v958 = vshll.u32 %v815, 16
  %v960 = vrot.slane %v958, 5
  %v961 = vsel %vm857, %v956, %v960
  %v962 = vshrl.u32 %v815, 16
  %v964 = vrot.slane %v962, 4
  %v965 = vor.u32 %v964, %v960
  %v966 = vrot.slane %v965, 4
  %v968 = vshll.u32 %v816, 16
  %v970 = vrot.slane %v968, 5
  %v971 = vsel %vm857, %v966, %v970
  %v972 = vshrl.u32 %v816, 16
  %v974 = vrot.slane %v972, 4
  %v975 = vor.u32 %v974, %v970
  %v976 = vrot.slane %v975, 4
  %v978 = vshll.u32 %v817, 16
  %v980 = vrot.slane %v978, 5
  %v981 = vsel %vm857, %v976, %v980
  %v982 = vshrl.u32 %v817, 16
  %v984 = vrot.slane %v982, 4
  %v985 = vor.u32 %v984, %v980
  %v986 = vrot.slane %v985, 4
  %v988 = vshll.u32 %v818, 16
  %v990 = vrot.slane %v988, 5
  %v991 = vsel %vm857, %v986, %v990
  %v992 = vshrl.u32 %v818, 16
  %v994 = vrot.slane %v992, 4
  %v995 = vor.u32 %v994, %v990
  %v996 = vrot.slane %v995, 4
  %v998 = vshll.u32 %v819, 16
  %v1000 = vrot.slane %v998, 5
  %v1001 = vsel %vm857, %v996, %v1000
  %v1002 = vshrl.u32 %v819, 16
  %v1004 = vrot.slane %v1002, 4
  %v1005 = vor.u32 %v1004, %v1000
  %v1006 = vrot.slane %v1005, 4
  %1007 = vrot.lane.b32.xlu0 %v871, 64
  %v1008 = vpop.permute.xlu0 %1007
  %1009 = vrot.lane.b32.xlu0 %v881, 64
  %v1010 = vpop.permute.xlu0 %1009
  %1011 = vrot.lane.b32.xlu0 %v891, 64
  %v1012 = vpop.permute.xlu0 %1011
  %1013 = vrot.lane.b32.xlu0 %v901, 64
  %v1014 = vpop.permute.xlu0 %1013
  %1015 = vrot.lane.b32.xlu0 %v911, 64
  %v1016 = vpop.permute.xlu0 %1015
  %1017 = vrot.lane.b32.xlu0 %v921, 64
  %v1018 = vpop.permute.xlu0 %1017
  %1019 = vrot.lane.b32.xlu0 %v931, 64
  %v1020 = vpop.permute.xlu0 %1019
  %1021 = vrot.lane.b32.xlu0 %v941, 64
  %v1022 = vpop.permute.xlu0 %1021
  %1023 = vrot.lane.b32.xlu0 %v951, 64
  %v1024 = vpop.permute.xlu0 %1023
  %1025 = vrot.lane.b32.xlu0 %v961, 64
  %v1026 = vpop.permute.xlu0 %1025
  %1027 = vrot.lane.b32.xlu0 %v971, 64
  %v1028 = vpop.permute.xlu0 %1027
  %1029 = vrot.lane.b32.xlu0 %v981, 64
  %v1030 = vpop.permute.xlu0 %1029
  %1031 = vrot.lane.b32.xlu0 %v991, 64
  %v1032 = vpop.permute.xlu0 %1031
  %1033 = vrot.lane.b32.xlu0 %v1001, 64
  %v1034 = vpop.permute.xlu0 %1033
  %1035 = vrot.lane.b32.xlu0 %v1006, 64
  %v1036 = vpop.permute.xlu0 %1035
  %vm1052 = vcmask 1043968
  %1053 = vst.msk [vmem:[#allocation3] sm:$0xf] %vm1052, %v1008
  %1054 = vst.msk [vmem:[#allocation3 + $0x8] sm:$0xf] %vm1052, %v1010
  %1055 = vst.msk [vmem:[#allocation3 + $0x10] sm:$0xf] %vm1052, %v1012
  %1056 = vst.msk [vmem:[#allocation3 + $0x18] sm:$0xf] %vm1052, %v1014
  %1057 = vst.msk [vmem:[#allocation3 + $0x20] sm:$0xf] %vm1052, %v1016
  %1058 = vst.msk [vmem:[#allocation3 + $0x28] sm:$0xf] %vm1052, %v1018
  %1059 = vst.msk [vmem:[#allocation3 + $0x30] sm:$0xf] %vm1052, %v1020
  %1060 = vst.msk [vmem:[#allocation3 + $0x38] sm:$0xf] %vm1052, %v1022
  %1061 = vst.msk [vmem:[#allocation3 + $0x40] sm:$0xf] %vm1052, %v1024
  %1062 = vst.msk [vmem:[#allocation3 + $0x48] sm:$0xf] %vm1052, %v1026
  %1063 = vst.msk [vmem:[#allocation3 + $0x50] sm:$0xf] %vm1052, %v1028
  %1064 = vst.msk [vmem:[#allocation3 + $0x58] sm:$0xf] %vm1052, %v1030
  %1065 = vst.msk [vmem:[#allocation3 + $0x60] sm:$0xf] %vm1052, %v1032
  %1066 = vst.msk [vmem:[#allocation3 + $0x68] sm:$0xf] %vm1052, %v1034
  %vm1067 = vcmask 1043968
  %vm1068 = vmand %vm1067, %vm851
  %v1069 = vld [vmem:[#allocation3 + $0x70] sm:$0xf]
  %v1070 = vsel %vm1068, %v1036, %v1069
  %1071 = vst [vmem:[#allocation3 + $0x70] sm:$0xf] %v1070
  %v1072 = vpack.c.bf16 %v773, %v772
  %v1074 = vunpack.c.l.b16 %v1072
  %v1075 = vunpack.c.h.b16 %v1072
  %v1076 = vpack.c.b16 %v1074, %v1074
  %v1077 = vpack.c.b16 %v1075, %v1075
  %vm1078 = vcmask 1042432
  %vm1079 = vcmask 1046532
  %vm1080 = vmor %vm1078, %vm1079
  %v1081 = vrot.slane %v805, 5
  %v1082 = vrot.slane %v1081, 4
  %v1083 = vrot.slane %v806, 5
  %v1084 = vsel %vm1080, %v1082, %v1083
  %v1085 = vrot.slane %v1083, 4
  %v1086 = vrot.slane %v807, 5
  %v1087 = vsel %vm1080, %v1085, %v1086
  %v1088 = vrot.slane %v1086, 4
  %v1089 = vrot.slane %v808, 5
  %v1090 = vsel %vm1080, %v1088, %v1089
  %v1091 = vrot.slane %v1089, 4
  %v1092 = vrot.slane %v809, 5
  %v1093 = vsel %vm1080, %v1091, %v1092
  %v1094 = vrot.slane %v1092, 4
  %v1095 = vrot.slane %v810, 5
  %v1096 = vsel %vm1080, %v1094, %v1095
  %v1097 = vrot.slane %v1095, 4
  %v1098 = vrot.slane %v811, 5
  %v1099 = vsel %vm1080, %v1097, %v1098
  %v1100 = vrot.slane %v1098, 4
  %v1101 = vrot.slane %v812, 5
  %v1102 = vsel %vm1080, %v1100, %v1101
  %v1103 = vrot.slane %v1101, 4
  %v1104 = vrot.slane %v813, 5
  %v1105 = vsel %vm1080, %v1103, %v1104
  %v1106 = vrot.slane %v1104, 4
  %v1107 = vrot.slane %v814, 5
  %v1108 = vsel %vm1080, %v1106, %v1107
  %v1109 = vrot.slane %v1107, 4
  %v1110 = vrot.slane %v815, 5
  %v1111 = vsel %vm1080, %v1109, %v1110
  %v1112 = vrot.slane %v1110, 4
  %v1113 = vrot.slane %v816, 5
  %v1114 = vsel %vm1080, %v1112, %v1113
  %v1115 = vrot.slane %v1113, 4
  %v1116 = vrot.slane %v817, 5
  %v1117 = vsel %vm1080, %v1115, %v1116
  %v1118 = vrot.slane %v1116, 4
  %v1119 = vrot.slane %v818, 5
  %v1120 = vsel %vm1080, %v1118, %v1119
  %v1121 = vrot.slane %v1119, 4
  %v1122 = vrot.slane %v1076, 5
  %v1123 = vsel %vm1080, %v1121, %v1122
  %v1124 = vrot.slane %v1122, 4
  %v1125 = vrot.slane %v1077, 5
  %v1126 = vsel %vm1080, %v1124, %v1125
  %1142 = vst.msk [vmem:[#allocation3 + $0x4] sm:$0xf] %vm835, %v1084
  %1143 = vst.msk [vmem:[#allocation3 + $0xc] sm:$0xf] %vm835, %v1087
  %1144 = vst.msk [vmem:[#allocation3 + $0x14] sm:$0xf] %vm835, %v1090
  %1145 = vst.msk [vmem:[#allocation3 + $0x1c] sm:$0xf] %vm835, %v1093
  %1146 = vst.msk [vmem:[#allocation3 + $0x24] sm:$0xf] %vm835, %v1096
  %1147 = vst.msk [vmem:[#allocation3 + $0x2c] sm:$0xf] %vm835, %v1099
  %1148 = vst.msk [vmem:[#allocation3 + $0x34] sm:$0xf] %vm835, %v1102
  %1149 = vst.msk [vmem:[#allocation3 + $0x3c] sm:$0xf] %vm835, %v1105
  %1150 = vst.msk [vmem:[#allocation3 + $0x44] sm:$0xf] %vm835, %v1108
  %1151 = vst.msk [vmem:[#allocation3 + $0x4c] sm:$0xf] %vm835, %v1111
  %1152 = vst.msk [vmem:[#allocation3 + $0x54] sm:$0xf] %vm835, %v1114
  %1153 = vst.msk [vmem:[#allocation3 + $0x5c] sm:$0xf] %vm835, %v1117
  %1154 = vst.msk [vmem:[#allocation3 + $0x64] sm:$0xf] %vm835, %v1120
  %1155 = vst.msk [vmem:[#allocation3 + $0x6c] sm:$0xf] %vm835, %v1123
  %v1156 = vld [vmem:[#allocation3 + $0x74] sm:$0xf]
  %v1157 = vsel %vm852, %v1126, %v1156
  %1158 = vst [vmem:[#allocation3 + $0x74] sm:$0xf] %v1157
  %v1159 = vld [vmem:[#allocation3] sm:$0xff]
  %v1160 = vld [vmem:[#allocation3 + $0x8] sm:$0xff]
  %v1161 = vld [vmem:[#allocation3 + $0x10] sm:$0xff]
  %v1162 = vld [vmem:[#allocation3 + $0x18] sm:$0xff]
  %v1163 = vld [vmem:[#allocation3 + $0x20] sm:$0xff]
  %v1164 = vld [vmem:[#allocation3 + $0x28] sm:$0xff]
  %v1165 = vld [vmem:[#allocation3 + $0x30] sm:$0xff]
  %v1166 = vld [vmem:[#allocation3 + $0x38] sm:$0xff]
  %v1167 = vld [vmem:[#allocation3 + $0x40] sm:$0xff]
  %v1168 = vld [vmem:[#allocation3 + $0x48] sm:$0xff]
  %v1169 = vld [vmem:[#allocation3 + $0x50] sm:$0xff]
  %v1170 = vld [vmem:[#allocation3 + $0x58] sm:$0xff]
  %v1171 = vld [vmem:[#allocation3 + $0x60] sm:$0xff]
  %v1172 = vld [vmem:[#allocation3 + $0x68] sm:$0xff]
  %v1173 = vld [vmem:[#allocation3 + $0x70] sm:$0xff]
  %v1174 = vld [vmem:[%s5] sm:$0xf]
  %v1175 = vld [vmem:[%s5 + $0x4] sm:$0xf]
  %v1176 = vld [vmem:[%s5 + $0x8] sm:$0xf]
  %v1177 = vld [vmem:[%s5 + $0xc] sm:$0xf]
  %v1178 = vld [vmem:[%s5 + $0x10] sm:$0xf]
  %v1179 = vld [vmem:[%s5 + $0x14] sm:$0xf]
  %v1180 = vld [vmem:[%s5 + $0x18] sm:$0xf]
  %v1181 = vld [vmem:[%s5 + $0x1c] sm:$0xf]
  %v1182 = vld [vmem:[%s5 + $0x20] sm:$0xf]
  %v1183 = vld [vmem:[%s5 + $0x24] sm:$0xf]
  %v1184 = vld [vmem:[%s5 + $0x28] sm:$0xf]
  %v1185 = vld [vmem:[%s5 + $0x2c] sm:$0xf]
  %v1186 = vld [vmem:[%s5 + $0x30] sm:$0xf]
  %v1187 = vld [vmem:[%s5 + $0x34] sm:$0xf]
  %v1188 = vld [vmem:[%s5 + $0x38] sm:$0xf]
  %v1189 = vld [vmem:[%s5 + $0x3c] sm:$0xf]
  %v1190 = vld [vmem:[%s5 + $0x40] sm:$0xf]
  %v1191 = vld [vmem:[%s5 + $0x44] sm:$0xf]
  %v1192 = vld [vmem:[%s5 + $0x48] sm:$0xf]
  %v1193 = vld [vmem:[%s5 + $0x4c] sm:$0xf]
  %v1194 = vld [vmem:[%s5 + $0x50] sm:$0xf]
  %v1195 = vld [vmem:[%s5 + $0x54] sm:$0xf]
  %v1196 = vld [vmem:[%s5 + $0x58] sm:$0xf]
  %v1197 = vld [vmem:[%s5 + $0x5c] sm:$0xf]
  %v1198 = vld [vmem:[%s6] sm:$0x1]
  %v1200 = vlaneseq
  %v1201 = vshrl.u32 %v1200, 7
  %v1202 = vsub.s32 0, %v1201
  %v1203 = vrot.slane %v1198, %v1202
  %v1220 = vunpack.c.l.b16 %v1159
  %v1221 = vunpack.c.h.b16 %v1159
  %v1222 = vunpack.c.l.b16 %v1160
  %v1223 = vunpack.c.h.b16 %v1160
  %v1224 = vunpack.c.l.b16 %v1161
  %v1225 = vunpack.c.h.b16 %v1161
  %v1226 = vunpack.c.l.b16 %v1162
  %v1227 = vunpack.c.h.b16 %v1162
  %v1228 = vunpack.c.l.b16 %v1163
  %v1229 = vunpack.c.h.b16 %v1163
  %v1230 = vunpack.c.l.b16 %v1164
  %v1231 = vunpack.c.h.b16 %v1164
  %v1232 = vunpack.c.l.b16 %v1165
  %v1233 = vunpack.c.h.b16 %v1165
  %v1234 = vunpack.c.l.b16 %v1166
  %v1235 = vunpack.c.h.b16 %v1166
  %v1236 = vunpack.c.l.b16 %v1167
  %v1237 = vunpack.c.h.b16 %v1167
  %v1238 = vunpack.c.l.b16 %v1168
  %v1239 = vunpack.c.h.b16 %v1168
  %v1240 = vunpack.c.l.b16 %v1169
  %v1241 = vunpack.c.h.b16 %v1169
  %v1242 = vunpack.c.l.b16 %v1170
  %v1243 = vunpack.c.h.b16 %v1170
  %v1244 = vunpack.c.l.b16 %v1171
  %v1245 = vunpack.c.h.b16 %v1171
  %v1246 = vunpack.c.l.b16 %v1172
  %v1247 = vunpack.c.h.b16 %v1172
  %v1248 = vunpack.c.l.b16 %v1173
  %v1249 = vunpack.c.h.b16 %v1173
  %v1250 = vpack.c.b16 %v1222, %v1220
  %v1251 = vpack.c.b16 %v1223, %v1221
  %v1252 = vpack.c.b16 %v1226, %v1224
  %v1253 = vpack.c.b16 %v1227, %v1225
  %v1254 = vpack.c.b16 %v1230, %v1228
  %v1255 = vpack.c.b16 %v1231, %v1229
  %v1256 = vpack.c.b16 %v1234, %v1232
  %v1257 = vpack.c.b16 %v1235, %v1233
  %v1258 = vpack.c.b16 %v1238, %v1236
  %v1259 = vpack.c.b16 %v1239, %v1237
  %v1260 = vpack.c.b16 %v1242, %v1240
  %v1261 = vpack.c.b16 %v1243, %v1241
  %v1262 = vpack.c.b16 %v1246, %v1244
  %v1263 = vpack.c.b16 %v1247, %v1245
  %v1264 = vpack.c.b16 %v1248, %v1248
  %v1265 = vpack.c.b16 %v1249, %v1249
  %v1298 = vunpack.c.l.b16 %v1174
  %v1299 = vunpack.c.l.b16 %v1175
  %v1300 = vunpack.c.l.b16 %v1176
  %v1301 = vunpack.c.l.b16 %v1177
  %v1302 = vunpack.c.l.b16 %v1178
  %v1303 = vunpack.c.l.b16 %v1179
  %v1304 = vunpack.c.l.b16 %v1180
  %v1305 = vunpack.c.l.b16 %v1181
  %v1306 = vunpack.c.l.b16 %v1182
  %v1307 = vunpack.c.l.b16 %v1183
  %v1308 = vunpack.c.l.b16 %v1184
  %v1309 = vunpack.c.l.b16 %v1185
  %v1310 = vunpack.c.l.b16 %v1186
  %v1311 = vunpack.c.l.b16 %v1187
  %v1312 = vunpack.c.l.b16 %v1188
  %v1313 = vunpack.c.l.b16 %v1189
  %v1314 = vunpack.c.l.b16 %v1190
  %v1315 = vunpack.c.l.b16 %v1191
  %v1316 = vunpack.c.l.b16 %v1192
  %v1317 = vunpack.c.l.b16 %v1193
  %v1318 = vunpack.c.l.b16 %v1194
  %v1319 = vunpack.c.l.b16 %v1195
  %v1320 = vunpack.c.l.b16 %v1196
  %v1321 = vunpack.c.l.b16 %v1197
  %v1322 = vpack.c.b16 %v1299, %v1298
  %v1323 = vpack.c.b16 %v1301, %v1300
  %v1324 = vpack.c.b16 %v1303, %v1302
  %v1325 = vpack.c.b16 %v1305, %v1304
  %v1326 = vpack.c.b16 %v1307, %v1306
  %v1327 = vpack.c.b16 %v1309, %v1308
  %v1328 = vpack.c.b16 %v1311, %v1310
  %v1329 = vpack.c.b16 %v1313, %v1312
  %v1330 = vpack.c.b16 %v1315, %v1314
  %v1331 = vpack.c.b16 %v1317, %v1316
  %v1332 = vpack.c.b16 %v1319, %v1318
  %v1333 = vpack.c.b16 %v1321, %v1320
  %v1347 = vsel %vm128, %v1251, 0
  %v1350 = vsel %vm128, %v1253, 0
  %v1353 = vsel %vm128, %v1255, 0
  %v1356 = vsel %vm128, %v1257, 0
  %v1359 = vsel %vm128, %v1259, 0
  %v1362 = vsel %vm128, %v1261, 0
  %v1365 = vsel %vm128, %v1263, 0
  %v1368 = vsel %vm128, %v1265, 0
  %1370 = vmatprep.subr.bf16.mxu0 0
  %1371 = vmatpush1.bf16.msra.mxu0 %v1322
  %1372 = vmatprep.subr.bf16.mxu0 0
  %1373 = vmatpush1.bf16.msra.mxu0 %v1323
  %1374 = vmatprep.subr.bf16.mxu0 0
  %1375 = vmatpush1.bf16.msra.mxu0 %v1324
  %1376 = vmatprep.subr.bf16.mxu0 0
  %1377 = vmatpush1.bf16.msra.mxu0 %v1325
  %1378 = vmatprep.subr.bf16.mxu0 0
  %1379 = vmatpush1.bf16.msra.mxu0 %v1326
  %1380 = vmatprep.subr.bf16.mxu0 0
  %1381 = vmatpush1.bf16.msra.mxu0 %v1327
  %1382 = vmatprep.subr.bf16.mxu0 0
  %1383 = vmatpush1.bf16.msra.mxu0 %v1328
  %1384 = vmatprep.subr.bf16.mxu0 0
  %1385 = vmatpush1.bf16.msra.mxu0 %v1329
  %1386 = vmatprep.subr.bf16.mxu0 0
  %1387 = vmatpush1.bf16.msra.mxu0 %v1330
  %1388 = vmatprep.subr.bf16.mxu0 0
  %1389 = vmatpush1.bf16.msra.mxu0 %v1331
  %1390 = vmatprep.subr.bf16.mxu0 0
  %1391 = vmatpush1.bf16.msra.mxu0 %v1332
  %1392 = vmatprep.subr.bf16.mxu0 0
  %1393 = vmatpush1.bf16.msra.mxu0 %v1333
  %1394 = vmatprep.subr.bf16.mxu0 0
  %1395 = vmatpush1.bf16.msra.mxu0 0
  %1396 = vmatprep.subr.bf16.mxu0 0
  %1397 = vmatpush1.bf16.msra.mxu0 0
  %1398 = vmatprep.subr.bf16.mxu0 0
  %1399 = vmatpush1.bf16.msra.mxu0 0
  %1400 = vmatprep.subr.bf16.mxu0 0
  %1401 = vmatpush1.bf16.msra.mxu0 0
  %1402 = vmatprep.mubr.bf16.mxu0 %v1347
  %1403 = vmatmul.mubr.bf16.gmra.mrb[0].mxu0 %v1250
  %v1404 = vpop.f32.mrb[0].mxu0
  %v1405 = vadd.f32 %v1203, %v1404
  %v1406 = vpop.f32.mrb[0].mxu0
  %v1407 = vpop.f32.mrb[0].mxu0
  %v1408 = vadd.f32 %v1203, %v1407
  %v1409 = vpop.f32.mrb[0].mxu0
  %1410 = vmatprep.mubr.bf16.mxu0 %v1350
  %1411 = vmatmul.mubr.bf16.gmra.mrb[0].mxu0 %v1252
  %v1412 = vpop.f32.mrb[0].mxu0
  %v1413 = vadd.f32 %v1203, %v1412
  %v1414 = vpop.f32.mrb[0].mxu0
  %v1415 = vpop.f32.mrb[0].mxu0
  %v1416 = vadd.f32 %v1203, %v1415
  %v1417 = vpop.f32.mrb[0].mxu0
  %1418 = vmatprep.mubr.bf16.mxu0 %v1353
  %1419 = vmatmul.mubr.bf16.gmra.mrb[0].mxu0 %v1254
  %v1420 = vpop.f32.mrb[0].mxu0
  %v1421 = vadd.f32 %v1203, %v1420
  %v1422 = vpop.f32.mrb[0].mxu0
  %v1423 = vpop.f32.mrb[0].mxu0
  %v1424 = vadd.f32 %v1203, %v1423
  %v1425 = vpop.f32.mrb[0].mxu0
  %1426 = vmatprep.mubr.bf16.mxu0 %v1356
  %1427 = vmatmul.mubr.bf16.gmra.mrb[0].mxu0 %v1256
  %v1428 = vpop.f32.mrb[0].mxu0
  %v1429 = vadd.f32 %v1203, %v1428
  %v1430 = vpop.f32.mrb[0].mxu0
  %v1431 = vpop.f32.mrb[0].mxu0
  %v1432 = vadd.f32 %v1203, %v1431
  %v1433 = vpop.f32.mrb[0].mxu0
  %1434 = vmatprep.mubr.bf16.mxu0 %v1359
  %1435 = vmatmul.mubr.bf16.gmra.mrb[0].mxu0 %v1258
  %v1436 = vpop.f32.mrb[0].mxu0
  %v1437 = vadd.f32 %v1203, %v1436
  %v1438 = vpop.f32.mrb[0].mxu0
  %v1439 = vpop.f32.mrb[0].mxu0
  %v1440 = vadd.f32 %v1203, %v1439
  %v1441 = vpop.f32.mrb[0].mxu0
  %1442 = vmatprep.mubr.bf16.mxu0 %v1362
  %1443 = vmatmul.mubr.bf16.gmra.mrb[0].mxu0 %v1260
  %v1444 = vpop.f32.mrb[0].mxu0
  %v1445 = vadd.f32 %v1203, %v1444
  %v1446 = vpop.f32.mrb[0].mxu0
  %v1447 = vpop.f32.mrb[0].mxu0
  %v1448 = vadd.f32 %v1203, %v1447
  %v1449 = vpop.f32.mrb[0].mxu0
  %1450 = vmatprep.mubr.bf16.mxu0 %v1365
  %1451 = vmatmul.mubr.bf16.gmra.mrb[0].mxu0 %v1262
  %v1452 = vpop.f32.mrb[0].mxu0
  %v1453 = vadd.f32 %v1203, %v1452
  %v1454 = vpop.f32.mrb[0].mxu0
  %v1455 = vpop.f32.mrb[0].mxu0
  %v1456 = vadd.f32 %v1203, %v1455
  %v1457 = vpop.f32.mrb[0].mxu0
  %1458 = vmatprep.mubr.bf16.mxu0 %v1368
  %1459 = vmatmul.mubr.bf16.gmra.mrb[0].mxu0 %v1264
  %v1460 = vpop.f32.mrb[0].mxu0
  %v1461 = vadd.f32 %v1203, %v1460
  %v1462 = vpop.f32.mrb[0].mxu0
  %v1463 = vpop.f32.mrb[0].mxu0
  %v1464 = vpop.f32.mrb[0].mxu0
  %1465 = vdwg.mxu0
  %1466 = vst.msk [vmem:[#allocation2] sm:$0xff] %vm128, %v1405
  %1467 = vst.msk [vmem:[#allocation2 + $0x8] sm:$0xff] %vm128, %v1408
  %1468 = vst.msk [vmem:[#allocation2 + $0x10] sm:$0xff] %vm128, %v1413
  %1469 = vst.msk [vmem:[#allocation2 + $0x18] sm:$0xff] %vm128, %v1416
  %1470 = vst.msk [vmem:[#allocation2 + $0x20] sm:$0xff] %vm128, %v1421
  %1471 = vst.msk [vmem:[#allocation2 + $0x28] sm:$0xff] %vm128, %v1424
  %1472 = vst.msk [vmem:[#allocation2 + $0x30] sm:$0xff] %vm128, %v1429
  %1473 = vst.msk [vmem:[#allocation2 + $0x38] sm:$0xff] %vm128, %v1432
  %1474 = vst.msk [vmem:[#allocation2 + $0x40] sm:$0xff] %vm128, %v1437
  %1475 = vst.msk [vmem:[#allocation2 + $0x48] sm:$0xff] %vm128, %v1440
  %1476 = vst.msk [vmem:[#allocation2 + $0x50] sm:$0xff] %vm128, %v1445
  %1477 = vst.msk [vmem:[#allocation2 + $0x58] sm:$0xff] %vm128, %v1448
  %1478 = vst.msk [vmem:[#allocation2 + $0x60] sm:$0xff] %vm128, %v1453
  %1479 = vst.msk [vmem:[#allocation2 + $0x68] sm:$0xff] %vm128, %v1456
  %vm1480 = vcmask 522240
  %1481 = vst.msk [vmem:[#allocation2 + $0x70] sm:$0x7f] %vm1480, %v1461
  %v1482 = vsel %vm128, %v1405, 0.0
  %v1483 = vsel %vm128, %v1408, 0.0
  %v1484 = vadd.f32 %v1482, %v1483
  %v1485 = vsel %vm128, %v1413, 0.0
  %v1486 = vadd.f32 %v1484, %v1485
  %v1487 = vsel %vm128, %v1416, 0.0
  %v1488 = vadd.f32 %v1486, %v1487
  %v1489 = vsel %vm128, %v1421, 0.0
  %v1490 = vadd.f32 %v1488, %v1489
  %v1491 = vsel %vm128, %v1424, 0.0
  %v1492 = vadd.f32 %v1490, %v1491
  %v1493 = vsel %vm128, %v1429, 0.0
  %v1494 = vadd.f32 %v1492, %v1493
  %v1495 = vsel %vm128, %v1432, 0.0
  %v1496 = vadd.f32 %v1494, %v1495
  %v1497 = vsel %vm128, %v1437, 0.0
  %v1498 = vadd.f32 %v1496, %v1497
  %v1499 = vsel %vm128, %v1440, 0.0
  %v1500 = vadd.f32 %v1498, %v1499
  %v1501 = vsel %vm128, %v1445, 0.0
  %v1502 = vadd.f32 %v1500, %v1501
  %v1503 = vsel %vm128, %v1448, 0.0
  %v1504 = vadd.f32 %v1502, %v1503
  %v1505 = vsel %vm128, %v1453, 0.0
  %v1506 = vadd.f32 %v1504, %v1505
  %v1507 = vsel %vm128, %v1456, 0.0
  %v1508 = vadd.f32 %v1506, %v1507
  %v1509 = vsel %vm1480, %v1461, 0.0
  %v1510 = vadd.f32 %v1508, %v1509
  %v1511 = vrot.slane %v1510, 4
  %v1512 = vadd.f32 %v1510, %v1511
  %v1513 = vrot.slane %v1512, 2
  %v1514 = vadd.f32 %v1512, %v1513
  %v1515 = vrot.slane %v1514, 1
  %v1516 = vadd.f32 %v1514, %v1515
  %v1517 = vadd.f32 %v1516, 0.0
  %v1518 = vmul.f32 %v1405, %v1405
  %v1519 = vmul.f32 %v1408, %v1408
  %v1520 = vmul.f32 %v1413, %v1413
  %v1521 = vmul.f32 %v1416, %v1416
  %v1522 = vmul.f32 %v1421, %v1421
  %v1523 = vmul.f32 %v1424, %v1424
  %v1524 = vmul.f32 %v1429, %v1429
  %v1525 = vmul.f32 %v1432, %v1432
  %v1526 = vmul.f32 %v1437, %v1437
  %v1527 = vmul.f32 %v1440, %v1440
  %v1528 = vmul.f32 %v1445, %v1445
  %v1529 = vmul.f32 %v1448, %v1448
  %v1530 = vmul.f32 %v1453, %v1453
  %v1531 = vmul.f32 %v1456, %v1456
  %v1532 = vmul.f32 %v1461, %v1461
  %v1533 = vsel %vm128, %v1518, 0.0
  %v1534 = vsel %vm128, %v1519, 0.0
  %v1535 = vadd.f32 %v1533, %v1534
  %v1536 = vsel %vm128, %v1520, 0.0
  %v1537 = vadd.f32 %v1535, %v1536
  %v1538 = vsel %vm128, %v1521, 0.0
  %v1539 = vadd.f32 %v1537, %v1538
  %v1540 = vsel %vm128, %v1522, 0.0
  %v1541 = vadd.f32 %v1539, %v1540
  %v1542 = vsel %vm128, %v1523, 0.0
  %v1543 = vadd.f32 %v1541, %v1542
  %v1544 = vsel %vm128, %v1524, 0.0
  %v1545 = vadd.f32 %v1543, %v1544
  %v1546 = vsel %vm128, %v1525, 0.0
  %v1547 = vadd.f32 %v1545, %v1546
  %v1548 = vsel %vm128, %v1526, 0.0
  %v1549 = vadd.f32 %v1547, %v1548
  %v1550 = vsel %vm128, %v1527, 0.0
  %v1551 = vadd.f32 %v1549, %v1550
  %v1552 = vsel %vm128, %v1528, 0.0
  %v1553 = vadd.f32 %v1551, %v1552
  %v1554 = vsel %vm128, %v1529, 0.0
  %v1555 = vadd.f32 %v1553, %v1554
  %v1556 = vsel %vm128, %v1530, 0.0
  %v1557 = vadd.f32 %v1555, %v1556
  %v1558 = vsel %vm128, %v1531, 0.0
  %v1559 = vadd.f32 %v1557, %v1558
  %v1560 = vsel %vm1480, %v1532, 0.0
  %v1561 = vadd.f32 %v1559, %v1560
  %v1562 = vrot.slane %v1561, 4
  %v1563 = vadd.f32 %v1561, %v1562
  %v1564 = vrot.slane %v1563, 2
  %v1565 = vadd.f32 %v1563, %v1564
  %v1566 = vrot.slane %v1565, 1
  %v1567 = vadd.f32 %v1565, %v1566
  %v1568 = vadd.f32 %v1567, 0.0
  %v1569 = vld [vmem:[%s576] sm:$0xff]
  %v1570 = vld [vmem:[%s576 + $0x8] sm:$0xff]
  %v1571 = vld [vmem:[%s576 + $0x10] sm:$0xff]
  %v1572 = vld [vmem:[%s576 + $0x18] sm:$0xff]
  %v1573 = vld [vmem:[%s576 + $0x20] sm:$0xff]
  %v1574 = vld [vmem:[%s576 + $0x28] sm:$0xff]
  %v1575 = vld [vmem:[%s576 + $0x30] sm:$0xff]
  %v1576 = vld [vmem:[%s576 + $0x38] sm:$0xff]
  %v1577 = vld [vmem:[%s576 + $0x40] sm:$0xff]
  %v1578 = vld [vmem:[%s576 + $0x48] sm:$0xff]
  %v1579 = vld [vmem:[%s576 + $0x50] sm:$0xff]
  %v1580 = vld [vmem:[%s576 + $0x58] sm:$0xff]
  %v1581 = vld [vmem:[%s576 + $0x60] sm:$0xff]
  %v1582 = vld [vmem:[%s576 + $0x68] sm:$0xff]
  %v1583 = vld [vmem:[%s576 + $0x70] sm:$0xff]
  %v1584 = vld [vmem:[%s576 + $0x78] sm:$0x1]
  %v1585 = vmul.f32 %v1569, %v718
  %v1586 = vmul.f32 %v1570, %v718
  %v1587 = vmul.f32 %v1571, %v718
  %v1588 = vmul.f32 %v1572, %v718
  %v1589 = vmul.f32 %v1573, %v718
  %v1590 = vmul.f32 %v1574, %v718
  %v1591 = vmul.f32 %v1575, %v718
  %v1592 = vmul.f32 %v1576, %v718
  %v1593 = vmul.f32 %v1577, %v718
  %v1594 = vmul.f32 %v1578, %v718
  %v1595 = vmul.f32 %v1579, %v718
  %v1596 = vmul.f32 %v1580, %v718
  %v1597 = vmul.f32 %v1581, %v718
  %v1598 = vmul.f32 %v1582, %v718
  %v1599 = vmul.f32 %v1583, %v718
  %v1600 = vmul.f32 %v1584, %v718
  %v1601 = vadd.f32 %v1585, %v740
  %v1602 = vadd.f32 %v1586, %v740
  %v1603 = vadd.f32 %v1587, %v740
  %v1604 = vadd.f32 %v1588, %v740
  %v1605 = vadd.f32 %v1589, %v740
  %v1606 = vadd.f32 %v1590, %v740
  %v1607 = vadd.f32 %v1591, %v740
  %v1608 = vadd.f32 %v1592, %v740
  %v1609 = vadd.f32 %v1593, %v740
  %v1610 = vadd.f32 %v1594, %v740
  %v1611 = vadd.f32 %v1595, %v740
  %v1612 = vadd.f32 %v1596, %v740
  %v1613 = vadd.f32 %v1597, %v740
  %v1614 = vadd.f32 %v1598, %v740
  %v1615 = vadd.f32 %v1599, %v740
  %v1616 = vadd.f32 %v1600, %v740
  %v1617 = vmax.f32 %v1601, 0.0
  %v1618 = vmax.f32 %v1602, 0.0
  %v1619 = vmax.f32 %v1603, 0.0
  %v1620 = vmax.f32 %v1604, 0.0
  %v1621 = vmax.f32 %v1605, 0.0
  %v1622 = vmax.f32 %v1606, 0.0
  %v1623 = vmax.f32 %v1607, 0.0
  %v1624 = vmax.f32 %v1608, 0.0
  %v1625 = vmax.f32 %v1609, 0.0
  %v1626 = vmax.f32 %v1610, 0.0
  %v1627 = vmax.f32 %v1611, 0.0
  %v1628 = vmax.f32 %v1612, 0.0
  %v1629 = vmax.f32 %v1613, 0.0
  %v1630 = vmax.f32 %v1614, 0.0
  %v1631 = vmax.f32 %v1615, 0.0
  %v1632 = vmax.f32 %v1616, 0.0
  %v1633 = vpack.c.bf16 %v1618, %v1617
  %v1634 = vpack.c.bf16 %v1620, %v1619
  %v1635 = vpack.c.bf16 %v1622, %v1621
  %v1636 = vpack.c.bf16 %v1624, %v1623
  %v1637 = vpack.c.bf16 %v1626, %v1625
  %v1638 = vpack.c.bf16 %v1628, %v1627
  %v1639 = vpack.c.bf16 %v1630, %v1629
  %v1640 = vpack.c.bf16 %v1631, %v1631
  %v1649 = vunpack.c.l.b16 %v1633
  %v1650 = vunpack.c.h.b16 %v1633
  %v1651 = vunpack.c.l.b16 %v1634
  %v1652 = vunpack.c.h.b16 %v1634
  %v1653 = vunpack.c.l.b16 %v1635
  %v1654 = vunpack.c.h.b16 %v1635
  %v1655 = vunpack.c.l.b16 %v1636
  %v1656 = vunpack.c.h.b16 %v1636
  %v1657 = vunpack.c.l.b16 %v1637
  %v1658 = vunpack.c.h.b16 %v1637
  %v1659 = vunpack.c.l.b16 %v1638
  %v1660 = vunpack.c.h.b16 %v1638
  %v1661 = vunpack.c.l.b16 %v1639
  %v1662 = vunpack.c.h.b16 %v1639
  %v1663 = vunpack.c.l.b16 %v1640
  %v1664 = vpack.c.b16 %v1649, %v1649
  %v1665 = vpack.c.b16 %v1650, %v1650
  %v1666 = vpack.c.b16 %v1651, %v1651
  %v1667 = vpack.c.b16 %v1652, %v1652
  %v1668 = vpack.c.b16 %v1653, %v1653
  %v1669 = vpack.c.b16 %v1654, %v1654
  %v1670 = vpack.c.b16 %v1655, %v1655
  %v1671 = vpack.c.b16 %v1656, %v1656
  %v1672 = vpack.c.b16 %v1657, %v1657
  %v1673 = vpack.c.b16 %v1658, %v1658
  %v1674 = vpack.c.b16 %v1659, %v1659
  %v1675 = vpack.c.b16 %v1660, %v1660
  %v1676 = vpack.c.b16 %v1661, %v1661
  %v1677 = vpack.c.b16 %v1662, %v1662
  %v1678 = vpack.c.b16 %v1663, %v1663
  %1694 = vst.msk [vmem:[#allocation3] sm:$0xf] %vm835, %v1664
  %1695 = vst.msk [vmem:[#allocation3 + $0x8] sm:$0xf] %vm835, %v1665
  %1696 = vst.msk [vmem:[#allocation3 + $0x10] sm:$0xf] %vm835, %v1666
  %1697 = vst.msk [vmem:[#allocation3 + $0x18] sm:$0xf] %vm835, %v1667
  %1698 = vst.msk [vmem:[#allocation3 + $0x20] sm:$0xf] %vm835, %v1668
  %1699 = vst.msk [vmem:[#allocation3 + $0x28] sm:$0xf] %vm835, %v1669
  %1700 = vst.msk [vmem:[#allocation3 + $0x30] sm:$0xf] %vm835, %v1670
  %1701 = vst.msk [vmem:[#allocation3 + $0x38] sm:$0xf] %vm835, %v1671
  %1702 = vst.msk [vmem:[#allocation3 + $0x40] sm:$0xf] %vm835, %v1672
  %1703 = vst.msk [vmem:[#allocation3 + $0x48] sm:$0xf] %vm835, %v1673
  %1704 = vst.msk [vmem:[#allocation3 + $0x50] sm:$0xf] %vm835, %v1674
  %1705 = vst.msk [vmem:[#allocation3 + $0x58] sm:$0xf] %vm835, %v1675
  %1706 = vst.msk [vmem:[#allocation3 + $0x60] sm:$0xf] %vm835, %v1676
  %1707 = vst.msk [vmem:[#allocation3 + $0x68] sm:$0xf] %vm835, %v1677
  %v1708 = vld [vmem:[#allocation3 + $0x70] sm:$0xf]
  %v1709 = vsel %vm852, %v1678, %v1708
  %1710 = vst [vmem:[#allocation3 + $0x70] sm:$0xf] %v1709
  %v1712 = vshrl.u32 %v1664, 16
  %v1714 = vrot.slane %v1712, 4
  %v1715 = vshll.u32 %v1664, 16
  %v1717 = vrot.slane %v1715, 5
  %v1718 = vor.u32 %v1714, %v1717
  %v1719 = vrot.slane %v1718, 4
  %v1721 = vshll.u32 %v1665, 16
  %v1723 = vrot.slane %v1721, 5
  %v1724 = vsel %vm857, %v1719, %v1723
  %v1725 = vshrl.u32 %v1665, 16
  %v1727 = vrot.slane %v1725, 4
  %v1728 = vor.u32 %v1727, %v1723
  %v1729 = vrot.slane %v1728, 4
  %v1731 = vshll.u32 %v1666, 16
  %v1733 = vrot.slane %v1731, 5
  %v1734 = vsel %vm857, %v1729, %v1733
  %v1735 = vshrl.u32 %v1666, 16
  %v1737 = vrot.slane %v1735, 4
  %v1738 = vor.u32 %v1737, %v1733
  %v1739 = vrot.slane %v1738, 4
  %v1741 = vshll.u32 %v1667, 16
  %v1743 = vrot.slane %v1741, 5
  %v1744 = vsel %vm857, %v1739, %v1743
  %v1745 = vshrl.u32 %v1667, 16
  %v1747 = vrot.slane %v1745, 4
  %v1748 = vor.u32 %v1747, %v1743
  %v1749 = vrot.slane %v1748, 4
  %v1751 = vshll.u32 %v1668, 16
  %v1753 = vrot.slane %v1751, 5
  %v1754 = vsel %vm857, %v1749, %v1753
  %v1755 = vshrl.u32 %v1668, 16
  %v1757 = vrot.slane %v1755, 4
  %v1758 = vor.u32 %v1757, %v1753
  %v1759 = vrot.slane %v1758, 4
  %v1761 = vshll.u32 %v1669, 16
  %v1763 = vrot.slane %v1761, 5
  %v1764 = vsel %vm857, %v1759, %v1763
  %v1765 = vshrl.u32 %v1669, 16
  %v1767 = vrot.slane %v1765, 4
  %v1768 = vor.u32 %v1767, %v1763
  %v1769 = vrot.slane %v1768, 4
  %v1771 = vshll.u32 %v1670, 16
  %v1773 = vrot.slane %v1771, 5
  %v1774 = vsel %vm857, %v1769, %v1773
  %v1775 = vshrl.u32 %v1670, 16
  %v1777 = vrot.slane %v1775, 4
  %v1778 = vor.u32 %v1777, %v1773
  %v1779 = vrot.slane %v1778, 4
  %v1781 = vshll.u32 %v1671, 16
  %v1783 = vrot.slane %v1781, 5
  %v1784 = vsel %vm857, %v1779, %v1783
  %v1785 = vshrl.u32 %v1671, 16
  %v1787 = vrot.slane %v1785, 4
  %v1788 = vor.u32 %v1787, %v1783
  %v1789 = vrot.slane %v1788, 4
  %v1791 = vshll.u32 %v1672, 16
  %v1793 = vrot.slane %v1791, 5
  %v1794 = vsel %vm857, %v1789, %v1793
  %v1795 = vshrl.u32 %v1672, 16
  %v1797 = vrot.slane %v1795, 4
  %v1798 = vor.u32 %v1797, %v1793
  %v1799 = vrot.slane %v1798, 4
  %v1801 = vshll.u32 %v1673, 16
  %v1803 = vrot.slane %v1801, 5
  %v1804 = vsel %vm857, %v1799, %v1803
  %v1805 = vshrl.u32 %v1673, 16
  %v1807 = vrot.slane %v1805, 4
  %v1808 = vor.u32 %v1807, %v1803
  %v1809 = vrot.slane %v1808, 4
  %v1811 = vshll.u32 %v1674, 16
  %v1813 = vrot.slane %v1811, 5
  %v1814 = vsel %vm857, %v1809, %v1813
  %v1815 = vshrl.u32 %v1674, 16
  %v1817 = vrot.slane %v1815, 4
  %v1818 = vor.u32 %v1817, %v1813
  %v1819 = vrot.slane %v1818, 4
  %v1821 = vshll.u32 %v1675, 16
  %v1823 = vrot.slane %v1821, 5
  %v1824 = vsel %vm857, %v1819, %v1823
  %v1825 = vshrl.u32 %v1675, 16
  %v1827 = vrot.slane %v1825, 4
  %v1828 = vor.u32 %v1827, %v1823
  %v1829 = vrot.slane %v1828, 4
  %v1831 = vshll.u32 %v1676, 16
  %v1833 = vrot.slane %v1831, 5
  %v1834 = vsel %vm857, %v1829, %v1833
  %v1835 = vshrl.u32 %v1676, 16
  %v1837 = vrot.slane %v1835, 4
  %v1838 = vor.u32 %v1837, %v1833
  %v1839 = vrot.slane %v1838, 4
  %v1841 = vshll.u32 %v1677, 16
  %v1843 = vrot.slane %v1841, 5
  %v1844 = vsel %vm857, %v1839, %v1843
  %v1845 = vshrl.u32 %v1677, 16
  %v1847 = vrot.slane %v1845, 4
  %v1848 = vor.u32 %v1847, %v1843
  %v1849 = vrot.slane %v1848, 4
  %v1851 = vshll.u32 %v1678, 16
  %v1853 = vrot.slane %v1851, 5
  %v1854 = vsel %vm857, %v1849, %v1853
  %v1855 = vshrl.u32 %v1678, 16
  %v1857 = vrot.slane %v1855, 4
  %v1858 = vor.u32 %v1857, %v1853
  %v1859 = vrot.slane %v1858, 4
  %1860 = vrot.lane.b32.xlu0 %v1724, 64
  %v1861 = vpop.permute.xlu0 %1860
  %1862 = vrot.lane.b32.xlu0 %v1734, 64
  %v1863 = vpop.permute.xlu0 %1862
  %1864 = vrot.lane.b32.xlu0 %v1744, 64
  %v1865 = vpop.permute.xlu0 %1864
  %1866 = vrot.lane.b32.xlu0 %v1754, 64
  %v1867 = vpop.permute.xlu0 %1866
  %1868 = vrot.lane.b32.xlu0 %v1764, 64
  %v1869 = vpop.permute.xlu0 %1868
  %1870 = vrot.lane.b32.xlu0 %v1774, 64
  %v1871 = vpop.permute.xlu0 %1870
  %1872 = vrot.lane.b32.xlu0 %v1784, 64
  %v1873 = vpop.permute.xlu0 %1872
  %1874 = vrot.lane.b32.xlu0 %v1794, 64
  %v1875 = vpop.permute.xlu0 %1874
  %1876 = vrot.lane.b32.xlu0 %v1804, 64
  %v1877 = vpop.permute.xlu0 %1876
  %1878 = vrot.lane.b32.xlu0 %v1814, 64
  %v1879 = vpop.permute.xlu0 %1878
  %1880 = vrot.lane.b32.xlu0 %v1824, 64
  %v1881 = vpop.permute.xlu0 %1880
  %1882 = vrot.lane.b32.xlu0 %v1834, 64
  %v1883 = vpop.permute.xlu0 %1882
  %1884 = vrot.lane.b32.xlu0 %v1844, 64
  %v1885 = vpop.permute.xlu0 %1884
  %1886 = vrot.lane.b32.xlu0 %v1854, 64
  %v1887 = vpop.permute.xlu0 %1886
  %1888 = vrot.lane.b32.xlu0 %v1859, 64
  %v1889 = vpop.permute.xlu0 %1888
  %1905 = vst.msk [vmem:[#allocation3] sm:$0xf] %vm1052, %v1861
  %1906 = vst.msk [vmem:[#allocation3 + $0x8] sm:$0xf] %vm1052, %v1863
  %1907 = vst.msk [vmem:[#allocation3 + $0x10] sm:$0xf] %vm1052, %v1865
  %1908 = vst.msk [vmem:[#allocation3 + $0x18] sm:$0xf] %vm1052, %v1867
  %1909 = vst.msk [vmem:[#allocation3 + $0x20] sm:$0xf] %vm1052, %v1869
  %1910 = vst.msk [vmem:[#allocation3 + $0x28] sm:$0xf] %vm1052, %v1871
  %1911 = vst.msk [vmem:[#allocation3 + $0x30] sm:$0xf] %vm1052, %v1873
  %1912 = vst.msk [vmem:[#allocation3 + $0x38] sm:$0xf] %vm1052, %v1875
  %1913 = vst.msk [vmem:[#allocation3 + $0x40] sm:$0xf] %vm1052, %v1877
  %1914 = vst.msk [vmem:[#allocation3 + $0x48] sm:$0xf] %vm1052, %v1879
  %1915 = vst.msk [vmem:[#allocation3 + $0x50] sm:$0xf] %vm1052, %v1881
  %1916 = vst.msk [vmem:[#allocation3 + $0x58] sm:$0xf] %vm1052, %v1883
  %1917 = vst.msk [vmem:[#allocation3 + $0x60] sm:$0xf] %vm1052, %v1885
  %1918 = vst.msk [vmem:[#allocation3 + $0x68] sm:$0xf] %vm1052, %v1887
  %v1919 = vld [vmem:[#allocation3 + $0x70] sm:$0xf]
  %v1920 = vsel %vm1068, %v1889, %v1919
  %1921 = vst [vmem:[#allocation3 + $0x70] sm:$0xf] %v1920
  %v1922 = vpack.c.bf16 %v1632, %v1631
  %v1924 = vunpack.c.l.b16 %v1922
  %v1925 = vunpack.c.h.b16 %v1922
  %v1926 = vpack.c.b16 %v1924, %v1924
  %v1927 = vpack.c.b16 %v1925, %v1925
  %v1928 = vrot.slane %v1664, 5
  %v1929 = vrot.slane %v1928, 4
  %v1930 = vrot.slane %v1665, 5
  %v1931 = vsel %vm1080, %v1929, %v1930
  %v1932 = vrot.slane %v1930, 4
  %v1933 = vrot.slane %v1666, 5
  %v1934 = vsel %vm1080, %v1932, %v1933
  %v1935 = vrot.slane %v1933, 4
  %v1936 = vrot.slane %v1667, 5
  %v1937 = vsel %vm1080, %v1935, %v1936
  %v1938 = vrot.slane %v1936, 4
  %v1939 = vrot.slane %v1668, 5
  %v1940 = vsel %vm1080, %v1938, %v1939
  %v1941 = vrot.slane %v1939, 4
  %v1942 = vrot.slane %v1669, 5
  %v1943 = vsel %vm1080, %v1941, %v1942
  %v1944 = vrot.slane %v1942, 4
  %v1945 = vrot.slane %v1670, 5
  %v1946 = vsel %vm1080, %v1944, %v1945
  %v1947 = vrot.slane %v1945, 4
  %v1948 = vrot.slane %v1671, 5
  %v1949 = vsel %vm1080, %v1947, %v1948
  %v1950 = vrot.slane %v1948, 4
  %v1951 = vrot.slane %v1672, 5
  %v1952 = vsel %vm1080, %v1950, %v1951
  %v1953 = vrot.slane %v1951, 4
  %v1954 = vrot.slane %v1673, 5
  %v1955 = vsel %vm1080, %v1953, %v1954
  %v1956 = vrot.slane %v1954, 4
  %v1957 = vrot.slane %v1674, 5
  %v1958 = vsel %vm1080, %v1956, %v1957
  %v1959 = vrot.slane %v1957, 4
  %v1960 = vrot.slane %v1675, 5
  %v1961 = vsel %vm1080, %v1959, %v1960
  %v1962 = vrot.slane %v1960, 4
  %v1963 = vrot.slane %v1676, 5
  %v1964 = vsel %vm1080, %v1962, %v1963
  %v1965 = vrot.slane %v1963, 4
  %v1966 = vrot.slane %v1677, 5
  %v1967 = vsel %vm1080, %v1965, %v1966
  %v1968 = vrot.slane %v1966, 4
  %v1969 = vrot.slane %v1926, 5
  %v1970 = vsel %vm1080, %v1968, %v1969
  %v1971 = vrot.slane %v1969, 4
  %v1972 = vrot.slane %v1927, 5
  %v1973 = vsel %vm1080, %v1971, %v1972
  %1989 = vst.msk [vmem:[#allocation3 + $0x4] sm:$0xf] %vm835, %v1931
  %1990 = vst.msk [vmem:[#allocation3 + $0xc] sm:$0xf] %vm835, %v1934
  %1991 = vst.msk [vmem:[#allocation3 + $0x14] sm:$0xf] %vm835, %v1937
  %1992 = vst.msk [vmem:[#allocation3 + $0x1c] sm:$0xf] %vm835, %v1940
  %1993 = vst.msk [vmem:[#allocation3 + $0x24] sm:$0xf] %vm835, %v1943
  %1994 = vst.msk [vmem:[#allocation3 + $0x2c] sm:$0xf] %vm835, %v1946
  %1995 = vst.msk [vmem:[#allocation3 + $0x34] sm:$0xf] %vm835, %v1949
  %1996 = vst.msk [vmem:[#allocation3 + $0x3c] sm:$0xf] %vm835, %v1952
  %1997 = vst.msk [vmem:[#allocation3 + $0x44] sm:$0xf] %vm835, %v1955
  %1998 = vst.msk [vmem:[#allocation3 + $0x4c] sm:$0xf] %vm835, %v1958
  %1999 = vst.msk [vmem:[#allocation3 + $0x54] sm:$0xf] %vm835, %v1961
  %2000 = vst.msk [vmem:[#allocation3 + $0x5c] sm:$0xf] %vm835, %v1964
  %2001 = vst.msk [vmem:[#allocation3 + $0x64] sm:$0xf] %vm835, %v1967
  %2002 = vst.msk [vmem:[#allocation3 + $0x6c] sm:$0xf] %vm835, %v1970
  %v2003 = vld [vmem:[#allocation3 + $0x74] sm:$0xf]
  %v2004 = vsel %vm852, %v1973, %v2003
  %2005 = vst [vmem:[#allocation3 + $0x74] sm:$0xf] %v2004
  %v2006 = vld [vmem:[#allocation3] sm:$0xff]
  %v2007 = vld [vmem:[#allocation3 + $0x8] sm:$0xff]
  %v2008 = vld [vmem:[#allocation3 + $0x10] sm:$0xff]
  %v2009 = vld [vmem:[#allocation3 + $0x18] sm:$0xff]
  %v2010 = vld [vmem:[#allocation3 + $0x20] sm:$0xff]
  %v2011 = vld [vmem:[#allocation3 + $0x28] sm:$0xff]
  %v2012 = vld [vmem:[#allocation3 + $0x30] sm:$0xff]
  %v2013 = vld [vmem:[#allocation3 + $0x38] sm:$0xff]
  %v2014 = vld [vmem:[#allocation3 + $0x40] sm:$0xff]
  %v2015 = vld [vmem:[#allocation3 + $0x48] sm:$0xff]
  %v2016 = vld [vmem:[#allocation3 + $0x50] sm:$0xff]
  %v2017 = vld [vmem:[#allocation3 + $0x58] sm:$0xff]
  %v2018 = vld [vmem:[#allocation3 + $0x60] sm:$0xff]
  %v2019 = vld [vmem:[#allocation3 + $0x68] sm:$0xff]
  %v2020 = vld [vmem:[#allocation3 + $0x70] sm:$0xff]
  %v2021 = vld [vmem:[%s5] sm:$0xf]
  %v2022 = vld [vmem:[%s5 + $0x4] sm:$0xf]
  %v2023 = vld [vmem:[%s5 + $0x8] sm:$0xf]
  %v2024 = vld [vmem:[%s5 + $0xc] sm:$0xf]
  %v2025 = vld [vmem:[%s5 + $0x10] sm:$0xf]
  %v2026 = vld [vmem:[%s5 + $0x14] sm:$0xf]
  %v2027 = vld [vmem:[%s5 + $0x18] sm:$0xf]
  %v2028 = vld [vmem:[%s5 + $0x1c] sm:$0xf]
  %v2029 = vld [vmem:[%s5 + $0x20] sm:$0xf]
  %v2030 = vld [vmem:[%s5 + $0x24] sm:$0xf]
  %v2031 = vld [vmem:[%s5 + $0x28] sm:$0xf]
  %v2032 = vld [vmem:[%s5 + $0x2c] sm:$0xf]
  %v2033 = vld [vmem:[%s5 + $0x30] sm:$0xf]
  %v2034 = vld [vmem:[%s5 + $0x34] sm:$0xf]
  %v2035 = vld [vmem:[%s5 + $0x38] sm:$0xf]
  %v2036 = vld [vmem:[%s5 + $0x3c] sm:$0xf]
  %v2037 = vld [vmem:[%s5 + $0x40] sm:$0xf]
  %v2038 = vld [vmem:[%s5 + $0x44] sm:$0xf]
  %v2039 = vld [vmem:[%s5 + $0x48] sm:$0xf]
  %v2040 = vld [vmem:[%s5 + $0x4c] sm:$0xf]
  %v2041 = vld [vmem:[%s5 + $0x50] sm:$0xf]
  %v2042 = vld [vmem:[%s5 + $0x54] sm:$0xf]
  %v2043 = vld [vmem:[%s5 + $0x58] sm:$0xf]
  %v2044 = vld [vmem:[%s5 + $0x5c] sm:$0xf]
  %v2045 = vld [vmem:[%s6] sm:$0x1]
  %v2047 = vlaneseq
  %v2048 = vshrl.u32 %v2047, 7
  %v2049 = vsub.s32 0, %v2048
  %v2050 = vrot.slane %v2045, %v2049
  %v2067 = vunpack.c.l.b16 %v2006
  %v2068 = vunpack.c.h.b16 %v2006
  %v2069 = vunpack.c.l.b16 %v2007
  %v2070 = vunpack.c.h.b16 %v2007
  %v2071 = vunpack.c.l.b16 %v2008
  %v2072 = vunpack.c.h.b16 %v2008
  %v2073 = vunpack.c.l.b16 %v2009
  %v2074 = vunpack.c.h.b16 %v2009
  %v2075 = vunpack.c.l.b16 %v2010
  %v2076 = vunpack.c.h.b16 %v2010
  %v2077 = vunpack.c.l.b16 %v2011
  %v2078 = vunpack.c.h.b16 %v2011
  %v2079 = vunpack.c.l.b16 %v2012
  %v2080 = vunpack.c.h.b16 %v2012
  %v2081 = vunpack.c.l.b16 %v2013
  %v2082 = vunpack.c.h.b16 %v2013
  %v2083 = vunpack.c.l.b16 %v2014
  %v2084 = vunpack.c.h.b16 %v2014
  %v2085 = vunpack.c.l.b16 %v2015
  %v2086 = vunpack.c.h.b16 %v2015
  %v2087 = vunpack.c.l.b16 %v2016
  %v2088 = vunpack.c.h.b16 %v2016
  %v2089 = vunpack.c.l.b16 %v2017
  %v2090 = vunpack.c.h.b16 %v2017
  %v2091 = vunpack.c.l.b16 %v2018
  %v2092 = vunpack.c.h.b16 %v2018
  %v2093 = vunpack.c.l.b16 %v2019
  %v2094 = vunpack.c.h.b16 %v2019
  %v2095 = vunpack.c.l.b16 %v2020
  %v2096 = vunpack.c.h.b16 %v2020
  %v2097 = vpack.c.b16 %v2069, %v2067
  %v2098 = vpack.c.b16 %v2070, %v2068
  %v2099 = vpack.c.b16 %v2073, %v2071
  %v2100 = vpack.c.b16 %v2074, %v2072
  %v2101 = vpack.c.b16 %v2077, %v2075
  %v2102 = vpack.c.b16 %v2078, %v2076
  %v2103 = vpack.c.b16 %v2081, %v2079
  %v2104 = vpack.c.b16 %v2082, %v2080
  %v2105 = vpack.c.b16 %v2085, %v2083
  %v2106 = vpack.c.b16 %v2086, %v2084
  %v2107 = vpack.c.b16 %v2089, %v2087
  %v2108 = vpack.c.b16 %v2090, %v2088
  %v2109 = vpack.c.b16 %v2093, %v2091
  %v2110 = vpack.c.b16 %v2094, %v2092
  %v2111 = vpack.c.b16 %v2095, %v2095
  %v2112 = vpack.c.b16 %v2096, %v2096
  %v2145 = vunpack.c.l.b16 %v2021
  %v2146 = vunpack.c.l.b16 %v2022
  %v2147 = vunpack.c.l.b16 %v2023
  %v2148 = vunpack.c.l.b16 %v2024
  %v2149 = vunpack.c.l.b16 %v2025
  %v2150 = vunpack.c.l.b16 %v2026
  %v2151 = vunpack.c.l.b16 %v2027
  %v2152 = vunpack.c.l.b16 %v2028
  %v2153 = vunpack.c.l.b16 %v2029
  %v2154 = vunpack.c.l.b16 %v2030
  %v2155 = vunpack.c.l.b16 %v2031
  %v2156 = vunpack.c.l.b16 %v2032
  %v2157 = vunpack.c.l.b16 %v2033
  %v2158 = vunpack.c.l.b16 %v2034
  %v2159 = vunpack.c.l.b16 %v2035
  %v2160 = vunpack.c.l.b16 %v2036
  %v2161 = vunpack.c.l.b16 %v2037
  %v2162 = vunpack.c.l.b16 %v2038
  %v2163 = vunpack.c.l.b16 %v2039
  %v2164 = vunpack.c.l.b16 %v2040
  %v2165 = vunpack.c.l.b16 %v2041
  %v2166 = vunpack.c.l.b16 %v2042
  %v2167 = vunpack.c.l.b16 %v2043
  %v2168 = vunpack.c.l.b16 %v2044
  %v2169 = vpack.c.b16 %v2146, %v2145
  %v2170 = vpack.c.b16 %v2148, %v2147
  %v2171 = vpack.c.b16 %v2150, %v2149
  %v2172 = vpack.c.b16 %v2152, %v2151
  %v2173 = vpack.c.b16 %v2154, %v2153
  %v2174 = vpack.c.b16 %v2156, %v2155
  %v2175 = vpack.c.b16 %v2158, %v2157
  %v2176 = vpack.c.b16 %v2160, %v2159
  %v2177 = vpack.c.b16 %v2162, %v2161
  %v2178 = vpack.c.b16 %v2164, %v2163
  %v2179 = vpack.c.b16 %v2166, %v2165
  %v2180 = vpack.c.b16 %v2168, %v2167
  %v2194 = vsel %vm128, %v2098, 0
  %v2197 = vsel %vm128, %v2100, 0
  %v2200 = vsel %vm128, %v2102, 0
  %v2203 = vsel %vm128, %v2104, 0
  %v2206 = vsel %vm128, %v2106, 0
  %v2209 = vsel %vm128, %v2108, 0
  %v2212 = vsel %vm128, %v2110, 0
  %v2215 = vsel %vm128, %v2112, 0
  %2217 = vmatprep.subr.bf16.mxu0 0
  %2218 = vmatpush1.bf16.msra.mxu0 %v2169
  %2219 = vmatprep.subr.bf16.mxu0 0
  %2220 = vmatpush1.bf16.msra.mxu0 %v2170
  %2221 = vmatprep.subr.bf16.mxu0 0
  %2222 = vmatpush1.bf16.msra.mxu0 %v2171
  %2223 = vmatprep.subr.bf16.mxu0 0
  %2224 = vmatpush1.bf16.msra.mxu0 %v2172
  %2225 = vmatprep.subr.bf16.mxu0 0
  %2226 = vmatpush1.bf16.msra.mxu0 %v2173
  %2227 = vmatprep.subr.bf16.mxu0 0
  %2228 = vmatpush1.bf16.msra.mxu0 %v2174
  %2229 = vmatprep.subr.bf16.mxu0 0
  %2230 = vmatpush1.bf16.msra.mxu0 %v2175
  %2231 = vmatprep.subr.bf16.mxu0 0
  %2232 = vmatpush1.bf16.msra.mxu0 %v2176
  %2233 = vmatprep.subr.bf16.mxu0 0
  %2234 = vmatpush1.bf16.msra.mxu0 %v2177
  %2235 = vmatprep.subr.bf16.mxu0 0
  %2236 = vmatpush1.bf16.msra.mxu0 %v2178
  %2237 = vmatprep.subr.bf16.mxu0 0
  %2238 = vmatpush1.bf16.msra.mxu0 %v2179
  %2239 = vmatprep.subr.bf16.mxu0 0
  %2240 = vmatpush1.bf16.msra.mxu0 %v2180
  %2241 = vmatprep.subr.bf16.mxu0 0
  %2242 = vmatpush1.bf16.msra.mxu0 0
  %2243 = vmatprep.subr.bf16.mxu0 0
  %2244 = vmatpush1.bf16.msra.mxu0 0
  %2245 = vmatprep.subr.bf16.mxu0 0
  %2246 = vmatpush1.bf16.msra.mxu0 0
  %2247 = vmatprep.subr.bf16.mxu0 0
  %2248 = vmatpush1.bf16.msra.mxu0 0
  %2249 = vmatprep.mubr.bf16.mxu0 %v2194
  %2250 = vmatmul.mubr.bf16.gmra.mrb[0].mxu0 %v2097
  %v2251 = vpop.f32.mrb[0].mxu0
  %v2252 = vadd.f32 %v2050, %v2251
  %v2253 = vpop.f32.mrb[0].mxu0
  %v2254 = vpop.f32.mrb[0].mxu0
  %v2255 = vadd.f32 %v2050, %v2254
  %v2256 = vpop.f32.mrb[0].mxu0
  %2257 = vmatprep.mubr.bf16.mxu0 %v2197
  %2258 = vmatmul.mubr.bf16.gmra.mrb[0].mxu0 %v2099
  %v2259 = vpop.f32.mrb[0].mxu0
  %v2260 = vadd.f32 %v2050, %v2259
  %v2261 = vpop.f32.mrb[0].mxu0
  %v2262 = vpop.f32.mrb[0].mxu0
  %v2263 = vadd.f32 %v2050, %v2262
  %v2264 = vpop.f32.mrb[0].mxu0
  %2265 = vmatprep.mubr.bf16.mxu0 %v2200
  %2266 = vmatmul.mubr.bf16.gmra.mrb[0].mxu0 %v2101
  %v2267 = vpop.f32.mrb[0].mxu0
  %v2268 = vadd.f32 %v2050, %v2267
  %v2269 = vpop.f32.mrb[0].mxu0
  %v2270 = vpop.f32.mrb[0].mxu0
  %v2271 = vadd.f32 %v2050, %v2270
  %v2272 = vpop.f32.mrb[0].mxu0
  %2273 = vmatprep.mubr.bf16.mxu0 %v2203
  %2274 = vmatmul.mubr.bf16.gmra.mrb[0].mxu0 %v2103
  %v2275 = vpop.f32.mrb[0].mxu0
  %v2276 = vadd.f32 %v2050, %v2275
  %v2277 = vpop.f32.mrb[0].mxu0
  %v2278 = vpop.f32.mrb[0].mxu0
  %v2279 = vadd.f32 %v2050, %v2278
  %v2280 = vpop.f32.mrb[0].mxu0
  %2281 = vmatprep.mubr.bf16.mxu0 %v2206
  %2282 = vmatmul.mubr.bf16.gmra.mrb[0].mxu0 %v2105
  %v2283 = vpop.f32.mrb[0].mxu0
  %v2284 = vadd.f32 %v2050, %v2283
  %v2285 = vpop.f32.mrb[0].mxu0
  %v2286 = vpop.f32.mrb[0].mxu0
  %v2287 = vadd.f32 %v2050, %v2286
  %v2288 = vpop.f32.mrb[0].mxu0
  %2289 = vmatprep.mubr.bf16.mxu0 %v2209
  %2290 = vmatmul.mubr.bf16.gmra.mrb[0].mxu0 %v2107
  %v2291 = vpop.f32.mrb[0].mxu0
  %v2292 = vadd.f32 %v2050, %v2291
  %v2293 = vpop.f32.mrb[0].mxu0
  %v2294 = vpop.f32.mrb[0].mxu0
  %v2295 = vadd.f32 %v2050, %v2294
  %v2296 = vpop.f32.mrb[0].mxu0
  %2297 = vmatprep.mubr.bf16.mxu0 %v2212
  %2298 = vmatmul.mubr.bf16.gmra.mrb[0].mxu0 %v2109
  %v2299 = vpop.f32.mrb[0].mxu0
  %v2300 = vadd.f32 %v2050, %v2299
  %v2301 = vpop.f32.mrb[0].mxu0
  %v2302 = vpop.f32.mrb[0].mxu0
  %v2303 = vadd.f32 %v2050, %v2302
  %v2304 = vpop.f32.mrb[0].mxu0
  %2305 = vmatprep.mubr.bf16.mxu0 %v2215
  %2306 = vmatmul.mubr.bf16.gmra.mrb[0].mxu0 %v2111
  %v2307 = vpop.f32.mrb[0].mxu0
  %v2308 = vadd.f32 %v2050, %v2307
  %v2309 = vpop.f32.mrb[0].mxu0
  %v2310 = vpop.f32.mrb[0].mxu0
  %v2311 = vpop.f32.mrb[0].mxu0
  %2312 = vdwg.mxu0
  %2313 = vst.msk [vmem:[%s576] sm:$0xff] %vm128, %v2252
  %2314 = vst.msk [vmem:[%s576 + $0x8] sm:$0xff] %vm128, %v2255
  %2315 = vst.msk [vmem:[%s576 + $0x10] sm:$0xff] %vm128, %v2260
  %2316 = vst.msk [vmem:[%s576 + $0x18] sm:$0xff] %vm128, %v2263
  %2317 = vst.msk [vmem:[%s576 + $0x20] sm:$0xff] %vm128, %v2268
  %2318 = vst.msk [vmem:[%s576 + $0x28] sm:$0xff] %vm128, %v2271
  %2319 = vst.msk [vmem:[%s576 + $0x30] sm:$0xff] %vm128, %v2276
  %2320 = vst.msk [vmem:[%s576 + $0x38] sm:$0xff] %vm128, %v2279
  %2321 = vst.msk [vmem:[%s576 + $0x40] sm:$0xff] %vm128, %v2284
  %2322 = vst.msk [vmem:[%s576 + $0x48] sm:$0xff] %vm128, %v2287
  %2323 = vst.msk [vmem:[%s576 + $0x50] sm:$0xff] %vm128, %v2292
  %2324 = vst.msk [vmem:[%s576 + $0x58] sm:$0xff] %vm128, %v2295
  %2325 = vst.msk [vmem:[%s576 + $0x60] sm:$0xff] %vm128, %v2300
  %2326 = vst.msk [vmem:[%s576 + $0x68] sm:$0xff] %vm128, %v2303
  %2327 = vst.msk [vmem:[%s576 + $0x70] sm:$0x7f] %vm1480, %v2308
  %v2328 = vsel %vm128, %v2252, 0.0
  %v2329 = vsel %vm128, %v2255, 0.0
  %v2330 = vadd.f32 %v2328, %v2329
  %v2331 = vsel %vm128, %v2260, 0.0
  %v2332 = vadd.f32 %v2330, %v2331
  %v2333 = vsel %vm128, %v2263, 0.0
  %v2334 = vadd.f32 %v2332, %v2333
  %v2335 = vsel %vm128, %v2268, 0.0
  %v2336 = vadd.f32 %v2334, %v2335
  %v2337 = vsel %vm128, %v2271, 0.0
  %v2338 = vadd.f32 %v2336, %v2337
  %v2339 = vsel %vm128, %v2276, 0.0
  %v2340 = vadd.f32 %v2338, %v2339
  %v2341 = vsel %vm128, %v2279, 0.0
  %v2342 = vadd.f32 %v2340, %v2341
  %v2343 = vsel %vm128, %v2284, 0.0
  %v2344 = vadd.f32 %v2342, %v2343
  %v2345 = vsel %vm128, %v2287, 0.0
  %v2346 = vadd.f32 %v2344, %v2345
  %v2347 = vsel %vm128, %v2292, 0.0
  %v2348 = vadd.f32 %v2346, %v2347
  %v2349 = vsel %vm128, %v2295, 0.0
  %v2350 = vadd.f32 %v2348, %v2349
  %v2351 = vsel %vm128, %v2300, 0.0
  %v2352 = vadd.f32 %v2350, %v2351
  %v2353 = vsel %vm128, %v2303, 0.0
  %v2354 = vadd.f32 %v2352, %v2353
  %v2355 = vsel %vm1480, %v2308, 0.0
  %v2356 = vadd.f32 %v2354, %v2355
  %v2357 = vrot.slane %v2356, 4
  %v2358 = vadd.f32 %v2356, %v2357
  %v2359 = vrot.slane %v2358, 2
  %v2360 = vadd.f32 %v2358, %v2359
  %v2361 = vrot.slane %v2360, 1
  %v2362 = vadd.f32 %v2360, %v2361
  %v2363 = vadd.f32 %v1517, %v2362
  %v2364 = vmul.f32 %v2252, %v2252
  %v2365 = vmul.f32 %v2255, %v2255
  %v2366 = vmul.f32 %v2260, %v2260
  %v2367 = vmul.f32 %v2263, %v2263
  %v2368 = vmul.f32 %v2268, %v2268
  %v2369 = vmul.f32 %v2271, %v2271
  %v2370 = vmul.f32 %v2276, %v2276
  %v2371 = vmul.f32 %v2279, %v2279
  %v2372 = vmul.f32 %v2284, %v2284
  %v2373 = vmul.f32 %v2287, %v2287
  %v2374 = vmul.f32 %v2292, %v2292
  %v2375 = vmul.f32 %v2295, %v2295
  %v2376 = vmul.f32 %v2300, %v2300
  %v2377 = vmul.f32 %v2303, %v2303
  %v2378 = vmul.f32 %v2308, %v2308
  %v2379 = vsel %vm128, %v2364, 0.0
  %v2380 = vsel %vm128, %v2365, 0.0
  %v2381 = vadd.f32 %v2379, %v2380
  %v2382 = vsel %vm128, %v2366, 0.0
  %v2383 = vadd.f32 %v2381, %v2382
  %v2384 = vsel %vm128, %v2367, 0.0
  %v2385 = vadd.f32 %v2383, %v2384
  %v2386 = vsel %vm128, %v2368, 0.0
  %v2387 = vadd.f32 %v2385, %v2386
  %v2388 = vsel %vm128, %v2369, 0.0
  %v2389 = vadd.f32 %v2387, %v2388
  %v2390 = vsel %vm128, %v2370, 0.0
  %v2391 = vadd.f32 %v2389, %v2390
  %v2392 = vsel %vm128, %v2371, 0.0
  %v2393 = vadd.f32 %v2391, %v2392
  %v2394 = vsel %vm128, %v2372, 0.0
  %v2395 = vadd.f32 %v2393, %v2394
  %v2396 = vsel %vm128, %v2373, 0.0
  %v2397 = vadd.f32 %v2395, %v2396
  %v2398 = vsel %vm128, %v2374, 0.0
  %v2399 = vadd.f32 %v2397, %v2398
  %v2400 = vsel %vm128, %v2375, 0.0
  %v2401 = vadd.f32 %v2399, %v2400
  %v2402 = vsel %vm128, %v2376, 0.0
  %v2403 = vadd.f32 %v2401, %v2402
  %v2404 = vsel %vm128, %v2377, 0.0
  %v2405 = vadd.f32 %v2403, %v2404
  %v2406 = vsel %vm1480, %v2378, 0.0
  %v2407 = vadd.f32 %v2405, %v2406
  %v2408 = vrot.slane %v2407, 4
  %v2409 = vadd.f32 %v2407, %v2408
  %v2410 = vrot.slane %v2409, 2
  %v2411 = vadd.f32 %v2409, %v2410
  %v2412 = vrot.slane %v2411, 1
  %v2413 = vadd.f32 %v2411, %v2412
  %v2414 = vadd.f32 %v1568, %v2413
  %v2415 = vld [vmem:[%s7] sm:$0x1]
  %v2416 = vld [vmem:[%s8] sm:$0x1]
  %v2417 = vrcp.pop 238.0
  %v2418 = vmul.f32 %v2363, %v2417
  %v2419 = vmul.f32 %v2414, %v2417
  %v2420 = vmul.f32 %v2418, %v2418
  %v2421 = vsub.f32 %v2419, %v2420
  %v2422 = vmax.f32 %v2421, 0.0
  %v2423 = vadd.f32 %v2422, 1e-05
  %v2424 = vrsqrt.pop %v2423
  %v2425 = vmul.f32 %v2415, %v2424
  %v2426 = vmul.f32 %v2418, %v2425
  %v2427 = vsub.f32 %v2416, %v2426
  %v2428 = vld [vmem:[#allocation2] sm:$0xff]
  %v2429 = vld [vmem:[#allocation2 + $0x8] sm:$0xff]
  %v2430 = vld [vmem:[#allocation2 + $0x10] sm:$0xff]
  %v2431 = vld [vmem:[#allocation2 + $0x18] sm:$0xff]
  %v2432 = vld [vmem:[#allocation2 + $0x20] sm:$0xff]
  %v2433 = vld [vmem:[#allocation2 + $0x28] sm:$0xff]
  %v2434 = vld [vmem:[#allocation2 + $0x30] sm:$0xff]
  %v2435 = vld [vmem:[#allocation2 + $0x38] sm:$0xff]
  %v2436 = vld [vmem:[#allocation2 + $0x40] sm:$0xff]
  %v2437 = vld [vmem:[#allocation2 + $0x48] sm:$0xff]
  %v2438 = vld [vmem:[#allocation2 + $0x50] sm:$0xff]
  %v2439 = vld [vmem:[#allocation2 + $0x58] sm:$0xff]
  %v2440 = vld [vmem:[#allocation2 + $0x60] sm:$0xff]
  %v2441 = vld [vmem:[#allocation2 + $0x68] sm:$0xff]
  %v2442 = vld [vmem:[#allocation2 + $0x70] sm:$0x7f]
  %v2444 = vlaneseq
  %v2445 = vshrl.u32 %v2444, 7
  %v2446 = vsub.s32 0, %v2445
  %v2447 = vrot.slane %v2425, %v2446
  %v2449 = vmul.f32 %v2428, %v2447
  %v2450 = vmul.f32 %v2429, %v2447
  %v2451 = vmul.f32 %v2430, %v2447
  %v2452 = vmul.f32 %v2431, %v2447
  %v2453 = vmul.f32 %v2432, %v2447
  %v2454 = vmul.f32 %v2433, %v2447
  %v2455 = vmul.f32 %v2434, %v2447
  %v2456 = vmul.f32 %v2435, %v2447
  %v2457 = vmul.f32 %v2436, %v2447
  %v2458 = vmul.f32 %v2437, %v2447
  %v2459 = vmul.f32 %v2438, %v2447
  %v2460 = vmul.f32 %v2439, %v2447
  %v2461 = vmul.f32 %v2440, %v2447
  %v2462 = vmul.f32 %v2441, %v2447
  %v2463 = vmul.f32 %v2442, %v2447
  %v2465 = vlaneseq
  %v2466 = vshrl.u32 %v2465, 7
  %v2467 = vsub.s32 0, %v2466
  %v2468 = vrot.slane %v2427, %v2467
  %v2470 = vadd.f32 %v2449, %v2468
  %v2471 = vadd.f32 %v2450, %v2468
  %v2472 = vadd.f32 %v2451, %v2468
  %v2473 = vadd.f32 %v2452, %v2468
  %v2474 = vadd.f32 %v2453, %v2468
  %v2475 = vadd.f32 %v2454, %v2468
  %v2476 = vadd.f32 %v2455, %v2468
  %v2477 = vadd.f32 %v2456, %v2468
  %v2478 = vadd.f32 %v2457, %v2468
  %v2479 = vadd.f32 %v2458, %v2468
  %v2480 = vadd.f32 %v2459, %v2468
  %v2481 = vadd.f32 %v2460, %v2468
  %v2482 = vadd.f32 %v2461, %v2468
  %v2483 = vadd.f32 %v2462, %v2468
  %v2484 = vadd.f32 %v2463, %v2468
  %v2485 = vmax.f32 %v2470, 0.0
  %v2486 = vmax.f32 %v2471, 0.0
  %v2487 = vmax.f32 %v2472, 0.0
  %v2488 = vmax.f32 %v2473, 0.0
  %v2489 = vmax.f32 %v2474, 0.0
  %v2490 = vmax.f32 %v2475, 0.0
  %v2491 = vmax.f32 %v2476, 0.0
  %v2492 = vmax.f32 %v2477, 0.0
  %v2493 = vmax.f32 %v2478, 0.0
  %v2494 = vmax.f32 %v2479, 0.0
  %v2495 = vmax.f32 %v2480, 0.0
  %v2496 = vmax.f32 %v2481, 0.0
  %v2497 = vmax.f32 %v2482, 0.0
  %v2498 = vmax.f32 %v2483, 0.0
  %v2499 = vmax.f32 %v2484, 0.0
  %2500 = vst.msk [vmem:[%s9] sm:$0xff] %vm128, %v2485
  %2501 = vst.msk [vmem:[%s9 + $0x8] sm:$0xff] %vm128, %v2486
  %2502 = vst.msk [vmem:[%s9 + $0x10] sm:$0xff] %vm128, %v2487
  %2503 = vst.msk [vmem:[%s9 + $0x18] sm:$0xff] %vm128, %v2488
  %2504 = vst.msk [vmem:[%s9 + $0x20] sm:$0xff] %vm128, %v2489
  %2505 = vst.msk [vmem:[%s9 + $0x28] sm:$0xff] %vm128, %v2490
  %2506 = vst.msk [vmem:[%s9 + $0x30] sm:$0xff] %vm128, %v2491
  %2507 = vst.msk [vmem:[%s9 + $0x38] sm:$0xff] %vm128, %v2492
  %2508 = vst.msk [vmem:[%s9 + $0x40] sm:$0xff] %vm128, %v2493
  %2509 = vst.msk [vmem:[%s9 + $0x48] sm:$0xff] %vm128, %v2494
  %2510 = vst.msk [vmem:[%s9 + $0x50] sm:$0xff] %vm128, %v2495
  %2511 = vst.msk [vmem:[%s9 + $0x58] sm:$0xff] %vm128, %v2496
  %2512 = vst.msk [vmem:[%s9 + $0x60] sm:$0xff] %vm128, %v2497
  %2513 = vst.msk [vmem:[%s9 + $0x68] sm:$0xff] %vm128, %v2498
  %2514 = vst.msk [vmem:[%s9 + $0x70] sm:$0x7f] %vm1480, %v2499
  %v2515 = vld [vmem:[%s576] sm:$0xff]
  %v2516 = vld [vmem:[%s576 + $0x8] sm:$0xff]
  %v2517 = vld [vmem:[%s576 + $0x10] sm:$0xff]
  %v2518 = vld [vmem:[%s576 + $0x18] sm:$0xff]
  %v2519 = vld [vmem:[%s576 + $0x20] sm:$0xff]
  %v2520 = vld [vmem:[%s576 + $0x28] sm:$0xff]
  %v2521 = vld [vmem:[%s576 + $0x30] sm:$0xff]
  %v2522 = vld [vmem:[%s576 + $0x38] sm:$0xff]
  %v2523 = vld [vmem:[%s576 + $0x40] sm:$0xff]
  %v2524 = vld [vmem:[%s576 + $0x48] sm:$0xff]
  %v2525 = vld [vmem:[%s576 + $0x50] sm:$0xff]
  %v2526 = vld [vmem:[%s576 + $0x58] sm:$0xff]
  %v2527 = vld [vmem:[%s576 + $0x60] sm:$0xff]
  %v2528 = vld [vmem:[%s576 + $0x68] sm:$0xff]
  %v2529 = vld [vmem:[%s576 + $0x70] sm:$0x7f]
  %v2530 = vmul.f32 %v2515, %v2447
  %v2531 = vmul.f32 %v2516, %v2447
  %v2532 = vmul.f32 %v2517, %v2447
  %v2533 = vmul.f32 %v2518, %v2447
  %v2534 = vmul.f32 %v2519, %v2447
  %v2535 = vmul.f32 %v2520, %v2447
  %v2536 = vmul.f32 %v2521, %v2447
  %v2537 = vmul.f32 %v2522, %v2447
  %v2538 = vmul.f32 %v2523, %v2447
  %v2539 = vmul.f32 %v2524, %v2447
  %v2540 = vmul.f32 %v2525, %v2447
  %v2541 = vmul.f32 %v2526, %v2447
  %v2542 = vmul.f32 %v2527, %v2447
  %v2543 = vmul.f32 %v2528, %v2447
  %v2544 = vmul.f32 %v2529, %v2447
  %v2545 = vadd.f32 %v2530, %v2468
  %v2546 = vadd.f32 %v2531, %v2468
  %v2547 = vadd.f32 %v2532, %v2468
  %v2548 = vadd.f32 %v2533, %v2468
  %v2549 = vadd.f32 %v2534, %v2468
  %v2550 = vadd.f32 %v2535, %v2468
  %v2551 = vadd.f32 %v2536, %v2468
  %v2552 = vadd.f32 %v2537, %v2468
  %v2553 = vadd.f32 %v2538, %v2468
  %v2554 = vadd.f32 %v2539, %v2468
  %v2555 = vadd.f32 %v2540, %v2468
  %v2556 = vadd.f32 %v2541, %v2468
  %v2557 = vadd.f32 %v2542, %v2468
  %v2558 = vadd.f32 %v2543, %v2468
  %v2559 = vadd.f32 %v2544, %v2468
  %v2560 = vmax.f32 %v2545, 0.0
  %v2561 = vmax.f32 %v2546, 0.0
  %v2562 = vmax.f32 %v2547, 0.0
  %v2563 = vmax.f32 %v2548, 0.0
  %v2564 = vmax.f32 %v2549, 0.0
  %v2565 = vmax.f32 %v2550, 0.0
  %v2566 = vmax.f32 %v2551, 0.0
  %v2567 = vmax.f32 %v2552, 0.0
  %v2568 = vmax.f32 %v2553, 0.0
  %v2569 = vmax.f32 %v2554, 0.0
  %v2570 = vmax.f32 %v2555, 0.0
  %v2571 = vmax.f32 %v2556, 0.0
  %v2572 = vmax.f32 %v2557, 0.0
  %v2573 = vmax.f32 %v2558, 0.0
  %v2574 = vmax.f32 %v2559, 0.0
  %s2575 = scalar_lea.vmem %s9, 120
  %2576 = vst.msk [vmem:[%s2575] sm:$0xff] %vm128, %v2560
  %2577 = vst.msk [vmem:[%s2575 + $0x8] sm:$0xff] %vm128, %v2561
  %2578 = vst.msk [vmem:[%s2575 + $0x10] sm:$0xff] %vm128, %v2562
  %2579 = vst.msk [vmem:[%s2575 + $0x18] sm:$0xff] %vm128, %v2563
  %2580 = vst.msk [vmem:[%s2575 + $0x20] sm:$0xff] %vm128, %v2564
  %2581 = vst.msk [vmem:[%s2575 + $0x28] sm:$0xff] %vm128, %v2565
  %2582 = vst.msk [vmem:[%s2575 + $0x30] sm:$0xff] %vm128, %v2566
  %2583 = vst.msk [vmem:[%s2575 + $0x38] sm:$0xff] %vm128, %v2567
  %2584 = vst.msk [vmem:[%s2575 + $0x40] sm:$0xff] %vm128, %v2568
  %2585 = vst.msk [vmem:[%s2575 + $0x48] sm:$0xff] %vm128, %v2569
  %2586 = vst.msk [vmem:[%s2575 + $0x50] sm:$0xff] %vm128, %v2570
  %2587 = vst.msk [vmem:[%s2575 + $0x58] sm:$0xff] %vm128, %v2571
  %2588 = vst.msk [vmem:[%s2575 + $0x60] sm:$0xff] %vm128, %v2572
  %2589 = vst.msk [vmem:[%s2575 + $0x68] sm:$0xff] %vm128, %v2573
  %2590 = vst.msk [vmem:[%s2575 + $0x70] sm:$0x7f] %vm1480, %v2574
  // Predicated region
  $region38: #{kan_res_wide_x2.9} parent=0 // pred_check
    _
  $region39: #{kan_res_wide_x2.9} parent=0 // pred_check_branch
    %2592 = sbr.rel (0) target = $region41
  $region40: #{kan_res_wide_x2.9} parent=0 // pred_region
    _
  $region41: #{kan_res_wide_x2.9} parent=0 // pred_fallthru
    _
  // Predicated region
  $region42: #{kan_res_wide_x2.9} parent=0 // pred_check
    _
  $region43: #{kan_res_wide_x2.9} parent=0 // pred_check_branch
    %2594 = sbr.rel (0) target = $region45
  $region44: #{kan_res_wide_x2.9} parent=0 // pred_region
    _
  $region45: #{kan_res_wide_x2.9} parent=0 // pred_fallthru
    _

// kernel: kan_res_wide_x2.10
$region0: #{kan_res_wide_x2.10}
  #allocation0 [shape = 'u32[]', space=smem, size = 0x4, offset = 0x4, fixed_abs, tag = 'smem constant byte address 0x4 - core index']
  #allocation1 [shape = 'u32[144,128]{1,0:T(1,128)}', space=vmem, size = 0x12000, scoped, tag = 'internal scratch']
  #allocation2 [shape = 'f32[2,59,64]{2,1,0:T(8,128)}', space=vmem, size = 0x10000, scoped, tag = 'scratch operand']
  #allocation3 [shape = 'bf16[112,1024]{1,0:T(16,128)(2,1)}', space=vmem, size = 0x38000, scoped, tag = 'scratch operand']
  #allocation4 [shape = 'f32[112,256]{1,0:T(8,128)}', space=vmem, size = 0x1c000, scoped, tag = 'scratch operand']
  %s0 = inlined_call_operand.vmem [shape: f32[2,59,64], index: 0, kind: input, shape index: {}]
  %s1 = inlined_call_operand.vmem [shape: bf16[1024,256], index: 1, kind: input, shape index: {}]
  %s2 = inlined_call_operand.vmem [shape: f32[1,64], index: 2, kind: input, shape index: {}]
  %s3 = inlined_call_operand.vmem [shape: f32[1,64], index: 3, kind: input, shape index: {}]
  %s4 = inlined_call_operand.vmem [shape: f32[1,64], index: 4, kind: input, shape index: {}]
  %s5 = inlined_call_operand.vmem [shape: bf16[1024,256], index: 5, kind: input, shape index: {}]
  %s6 = inlined_call_operand.vmem [shape: f32[1,64], index: 6, kind: input, shape index: {}]
  %s7 = inlined_call_operand.vmem [shape: f32[1,64], index: 7, kind: input, shape index: {}]
  %s8 = inlined_call_operand.vmem [shape: f32[1,64], index: 8, kind: input, shape index: {}]
  %s9 = inlined_call_operand.vmem [shape: f32[2,59,64], index: 9, kind: output, shape index: {}]
  %s10 = sld [smem:[#allocation0]]
  $region46: #{kan_res_wide_x2.10} parent=0
    _
  %s12 = ssub.s32 1, %s10
  %s13 = scalar_select 0, %s12, %s10
  // Predicated region
  $region2: #{kan_res_wide_x2.10} parent=0 // pred_check
    _
  $region3: #{kan_res_wide_x2.10} parent=0 // pred_check_branch
    %15 = sbr.rel (0) target = $region5
  $region4: #{kan_res_wide_x2.10} parent=0 // pred_region
    _
  $region5: #{kan_res_wide_x2.10} parent=0 // pred_fallthru
    _
  // Predicated region
  $region6: #{kan_res_wide_x2.10} parent=0 // pred_check
    _
  $region7: #{kan_res_wide_x2.10} parent=0 // pred_check_branch
    %17 = sbr.rel (0) target = $region9
  $region8: #{kan_res_wide_x2.10} parent=0 // pred_region
    _
  $region9: #{kan_res_wide_x2.10} parent=0 // pred_fallthru
    _
  // Predicated region
  $region10: #{kan_res_wide_x2.10} parent=0 // pred_check
    _
  $region11: #{kan_res_wide_x2.10} parent=0 // pred_check_branch
    %19 = sbr.rel (0) target = $region13
  $region12: #{kan_res_wide_x2.10} parent=0 // pred_region
    _
  $region13: #{kan_res_wide_x2.10} parent=0 // pred_fallthru
    _
  // Predicated region
  $region14: #{kan_res_wide_x2.10} parent=0 // pred_check
    _
  $region15: #{kan_res_wide_x2.10} parent=0 // pred_check_branch
    %21 = sbr.rel (0) target = $region17
  $region16: #{kan_res_wide_x2.10} parent=0 // pred_region
    _
  $region17: #{kan_res_wide_x2.10} parent=0 // pred_fallthru
    _
  // Predicated region
  $region18: #{kan_res_wide_x2.10} parent=0 // pred_check
    _
  $region19: #{kan_res_wide_x2.10} parent=0 // pred_check_branch
    %23 = sbr.rel (0) target = $region21
  $region20: #{kan_res_wide_x2.10} parent=0 // pred_region
    _
  $region21: #{kan_res_wide_x2.10} parent=0 // pred_fallthru
    _
  // Predicated region
  $region22: #{kan_res_wide_x2.10} parent=0 // pred_check
    _
  $region23: #{kan_res_wide_x2.10} parent=0 // pred_check_branch
    %25 = sbr.rel (0) target = $region25
  $region24: #{kan_res_wide_x2.10} parent=0 // pred_region
    _
  $region25: #{kan_res_wide_x2.10} parent=0 // pred_fallthru
    _
  // Predicated region
  $region26: #{kan_res_wide_x2.10} parent=0 // pred_check
    _
  $region27: #{kan_res_wide_x2.10} parent=0 // pred_check_branch
    %27 = sbr.rel (0) target = $region29
  $region28: #{kan_res_wide_x2.10} parent=0 // pred_region
    _
  $region29: #{kan_res_wide_x2.10} parent=0 // pred_fallthru
    _
  // Predicated region
  $region30: #{kan_res_wide_x2.10} parent=0 // pred_check
    _
  $region31: #{kan_res_wide_x2.10} parent=0 // pred_check_branch
    %29 = sbr.rel (0) target = $region33
  $region32: #{kan_res_wide_x2.10} parent=0 // pred_region
    _
  $region33: #{kan_res_wide_x2.10} parent=0 // pred_fallthru
    _
  // Predicated region
  $region34: #{kan_res_wide_x2.10} parent=0 // pred_check
    _
  $region35: #{kan_res_wide_x2.10} parent=0 // pred_check_branch
    %31 = sbr.rel (0) target = $region37
  $region36: #{kan_res_wide_x2.10} parent=0 // pred_region
    _
  $region37: #{kan_res_wide_x2.10} parent=0 // pred_fallthru
    _
  %33 = vst [vmem:[#allocation3] sm:$0xff] 0
  %34 = vst [vmem:[#allocation3 + $0x8] sm:$0xff] 0
  %35 = vst [vmem:[#allocation3 + $0x10] sm:$0xff] 0
  %36 = vst [vmem:[#allocation3 + $0x18] sm:$0xff] 0
  %37 = vst [vmem:[#allocation3 + $0x20] sm:$0xff] 0
  %38 = vst [vmem:[#allocation3 + $0x28] sm:$0xff] 0
  %39 = vst [vmem:[#allocation3 + $0x30] sm:$0xff] 0
  %40 = vst [vmem:[#allocation3 + $0x38] sm:$0xff] 0
  %41 = vst [vmem:[#allocation3 + $0x40] sm:$0xf] 0
  %42 = vst [vmem:[#allocation3 + $0x48] sm:$0xf] 0
  %43 = vst [vmem:[#allocation3 + $0x50] sm:$0xf] 0
  %44 = vst [vmem:[#allocation3 + $0x58] sm:$0xf] 0
  %45 = vst [vmem:[#allocation3 + $0x60] sm:$0xf] 0
  %46 = vst [vmem:[#allocation3 + $0x68] sm:$0xf] 0
  %47 = vst [vmem:[#allocation3 + $0x70] sm:$0xf] 0
  %48 = vst [vmem:[#allocation3 + $0x78] sm:$0xf] 0
  %vm49 = vcmask 1047557
  %vm50 = vsmask.f32 7958
  %vm51 = vmand %vm49, %vm50
  %v52 = vld [vmem:[#allocation3 + $0xc0] sm:$0xe0]
  %v53 = vsel %vm51, 0, %v52
  %54 = vst [vmem:[#allocation3 + $0xc0] sm:$0xe0] %v53
  %v55 = vld [vmem:[#allocation3 + $0xc8] sm:$0xe0]
  %v56 = vsel %vm51, 0, %v55
  %57 = vst [vmem:[#allocation3 + $0xc8] sm:$0xe0] %v56
  %v58 = vld [vmem:[#allocation3 + $0xd0] sm:$0xe0]
  %v59 = vsel %vm51, 0, %v58
  %60 = vst [vmem:[#allocation3 + $0xd0] sm:$0xe0] %v59
  %v61 = vld [vmem:[#allocation3 + $0xd8] sm:$0xe0]
  %v62 = vsel %vm51, 0, %v61
  %63 = vst [vmem:[#allocation3 + $0xd8] sm:$0xe0] %v62
  %v64 = vld [vmem:[#allocation3 + $0xe0] sm:$0xe0]
  %v65 = vsel %vm51, 0, %v64
  %66 = vst [vmem:[#allocation3 + $0xe0] sm:$0xe0] %v65
  %v67 = vld [vmem:[#allocation3 + $0xe8] sm:$0xe0]
  %v68 = vsel %vm51, 0, %v67
  %69 = vst [vmem:[#allocation3 + $0xe8] sm:$0xe0] %v68
  %v70 = vld [vmem:[#allocation3 + $0xf0] sm:$0xe0]
  %v71 = vsel %vm51, 0, %v70
  %72 = vst [vmem:[#allocation3 + $0xf0] sm:$0xe0] %v71
  %v73 = vld [vmem:[#allocation3 + $0xf8] sm:$0xe0]
  %v74 = vsel %vm51, 0, %v73
  %75 = vst [vmem:[#allocation3 + $0xf8] sm:$0xe0] %v74
  %76 = vst [vmem:[#allocation3 + $0x100] sm:$0xff] 0
  %77 = vst [vmem:[#allocation3 + $0x108] sm:$0xff] 0
  %78 = vst [vmem:[#allocation3 + $0x110] sm:$0xff] 0
  %79 = vst [vmem:[#allocation3 + $0x118] sm:$0xff] 0
  %80 = vst [vmem:[#allocation3 + $0x120] sm:$0xff] 0
  %81 = vst [vmem:[#allocation3 + $0x128] sm:$0xff] 0
  %82 = vst [vmem:[#allocation3 + $0x130] sm:$0xff] 0
  %83 = vst [vmem:[#allocation3 + $0x138] sm:$0xff] 0
  %84 = vst [vmem:[#allocation3 + $0x140] sm:$0xff] 0
  %85 = vst [vmem:[#allocation3 + $0x148] sm:$0xff] 0
  %86 = vst [vmem:[#allocation3 + $0x150] sm:$0xff] 0
  %87 = vst [vmem:[#allocation3 + $0x158] sm:$0xff] 0
  %88 = vst [vmem:[#allocation3 + $0x160] sm:$0xff] 0
  %89 = vst [vmem:[#allocation3 + $0x168] sm:$0xff] 0
  %90 = vst [vmem:[#allocation3 + $0x170] sm:$0xff] 0
  %91 = vst [vmem:[#allocation3 + $0x178] sm:$0xff] 0
  %92 = vst [vmem:[#allocation3 + $0x180] sm:$0xff] 0
  %93 = vst [vmem:[#allocation3 + $0x188] sm:$0xff] 0
  %94 = vst [vmem:[#allocation3 + $0x190] sm:$0xff] 0
  %95 = vst [vmem:[#allocation3 + $0x198] sm:$0xff] 0
  %96 = vst [vmem:[#allocation3 + $0x1a0] sm:$0xff] 0
  %97 = vst [vmem:[#allocation3 + $0x1a8] sm:$0xff] 0
  %98 = vst [vmem:[#allocation3 + $0x1b0] sm:$0xff] 0
  %99 = vst [vmem:[#allocation3 + $0x1b8] sm:$0xff] 0
  %v100 = vld [vmem:[%s0] sm:$0xff]
  %v101 = vld [vmem:[%s0 + $0x8] sm:$0xff]
  %v102 = vld [vmem:[%s0 + $0x10] sm:$0xff]
  %v103 = vld [vmem:[%s0 + $0x18] sm:$0xff]
  %v104 = vld [vmem:[%s0 + $0x20] sm:$0xff]
  %v105 = vld [vmem:[%s0 + $0x28] sm:$0xff]
  %v106 = vld [vmem:[%s0 + $0x30] sm:$0xff]
  %v107 = vld [vmem:[%s0 + $0x38] sm:$0x7]
  %vm116 = vcmask 1041408
  %v117 = vrot.slane %v100, 6
  %v118 = vrot.slane %v101, 6
  %v119 = vsel %vm116, %v117, %v118
  %v120 = vrot.slane %v102, 6
  %v121 = vsel %vm116, %v118, %v120
  %v122 = vrot.slane %v103, 6
  %v123 = vsel %vm116, %v120, %v122
  %v124 = vrot.slane %v104, 6
  %v125 = vsel %vm116, %v122, %v124
  %v126 = vrot.slane %v105, 6
  %v127 = vsel %vm116, %v124, %v126
  %v128 = vrot.slane %v106, 6
  %v129 = vsel %vm116, %v126, %v128
  %v130 = vrot.slane %v107, 6
  %v131 = vsel %vm116, %v128, %v130
  %v140 = vsel %vm116, 0.0, %v117
  %vm141 = vcmask 1040384
  %v142 = vrot.slane %v100, 7
  %v143 = vrot.slane %v101, 7
  %v144 = vsel %vm141, %v142, %v143
  %v145 = vrot.slane %v102, 7
  %v146 = vsel %vm141, %v143, %v145
  %v147 = vrot.slane %v103, 7
  %v148 = vsel %vm141, %v145, %v147
  %v149 = vrot.slane %v104, 7
  %v150 = vsel %vm141, %v147, %v149
  %v151 = vrot.slane %v105, 7
  %v152 = vsel %vm141, %v149, %v151
  %v153 = vrot.slane %v106, 7
  %v154 = vsel %vm141, %v151, %v153
  %v155 = vrot.slane %v107, 7
  %v156 = vsel %vm141, %v153, %v155
  %v159 = vsel %vm141, 0.0, %v142
  %vm160 = vcmask 1043456
  %v161 = vsel %vm160, %v156, 0.0
  %164 = vrot.lane.b32.xlu0 %v159, 64
  %v165 = vpop.permute.xlu0 %164
  %166 = vrot.lane.b32.xlu0 %v144, 64
  %v167 = vpop.permute.xlu0 %166
  %168 = vrot.lane.b32.xlu0 %v146, 64
  %v169 = vpop.permute.xlu0 %168
  %170 = vrot.lane.b32.xlu0 %v148, 64
  %v171 = vpop.permute.xlu0 %170
  %172 = vrot.lane.b32.xlu0 %v150, 64
  %v173 = vpop.permute.xlu0 %172
  %174 = vrot.lane.b32.xlu0 %v152, 64
  %v175 = vpop.permute.xlu0 %174
  %176 = vrot.lane.b32.xlu0 %v154, 64
  %v177 = vpop.permute.xlu0 %176
  %178 = vrot.lane.b32.xlu0 %v161, 64
  %v179 = vpop.permute.xlu0 %178
  %vm188 = vcmask 523264
  %v189 = vsel %vm188, %v140, %v165
  %v190 = vsel %vm188, %v119, %v167
  %v191 = vsel %vm188, %v121, %v169
  %v192 = vsel %vm188, %v123, %v171
  %v193 = vsel %vm188, %v125, %v173
  %v194 = vsel %vm188, %v127, %v175
  %v195 = vsel %vm188, %v129, %v177
  %v196 = vsel %vm188, %v131, %v179
  %v197 = vpack.c.bf16 %v190, %v189
  %v198 = vpack.c.bf16 %v192, %v191
  %v199 = vpack.c.bf16 %v194, %v193
  %v200 = vpack.c.bf16 %v196, %v195
  %vm205 = vcmask 1042432
  %v206 = vrot.slane %v197, 5
  %v207 = vrot.slane %v198, 5
  %v208 = vsel %vm205, %v206, %v207
  %v209 = vrot.slane %v199, 5
  %v210 = vsel %vm205, %v207, %v209
  %v211 = vrot.slane %v200, 5
  %v212 = vsel %vm205, %v209, %v211
  %218 = vst [vmem:[#allocation3 + $0x40] sm:$0xf8] %v206
  %219 = vst [vmem:[#allocation3 + $0x80] sm:$0xff] %v208
  %220 = vst [vmem:[#allocation3 + $0xc0] sm:$0xff] %v210
  %221 = vst [vmem:[#allocation3 + $0x100] sm:$0xff] %v212
  %vm222 = vcmask 1041408
  %vm223 = vsmask.f32 1280
  %vm224 = vmand %vm222, %vm223
  %v225 = vld [vmem:[#allocation3 + $0x140] sm:$0x3]
  %v226 = vsel %vm224, %v211, %v225
  %227 = vst [vmem:[#allocation3 + $0x140] sm:$0x3] %v226
  %v228 = vrot.slane %v197, 6
  %v229 = vrot.slane %v198, 6
  %v230 = vsel %vm222, %v228, %v229
  %v231 = vrot.slane %v199, 6
  %v232 = vsel %vm222, %v229, %v231
  %v233 = vrot.slane %v200, 6
  %v234 = vsel %vm222, %v231, %v233
  %240 = vst [vmem:[#allocation3 + $0x48] sm:$0xfc] %v228
  %241 = vst [vmem:[#allocation3 + $0x88] sm:$0xff] %v230
  %242 = vst [vmem:[#allocation3 + $0xc8] sm:$0xff] %v232
  %243 = vst [vmem:[#allocation3 + $0x108] sm:$0xff] %v234
  %vm244 = vcmask 1040384
  %vm245 = vsmask.f32 256
  %vm246 = vmand %vm244, %vm245
  %v247 = vld [vmem:[#allocation3 + $0x148] sm:$0x1]
  %v248 = vsel %vm246, %v233, %v247
  %249 = vst [vmem:[#allocation3 + $0x148] sm:$0x1] %v248
  %v250 = vrot.slane %v197, 7
  %v251 = vrot.slane %v198, 7
  %v252 = vsel %vm244, %v250, %v251
  %v253 = vrot.slane %v199, 7
  %v254 = vsel %vm244, %v251, %v253
  %v255 = vrot.slane %v200, 7
  %v256 = vsel %vm244, %v253, %v255
  %261 = vst [vmem:[#allocation3 + $0x50] sm:$0xfe] %v250
  %262 = vst [vmem:[#allocation3 + $0x90] sm:$0xff] %v252
  %263 = vst [vmem:[#allocation3 + $0xd0] sm:$0xff] %v254
  %vm264 = vcmask 1047552
  %vm265 = vsmask.f32 7424
  %vm266 = vmand %vm264, %vm265
  %v267 = vld [vmem:[#allocation3 + $0x110] sm:$0xff]
  %v268 = vsel %vm266, %v256, %v267
  %269 = vst [vmem:[#allocation3 + $0x110] sm:$0xff] %v268
  %270 = vst [vmem:[#allocation3 + $0x58] sm:$0xff] %v197
  %271 = vst [vmem:[#allocation3 + $0x98] sm:$0xff] %v198
  %272 = vst [vmem:[#allocation3 + $0xd8] sm:$0xff] %v199
  %vm273 = vcmask 1046528
  %vm274 = vsmask.f32 6400
  %vm275 = vmand %vm273, %vm274
  %v276 = vld [vmem:[#allocation3 + $0x118] sm:$0x7f]
  %v277 = vsel %vm275, %v200, %v276
  %278 = vst [vmem:[#allocation3 + $0x118] sm:$0x7f] %v277
  %v279 = vrot.slane %v197, 1
  %v280 = vrot.slane %v198, 1
  %v281 = vsel %vm273, %v279, %v280
  %v282 = vrot.slane %v199, 1
  %v283 = vsel %vm273, %v280, %v282
  %v284 = vrot.slane %v200, 1
  %v285 = vsel %vm273, %v282, %v284
  %291 = vst [vmem:[#allocation3 + $0x20] sm:$0x80] %v279
  %292 = vst [vmem:[#allocation3 + $0x60] sm:$0xff] %v281
  %293 = vst [vmem:[#allocation3 + $0xa0] sm:$0xff] %v283
  %294 = vst [vmem:[#allocation3 + $0xe0] sm:$0xff] %v285
  %vm295 = vcmask 1045504
  %vm296 = vsmask.f32 5376
  %vm297 = vmand %vm295, %vm296
  %v298 = vld [vmem:[#allocation3 + $0x120] sm:$0x3f]
  %v299 = vsel %vm297, %v284, %v298
  %300 = vst [vmem:[#allocation3 + $0x120] sm:$0x3f] %v299
  %v301 = vrot.slane %v197, 2
  %v302 = vrot.slane %v198, 2
  %v303 = vsel %vm295, %v301, %v302
  %v304 = vrot.slane %v199, 2
  %v305 = vsel %vm295, %v302, %v304
  %v306 = vrot.slane %v200, 2
  %v307 = vsel %vm295, %v304, %v306
  %313 = vst [vmem:[#allocation3 + $0x28] sm:$0xc0] %v301
  %314 = vst [vmem:[#allocation3 + $0x68] sm:$0xff] %v303
  %315 = vst [vmem:[#allocation3 + $0xa8] sm:$0xff] %v305
  %316 = vst [vmem:[#allocation3 + $0xe8] sm:$0xff] %v307
  %vm317 = vcmask 1044480
  %vm318 = vsmask.f32 4352
  %vm319 = vmand %vm317, %vm318
  %v320 = vld [vmem:[#allocation3 + $0x128] sm:$0x1f]
  %v321 = vsel %vm319, %v306, %v320
  %322 = vst [vmem:[#allocation3 + $0x128] sm:$0x1f] %v321
  %v323 = vrot.slane %v197, 3
  %v324 = vrot.slane %v198, 3
  %v325 = vsel %vm317, %v323, %v324
  %v326 = vrot.slane %v199, 3
  %v327 = vsel %vm317, %v324, %v326
  %v328 = vrot.slane %v200, 3
  %v329 = vsel %vm317, %v326, %v328
  %335 = vst [vmem:[#allocation3 + $0x30] sm:$0xe0] %v323
  %336 = vst [vmem:[#allocation3 + $0x70] sm:$0xff] %v325
  %337 = vst [vmem:[#allocation3 + $0xb0] sm:$0xff] %v327
  %338 = vst [vmem:[#allocation3 + $0xf0] sm:$0xff] %v329
  %vm339 = vcmask 1043456
  %vm340 = vsmask.f32 3328
  %vm341 = vmand %vm339, %vm340
  %v342 = vld [vmem:[#allocation3 + $0x130] sm:$0xf]
  %v343 = vsel %vm341, %v328, %v342
  %344 = vst [vmem:[#allocation3 + $0x130] sm:$0xf] %v343
  %v345 = vrot.slane %v197, 4
  %v346 = vrot.slane %v198, 4
  %v347 = vsel %vm339, %v345, %v346
  %v348 = vrot.slane %v199, 4
  %v349 = vsel %vm339, %v346, %v348
  %v350 = vrot.slane %v200, 4
  %v351 = vsel %vm339, %v348, %v350
  %357 = vst [vmem:[#allocation3 + $0x38] sm:$0xf0] %v345
  %358 = vst [vmem:[#allocation3 + $0x78] sm:$0xff] %v347
  %359 = vst [vmem:[#allocation3 + $0xb8] sm:$0xff] %v349
  %360 = vst [vmem:[#allocation3 + $0xf8] sm:$0xff] %v351
  %vm361 = vsmask.f32 2304
  %vm362 = vmand %vm205, %vm361
  %v363 = vld [vmem:[#allocation3 + $0x138] sm:$0x7]
  %v364 = vsel %vm362, %v350, %v363
  %365 = vst [vmem:[#allocation3 + $0x138] sm:$0x7] %v364
  %v366 = vld [vmem:[#allocation3] sm:$0xff]
  %v367 = vld [vmem:[#allocation3 + $0x8] sm:$0xff]
  %v368 = vld [vmem:[#allocation3 + $0x10] sm:$0xff]
  %v369 = vld [vmem:[#allocation3 + $0x18] sm:$0xff]
  %v370 = vld [vmem:[#allocation3 + $0x20] sm:$0xff]
  %v371 = vld [vmem:[#allocation3 + $0x28] sm:$0xff]
  %v372 = vld [vmem:[#allocation3 + $0x30] sm:$0xff]
  %v373 = vld [vmem:[#allocation3 + $0x38] sm:$0xff]
  %v374 = vld [vmem:[#allocation3 + $0x40] sm:$0xff]
  %v375 = vld [vmem:[#allocation3 + $0x48] sm:$0xff]
  %v376 = vld [vmem:[#allocation3 + $0x50] sm:$0xff]
  %v377 = vld [vmem:[#allocation3 + $0x58] sm:$0xff]
  %v378 = vld [vmem:[#allocation3 + $0x60] sm:$0xff]
  %v379 = vld [vmem:[#allocation3 + $0x68] sm:$0xff]
  %v380 = vld [vmem:[#allocation3 + $0x70] sm:$0xff]
  %v381 = vld [vmem:[#allocation3 + $0x78] sm:$0xff]
  %v382 = vld [vmem:[#allocation3 + $0x80] sm:$0xff]
  %v383 = vld [vmem:[#allocation3 + $0x88] sm:$0xff]
  %v384 = vld [vmem:[#allocation3 + $0x90] sm:$0xff]
  %v385 = vld [vmem:[#allocation3 + $0x98] sm:$0xff]
  %v386 = vld [vmem:[#allocation3 + $0xa0] sm:$0xff]
  %v387 = vld [vmem:[#allocation3 + $0xa8] sm:$0xff]
  %v388 = vld [vmem:[#allocation3 + $0xb0] sm:$0xff]
  %v389 = vld [vmem:[#allocation3 + $0xb8] sm:$0xff]
  %v390 = vld [vmem:[#allocation3 + $0xc0] sm:$0xff]
  %v391 = vld [vmem:[#allocation3 + $0xc8] sm:$0xff]
  %v392 = vld [vmem:[#allocation3 + $0xd0] sm:$0xff]
  %v393 = vld [vmem:[#allocation3 + $0xd8] sm:$0xff]
  %v394 = vld [vmem:[#allocation3 + $0xe0] sm:$0xff]
  %v395 = vld [vmem:[#allocation3 + $0xe8] sm:$0xff]
  %v396 = vld [vmem:[#allocation3 + $0xf0] sm:$0xff]
  %v397 = vld [vmem:[#allocation3 + $0xf8] sm:$0xff]
  %v398 = vld [vmem:[#allocation3 + $0x100] sm:$0xff]
  %v399 = vld [vmem:[#allocation3 + $0x108] sm:$0xff]
  %v400 = vld [vmem:[#allocation3 + $0x110] sm:$0xff]
  %v401 = vld [vmem:[#allocation3 + $0x118] sm:$0xff]
  %v402 = vld [vmem:[#allocation3 + $0x120] sm:$0xff]
  %v403 = vld [vmem:[#allocation3 + $0x128] sm:$0xff]
  %v404 = vld [vmem:[#allocation3 + $0x130] sm:$0xff]
  %v405 = vld [vmem:[#allocation3 + $0x138] sm:$0xff]
  %v406 = vld [vmem:[#allocation3 + $0x140] sm:$0xff]
  %v407 = vld [vmem:[#allocation3 + $0x148] sm:$0xff]
  %v408 = vld [vmem:[#allocation3 + $0x150] sm:$0xff]
  %v409 = vld [vmem:[#allocation3 + $0x158] sm:$0xff]
  %v410 = vld [vmem:[#allocation3 + $0x160] sm:$0xff]
  %v411 = vld [vmem:[#allocation3 + $0x168] sm:$0xff]
  %v412 = vld [vmem:[#allocation3 + $0x170] sm:$0xff]
  %v413 = vld [vmem:[#allocation3 + $0x178] sm:$0xff]
  %v414 = vld [vmem:[#allocation3 + $0x180] sm:$0x3f]
  %v415 = vld [vmem:[#allocation3 + $0x188] sm:$0x3f]
  %v416 = vld [vmem:[#allocation3 + $0x190] sm:$0x3f]
  %v417 = vld [vmem:[#allocation3 + $0x198] sm:$0x3f]
  %v418 = vld [vmem:[#allocation3 + $0x1a0] sm:$0x3f]
  %v419 = vld [vmem:[#allocation3 + $0x1a8] sm:$0x3f]
  %v420 = vld [vmem:[#allocation3 + $0x1b0] sm:$0x3f]
  %v421 = vld [vmem:[#allocation3 + $0x1b8] sm:$0x3f]
  %v422 = vld [vmem:[%s1] sm:$0xff]
  %v423 = vld [vmem:[%s1 + $0x8] sm:$0xff]
  %v424 = vld [vmem:[%s1 + $0x10] sm:$0xff]
  %v425 = vld [vmem:[%s1 + $0x18] sm:$0xff]
  %v426 = vld [vmem:[%s1 + $0x20] sm:$0xff]
  %v427 = vld [vmem:[%s1 + $0x28] sm:$0xff]
  %v428 = vld [vmem:[%s1 + $0x30] sm:$0xff]
  %v429 = vld [vmem:[%s1 + $0x38] sm:$0xff]
  %v430 = vld [vmem:[%s1 + $0x40] sm:$0xff]
  %v431 = vld [vmem:[%s1 + $0x48] sm:$0xff]
  %v432 = vld [vmem:[%s1 + $0x50] sm:$0xff]
  %v433 = vld [vmem:[%s1 + $0x58] sm:$0xff]
  %v434 = vld [vmem:[%s1 + $0x60] sm:$0xff]
  %v435 = vld [vmem:[%s1 + $0x68] sm:$0xff]
  %v436 = vld [vmem:[%s1 + $0x70] sm:$0xff]
  %v437 = vld [vmem:[%s1 + $0x78] sm:$0xff]
  %v438 = vld [vmem:[%s1 + $0x80] sm:$0xff]
  %v439 = vld [vmem:[%s1 + $0x88] sm:$0xff]
  %v440 = vld [vmem:[%s1 + $0x90] sm:$0xff]
  %v441 = vld [vmem:[%s1 + $0x98] sm:$0xff]
  %v442 = vld [vmem:[%s1 + $0xa0] sm:$0xff]
  %v443 = vld [vmem:[%s1 + $0xa8] sm:$0xff]
  %v444 = vld [vmem:[%s1 + $0xb0] sm:$0xff]
  %v445 = vld [vmem:[%s1 + $0xb8] sm:$0xff]
  %v446 = vld [vmem:[%s1 + $0xc0] sm:$0xff]
  %v447 = vld [vmem:[%s1 + $0xc8] sm:$0xff]
  %v448 = vld [vmem:[%s1 + $0xd0] sm:$0xff]
  %v449 = vld [vmem:[%s1 + $0xd8] sm:$0xff]
  %v450 = vld [vmem:[%s1 + $0xe0] sm:$0xff]
  %v451 = vld [vmem:[%s1 + $0xe8] sm:$0xff]
  %v452 = vld [vmem:[%s1 + $0xf0] sm:$0xff]
  %v453 = vld [vmem:[%s1 + $0xf8] sm:$0xff]
  %v454 = vld [vmem:[%s1 + $0x100] sm:$0xff]
  %v455 = vld [vmem:[%s1 + $0x108] sm:$0xff]
  %v456 = vld [vmem:[%s1 + $0x110] sm:$0xff]
  %v457 = vld [vmem:[%s1 + $0x118] sm:$0xff]
  %v458 = vld [vmem:[%s1 + $0x120] sm:$0xff]
  %v459 = vld [vmem:[%s1 + $0x128] sm:$0xff]
  %v460 = vld [vmem:[%s1 + $0x130] sm:$0xff]
  %v461 = vld [vmem:[%s1 + $0x138] sm:$0xff]
  %v462 = vld [vmem:[%s1 + $0x140] sm:$0xff]
  %v463 = vld [vmem:[%s1 + $0x148] sm:$0xff]
  %v464 = vld [vmem:[%s1 + $0x150] sm:$0xff]
  %v465 = vld [vmem:[%s1 + $0x158] sm:$0xff]
  %v466 = vld [vmem:[%s1 + $0x160] sm:$0xff]
  %v467 = vld [vmem:[%s1 + $0x168] sm:$0xff]
  %v468 = vld [vmem:[%s1 + $0x170] sm:$0xff]
  %v469 = vld [vmem:[%s1 + $0x178] sm:$0xff]
  %v470 = vld [vmem:[%s1 + $0x180] sm:$0xff]
  %v471 = vld [vmem:[%s1 + $0x188] sm:$0xff]
  %v472 = vld [vmem:[%s1 + $0x190] sm:$0xff]
  %v473 = vld [vmem:[%s1 + $0x198] sm:$0xff]
  %v474 = vld [vmem:[%s1 + $0x1a0] sm:$0xff]
  %v475 = vld [vmem:[%s1 + $0x1a8] sm:$0xff]
  %v476 = vld [vmem:[%s1 + $0x1b0] sm:$0xff]
  %v477 = vld [vmem:[%s1 + $0x1b8] sm:$0xff]
  %v478 = vld [vmem:[%s1 + $0x1c0] sm:$0xff]
  %v479 = vld [vmem:[%s1 + $0x1c8] sm:$0xff]
  %v480 = vld [vmem:[%s1 + $0x1d0] sm:$0xff]
  %v481 = vld [vmem:[%s1 + $0x1d8] sm:$0xff]
  %v482 = vld [vmem:[%s1 + $0x1e0] sm:$0xff]
  %v483 = vld [vmem:[%s1 + $0x1e8] sm:$0xff]
  %v484 = vld [vmem:[%s1 + $0x1f0] sm:$0xff]
  %v485 = vld [vmem:[%s1 + $0x1f8] sm:$0xff]
  %v486 = vld [vmem:[%s1 + $0x200] sm:$0xff]
  %v487 = vld [vmem:[%s1 + $0x208] sm:$0xff]
  %v488 = vld [vmem:[%s1 + $0x210] sm:$0xff]
  %v489 = vld [vmem:[%s1 + $0x218] sm:$0xff]
  %v490 = vld [vmem:[%s1 + $0x220] sm:$0xff]
  %v491 = vld [vmem:[%s1 + $0x228] sm:$0xff]
  %v492 = vld [vmem:[%s1 + $0x230] sm:$0xff]
  %v493 = vld [vmem:[%s1 + $0x238] sm:$0xff]
  %v494 = vld [vmem:[%s1 + $0x240] sm:$0xff]
  %v495 = vld [vmem:[%s1 + $0x248] sm:$0xff]
  %v496 = vld [vmem:[%s1 + $0x250] sm:$0xff]
  %v497 = vld [vmem:[%s1 + $0x258] sm:$0xff]
  %v498 = vld [vmem:[%s1 + $0x260] sm:$0xff]
  %v499 = vld [vmem:[%s1 + $0x268] sm:$0xff]
  %v500 = vld [vmem:[%s1 + $0x270] sm:$0xff]
  %v501 = vld [vmem:[%s1 + $0x278] sm:$0xff]
  %v502 = vld [vmem:[%s1 + $0x280] sm:$0xff]
  %v503 = vld [vmem:[%s1 + $0x288] sm:$0xff]
  %v504 = vld [vmem:[%s1 + $0x290] sm:$0xff]
  %v505 = vld [vmem:[%s1 + $0x298] sm:$0xff]
  %v506 = vld [vmem:[%s1 + $0x2a0] sm:$0xff]
  %v507 = vld [vmem:[%s1 + $0x2a8] sm:$0xff]
  %v508 = vld [vmem:[%s1 + $0x2b0] sm:$0xff]
  %v509 = vld [vmem:[%s1 + $0x2b8] sm:$0xff]
  %v510 = vld [vmem:[%s1 + $0x2c0] sm:$0xff]
  %v511 = vld [vmem:[%s1 + $0x2c8] sm:$0xff]
  %v512 = vld [vmem:[%s1 + $0x2d0] sm:$0xff]
  %v513 = vld [vmem:[%s1 + $0x2d8] sm:$0xff]
  %v514 = vld [vmem:[%s1 + $0x2e0] sm:$0xff]
  %v515 = vld [vmem:[%s1 + $0x2e8] sm:$0xff]
  %v516 = vld [vmem:[%s1 + $0x2f0] sm:$0xff]
  %v517 = vld [vmem:[%s1 + $0x2f8] sm:$0xff]
  %v518 = vld [vmem:[%s1 + $0x300] sm:$0xff]
  %v519 = vld [vmem:[%s1 + $0x308] sm:$0xff]
  %v520 = vld [vmem:[%s1 + $0x310] sm:$0xff]
  %v521 = vld [vmem:[%s1 + $0x318] sm:$0xff]
  %v522 = vld [vmem:[%s1 + $0x320] sm:$0xff]
  %v523 = vld [vmem:[%s1 + $0x328] sm:$0xff]
  %v524 = vld [vmem:[%s1 + $0x330] sm:$0xff]
  %v525 = vld [vmem:[%s1 + $0x338] sm:$0xff]
  %v526 = vld [vmem:[%s1 + $0x340] sm:$0xff]
  %v527 = vld [vmem:[%s1 + $0x348] sm:$0xff]
  %v528 = vld [vmem:[%s1 + $0x350] sm:$0xff]
  %v529 = vld [vmem:[%s1 + $0x358] sm:$0xff]
  %v530 = vld [vmem:[%s1 + $0x360] sm:$0xff]
  %v531 = vld [vmem:[%s1 + $0x368] sm:$0xff]
  %v532 = vld [vmem:[%s1 + $0x370] sm:$0xff]
  %v533 = vld [vmem:[%s1 + $0x378] sm:$0xff]
  %v534 = vld [vmem:[%s1 + $0x380] sm:$0xff]
  %v535 = vld [vmem:[%s1 + $0x388] sm:$0xff]
  %v536 = vld [vmem:[%s1 + $0x390] sm:$0xff]
  %v537 = vld [vmem:[%s1 + $0x398] sm:$0xff]
  %v538 = vld [vmem:[%s1 + $0x3a0] sm:$0xff]
  %v539 = vld [vmem:[%s1 + $0x3a8] sm:$0xff]
  %v540 = vld [vmem:[%s1 + $0x3b0] sm:$0xff]
  %v541 = vld [vmem:[%s1 + $0x3b8] sm:$0xff]
  %v542 = vld [vmem:[%s1 + $0x3c0] sm:$0xff]
  %v543 = vld [vmem:[%s1 + $0x3c8] sm:$0xff]
  %v544 = vld [vmem:[%s1 + $0x3d0] sm:$0xff]
  %v545 = vld [vmem:[%s1 + $0x3d8] sm:$0xff]
  %v546 = vld [vmem:[%s1 + $0x3e0] sm:$0xff]
  %v547 = vld [vmem:[%s1 + $0x3e8] sm:$0xff]
  %v548 = vld [vmem:[%s1 + $0x3f0] sm:$0xff]
  %v549 = vld [vmem:[%s1 + $0x3f8] sm:$0xff]
  %v678 = vunpack.c.l.b16 %v422
  %v679 = vunpack.c.h.b16 %v422
  %v680 = vunpack.c.l.b16 %v423
  %v681 = vunpack.c.h.b16 %v423
  %v682 = vunpack.c.l.b16 %v424
  %v683 = vunpack.c.h.b16 %v424
  %v684 = vunpack.c.l.b16 %v425
  %v685 = vunpack.c.h.b16 %v425
  %v686 = vunpack.c.l.b16 %v426
  %v687 = vunpack.c.h.b16 %v426
  %v688 = vunpack.c.l.b16 %v427
  %v689 = vunpack.c.h.b16 %v427
  %v690 = vunpack.c.l.b16 %v428
  %v691 = vunpack.c.h.b16 %v428
  %v692 = vunpack.c.l.b16 %v429
  %v693 = vunpack.c.h.b16 %v429
  %v694 = vunpack.c.l.b16 %v430
  %v695 = vunpack.c.h.b16 %v430
  %v696 = vunpack.c.l.b16 %v431
  %v697 = vunpack.c.h.b16 %v431
  %v698 = vunpack.c.l.b16 %v432
  %v699 = vunpack.c.h.b16 %v432
  %v700 = vunpack.c.l.b16 %v433
  %v701 = vunpack.c.h.b16 %v433
  %v702 = vunpack.c.l.b16 %v434
  %v703 = vunpack.c.h.b16 %v434
  %v704 = vunpack.c.l.b16 %v435
  %v705 = vunpack.c.h.b16 %v435
  %v706 = vunpack.c.l.b16 %v436
  %v707 = vunpack.c.h.b16 %v436
  %v708 = vunpack.c.l.b16 %v437
  %v709 = vunpack.c.h.b16 %v437
  %v710 = vunpack.c.l.b16 %v438
  %v711 = vunpack.c.h.b16 %v438
  %v712 = vunpack.c.l.b16 %v439
  %v713 = vunpack.c.h.b16 %v439
  %v714 = vunpack.c.l.b16 %v440
  %v715 = vunpack.c.h.b16 %v440
  %v716 = vunpack.c.l.b16 %v441
  %v717 = vunpack.c.h.b16 %v441
  %v718 = vunpack.c.l.b16 %v442
  %v719 = vunpack.c.h.b16 %v442
  %v720 = vunpack.c.l.b16 %v443
  %v721 = vunpack.c.h.b16 %v443
  %v722 = vunpack.c.l.b16 %v444
  %v723 = vunpack.c.h.b16 %v444
  %v724 = vunpack.c.l.b16 %v445
  %v725 = vunpack.c.h.b16 %v445
  %v726 = vunpack.c.l.b16 %v446
  %v727 = vunpack.c.h.b16 %v446
  %v728 = vunpack.c.l.b16 %v447
  %v729 = vunpack.c.h.b16 %v447
  %v730 = vunpack.c.l.b16 %v448
  %v731 = vunpack.c.h.b16 %v448
  %v732 = vunpack.c.l.b16 %v449
  %v733 = vunpack.c.h.b16 %v449
  %v734 = vunpack.c.l.b16 %v450
  %v735 = vunpack.c.h.b16 %v450
  %v736 = vunpack.c.l.b16 %v451
  %v737 = vunpack.c.h.b16 %v451
  %v738 = vunpack.c.l.b16 %v452
  %v739 = vunpack.c.h.b16 %v452
  %v740 = vunpack.c.l.b16 %v453
  %v741 = vunpack.c.h.b16 %v453
  %v742 = vunpack.c.l.b16 %v454
  %v743 = vunpack.c.h.b16 %v454
  %v744 = vunpack.c.l.b16 %v455
  %v745 = vunpack.c.h.b16 %v455
  %v746 = vunpack.c.l.b16 %v456
  %v747 = vunpack.c.h.b16 %v456
  %v748 = vunpack.c.l.b16 %v457
  %v749 = vunpack.c.h.b16 %v457
  %v750 = vunpack.c.l.b16 %v458
  %v751 = vunpack.c.h.b16 %v458
  %v752 = vunpack.c.l.b16 %v459
  %v753 = vunpack.c.h.b16 %v459
  %v754 = vunpack.c.l.b16 %v460
  %v755 = vunpack.c.h.b16 %v460
  %v756 = vunpack.c.l.b16 %v461
  %v757 = vunpack.c.h.b16 %v461
  %v758 = vunpack.c.l.b16 %v462
  %v759 = vunpack.c.h.b16 %v462
  %v760 = vunpack.c.l.b16 %v463
  %v761 = vunpack.c.h.b16 %v463
  %v762 = vunpack.c.l.b16 %v464
  %v763 = vunpack.c.h.b16 %v464
  %v764 = vunpack.c.l.b16 %v465
  %v765 = vunpack.c.h.b16 %v465
  %v766 = vunpack.c.l.b16 %v466
  %v767 = vunpack.c.h.b16 %v466
  %v768 = vunpack.c.l.b16 %v467
  %v769 = vunpack.c.h.b16 %v467
  %v770 = vunpack.c.l.b16 %v468
  %v771 = vunpack.c.h.b16 %v468
  %v772 = vunpack.c.l.b16 %v469
  %v773 = vunpack.c.h.b16 %v469
  %v774 = vunpack.c.l.b16 %v470
  %v775 = vunpack.c.h.b16 %v470
  %v776 = vunpack.c.l.b16 %v471
  %v777 = vunpack.c.h.b16 %v471
  %v778 = vunpack.c.l.b16 %v472
  %v779 = vunpack.c.h.b16 %v472
  %v780 = vunpack.c.l.b16 %v473
  %v781 = vunpack.c.h.b16 %v473
  %v782 = vunpack.c.l.b16 %v474
  %v783 = vunpack.c.h.b16 %v474
  %v784 = vunpack.c.l.b16 %v475
  %v785 = vunpack.c.h.b16 %v475
  %v786 = vunpack.c.l.b16 %v476
  %v787 = vunpack.c.h.b16 %v476
  %v788 = vunpack.c.l.b16 %v477
  %v789 = vunpack.c.h.b16 %v477
  %v790 = vunpack.c.l.b16 %v478
  %v791 = vunpack.c.h.b16 %v478
  %v792 = vunpack.c.l.b16 %v479
  %v793 = vunpack.c.h.b16 %v479
  %v794 = vunpack.c.l.b16 %v480
  %v795 = vunpack.c.h.b16 %v480
  %v796 = vunpack.c.l.b16 %v481
  %v797 = vunpack.c.h.b16 %v481
  %v798 = vunpack.c.l.b16 %v482
  %v799 = vunpack.c.h.b16 %v482
  %v800 = vunpack.c.l.b16 %v483
  %v801 = vunpack.c.h.b16 %v483
  %v802 = vunpack.c.l.b16 %v484
  %v803 = vunpack.c.h.b16 %v484
  %v804 = vunpack.c.l.b16 %v485
  %v805 = vunpack.c.h.b16 %v485
  %v806 = vunpack.c.l.b16 %v486
  %v807 = vunpack.c.h.b16 %v486
  %v808 = vunpack.c.l.b16 %v487
  %v809 = vunpack.c.h.b16 %v487
  %v810 = vunpack.c.l.b16 %v488
  %v811 = vunpack.c.h.b16 %v488
  %v812 = vunpack.c.l.b16 %v489
  %v813 = vunpack.c.h.b16 %v489
  %v814 = vunpack.c.l.b16 %v490
  %v815 = vunpack.c.h.b16 %v490
  %v816 = vunpack.c.l.b16 %v491
  %v817 = vunpack.c.h.b16 %v491
  %v818 = vunpack.c.l.b16 %v492
  %v819 = vunpack.c.h.b16 %v492
  %v820 = vunpack.c.l.b16 %v493
  %v821 = vunpack.c.h.b16 %v493
  %v822 = vunpack.c.l.b16 %v494
  %v823 = vunpack.c.h.b16 %v494
  %v824 = vunpack.c.l.b16 %v495
  %v825 = vunpack.c.h.b16 %v495
  %v826 = vunpack.c.l.b16 %v496
  %v827 = vunpack.c.h.b16 %v496
  %v828 = vunpack.c.l.b16 %v497
  %v829 = vunpack.c.h.b16 %v497
  %v830 = vunpack.c.l.b16 %v498
  %v831 = vunpack.c.h.b16 %v498
  %v832 = vunpack.c.l.b16 %v499
  %v833 = vunpack.c.h.b16 %v499
  %v834 = vunpack.c.l.b16 %v500
  %v835 = vunpack.c.h.b16 %v500
  %v836 = vunpack.c.l.b16 %v501
  %v837 = vunpack.c.h.b16 %v501
  %v838 = vunpack.c.l.b16 %v502
  %v839 = vunpack.c.h.b16 %v502
  %v840 = vunpack.c.l.b16 %v503
  %v841 = vunpack.c.h.b16 %v503
  %v842 = vunpack.c.l.b16 %v504
  %v843 = vunpack.c.h.b16 %v504
  %v844 = vunpack.c.l.b16 %v505
  %v845 = vunpack.c.h.b16 %v505
  %v846 = vunpack.c.l.b16 %v506
  %v847 = vunpack.c.h.b16 %v506
  %v848 = vunpack.c.l.b16 %v507
  %v849 = vunpack.c.h.b16 %v507
  %v850 = vunpack.c.l.b16 %v508
  %v851 = vunpack.c.h.b16 %v508
  %v852 = vunpack.c.l.b16 %v509
  %v853 = vunpack.c.h.b16 %v509
  %v854 = vunpack.c.l.b16 %v510
  %v855 = vunpack.c.h.b16 %v510
  %v856 = vunpack.c.l.b16 %v511
  %v857 = vunpack.c.h.b16 %v511
  %v858 = vunpack.c.l.b16 %v512
  %v859 = vunpack.c.h.b16 %v512
  %v860 = vunpack.c.l.b16 %v513
  %v861 = vunpack.c.h.b16 %v513
  %v862 = vunpack.c.l.b16 %v514
  %v863 = vunpack.c.h.b16 %v514
  %v864 = vunpack.c.l.b16 %v515
  %v865 = vunpack.c.h.b16 %v515
  %v866 = vunpack.c.l.b16 %v516
  %v867 = vunpack.c.h.b16 %v516
  %v868 = vunpack.c.l.b16 %v517
  %v869 = vunpack.c.h.b16 %v517
  %v870 = vunpack.c.l.b16 %v518
  %v871 = vunpack.c.h.b16 %v518
  %v872 = vunpack.c.l.b16 %v519
  %v873 = vunpack.c.h.b16 %v519
  %v874 = vunpack.c.l.b16 %v520
  %v875 = vunpack.c.h.b16 %v520
  %v876 = vunpack.c.l.b16 %v521
  %v877 = vunpack.c.h.b16 %v521
  %v878 = vunpack.c.l.b16 %v522
  %v879 = vunpack.c.h.b16 %v522
  %v880 = vunpack.c.l.b16 %v523
  %v881 = vunpack.c.h.b16 %v523
  %v882 = vunpack.c.l.b16 %v524
  %v883 = vunpack.c.h.b16 %v524
  %v884 = vunpack.c.l.b16 %v525
  %v885 = vunpack.c.h.b16 %v525
  %v886 = vunpack.c.l.b16 %v526
  %v887 = vunpack.c.h.b16 %v526
  %v888 = vunpack.c.l.b16 %v527
  %v889 = vunpack.c.h.b16 %v527
  %v890 = vunpack.c.l.b16 %v528
  %v891 = vunpack.c.h.b16 %v528
  %v892 = vunpack.c.l.b16 %v529
  %v893 = vunpack.c.h.b16 %v529
  %v894 = vunpack.c.l.b16 %v530
  %v895 = vunpack.c.h.b16 %v530
  %v896 = vunpack.c.l.b16 %v531
  %v897 = vunpack.c.h.b16 %v531
  %v898 = vunpack.c.l.b16 %v532
  %v899 = vunpack.c.h.b16 %v532
  %v900 = vunpack.c.l.b16 %v533
  %v901 = vunpack.c.h.b16 %v533
  %v902 = vunpack.c.l.b16 %v534
  %v903 = vunpack.c.h.b16 %v534
  %v904 = vunpack.c.l.b16 %v535
  %v905 = vunpack.c.h.b16 %v535
  %v906 = vunpack.c.l.b16 %v536
  %v907 = vunpack.c.h.b16 %v536
  %v908 = vunpack.c.l.b16 %v537
  %v909 = vunpack.c.h.b16 %v537
  %v910 = vunpack.c.l.b16 %v538
  %v911 = vunpack.c.h.b16 %v538
  %v912 = vunpack.c.l.b16 %v539
  %v913 = vunpack.c.h.b16 %v539
  %v914 = vunpack.c.l.b16 %v540
  %v915 = vunpack.c.h.b16 %v540
  %v916 = vunpack.c.l.b16 %v541
  %v917 = vunpack.c.h.b16 %v541
  %v918 = vunpack.c.l.b16 %v542
  %v919 = vunpack.c.h.b16 %v542
  %v920 = vunpack.c.l.b16 %v543
  %v921 = vunpack.c.h.b16 %v543
  %v922 = vunpack.c.l.b16 %v544
  %v923 = vunpack.c.h.b16 %v544
  %v924 = vunpack.c.l.b16 %v545
  %v925 = vunpack.c.h.b16 %v545
  %v926 = vunpack.c.l.b16 %v546
  %v927 = vunpack.c.h.b16 %v546
  %v928 = vunpack.c.l.b16 %v547
  %v929 = vunpack.c.h.b16 %v547
  %v930 = vunpack.c.l.b16 %v548
  %v931 = vunpack.c.h.b16 %v548
  %v932 = vunpack.c.l.b16 %v549
  %v933 = vunpack.c.h.b16 %v549
  %v934 = vpack.c.b16 %v680, %v678
  %v935 = vpack.c.b16 %v681, %v679
  %v936 = vpack.c.b16 %v684, %v682
  %v937 = vpack.c.b16 %v685, %v683
  %v938 = vpack.c.b16 %v688, %v686
  %v939 = vpack.c.b16 %v689, %v687
  %v940 = vpack.c.b16 %v692, %v690
  %v941 = vpack.c.b16 %v693, %v691
  %v942 = vpack.c.b16 %v696, %v694
  %v943 = vpack.c.b16 %v697, %v695
  %v944 = vpack.c.b16 %v700, %v698
  %v945 = vpack.c.b16 %v701, %v699
  %v946 = vpack.c.b16 %v704, %v702
  %v947 = vpack.c.b16 %v705, %v703
  %v948 = vpack.c.b16 %v708, %v706
  %v949 = vpack.c.b16 %v709, %v707
  %v950 = vpack.c.b16 %v712, %v710
  %v951 = vpack.c.b16 %v713, %v711
  %v952 = vpack.c.b16 %v716, %v714
  %v953 = vpack.c.b16 %v717, %v715
  %v954 = vpack.c.b16 %v720, %v718
  %v955 = vpack.c.b16 %v721, %v719
  %v956 = vpack.c.b16 %v724, %v722
  %v957 = vpack.c.b16 %v725, %v723
  %v958 = vpack.c.b16 %v728, %v726
  %v959 = vpack.c.b16 %v729, %v727
  %v960 = vpack.c.b16 %v732, %v730
  %v961 = vpack.c.b16 %v733, %v731
  %v962 = vpack.c.b16 %v736, %v734
  %v963 = vpack.c.b16 %v737, %v735
  %v964 = vpack.c.b16 %v740, %v738
  %v965 = vpack.c.b16 %v741, %v739
  %v966 = vpack.c.b16 %v744, %v742
  %v967 = vpack.c.b16 %v745, %v743
  %v968 = vpack.c.b16 %v748, %v746
  %v969 = vpack.c.b16 %v749, %v747
  %v970 = vpack.c.b16 %v752, %v750
  %v971 = vpack.c.b16 %v753, %v751
  %v972 = vpack.c.b16 %v756, %v754
  %v973 = vpack.c.b16 %v757, %v755
  %v974 = vpack.c.b16 %v760, %v758
  %v975 = vpack.c.b16 %v761, %v759
  %v976 = vpack.c.b16 %v764, %v762
  %v977 = vpack.c.b16 %v765, %v763
  %v978 = vpack.c.b16 %v768, %v766
  %v979 = vpack.c.b16 %v769, %v767
  %v980 = vpack.c.b16 %v772, %v770
  %v981 = vpack.c.b16 %v773, %v771
  %v982 = vpack.c.b16 %v776, %v774
  %v983 = vpack.c.b16 %v777, %v775
  %v984 = vpack.c.b16 %v780, %v778
  %v985 = vpack.c.b16 %v781, %v779
  %v986 = vpack.c.b16 %v784, %v782
  %v987 = vpack.c.b16 %v785, %v783
  %v988 = vpack.c.b16 %v788, %v786
  %v989 = vpack.c.b16 %v789, %v787
  %v990 = vpack.c.b16 %v792, %v790
  %v991 = vpack.c.b16 %v793, %v791
  %v992 = vpack.c.b16 %v796, %v794
  %v993 = vpack.c.b16 %v797, %v795
  %v994 = vpack.c.b16 %v800, %v798
  %v995 = vpack.c.b16 %v801, %v799
  %v996 = vpack.c.b16 %v804, %v802
  %v997 = vpack.c.b16 %v805, %v803
  %v998 = vpack.c.b16 %v808, %v806
  %v999 = vpack.c.b16 %v809, %v807
  %v1000 = vpack.c.b16 %v812, %v810
  %v1001 = vpack.c.b16 %v813, %v811
  %v1002 = vpack.c.b16 %v816, %v814
  %v1003 = vpack.c.b16 %v817, %v815
  %v1004 = vpack.c.b16 %v820, %v818
  %v1005 = vpack.c.b16 %v821, %v819
  %v1006 = vpack.c.b16 %v824, %v822
  %v1007 = vpack.c.b16 %v825, %v823
  %v1008 = vpack.c.b16 %v828, %v826
  %v1009 = vpack.c.b16 %v829, %v827
  %v1010 = vpack.c.b16 %v832, %v830
  %v1011 = vpack.c.b16 %v833, %v831
  %v1012 = vpack.c.b16 %v836, %v834
  %v1013 = vpack.c.b16 %v837, %v835
  %v1014 = vpack.c.b16 %v840, %v838
  %v1015 = vpack.c.b16 %v841, %v839
  %v1016 = vpack.c.b16 %v844, %v842
  %v1017 = vpack.c.b16 %v845, %v843
  %v1018 = vpack.c.b16 %v848, %v846
  %v1019 = vpack.c.b16 %v849, %v847
  %v1020 = vpack.c.b16 %v852, %v850
  %v1021 = vpack.c.b16 %v853, %v851
  %v1022 = vpack.c.b16 %v856, %v854
  %v1023 = vpack.c.b16 %v857, %v855
  %v1024 = vpack.c.b16 %v860, %v858
  %v1025 = vpack.c.b16 %v861, %v859
  %v1026 = vpack.c.b16 %v864, %v862
  %v1027 = vpack.c.b16 %v865, %v863
  %v1028 = vpack.c.b16 %v868, %v866
  %v1029 = vpack.c.b16 %v869, %v867
  %v1030 = vpack.c.b16 %v872, %v870
  %v1031 = vpack.c.b16 %v873, %v871
  %v1032 = vpack.c.b16 %v876, %v874
  %v1033 = vpack.c.b16 %v877, %v875
  %v1034 = vpack.c.b16 %v880, %v878
  %v1035 = vpack.c.b16 %v881, %v879
  %v1036 = vpack.c.b16 %v884, %v882
  %v1037 = vpack.c.b16 %v885, %v883
  %v1038 = vpack.c.b16 %v888, %v886
  %v1039 = vpack.c.b16 %v889, %v887
  %v1040 = vpack.c.b16 %v892, %v890
  %v1041 = vpack.c.b16 %v893, %v891
  %v1042 = vpack.c.b16 %v896, %v894
  %v1043 = vpack.c.b16 %v897, %v895
  %v1044 = vpack.c.b16 %v900, %v898
  %v1045 = vpack.c.b16 %v901, %v899
  %v1046 = vpack.c.b16 %v904, %v902
  %v1047 = vpack.c.b16 %v905, %v903
  %v1048 = vpack.c.b16 %v908, %v906
  %v1049 = vpack.c.b16 %v909, %v907
  %v1050 = vpack.c.b16 %v912, %v910
  %v1051 = vpack.c.b16 %v913, %v911
  %v1052 = vpack.c.b16 %v916, %v914
  %v1053 = vpack.c.b16 %v917, %v915
  %v1054 = vpack.c.b16 %v920, %v918
  %v1055 = vpack.c.b16 %v921, %v919
  %v1056 = vpack.c.b16 %v924, %v922
  %v1057 = vpack.c.b16 %v925, %v923
  %v1058 = vpack.c.b16 %v928, %v926
  %v1059 = vpack.c.b16 %v929, %v927
  %v1060 = vpack.c.b16 %v932, %v930
  %v1061 = vpack.c.b16 %v933, %v931
  %1190 = vmatprep.subr.bf16.mxu0 %v935
  %1191 = vmatpush1.bf16.msra.mxu0 %v934
  %1192 = vmatprep.subr.bf16.mxu0 %v937
  %1193 = vmatpush1.bf16.msra.mxu0 %v936
  %1194 = vmatprep.subr.bf16.mxu0 %v939
  %1195 = vmatpush1.bf16.msra.mxu0 %v938
  %1196 = vmatprep.subr.bf16.mxu0 %v941
  %1197 = vmatpush1.bf16.msra.mxu0 %v940
  %1198 = vmatprep.subr.bf16.mxu0 %v943
  %1199 = vmatpush1.bf16.msra.mxu0 %v942
  %1200 = vmatprep.subr.bf16.mxu0 %v945
  %1201 = vmatpush1.bf16.msra.mxu0 %v944
  %1202 = vmatprep.subr.bf16.mxu0 %v947
  %1203 = vmatpush1.bf16.msra.mxu0 %v946
  %1204 = vmatprep.subr.bf16.mxu0 %v949
  %1205 = vmatpush1.bf16.msra.mxu0 %v948
  %1206 = vmatprep.subr.bf16.mxu0 %v951
  %1207 = vmatpush1.bf16.msra.mxu0 %v950
  %1208 = vmatprep.subr.bf16.mxu0 %v953
  %1209 = vmatpush1.bf16.msra.mxu0 %v952
  %1210 = vmatprep.subr.bf16.mxu0 %v955
  %1211 = vmatpush1.bf16.msra.mxu0 %v954
  %1212 = vmatprep.subr.bf16.mxu0 %v957
  %1213 = vmatpush1.bf16.msra.mxu0 %v956
  %1214 = vmatprep.subr.bf16.mxu0 %v959
  %1215 = vmatpush1.bf16.msra.mxu0 %v958
  %1216 = vmatprep.subr.bf16.mxu0 %v961
  %1217 = vmatpush1.bf16.msra.mxu0 %v960
  %1218 = vmatprep.subr.bf16.mxu0 %v963
  %1219 = vmatpush1.bf16.msra.mxu0 %v962
  %1220 = vmatprep.subr.bf16.mxu0 %v965
  %1221 = vmatpush1.bf16.msra.mxu0 %v964
  %1222 = vmatprep.mubr.bf16.mxu0 %v367
  %1223 = vmatmul.mubr.bf16.gmra.mrb[0].mxu0 %v366
  %v1224 = vpop.f32.mrb[0].mxu0
  %v1225 = vadd.f32 0.0, %v1224
  %v1226 = vpop.f32.mrb[0].mxu0
  %v1227 = vadd.f32 0.0, %v1226
  %v1228 = vpop.f32.mrb[0].mxu0
  %v1229 = vadd.f32 0.0, %v1228
  %v1230 = vpop.f32.mrb[0].mxu0
  %v1231 = vadd.f32 0.0, %v1230
  %1232 = vmatprep.mubr.bf16.mxu0 %v375
  %1233 = vmatmul.mubr.bf16.gmra.mrb[0].mxu0 %v374
  %v1234 = vpop.f32.mrb[0].mxu0
  %v1235 = vadd.f32 0.0, %v1234
  %v1236 = vpop.f32.mrb[0].mxu0
  %v1237 = vadd.f32 0.0, %v1236
  %v1238 = vpop.f32.mrb[0].mxu0
  %v1239 = vadd.f32 0.0, %v1238
  %v1240 = vpop.f32.mrb[0].mxu0
  %v1241 = vadd.f32 0.0, %v1240
  %1242 = vmatprep.mubr.bf16.mxu0 %v383
  %1243 = vmatmul.mubr.bf16.gmra.mrb[0].mxu0 %v382
  %v1244 = vpop.f32.mrb[0].mxu0
  %v1245 = vadd.f32 0.0, %v1244
  %v1246 = vpop.f32.mrb[0].mxu0
  %v1247 = vadd.f32 0.0, %v1246
  %v1248 = vpop.f32.mrb[0].mxu0
  %v1249 = vadd.f32 0.0, %v1248
  %v1250 = vpop.f32.mrb[0].mxu0
  %v1251 = vadd.f32 0.0, %v1250
  %1252 = vmatprep.mubr.bf16.mxu0 %v391
  %1253 = vmatmul.mubr.bf16.gmra.mrb[0].mxu0 %v390
  %v1254 = vpop.f32.mrb[0].mxu0
  %v1255 = vadd.f32 0.0, %v1254
  %v1256 = vpop.f32.mrb[0].mxu0
  %v1257 = vadd.f32 0.0, %v1256
  %v1258 = vpop.f32.mrb[0].mxu0
  %v1259 = vadd.f32 0.0, %v1258
  %v1260 = vpop.f32.mrb[0].mxu0
  %v1261 = vadd.f32 0.0, %v1260
  %1262 = vmatprep.mubr.bf16.mxu0 %v399
  %1263 = vmatmul.mubr.bf16.gmra.mrb[0].mxu0 %v398
  %v1264 = vpop.f32.mrb[0].mxu0
  %v1265 = vadd.f32 0.0, %v1264
  %v1266 = vpop.f32.mrb[0].mxu0
  %v1267 = vadd.f32 0.0, %v1266
  %v1268 = vpop.f32.mrb[0].mxu0
  %v1269 = vadd.f32 0.0, %v1268
  %v1270 = vpop.f32.mrb[0].mxu0
  %v1271 = vadd.f32 0.0, %v1270
  %1272 = vmatprep.mubr.bf16.mxu0 %v407
  %1273 = vmatmul.mubr.bf16.gmra.mrb[0].mxu0 %v406
  %v1274 = vpop.f32.mrb[0].mxu0
  %v1275 = vadd.f32 0.0, %v1274
  %v1276 = vpop.f32.mrb[0].mxu0
  %v1277 = vadd.f32 0.0, %v1276
  %v1278 = vpop.f32.mrb[0].mxu0
  %v1279 = vadd.f32 0.0, %v1278
  %v1280 = vpop.f32.mrb[0].mxu0
  %v1281 = vadd.f32 0.0, %v1280
  %1282 = vmatprep.mubr.bf16.mxu0 %v415
  %1283 = vmatmul.mubr.bf16.gmra.mrb[0].mxu0 %v414
  %v1284 = vpop.f32.mrb[0].mxu0
  %v1285 = vadd.f32 0.0, %v1284
  %v1286 = vpop.f32.mrb[0].mxu0
  %v1287 = vadd.f32 0.0, %v1286
  %v1288 = vpop.f32.mrb[0].mxu0
  %v1289 = vadd.f32 0.0, %v1288
  %v1290 = vpop.f32.mrb[0].mxu0
  %v1291 = vadd.f32 0.0, %v1290
  %1292 = vdwg.mxu0
  %1293 = vmatprep.subr.bf16.mxu0 %v967
  %1294 = vmatpush1.bf16.msra.mxu0 %v966
  %1295 = vmatprep.subr.bf16.mxu0 %v969
  %1296 = vmatpush1.bf16.msra.mxu0 %v968
  %1297 = vmatprep.subr.bf16.mxu0 %v971
  %1298 = vmatpush1.bf16.msra.mxu0 %v970
  %1299 = vmatprep.subr.bf16.mxu0 %v973
  %1300 = vmatpush1.bf16.msra.mxu0 %v972
  %1301 = vmatprep.subr.bf16.mxu0 %v975
  %1302 = vmatpush1.bf16.msra.mxu0 %v974
  %1303 = vmatprep.subr.bf16.mxu0 %v977
  %1304 = vmatpush1.bf16.msra.mxu0 %v976
  %1305 = vmatprep.subr.bf16.mxu0 %v979
  %1306 = vmatpush1.bf16.msra.mxu0 %v978
  %1307 = vmatprep.subr.bf16.mxu0 %v981
  %1308 = vmatpush1.bf16.msra.mxu0 %v980
  %1309 = vmatprep.subr.bf16.mxu0 %v983
  %1310 = vmatpush1.bf16.msra.mxu0 %v982
  %1311 = vmatprep.subr.bf16.mxu0 %v985
  %1312 = vmatpush1.bf16.msra.mxu0 %v984
  %1313 = vmatprep.subr.bf16.mxu0 %v987
  %1314 = vmatpush1.bf16.msra.mxu0 %v986
  %1315 = vmatprep.subr.bf16.mxu0 %v989
  %1316 = vmatpush1.bf16.msra.mxu0 %v988
  %1317 = vmatprep.subr.bf16.mxu0 %v991
  %1318 = vmatpush1.bf16.msra.mxu0 %v990
  %1319 = vmatprep.subr.bf16.mxu0 %v993
  %1320 = vmatpush1.bf16.msra.mxu0 %v992
  %1321 = vmatprep.subr.bf16.mxu0 %v995
  %1322 = vmatpush1.bf16.msra.mxu0 %v994
  %1323 = vmatprep.subr.bf16.mxu0 %v997
  %1324 = vmatpush1.bf16.msra.mxu0 %v996
  %1325 = vmatprep.mubr.bf16.mxu0 %v369
  %1326 = vmatmul.mubr.bf16.gmra.mrb[0].mxu0 %v368
  %v1327 = vpop.f32.mrb[0].mxu0
  %v1328 = vadd.f32 %v1225, %v1327
  %v1329 = vpop.f32.mrb[0].mxu0
  %v1330 = vadd.f32 %v1227, %v1329
  %v1331 = vpop.f32.mrb[0].mxu0
  %v1332 = vadd.f32 %v1229, %v1331
  %v1333 = vpop.f32.mrb[0].mxu0
  %v1334 = vadd.f32 %v1231, %v1333
  %1335 = vmatprep.mubr.bf16.mxu0 %v377
  %1336 = vmatmul.mubr.bf16.gmra.mrb[0].mxu0 %v376
  %v1337 = vpop.f32.mrb[0].mxu0
  %v1338 = vadd.f32 %v1235, %v1337
  %v1339 = vpop.f32.mrb[0].mxu0
  %v1340 = vadd.f32 %v1237, %v1339
  %v1341 = vpop.f32.mrb[0].mxu0
  %v1342 = vadd.f32 %v1239, %v1341
  %v1343 = vpop.f32.mrb[0].mxu0
  %v1344 = vadd.f32 %v1241, %v1343
  %1345 = vmatprep.mubr.bf16.mxu0 %v385
  %1346 = vmatmul.mubr.bf16.gmra.mrb[0].mxu0 %v384
  %v1347 = vpop.f32.mrb[0].mxu0
  %v1348 = vadd.f32 %v1245, %v1347
  %v1349 = vpop.f32.mrb[0].mxu0
  %v1350 = vadd.f32 %v1247, %v1349
  %v1351 = vpop.f32.mrb[0].mxu0
  %v1352 = vadd.f32 %v1249, %v1351
  %v1353 = vpop.f32.mrb[0].mxu0
  %v1354 = vadd.f32 %v1251, %v1353
  %1355 = vmatprep.mubr.bf16.mxu0 %v393
  %1356 = vmatmul.mubr.bf16.gmra.mrb[0].mxu0 %v392
  %v1357 = vpop.f32.mrb[0].mxu0
  %v1358 = vadd.f32 %v1255, %v1357
  %v1359 = vpop.f32.mrb[0].mxu0
  %v1360 = vadd.f32 %v1257, %v1359
  %v1361 = vpop.f32.mrb[0].mxu0
  %v1362 = vadd.f32 %v1259, %v1361
  %v1363 = vpop.f32.mrb[0].mxu0
  %v1364 = vadd.f32 %v1261, %v1363
  %1365 = vmatprep.mubr.bf16.mxu0 %v401
  %1366 = vmatmul.mubr.bf16.gmra.mrb[0].mxu0 %v400
  %v1367 = vpop.f32.mrb[0].mxu0
  %v1368 = vadd.f32 %v1265, %v1367
  %v1369 = vpop.f32.mrb[0].mxu0
  %v1370 = vadd.f32 %v1267, %v1369
  %v1371 = vpop.f32.mrb[0].mxu0
  %v1372 = vadd.f32 %v1269, %v1371
  %v1373 = vpop.f32.mrb[0].mxu0
  %v1374 = vadd.f32 %v1271, %v1373
  %1375 = vmatprep.mubr.bf16.mxu0 %v409
  %1376 = vmatmul.mubr.bf16.gmra.mrb[0].mxu0 %v408
  %v1377 = vpop.f32.mrb[0].mxu0
  %v1378 = vadd.f32 %v1275, %v1377
  %v1379 = vpop.f32.mrb[0].mxu0
  %v1380 = vadd.f32 %v1277, %v1379
  %v1381 = vpop.f32.mrb[0].mxu0
  %v1382 = vadd.f32 %v1279, %v1381
  %v1383 = vpop.f32.mrb[0].mxu0
  %v1384 = vadd.f32 %v1281, %v1383
  %1385 = vmatprep.mubr.bf16.mxu0 %v417
  %1386 = vmatmul.mubr.bf16.gmra.mrb[0].mxu0 %v416
  %v1387 = vpop.f32.mrb[0].mxu0
  %v1388 = vadd.f32 %v1285, %v1387
  %v1389 = vpop.f32.mrb[0].mxu0
  %v1390 = vadd.f32 %v1287, %v1389
  %v1391 = vpop.f32.mrb[0].mxu0
  %v1392 = vadd.f32 %v1289, %v1391
  %v1393 = vpop.f32.mrb[0].mxu0
  %v1394 = vadd.f32 %v1291, %v1393
  %1395 = vdwg.mxu0
  %1396 = vmatprep.subr.bf16.mxu0 %v999
  %1397 = vmatpush1.bf16.msra.mxu0 %v998
  %1398 = vmatprep.subr.bf16.mxu0 %v1001
  %1399 = vmatpush1.bf16.msra.mxu0 %v1000
  %1400 = vmatprep.subr.bf16.mxu0 %v1003
  %1401 = vmatpush1.bf16.msra.mxu0 %v1002
  %1402 = vmatprep.subr.bf16.mxu0 %v1005
  %1403 = vmatpush1.bf16.msra.mxu0 %v1004
  %1404 = vmatprep.subr.bf16.mxu0 %v1007
  %1405 = vmatpush1.bf16.msra.mxu0 %v1006
  %1406 = vmatprep.subr.bf16.mxu0 %v1009
  %1407 = vmatpush1.bf16.msra.mxu0 %v1008
  %1408 = vmatprep.subr.bf16.mxu0 %v1011
  %1409 = vmatpush1.bf16.msra.mxu0 %v1010
  %1410 = vmatprep.subr.bf16.mxu0 %v1013
  %1411 = vmatpush1.bf16.msra.mxu0 %v1012
  %1412 = vmatprep.subr.bf16.mxu0 %v1015
  %1413 = vmatpush1.bf16.msra.mxu0 %v1014
  %1414 = vmatprep.subr.bf16.mxu0 %v1017
  %1415 = vmatpush1.bf16.msra.mxu0 %v1016
  %1416 = vmatprep.subr.bf16.mxu0 %v1019
  %1417 = vmatpush1.bf16.msra.mxu0 %v1018
  %1418 = vmatprep.subr.bf16.mxu0 %v1021
  %1419 = vmatpush1.bf16.msra.mxu0 %v1020
  %1420 = vmatprep.subr.bf16.mxu0 %v1023
  %1421 = vmatpush1.bf16.msra.mxu0 %v1022
  %1422 = vmatprep.subr.bf16.mxu0 %v1025
  %1423 = vmatpush1.bf16.msra.mxu0 %v1024
  %1424 = vmatprep.subr.bf16.mxu0 %v1027
  %1425 = vmatpush1.bf16.msra.mxu0 %v1026
  %1426 = vmatprep.subr.bf16.mxu0 %v1029
  %1427 = vmatpush1.bf16.msra.mxu0 %v1028
  %1428 = vmatprep.mubr.bf16.mxu0 %v371
  %1429 = vmatmul.mubr.bf16.gmra.mrb[0].mxu0 %v370
  %v1430 = vpop.f32.mrb[0].mxu0
  %v1431 = vadd.f32 %v1328, %v1430
  %v1432 = vpop.f32.mrb[0].mxu0
  %v1433 = vadd.f32 %v1330, %v1432
  %v1434 = vpop.f32.mrb[0].mxu0
  %v1435 = vadd.f32 %v1332, %v1434
  %v1436 = vpop.f32.mrb[0].mxu0
  %v1437 = vadd.f32 %v1334, %v1436
  %1438 = vmatprep.mubr.bf16.mxu0 %v379
  %1439 = vmatmul.mubr.bf16.gmra.mrb[0].mxu0 %v378
  %v1440 = vpop.f32.mrb[0].mxu0
  %v1441 = vadd.f32 %v1338, %v1440
  %v1442 = vpop.f32.mrb[0].mxu0
  %v1443 = vadd.f32 %v1340, %v1442
  %v1444 = vpop.f32.mrb[0].mxu0
  %v1445 = vadd.f32 %v1342, %v1444
  %v1446 = vpop.f32.mrb[0].mxu0
  %v1447 = vadd.f32 %v1344, %v1446
  %1448 = vmatprep.mubr.bf16.mxu0 %v387
  %1449 = vmatmul.mubr.bf16.gmra.mrb[0].mxu0 %v386
  %v1450 = vpop.f32.mrb[0].mxu0
  %v1451 = vadd.f32 %v1348, %v1450
  %v1452 = vpop.f32.mrb[0].mxu0
  %v1453 = vadd.f32 %v1350, %v1452
  %v1454 = vpop.f32.mrb[0].mxu0
  %v1455 = vadd.f32 %v1352, %v1454
  %v1456 = vpop.f32.mrb[0].mxu0
  %v1457 = vadd.f32 %v1354, %v1456
  %1458 = vmatprep.mubr.bf16.mxu0 %v395
  %1459 = vmatmul.mubr.bf16.gmra.mrb[0].mxu0 %v394
  %v1460 = vpop.f32.mrb[0].mxu0
  %v1461 = vadd.f32 %v1358, %v1460
  %v1462 = vpop.f32.mrb[0].mxu0
  %v1463 = vadd.f32 %v1360, %v1462
  %v1464 = vpop.f32.mrb[0].mxu0
  %v1465 = vadd.f32 %v1362, %v1464
  %v1466 = vpop.f32.mrb[0].mxu0
  %v1467 = vadd.f32 %v1364, %v1466
  %1468 = vmatprep.mubr.bf16.mxu0 %v403
  %1469 = vmatmul.mubr.bf16.gmra.mrb[0].mxu0 %v402
  %v1470 = vpop.f32.mrb[0].mxu0
  %v1471 = vadd.f32 %v1368, %v1470
  %v1472 = vpop.f32.mrb[0].mxu0
  %v1473 = vadd.f32 %v1370, %v1472
  %v1474 = vpop.f32.mrb[0].mxu0
  %v1475 = vadd.f32 %v1372, %v1474
  %v1476 = vpop.f32.mrb[0].mxu0
  %v1477 = vadd.f32 %v1374, %v1476
  %1478 = vmatprep.mubr.bf16.mxu0 %v411
  %1479 = vmatmul.mubr.bf16.gmra.mrb[0].mxu0 %v410
  %v1480 = vpop.f32.mrb[0].mxu0
  %v1481 = vadd.f32 %v1378, %v1480
  %v1482 = vpop.f32.mrb[0].mxu0
  %v1483 = vadd.f32 %v1380, %v1482
  %v1484 = vpop.f32.mrb[0].mxu0
  %v1485 = vadd.f32 %v1382, %v1484
  %v1486 = vpop.f32.mrb[0].mxu0
  %v1487 = vadd.f32 %v1384, %v1486
  %1488 = vmatprep.mubr.bf16.mxu0 %v419
  %1489 = vmatmul.mubr.bf16.gmra.mrb[0].mxu0 %v418
  %v1490 = vpop.f32.mrb[0].mxu0
  %v1491 = vadd.f32 %v1388, %v1490
  %v1492 = vpop.f32.mrb[0].mxu0
  %v1493 = vadd.f32 %v1390, %v1492
  %v1494 = vpop.f32.mrb[0].mxu0
  %v1495 = vadd.f32 %v1392, %v1494
  %v1496 = vpop.f32.mrb[0].mxu0
  %v1497 = vadd.f32 %v1394, %v1496
  %1498 = vdwg.mxu0
  %1499 = vmatprep.subr.bf16.mxu0 %v1031
  %1500 = vmatpush1.bf16.msra.mxu0 %v1030
  %1501 = vmatprep.subr.bf16.mxu0 %v1033
  %1502 = vmatpush1.bf16.msra.mxu0 %v1032
  %1503 = vmatprep.subr.bf16.mxu0 %v1035
  %1504 = vmatpush1.bf16.msra.mxu0 %v1034
  %1505 = vmatprep.subr.bf16.mxu0 %v1037
  %1506 = vmatpush1.bf16.msra.mxu0 %v1036
  %1507 = vmatprep.subr.bf16.mxu0 %v1039
  %1508 = vmatpush1.bf16.msra.mxu0 %v1038
  %1509 = vmatprep.subr.bf16.mxu0 %v1041
  %1510 = vmatpush1.bf16.msra.mxu0 %v1040
  %1511 = vmatprep.subr.bf16.mxu0 %v1043
  %1512 = vmatpush1.bf16.msra.mxu0 %v1042
  %1513 = vmatprep.subr.bf16.mxu0 %v1045
  %1514 = vmatpush1.bf16.msra.mxu0 %v1044
  %1515 = vmatprep.subr.bf16.mxu0 %v1047
  %1516 = vmatpush1.bf16.msra.mxu0 %v1046
  %1517 = vmatprep.subr.bf16.mxu0 %v1049
  %1518 = vmatpush1.bf16.msra.mxu0 %v1048
  %1519 = vmatprep.subr.bf16.mxu0 %v1051
  %1520 = vmatpush1.bf16.msra.mxu0 %v1050
  %1521 = vmatprep.subr.bf16.mxu0 %v1053
  %1522 = vmatpush1.bf16.msra.mxu0 %v1052
  %1523 = vmatprep.subr.bf16.mxu0 %v1055
  %1524 = vmatpush1.bf16.msra.mxu0 %v1054
  %1525 = vmatprep.subr.bf16.mxu0 %v1057
  %1526 = vmatpush1.bf16.msra.mxu0 %v1056
  %1527 = vmatprep.subr.bf16.mxu0 %v1059
  %1528 = vmatpush1.bf16.msra.mxu0 %v1058
  %1529 = vmatprep.subr.bf16.mxu0 %v1061
  %1530 = vmatpush1.bf16.msra.mxu0 %v1060
  %1531 = vmatprep.mubr.bf16.mxu0 %v373
  %1532 = vmatmul.mubr.bf16.gmra.mrb[0].mxu0 %v372
  %v1533 = vpop.f32.mrb[0].mxu0
  %v1534 = vadd.f32 %v1431, %v1533
  %v1535 = vpop.f32.mrb[0].mxu0
  %v1536 = vadd.f32 %v1433, %v1535
  %v1537 = vpop.f32.mrb[0].mxu0
  %v1538 = vadd.f32 %v1435, %v1537
  %v1539 = vpop.f32.mrb[0].mxu0
  %v1540 = vadd.f32 %v1437, %v1539
  %1541 = vmatprep.mubr.bf16.mxu0 %v381
  %1542 = vmatmul.mubr.bf16.gmra.mrb[0].mxu0 %v380
  %v1543 = vpop.f32.mrb[0].mxu0
  %v1544 = vadd.f32 %v1441, %v1543
  %v1545 = vpop.f32.mrb[0].mxu0
  %v1546 = vadd.f32 %v1443, %v1545
  %v1547 = vpop.f32.mrb[0].mxu0
  %v1548 = vadd.f32 %v1445, %v1547
  %v1549 = vpop.f32.mrb[0].mxu0
  %v1550 = vadd.f32 %v1447, %v1549
  %1551 = vmatprep.mubr.bf16.mxu0 %v389
  %1552 = vmatmul.mubr.bf16.gmra.mrb[0].mxu0 %v388
  %v1553 = vpop.f32.mrb[0].mxu0
  %v1554 = vadd.f32 %v1451, %v1553
  %v1555 = vpop.f32.mrb[0].mxu0
  %v1556 = vadd.f32 %v1453, %v1555
  %v1557 = vpop.f32.mrb[0].mxu0
  %v1558 = vadd.f32 %v1455, %v1557
  %v1559 = vpop.f32.mrb[0].mxu0
  %v1560 = vadd.f32 %v1457, %v1559
  %1561 = vmatprep.mubr.bf16.mxu0 %v397
  %1562 = vmatmul.mubr.bf16.gmra.mrb[0].mxu0 %v396
  %v1563 = vpop.f32.mrb[0].mxu0
  %v1564 = vadd.f32 %v1461, %v1563
  %v1565 = vpop.f32.mrb[0].mxu0
  %v1566 = vadd.f32 %v1463, %v1565
  %v1567 = vpop.f32.mrb[0].mxu0
  %v1568 = vadd.f32 %v1465, %v1567
  %v1569 = vpop.f32.mrb[0].mxu0
  %v1570 = vadd.f32 %v1467, %v1569
  %1571 = vmatprep.mubr.bf16.mxu0 %v405
  %1572 = vmatmul.mubr.bf16.gmra.mrb[0].mxu0 %v404
  %v1573 = vpop.f32.mrb[0].mxu0
  %v1574 = vadd.f32 %v1471, %v1573
  %v1575 = vpop.f32.mrb[0].mxu0
  %v1576 = vadd.f32 %v1473, %v1575
  %v1577 = vpop.f32.mrb[0].mxu0
  %v1578 = vadd.f32 %v1475, %v1577
  %v1579 = vpop.f32.mrb[0].mxu0
  %v1580 = vadd.f32 %v1477, %v1579
  %1581 = vmatprep.mubr.bf16.mxu0 %v413
  %1582 = vmatmul.mubr.bf16.gmra.mrb[0].mxu0 %v412
  %v1583 = vpop.f32.mrb[0].mxu0
  %v1584 = vadd.f32 %v1481, %v1583
  %v1585 = vpop.f32.mrb[0].mxu0
  %v1586 = vadd.f32 %v1483, %v1585
  %v1587 = vpop.f32.mrb[0].mxu0
  %v1588 = vadd.f32 %v1485, %v1587
  %v1589 = vpop.f32.mrb[0].mxu0
  %v1590 = vadd.f32 %v1487, %v1589
  %1591 = vmatprep.mubr.bf16.mxu0 %v421
  %1592 = vmatmul.mubr.bf16.gmra.mrb[0].mxu0 %v420
  %v1593 = vpop.f32.mrb[0].mxu0
  %v1594 = vadd.f32 %v1491, %v1593
  %v1595 = vpop.f32.mrb[0].mxu0
  %v1596 = vadd.f32 %v1493, %v1595
  %v1597 = vpop.f32.mrb[0].mxu0
  %v1598 = vadd.f32 %v1495, %v1597
  %v1599 = vpop.f32.mrb[0].mxu0
  %v1600 = vadd.f32 %v1497, %v1599
  %1601 = vdwg.mxu0
  %1602 = vst [vmem:[#allocation4] sm:$0xff] %v1534
  %1603 = vst [vmem:[#allocation4 + $0x8] sm:$0xff] %v1536
  %1604 = vst [vmem:[#allocation4 + $0x10] sm:$0xff] %v1538
  %1605 = vst [vmem:[#allocation4 + $0x18] sm:$0xff] %v1540
  %1606 = vst [vmem:[#allocation4 + $0x20] sm:$0xff] %v1544
  %1607 = vst [vmem:[#allocation4 + $0x28] sm:$0xff] %v1546
  %1608 = vst [vmem:[#allocation4 + $0x30] sm:$0xff] %v1548
  %1609 = vst [vmem:[#allocation4 + $0x38] sm:$0xff] %v1550
  %1610 = vst [vmem:[#allocation4 + $0x40] sm:$0xff] %v1554
  %1611 = vst [vmem:[#allocation4 + $0x48] sm:$0xff] %v1556
  %1612 = vst [vmem:[#allocation4 + $0x50] sm:$0xff] %v1558
  %1613 = vst [vmem:[#allocation4 + $0x58] sm:$0xff] %v1560
  %1614 = vst [vmem:[#allocation4 + $0x60] sm:$0xff] %v1564
  %1615 = vst [vmem:[#allocation4 + $0x68] sm:$0xff] %v1566
  %1616 = vst [vmem:[#allocation4 + $0x70] sm:$0xff] %v1568
  %1617 = vst [vmem:[#allocation4 + $0x78] sm:$0xff] %v1570
  %1618 = vst [vmem:[#allocation4 + $0x80] sm:$0xff] %v1574
  %1619 = vst [vmem:[#allocation4 + $0x88] sm:$0xff] %v1576
  %1620 = vst [vmem:[#allocation4 + $0x90] sm:$0xff] %v1578
  %1621 = vst [vmem:[#allocation4 + $0x98] sm:$0xff] %v1580
  %1622 = vst [vmem:[#allocation4 + $0xa0] sm:$0xff] %v1584
  %1623 = vst [vmem:[#allocation4 + $0xa8] sm:$0xff] %v1586
  %1624 = vst [vmem:[#allocation4 + $0xb0] sm:$0xff] %v1588
  %1625 = vst [vmem:[#allocation4 + $0xb8] sm:$0xff] %v1590
  %1626 = vst [vmem:[#allocation4 + $0xc0] sm:$0xff] %v1594
  %1627 = vst [vmem:[#allocation4 + $0xc8] sm:$0xff] %v1596
  %1628 = vst [vmem:[#allocation4 + $0xd0] sm:$0x7] %v1598
  %1629 = vst [vmem:[#allocation4 + $0xd8] sm:$0x7] %v1600
  %v1630 = vld [vmem:[%s2] sm:$0x1]
  %v1631 = vld [vmem:[#allocation4] sm:$0xff]
  %v1632 = vld [vmem:[#allocation4 + $0x10] sm:$0xff]
  %v1633 = vld [vmem:[#allocation4 + $0x20] sm:$0xff]
  %v1634 = vld [vmem:[#allocation4 + $0x30] sm:$0xff]
  %v1635 = vld [vmem:[#allocation4 + $0x40] sm:$0xff]
  %v1636 = vld [vmem:[#allocation4 + $0x50] sm:$0xff]
  %v1637 = vld [vmem:[#allocation4 + $0x60] sm:$0xff]
  %v1638 = vld [vmem:[#allocation4 + $0x70] sm:$0x7]
  %v1640 = vlaneseq
  %v1641 = vshrl.u32 %v1640, 7
  %v1642 = vsub.s32 0, %v1641
  %v1643 = vrot.slane %v1630, %v1642
  %v1645 = vadd.f32 %v1643, %v1631
  %v1646 = vadd.f32 %v1643, %v1632
  %v1647 = vadd.f32 %v1643, %v1633
  %v1648 = vadd.f32 %v1643, %v1634
  %v1649 = vadd.f32 %v1643, %v1635
  %v1650 = vadd.f32 %v1643, %v1636
  %v1651 = vadd.f32 %v1643, %v1637
  %v1652 = vadd.f32 %v1643, %v1638
  %v1653 = vld [vmem:[#allocation4 + $0x70] sm:$0xff]
  %v1654 = vld [vmem:[#allocation4 + $0x80] sm:$0xff]
  %v1655 = vld [vmem:[#allocation4 + $0x90] sm:$0x7]
  %1664 = vrot.lane.b32.xlu0 %v1633, 64
  %v1665 = vpop.permute.xlu0 %1664
  %1666 = vrot.lane.b32.xlu0 %v1634, 64
  %v1667 = vpop.permute.xlu0 %1666
  %1668 = vrot.lane.b32.xlu0 %v1635, 64
  %v1669 = vpop.permute.xlu0 %1668
  %1670 = vrot.lane.b32.xlu0 %v1636, 64
  %v1671 = vpop.permute.xlu0 %1670
  %1672 = vrot.lane.b32.xlu0 %v1637, 64
  %v1673 = vpop.permute.xlu0 %1672
  %1674 = vrot.lane.b32.xlu0 %v1653, 64
  %v1675 = vpop.permute.xlu0 %1674
  %1676 = vrot.lane.b32.xlu0 %v1654, 64
  %v1677 = vpop.permute.xlu0 %1676
  %1678 = vrot.lane.b32.xlu0 %v1655, 64
  %v1679 = vpop.permute.xlu0 %1678
  %v1688 = vadd.f32 %v1645, %v1665
  %v1689 = vadd.f32 %v1646, %v1667
  %v1690 = vadd.f32 %v1647, %v1669
  %v1691 = vadd.f32 %v1648, %v1671
  %v1692 = vadd.f32 %v1649, %v1673
  %v1693 = vadd.f32 %v1650, %v1675
  %v1694 = vadd.f32 %v1651, %v1677
  %v1695 = vadd.f32 %v1652, %v1679
  %v1696 = vld [vmem:[#allocation4 + $0x48] sm:$0xff]
  %v1697 = vld [vmem:[#allocation4 + $0x58] sm:$0xff]
  %v1698 = vld [vmem:[#allocation4 + $0x68] sm:$0xff]
  %v1699 = vld [vmem:[#allocation4 + $0x78] sm:$0xff]
  %v1700 = vld [vmem:[#allocation4 + $0x88] sm:$0xff]
  %v1701 = vld [vmem:[#allocation4 + $0x98] sm:$0xff]
  %v1702 = vld [vmem:[#allocation4 + $0xa8] sm:$0xff]
  %v1703 = vld [vmem:[#allocation4 + $0xb8] sm:$0x7]
  %v1704 = vadd.f32 %v1688, %v1696
  %v1705 = vadd.f32 %v1689, %v1697
  %v1706 = vadd.f32 %v1690, %v1698
  %v1707 = vadd.f32 %v1691, %v1699
  %v1708 = vadd.f32 %v1692, %v1700
  %v1709 = vadd.f32 %v1693, %v1701
  %v1710 = vadd.f32 %v1694, %v1702
  %v1711 = vadd.f32 %v1695, %v1703
  %v1712 = vld [vmem:[#allocation4 + $0x68] sm:$0xff]
  %v1713 = vld [vmem:[#allocation4 + $0x78] sm:$0xff]
  %v1714 = vld [vmem:[#allocation4 + $0x88] sm:$0xff]
  %v1715 = vld [vmem:[#allocation4 + $0x98] sm:$0xff]
  %v1716 = vld [vmem:[#allocation4 + $0xa8] sm:$0xff]
  %v1717 = vld [vmem:[#allocation4 + $0xb8] sm:$0xff]
  %v1718 = vld [vmem:[#allocation4 + $0xc8] sm:$0xff]
  %v1719 = vld [vmem:[#allocation4 + $0xd8] sm:$0x7]
  %1728 = vrot.lane.b32.xlu0 %v1712, 64
  %v1729 = vpop.permute.xlu0 %1728
  %1730 = vrot.lane.b32.xlu0 %v1713, 64
  %v1731 = vpop.permute.xlu0 %1730
  %1732 = vrot.lane.b32.xlu0 %v1714, 64
  %v1733 = vpop.permute.xlu0 %1732
  %1734 = vrot.lane.b32.xlu0 %v1715, 64
  %v1735 = vpop.permute.xlu0 %1734
  %1736 = vrot.lane.b32.xlu0 %v1716, 64
  %v1737 = vpop.permute.xlu0 %1736
  %1738 = vrot.lane.b32.xlu0 %v1717, 64
  %v1739 = vpop.permute.xlu0 %1738
  %1740 = vrot.lane.b32.xlu0 %v1718, 64
  %v1741 = vpop.permute.xlu0 %1740
  %1742 = vrot.lane.b32.xlu0 %v1719, 64
  %v1743 = vpop.permute.xlu0 %1742
  %v1752 = vadd.f32 %v1704, %v1729
  %v1753 = vadd.f32 %v1705, %v1731
  %v1754 = vadd.f32 %v1706, %v1733
  %v1755 = vadd.f32 %v1707, %v1735
  %v1756 = vadd.f32 %v1708, %v1737
  %v1757 = vadd.f32 %v1709, %v1739
  %v1758 = vadd.f32 %v1710, %v1741
  %v1759 = vadd.f32 %v1711, %v1743
  %1760 = vst.msk [vmem:[#allocation2] sm:$0xff] %vm188, %v1752
  %1761 = vst.msk [vmem:[#allocation2 + $0x8] sm:$0xff] %vm188, %v1753
  %1762 = vst.msk [vmem:[#allocation2 + $0x10] sm:$0xff] %vm188, %v1754
  %1763 = vst.msk [vmem:[#allocation2 + $0x18] sm:$0xff] %vm188, %v1755
  %1764 = vst.msk [vmem:[#allocation2 + $0x20] sm:$0xff] %vm188, %v1756
  %1765 = vst.msk [vmem:[#allocation2 + $0x28] sm:$0xff] %vm188, %v1757
  %1766 = vst.msk [vmem:[#allocation2 + $0x30] sm:$0xff] %vm188, %v1758
  %vm1767 = vcmask 518144
  %1768 = vst.msk [vmem:[#allocation2 + $0x38] sm:$0x7] %vm1767, %v1759
  %v1769 = vsel %vm188, %v1752, 0.0
  %v1770 = vsel %vm188, %v1753, 0.0
  %v1771 = vadd.f32 %v1769, %v1770
  %v1772 = vsel %vm188, %v1754, 0.0
  %v1773 = vadd.f32 %v1771, %v1772
  %v1774 = vsel %vm188, %v1755, 0.0
  %v1775 = vadd.f32 %v1773, %v1774
  %v1776 = vsel %vm188, %v1756, 0.0
  %v1777 = vadd.f32 %v1775, %v1776
  %v1778 = vsel %vm188, %v1757, 0.0
  %v1779 = vadd.f32 %v1777, %v1778
  %v1780 = vsel %vm188, %v1758, 0.0
  %v1781 = vadd.f32 %v1779, %v1780
  %v1782 = vsel %vm1767, %v1759, 0.0
  %v1783 = vadd.f32 %v1781, %v1782
  %v1784 = vrot.slane %v1783, 4
  %v1785 = vadd.f32 %v1783, %v1784
  %v1786 = vrot.slane %v1785, 2
  %v1787 = vadd.f32 %v1785, %v1786
  %v1788 = vrot.slane %v1787, 1
  %v1789 = vadd.f32 %v1787, %v1788
  %v1790 = vadd.f32 %v1789, 0.0
  %v1791 = vmul.f32 %v1752, %v1752
  %v1792 = vmul.f32 %v1753, %v1753
  %v1793 = vmul.f32 %v1754, %v1754
  %v1794 = vmul.f32 %v1755, %v1755
  %v1795 = vmul.f32 %v1756, %v1756
  %v1796 = vmul.f32 %v1757, %v1757
  %v1797 = vmul.f32 %v1758, %v1758
  %v1798 = vmul.f32 %v1759, %v1759
  %v1799 = vsel %vm188, %v1791, 0.0
  %v1800 = vsel %vm188, %v1792, 0.0
  %v1801 = vadd.f32 %v1799, %v1800
  %v1802 = vsel %vm188, %v1793, 0.0
  %v1803 = vadd.f32 %v1801, %v1802
  %v1804 = vsel %vm188, %v1794, 0.0
  %v1805 = vadd.f32 %v1803, %v1804
  %v1806 = vsel %vm188, %v1795, 0.0
  %v1807 = vadd.f32 %v1805, %v1806
  %v1808 = vsel %vm188, %v1796, 0.0
  %v1809 = vadd.f32 %v1807, %v1808
  %v1810 = vsel %vm188, %v1797, 0.0
  %v1811 = vadd.f32 %v1809, %v1810
  %v1812 = vsel %vm1767, %v1798, 0.0
  %v1813 = vadd.f32 %v1811, %v1812
  %v1814 = vrot.slane %v1813, 4
  %v1815 = vadd.f32 %v1813, %v1814
  %v1816 = vrot.slane %v1815, 2
  %v1817 = vadd.f32 %v1815, %v1816
  %v1818 = vrot.slane %v1817, 1
  %v1819 = vadd.f32 %v1817, %v1818
  %v1820 = vadd.f32 %v1819, 0.0
  %s1821 = scalar_lea.vmem %s0, 64
  %v1822 = vld [vmem:[%s1821] sm:$0xff]
  %v1823 = vld [vmem:[%s1821 + $0x8] sm:$0xff]
  %v1824 = vld [vmem:[%s1821 + $0x10] sm:$0xff]
  %v1825 = vld [vmem:[%s1821 + $0x18] sm:$0xff]
  %v1826 = vld [vmem:[%s1821 + $0x20] sm:$0xff]
  %v1827 = vld [vmem:[%s1821 + $0x28] sm:$0xff]
  %v1828 = vld [vmem:[%s1821 + $0x30] sm:$0xff]
  %v1829 = vld [vmem:[%s1821 + $0x38] sm:$0x7]
  %v1838 = vrot.slane %v1822, 6
  %v1839 = vrot.slane %v1823, 6
  %v1840 = vsel %vm116, %v1838, %v1839
  %v1841 = vrot.slane %v1824, 6
  %v1842 = vsel %vm116, %v1839, %v1841
  %v1843 = vrot.slane %v1825, 6
  %v1844 = vsel %vm116, %v1841, %v1843
  %v1845 = vrot.slane %v1826, 6
  %v1846 = vsel %vm116, %v1843, %v1845
  %v1847 = vrot.slane %v1827, 6
  %v1848 = vsel %vm116, %v1845, %v1847
  %v1849 = vrot.slane %v1828, 6
  %v1850 = vsel %vm116, %v1847, %v1849
  %v1851 = vrot.slane %v1829, 6
  %v1852 = vsel %vm116, %v1849, %v1851
  %v1861 = vsel %vm116, 0.0, %v1838
  %v1862 = vrot.slane %v1822, 7
  %v1863 = vrot.slane %v1823, 7
  %v1864 = vsel %vm141, %v1862, %v1863
  %v1865 = vrot.slane %v1824, 7
  %v1866 = vsel %vm141, %v1863, %v1865
  %v1867 = vrot.slane %v1825, 7
  %v1868 = vsel %vm141, %v1865, %v1867
  %v1869 = vrot.slane %v1826, 7
  %v1870 = vsel %vm141, %v1867, %v1869
  %v1871 = vrot.slane %v1827, 7
  %v1872 = vsel %vm141, %v1869, %v1871
  %v1873 = vrot.slane %v1828, 7
  %v1874 = vsel %vm141, %v1871, %v1873
  %v1875 = vrot.slane %v1829, 7
  %v1876 = vsel %vm141, %v1873, %v1875
  %v1879 = vsel %vm141, 0.0, %v1862
  %v1880 = vsel %vm160, %v1876, 0.0
  %1883 = vrot.lane.b32.xlu0 %v1879, 64
  %v1884 = vpop.permute.xlu0 %1883
  %1885 = vrot.lane.b32.xlu0 %v1864, 64
  %v1886 = vpop.permute.xlu0 %1885
  %1887 = vrot.lane.b32.xlu0 %v1866, 64
  %v1888 = vpop.permute.xlu0 %1887
  %1889 = vrot.lane.b32.xlu0 %v1868, 64
  %v1890 = vpop.permute.xlu0 %1889
  %1891 = vrot.lane.b32.xlu0 %v1870, 64
  %v1892 = vpop.permute.xlu0 %1891
  %1893 = vrot.lane.b32.xlu0 %v1872, 64
  %v1894 = vpop.permute.xlu0 %1893
  %1895 = vrot.lane.b32.xlu0 %v1874, 64
  %v1896 = vpop.permute.xlu0 %1895
  %1897 = vrot.lane.b32.xlu0 %v1880, 64
  %v1898 = vpop.permute.xlu0 %1897
  %v1907 = vsel %vm188, %v1861, %v1884
  %v1908 = vsel %vm188, %v1840, %v1886
  %v1909 = vsel %vm188, %v1842, %v1888
  %v1910 = vsel %vm188, %v1844, %v1890
  %v1911 = vsel %vm188, %v1846, %v1892
  %v1912 = vsel %vm188, %v1848, %v1894
  %v1913 = vsel %vm188, %v1850, %v1896
  %v1914 = vsel %vm188, %v1852, %v1898
  %v1915 = vpack.c.bf16 %v1908, %v1907
  %v1916 = vpack.c.bf16 %v1910, %v1909
  %v1917 = vpack.c.bf16 %v1912, %v1911
  %v1918 = vpack.c.bf16 %v1914, %v1913
  %v1923 = vrot.slane %v1915, 5
  %v1924 = vrot.slane %v1916, 5
  %v1925 = vsel %vm205, %v1923, %v1924
  %v1926 = vrot.slane %v1917, 5
  %v1927 = vsel %vm205, %v1924, %v1926
  %v1928 = vrot.slane %v1918, 5
  %v1929 = vsel %vm205, %v1926, %v1928
  %1935 = vst [vmem:[#allocation3 + $0x40] sm:$0xf8] %v1923
  %1936 = vst [vmem:[#allocation3 + $0x80] sm:$0xff] %v1925
  %1937 = vst [vmem:[#allocation3 + $0xc0] sm:$0xff] %v1927
  %1938 = vst [vmem:[#allocation3 + $0x100] sm:$0xff] %v1929
  %v1939 = vld [vmem:[#allocation3 + $0x140] sm:$0x3]
  %v1940 = vsel %vm224, %v1928, %v1939
  %1941 = vst [vmem:[#allocation3 + $0x140] sm:$0x3] %v1940
  %v1942 = vrot.slane %v1915, 6
  %v1943 = vrot.slane %v1916, 6
  %v1944 = vsel %vm222, %v1942, %v1943
  %v1945 = vrot.slane %v1917, 6
  %v1946 = vsel %vm222, %v1943, %v1945
  %v1947 = vrot.slane %v1918, 6
  %v1948 = vsel %vm222, %v1945, %v1947
  %1954 = vst [vmem:[#allocation3 + $0x48] sm:$0xfc] %v1942
  %1955 = vst [vmem:[#allocation3 + $0x88] sm:$0xff] %v1944
  %1956 = vst [vmem:[#allocation3 + $0xc8] sm:$0xff] %v1946
  %1957 = vst [vmem:[#allocation3 + $0x108] sm:$0xff] %v1948
  %v1958 = vld [vmem:[#allocation3 + $0x148] sm:$0x1]
  %v1959 = vsel %vm246, %v1947, %v1958
  %1960 = vst [vmem:[#allocation3 + $0x148] sm:$0x1] %v1959
  %v1961 = vrot.slane %v1915, 7
  %v1962 = vrot.slane %v1916, 7
  %v1963 = vsel %vm244, %v1961, %v1962
  %v1964 = vrot.slane %v1917, 7
  %v1965 = vsel %vm244, %v1962, %v1964
  %v1966 = vrot.slane %v1918, 7
  %v1967 = vsel %vm244, %v1964, %v1966
  %1972 = vst [vmem:[#allocation3 + $0x50] sm:$0xfe] %v1961
  %1973 = vst [vmem:[#allocation3 + $0x90] sm:$0xff] %v1963
  %1974 = vst [vmem:[#allocation3 + $0xd0] sm:$0xff] %v1965
  %v1975 = vld [vmem:[#allocation3 + $0x110] sm:$0xff]
  %v1976 = vsel %vm266, %v1967, %v1975
  %1977 = vst [vmem:[#allocation3 + $0x110] sm:$0xff] %v1976
  %1978 = vst [vmem:[#allocation3 + $0x58] sm:$0xff] %v1915
  %1979 = vst [vmem:[#allocation3 + $0x98] sm:$0xff] %v1916
  %1980 = vst [vmem:[#allocation3 + $0xd8] sm:$0xff] %v1917
  %v1981 = vld [vmem:[#allocation3 + $0x118] sm:$0x7f]
  %v1982 = vsel %vm275, %v1918, %v1981
  %1983 = vst [vmem:[#allocation3 + $0x118] sm:$0x7f] %v1982
  %v1984 = vrot.slane %v1915, 1
  %v1985 = vrot.slane %v1916, 1
  %v1986 = vsel %vm273, %v1984, %v1985
  %v1987 = vrot.slane %v1917, 1
  %v1988 = vsel %vm273, %v1985, %v1987
  %v1989 = vrot.slane %v1918, 1
  %v1990 = vsel %vm273, %v1987, %v1989
  %1996 = vst [vmem:[#allocation3 + $0x20] sm:$0x80] %v1984
  %1997 = vst [vmem:[#allocation3 + $0x60] sm:$0xff] %v1986
  %1998 = vst [vmem:[#allocation3 + $0xa0] sm:$0xff] %v1988
  %1999 = vst [vmem:[#allocation3 + $0xe0] sm:$0xff] %v1990
  %v2000 = vld [vmem:[#allocation3 + $0x120] sm:$0x3f]
  %v2001 = vsel %vm297, %v1989, %v2000
  %2002 = vst [vmem:[#allocation3 + $0x120] sm:$0x3f] %v2001
  %v2003 = vrot.slane %v1915, 2
  %v2004 = vrot.slane %v1916, 2
  %v2005 = vsel %vm295, %v2003, %v2004
  %v2006 = vrot.slane %v1917, 2
  %v2007 = vsel %vm295, %v2004, %v2006
  %v2008 = vrot.slane %v1918, 2
  %v2009 = vsel %vm295, %v2006, %v2008
  %2015 = vst [vmem:[#allocation3 + $0x28] sm:$0xc0] %v2003
  %2016 = vst [vmem:[#allocation3 + $0x68] sm:$0xff] %v2005
  %2017 = vst [vmem:[#allocation3 + $0xa8] sm:$0xff] %v2007
  %2018 = vst [vmem:[#allocation3 + $0xe8] sm:$0xff] %v2009
  %v2019 = vld [vmem:[#allocation3 + $0x128] sm:$0x1f]
  %v2020 = vsel %vm319, %v2008, %v2019
  %2021 = vst [vmem:[#allocation3 + $0x128] sm:$0x1f] %v2020
  %v2022 = vrot.slane %v1915, 3
  %v2023 = vrot.slane %v1916, 3
  %v2024 = vsel %vm317, %v2022, %v2023
  %v2025 = vrot.slane %v1917, 3
  %v2026 = vsel %vm317, %v2023, %v2025
  %v2027 = vrot.slane %v1918, 3
  %v2028 = vsel %vm317, %v2025, %v2027
  %2034 = vst [vmem:[#allocation3 + $0x30] sm:$0xe0] %v2022
  %2035 = vst [vmem:[#allocation3 + $0x70] sm:$0xff] %v2024
  %2036 = vst [vmem:[#allocation3 + $0xb0] sm:$0xff] %v2026
  %2037 = vst [vmem:[#allocation3 + $0xf0] sm:$0xff] %v2028
  %v2038 = vld [vmem:[#allocation3 + $0x130] sm:$0xf]
  %v2039 = vsel %vm341, %v2027, %v2038
  %2040 = vst [vmem:[#allocation3 + $0x130] sm:$0xf] %v2039
  %v2041 = vrot.slane %v1915, 4
  %v2042 = vrot.slane %v1916, 4
  %v2043 = vsel %vm339, %v2041, %v2042
  %v2044 = vrot.slane %v1917, 4
  %v2045 = vsel %vm339, %v2042, %v2044
  %v2046 = vrot.slane %v1918, 4
  %v2047 = vsel %vm339, %v2044, %v2046
  %2053 = vst [vmem:[#allocation3 + $0x38] sm:$0xf0] %v2041
  %2054 = vst [vmem:[#allocation3 + $0x78] sm:$0xff] %v2043
  %2055 = vst [vmem:[#allocation3 + $0xb8] sm:$0xff] %v2045
  %2056 = vst [vmem:[#allocation3 + $0xf8] sm:$0xff] %v2047
  %v2057 = vld [vmem:[#allocation3 + $0x138] sm:$0x7]
  %v2058 = vsel %vm362, %v2046, %v2057
  %2059 = vst [vmem:[#allocation3 + $0x138] sm:$0x7] %v2058
  %v2060 = vld [vmem:[#allocation3] sm:$0xff]
  %v2061 = vld [vmem:[#allocation3 + $0x8] sm:$0xff]
  %v2062 = vld [vmem:[#allocation3 + $0x10] sm:$0xff]
  %v2063 = vld [vmem:[#allocation3 + $0x18] sm:$0xff]
  %v2064 = vld [vmem:[#allocation3 + $0x20] sm:$0xff]
  %v2065 = vld [vmem:[#allocation3 + $0x28] sm:$0xff]
  %v2066 = vld [vmem:[#allocation3 + $0x30] sm:$0xff]
  %v2067 = vld [vmem:[#allocation3 + $0x38] sm:$0xff]
  %v2068 = vld [vmem:[#allocation3 + $0x40] sm:$0xff]
  %v2069 = vld [vmem:[#allocation3 + $0x48] sm:$0xff]
  %v2070 = vld [vmem:[#allocation3 + $0x50] sm:$0xff]
  %v2071 = vld [vmem:[#allocation3 + $0x58] sm:$0xff]
  %v2072 = vld [vmem:[#allocation3 + $0x60] sm:$0xff]
  %v2073 = vld [vmem:[#allocation3 + $0x68] sm:$0xff]
  %v2074 = vld [vmem:[#allocation3 + $0x70] sm:$0xff]
  %v2075 = vld [vmem:[#allocation3 + $0x78] sm:$0xff]
  %v2076 = vld [vmem:[#allocation3 + $0x80] sm:$0xff]
  %v2077 = vld [vmem:[#allocation3 + $0x88] sm:$0xff]
  %v2078 = vld [vmem:[#allocation3 + $0x90] sm:$0xff]
  %v2079 = vld [vmem:[#allocation3 + $0x98] sm:$0xff]
  %v2080 = vld [vmem:[#allocation3 + $0xa0] sm:$0xff]
  %v2081 = vld [vmem:[#allocation3 + $0xa8] sm:$0xff]
  %v2082 = vld [vmem:[#allocation3 + $0xb0] sm:$0xff]
  %v2083 = vld [vmem:[#allocation3 + $0xb8] sm:$0xff]
  %v2084 = vld [vmem:[#allocation3 + $0xc0] sm:$0xff]
  %v2085 = vld [vmem:[#allocation3 + $0xc8] sm:$0xff]
  %v2086 = vld [vmem:[#allocation3 + $0xd0] sm:$0xff]
  %v2087 = vld [vmem:[#allocation3 + $0xd8] sm:$0xff]
  %v2088 = vld [vmem:[#allocation3 + $0xe0] sm:$0xff]
  %v2089 = vld [vmem:[#allocation3 + $0xe8] sm:$0xff]
  %v2090 = vld [vmem:[#allocation3 + $0xf0] sm:$0xff]
  %v2091 = vld [vmem:[#allocation3 + $0xf8] sm:$0xff]
  %v2092 = vld [vmem:[#allocation3 + $0x100] sm:$0xff]
  %v2093 = vld [vmem:[#allocation3 + $0x108] sm:$0xff]
  %v2094 = vld [vmem:[#allocation3 + $0x110] sm:$0xff]
  %v2095 = vld [vmem:[#allocation3 + $0x118] sm:$0xff]
  %v2096 = vld [vmem:[#allocation3 + $0x120] sm:$0xff]
  %v2097 = vld [vmem:[#allocation3 + $0x128] sm:$0xff]
  %v2098 = vld [vmem:[#allocation3 + $0x130] sm:$0xff]
  %v2099 = vld [vmem:[#allocation3 + $0x138] sm:$0xff]
  %v2100 = vld [vmem:[#allocation3 + $0x140] sm:$0xff]
  %v2101 = vld [vmem:[#allocation3 + $0x148] sm:$0xff]
  %v2102 = vld [vmem:[#allocation3 + $0x150] sm:$0xff]
  %v2103 = vld [vmem:[#allocation3 + $0x158] sm:$0xff]
  %v2104 = vld [vmem:[#allocation3 + $0x160] sm:$0xff]
  %v2105 = vld [vmem:[#allocation3 + $0x168] sm:$0xff]
  %v2106 = vld [vmem:[#allocation3 + $0x170] sm:$0xff]
  %v2107 = vld [vmem:[#allocation3 + $0x178] sm:$0xff]
  %v2108 = vld [vmem:[#allocation3 + $0x180] sm:$0x3f]
  %v2109 = vld [vmem:[#allocation3 + $0x188] sm:$0x3f]
  %v2110 = vld [vmem:[#allocation3 + $0x190] sm:$0x3f]
  %v2111 = vld [vmem:[#allocation3 + $0x198] sm:$0x3f]
  %v2112 = vld [vmem:[#allocation3 + $0x1a0] sm:$0x3f]
  %v2113 = vld [vmem:[#allocation3 + $0x1a8] sm:$0x3f]
  %v2114 = vld [vmem:[#allocation3 + $0x1b0] sm:$0x3f]
  %v2115 = vld [vmem:[#allocation3 + $0x1b8] sm:$0x3f]
  %v2116 = vld [vmem:[%s1] sm:$0xff]
  %v2117 = vld [vmem:[%s1 + $0x8] sm:$0xff]
  %v2118 = vld [vmem:[%s1 + $0x10] sm:$0xff]
  %v2119 = vld [vmem:[%s1 + $0x18] sm:$0xff]
  %v2120 = vld [vmem:[%s1 + $0x20] sm:$0xff]
  %v2121 = vld [vmem:[%s1 + $0x28] sm:$0xff]
  %v2122 = vld [vmem:[%s1 + $0x30] sm:$0xff]
  %v2123 = vld [vmem:[%s1 + $0x38] sm:$0xff]
  %v2124 = vld [vmem:[%s1 + $0x40] sm:$0xff]
  %v2125 = vld [vmem:[%s1 + $0x48] sm:$0xff]
  %v2126 = vld [vmem:[%s1 + $0x50] sm:$0xff]
  %v2127 = vld [vmem:[%s1 + $0x58] sm:$0xff]
  %v2128 = vld [vmem:[%s1 + $0x60] sm:$0xff]
  %v2129 = vld [vmem:[%s1 + $0x68] sm:$0xff]
  %v2130 = vld [vmem:[%s1 + $0x70] sm:$0xff]
  %v2131 = vld [vmem:[%s1 + $0x78] sm:$0xff]
  %v2132 = vld [vmem:[%s1 + $0x80] sm:$0xff]
  %v2133 = vld [vmem:[%s1 + $0x88] sm:$0xff]
  %v2134 = vld [vmem:[%s1 + $0x90] sm:$0xff]
  %v2135 = vld [vmem:[%s1 + $0x98] sm:$0xff]
  %v2136 = vld [vmem:[%s1 + $0xa0] sm:$0xff]
  %v2137 = vld [vmem:[%s1 + $0xa8] sm:$0xff]
  %v2138 = vld [vmem:[%s1 + $0xb0] sm:$0xff]
  %v2139 = vld [vmem:[%s1 + $0xb8] sm:$0xff]
  %v2140 = vld [vmem:[%s1 + $0xc0] sm:$0xff]
  %v2141 = vld [vmem:[%s1 + $0xc8] sm:$0xff]
  %v2142 = vld [vmem:[%s1 + $0xd0] sm:$0xff]
  %v2143 = vld [vmem:[%s1 + $0xd8] sm:$0xff]
  %v2144 = vld [vmem:[%s1 + $0xe0] sm:$0xff]
  %v2145 = vld [vmem:[%s1 + $0xe8] sm:$0xff]
  %v2146 = vld [vmem:[%s1 + $0xf0] sm:$0xff]
  %v2147 = vld [vmem:[%s1 + $0xf8] sm:$0xff]
  %v2148 = vld [vmem:[%s1 + $0x100] sm:$0xff]
  %v2149 = vld [vmem:[%s1 + $0x108] sm:$0xff]
  %v2150 = vld [vmem:[%s1 + $0x110] sm:$0xff]
  %v2151 = vld [vmem:[%s1 + $0x118] sm:$0xff]
  %v2152 = vld [vmem:[%s1 + $0x120] sm:$0xff]
  %v2153 = vld [vmem:[%s1 + $0x128] sm:$0xff]
  %v2154 = vld [vmem:[%s1 + $0x130] sm:$0xff]
  %v2155 = vld [vmem:[%s1 + $0x138] sm:$0xff]
  %v2156 = vld [vmem:[%s1 + $0x140] sm:$0xff]
  %v2157 = vld [vmem:[%s1 + $0x148] sm:$0xff]
  %v2158 = vld [vmem:[%s1 + $0x150] sm:$0xff]
  %v2159 = vld [vmem:[%s1 + $0x158] sm:$0xff]
  %v2160 = vld [vmem:[%s1 + $0x160] sm:$0xff]
  %v2161 = vld [vmem:[%s1 + $0x168] sm:$0xff]
  %v2162 = vld [vmem:[%s1 + $0x170] sm:$0xff]
  %v2163 = vld [vmem:[%s1 + $0x178] sm:$0xff]
  %v2164 = vld [vmem:[%s1 + $0x180] sm:$0xff]
  %v2165 = vld [vmem:[%s1 + $0x188] sm:$0xff]
  %v2166 = vld [vmem:[%s1 + $0x190] sm:$0xff]
  %v2167 = vld [vmem:[%s1 + $0x198] sm:$0xff]
  %v2168 = vld [vmem:[%s1 + $0x1a0] sm:$0xff]
  %v2169 = vld [vmem:[%s1 + $0x1a8] sm:$0xff]
  %v2170 = vld [vmem:[%s1 + $0x1b0] sm:$0xff]
  %v2171 = vld [vmem:[%s1 + $0x1b8] sm:$0xff]
  %v2172 = vld [vmem:[%s1 + $0x1c0] sm:$0xff]
  %v2173 = vld [vmem:[%s1 + $0x1c8] sm:$0xff]
  %v2174 = vld [vmem:[%s1 + $0x1d0] sm:$0xff]
  %v2175 = vld [vmem:[%s1 + $0x1d8] sm:$0xff]
  %v2176 = vld [vmem:[%s1 + $0x1e0] sm:$0xff]
  %v2177 = vld [vmem:[%s1 + $0x1e8] sm:$0xff]
  %v2178 = vld [vmem:[%s1 + $0x1f0] sm:$0xff]
  %v2179 = vld [vmem:[%s1 + $0x1f8] sm:$0xff]
  %v2180 = vld [vmem:[%s1 + $0x200] sm:$0xff]
  %v2181 = vld [vmem:[%s1 + $0x208] sm:$0xff]
  %v2182 = vld [vmem:[%s1 + $0x210] sm:$0xff]
  %v2183 = vld [vmem:[%s1 + $0x218] sm:$0xff]
  %v2184 = vld [vmem:[%s1 + $0x220] sm:$0xff]
  %v2185 = vld [vmem:[%s1 + $0x228] sm:$0xff]
  %v2186 = vld [vmem:[%s1 + $0x230] sm:$0xff]
  %v2187 = vld [vmem:[%s1 + $0x238] sm:$0xff]
  %v2188 = vld [vmem:[%s1 + $0x240] sm:$0xff]
  %v2189 = vld [vmem:[%s1 + $0x248] sm:$0xff]
  %v2190 = vld [vmem:[%s1 + $0x250] sm:$0xff]
  %v2191 = vld [vmem:[%s1 + $0x258] sm:$0xff]
  %v2192 = vld [vmem:[%s1 + $0x260] sm:$0xff]
  %v2193 = vld [vmem:[%s1 + $0x268] sm:$0xff]
  %v2194 = vld [vmem:[%s1 + $0x270] sm:$0xff]
  %v2195 = vld [vmem:[%s1 + $0x278] sm:$0xff]
  %v2196 = vld [vmem:[%s1 + $0x280] sm:$0xff]
  %v2197 = vld [vmem:[%s1 + $0x288] sm:$0xff]
  %v2198 = vld [vmem:[%s1 + $0x290] sm:$0xff]
  %v2199 = vld [vmem:[%s1 + $0x298] sm:$0xff]
  %v2200 = vld [vmem:[%s1 + $0x2a0] sm:$0xff]
  %v2201 = vld [vmem:[%s1 + $0x2a8] sm:$0xff]
  %v2202 = vld [vmem:[%s1 + $0x2b0] sm:$0xff]
  %v2203 = vld [vmem:[%s1 + $0x2b8] sm:$0xff]
  %v2204 = vld [vmem:[%s1 + $0x2c0] sm:$0xff]
  %v2205 = vld [vmem:[%s1 + $0x2c8] sm:$0xff]
  %v2206 = vld [vmem:[%s1 + $0x2d0] sm:$0xff]
  %v2207 = vld [vmem:[%s1 + $0x2d8] sm:$0xff]
  %v2208 = vld [vmem:[%s1 + $0x2e0] sm:$0xff]
  %v2209 = vld [vmem:[%s1 + $0x2e8] sm:$0xff]
  %v2210 = vld [vmem:[%s1 + $0x2f0] sm:$0xff]
  %v2211 = vld [vmem:[%s1 + $0x2f8] sm:$0xff]
  %v2212 = vld [vmem:[%s1 + $0x300] sm:$0xff]
  %v2213 = vld [vmem:[%s1 + $0x308] sm:$0xff]
  %v2214 = vld [vmem:[%s1 + $0x310] sm:$0xff]
  %v2215 = vld [vmem:[%s1 + $0x318] sm:$0xff]
  %v2216 = vld [vmem:[%s1 + $0x320] sm:$0xff]
  %v2217 = vld [vmem:[%s1 + $0x328] sm:$0xff]
  %v2218 = vld [vmem:[%s1 + $0x330] sm:$0xff]
  %v2219 = vld [vmem:[%s1 + $0x338] sm:$0xff]
  %v2220 = vld [vmem:[%s1 + $0x340] sm:$0xff]
  %v2221 = vld [vmem:[%s1 + $0x348] sm:$0xff]
  %v2222 = vld [vmem:[%s1 + $0x350] sm:$0xff]
  %v2223 = vld [vmem:[%s1 + $0x358] sm:$0xff]
  %v2224 = vld [vmem:[%s1 + $0x360] sm:$0xff]
  %v2225 = vld [vmem:[%s1 + $0x368] sm:$0xff]
  %v2226 = vld [vmem:[%s1 + $0x370] sm:$0xff]
  %v2227 = vld [vmem:[%s1 + $0x378] sm:$0xff]
  %v2228 = vld [vmem:[%s1 + $0x380] sm:$0xff]
  %v2229 = vld [vmem:[%s1 + $0x388] sm:$0xff]
  %v2230 = vld [vmem:[%s1 + $0x390] sm:$0xff]
  %v2231 = vld [vmem:[%s1 + $0x398] sm:$0xff]
  %v2232 = vld [vmem:[%s1 + $0x3a0] sm:$0xff]
  %v2233 = vld [vmem:[%s1 + $0x3a8] sm:$0xff]
  %v2234 = vld [vmem:[%s1 + $0x3b0] sm:$0xff]
  %v2235 = vld [vmem:[%s1 + $0x3b8] sm:$0xff]
  %v2236 = vld [vmem:[%s1 + $0x3c0] sm:$0xff]
  %v2237 = vld [vmem:[%s1 + $0x3c8] sm:$0xff]
  %v2238 = vld [vmem:[%s1 + $0x3d0] sm:$0xff]
  %v2239 = vld [vmem:[%s1 + $0x3d8] sm:$0xff]
  %v2240 = vld [vmem:[%s1 + $0x3e0] sm:$0xff]
  %v2241 = vld [vmem:[%s1 + $0x3e8] sm:$0xff]
  %v2242 = vld [vmem:[%s1 + $0x3f0] sm:$0xff]
  %v2243 = vld [vmem:[%s1 + $0x3f8] sm:$0xff]
  %v2372 = vunpack.c.l.b16 %v2116
  %v2373 = vunpack.c.h.b16 %v2116
  %v2374 = vunpack.c.l.b16 %v2117
  %v2375 = vunpack.c.h.b16 %v2117
  %v2376 = vunpack.c.l.b16 %v2118
  %v2377 = vunpack.c.h.b16 %v2118
  %v2378 = vunpack.c.l.b16 %v2119
  %v2379 = vunpack.c.h.b16 %v2119
  %v2380 = vunpack.c.l.b16 %v2120
  %v2381 = vunpack.c.h.b16 %v2120
  %v2382 = vunpack.c.l.b16 %v2121
  %v2383 = vunpack.c.h.b16 %v2121
  %v2384 = vunpack.c.l.b16 %v2122
  %v2385 = vunpack.c.h.b16 %v2122
  %v2386 = vunpack.c.l.b16 %v2123
  %v2387 = vunpack.c.h.b16 %v2123
  %v2388 = vunpack.c.l.b16 %v2124
  %v2389 = vunpack.c.h.b16 %v2124
  %v2390 = vunpack.c.l.b16 %v2125
  %v2391 = vunpack.c.h.b16 %v2125
  %v2392 = vunpack.c.l.b16 %v2126
  %v2393 = vunpack.c.h.b16 %v2126
  %v2394 = vunpack.c.l.b16 %v2127
  %v2395 = vunpack.c.h.b16 %v2127
  %v2396 = vunpack.c.l.b16 %v2128
  %v2397 = vunpack.c.h.b16 %v2128
  %v2398 = vunpack.c.l.b16 %v2129
  %v2399 = vunpack.c.h.b16 %v2129
  %v2400 = vunpack.c.l.b16 %v2130
  %v2401 = vunpack.c.h.b16 %v2130
  %v2402 = vunpack.c.l.b16 %v2131
  %v2403 = vunpack.c.h.b16 %v2131
  %v2404 = vunpack.c.l.b16 %v2132
  %v2405 = vunpack.c.h.b16 %v2132
  %v2406 = vunpack.c.l.b16 %v2133
  %v2407 = vunpack.c.h.b16 %v2133
  %v2408 = vunpack.c.l.b16 %v2134
  %v2409 = vunpack.c.h.b16 %v2134
  %v2410 = vunpack.c.l.b16 %v2135
  %v2411 = vunpack.c.h.b16 %v2135
  %v2412 = vunpack.c.l.b16 %v2136
  %v2413 = vunpack.c.h.b16 %v2136
  %v2414 = vunpack.c.l.b16 %v2137
  %v2415 = vunpack.c.h.b16 %v2137
  %v2416 = vunpack.c.l.b16 %v2138
  %v2417 = vunpack.c.h.b16 %v2138
  %v2418 = vunpack.c.l.b16 %v2139
  %v2419 = vunpack.c.h.b16 %v2139
  %v2420 = vunpack.c.l.b16 %v2140
  %v2421 = vunpack.c.h.b16 %v2140
  %v2422 = vunpack.c.l.b16 %v2141
  %v2423 = vunpack.c.h.b16 %v2141
  %v2424 = vunpack.c.l.b16 %v2142
  %v2425 = vunpack.c.h.b16 %v2142
  %v2426 = vunpack.c.l.b16 %v2143
  %v2427 = vunpack.c.h.b16 %v2143
  %v2428 = vunpack.c.l.b16 %v2144
  %v2429 = vunpack.c.h.b16 %v2144
  %v2430 = vunpack.c.l.b16 %v2145
  %v2431 = vunpack.c.h.b16 %v2145
  %v2432 = vunpack.c.l.b16 %v2146
  %v2433 = vunpack.c.h.b16 %v2146
  %v2434 = vunpack.c.l.b16 %v2147
  %v2435 = vunpack.c.h.b16 %v2147
  %v2436 = vunpack.c.l.b16 %v2148
  %v2437 = vunpack.c.h.b16 %v2148
  %v2438 = vunpack.c.l.b16 %v2149
  %v2439 = vunpack.c.h.b16 %v2149
  %v2440 = vunpack.c.l.b16 %v2150
  %v2441 = vunpack.c.h.b16 %v2150
  %v2442 = vunpack.c.l.b16 %v2151
  %v2443 = vunpack.c.h.b16 %v2151
  %v2444 = vunpack.c.l.b16 %v2152
  %v2445 = vunpack.c.h.b16 %v2152
  %v2446 = vunpack.c.l.b16 %v2153
  %v2447 = vunpack.c.h.b16 %v2153
  %v2448 = vunpack.c.l.b16 %v2154
  %v2449 = vunpack.c.h.b16 %v2154
  %v2450 = vunpack.c.l.b16 %v2155
  %v2451 = vunpack.c.h.b16 %v2155
  %v2452 = vunpack.c.l.b16 %v2156
  %v2453 = vunpack.c.h.b16 %v2156
  %v2454 = vunpack.c.l.b16 %v2157
  %v2455 = vunpack.c.h.b16 %v2157
  %v2456 = vunpack.c.l.b16 %v2158
  %v2457 = vunpack.c.h.b16 %v2158
  %v2458 = vunpack.c.l.b16 %v2159
  %v2459 = vunpack.c.h.b16 %v2159
  %v2460 = vunpack.c.l.b16 %v2160
  %v2461 = vunpack.c.h.b16 %v2160
  %v2462 = vunpack.c.l.b16 %v2161
  %v2463 = vunpack.c.h.b16 %v2161
  %v2464 = vunpack.c.l.b16 %v2162
  %v2465 = vunpack.c.h.b16 %v2162
  %v2466 = vunpack.c.l.b16 %v2163
  %v2467 = vunpack.c.h.b16 %v2163
  %v2468 = vunpack.c.l.b16 %v2164
  %v2469 = vunpack.c.h.b16 %v2164
  %v2470 = vunpack.c.l.b16 %v2165
  %v2471 = vunpack.c.h.b16 %v2165
  %v2472 = vunpack.c.l.b16 %v2166
  %v2473 = vunpack.c.h.b16 %v2166
  %v2474 = vunpack.c.l.b16 %v2167
  %v2475 = vunpack.c.h.b16 %v2167
  %v2476 = vunpack.c.l.b16 %v2168
  %v2477 = vunpack.c.h.b16 %v2168
  %v2478 = vunpack.c.l.b16 %v2169
  %v2479 = vunpack.c.h.b16 %v2169
  %v2480 = vunpack.c.l.b16 %v2170
  %v2481 = vunpack.c.h.b16 %v2170
  %v2482 = vunpack.c.l.b16 %v2171
  %v2483 = vunpack.c.h.b16 %v2171
  %v2484 = vunpack.c.l.b16 %v2172
  %v2485 = vunpack.c.h.b16 %v2172
  %v2486 = vunpack.c.l.b16 %v2173
  %v2487 = vunpack.c.h.b16 %v2173
  %v2488 = vunpack.c.l.b16 %v2174
  %v2489 = vunpack.c.h.b16 %v2174
  %v2490 = vunpack.c.l.b16 %v2175
  %v2491 = vunpack.c.h.b16 %v2175
  %v2492 = vunpack.c.l.b16 %v2176
  %v2493 = vunpack.c.h.b16 %v2176
  %v2494 = vunpack.c.l.b16 %v2177
  %v2495 = vunpack.c.h.b16 %v2177
  %v2496 = vunpack.c.l.b16 %v2178
  %v2497 = vunpack.c.h.b16 %v2178
  %v2498 = vunpack.c.l.b16 %v2179
  %v2499 = vunpack.c.h.b16 %v2179
  %v2500 = vunpack.c.l.b16 %v2180
  %v2501 = vunpack.c.h.b16 %v2180
  %v2502 = vunpack.c.l.b16 %v2181
  %v2503 = vunpack.c.h.b16 %v2181
  %v2504 = vunpack.c.l.b16 %v2182
  %v2505 = vunpack.c.h.b16 %v2182
  %v2506 = vunpack.c.l.b16 %v2183
  %v2507 = vunpack.c.h.b16 %v2183
  %v2508 = vunpack.c.l.b16 %v2184
  %v2509 = vunpack.c.h.b16 %v2184
  %v2510 = vunpack.c.l.b16 %v2185
  %v2511 = vunpack.c.h.b16 %v2185
  %v2512 = vunpack.c.l.b16 %v2186
  %v2513 = vunpack.c.h.b16 %v2186
  %v2514 = vunpack.c.l.b16 %v2187
  %v2515 = vunpack.c.h.b16 %v2187
  %v2516 = vunpack.c.l.b16 %v2188
  %v2517 = vunpack.c.h.b16 %v2188
  %v2518 = vunpack.c.l.b16 %v2189
  %v2519 = vunpack.c.h.b16 %v2189
  %v2520 = vunpack.c.l.b16 %v2190
  %v2521 = vunpack.c.h.b16 %v2190
  %v2522 = vunpack.c.l.b16 %v2191
  %v2523 = vunpack.c.h.b16 %v2191
  %v2524 = vunpack.c.l.b16 %v2192
  %v2525 = vunpack.c.h.b16 %v2192
  %v2526 = vunpack.c.l.b16 %v2193
  %v2527 = vunpack.c.h.b16 %v2193
  %v2528 = vunpack.c.l.b16 %v2194
  %v2529 = vunpack.c.h.b16 %v2194
  %v2530 = vunpack.c.l.b16 %v2195
  %v2531 = vunpack.c.h.b16 %v2195
  %v2532 = vunpack.c.l.b16 %v2196
  %v2533 = vunpack.c.h.b16 %v2196
  %v2534 = vunpack.c.l.b16 %v2197
  %v2535 = vunpack.c.h.b16 %v2197
  %v2536 = vunpack.c.l.b16 %v2198
  %v2537 = vunpack.c.h.b16 %v2198
  %v2538 = vunpack.c.l.b16 %v2199
  %v2539 = vunpack.c.h.b16 %v2199
  %v2540 = vunpack.c.l.b16 %v2200
  %v2541 = vunpack.c.h.b16 %v2200
  %v2542 = vunpack.c.l.b16 %v2201
  %v2543 = vunpack.c.h.b16 %v2201
  %v2544 = vunpack.c.l.b16 %v2202
  %v2545 = vunpack.c.h.b16 %v2202
  %v2546 = vunpack.c.l.b16 %v2203
  %v2547 = vunpack.c.h.b16 %v2203
  %v2548 = vunpack.c.l.b16 %v2204
  %v2549 = vunpack.c.h.b16 %v2204
  %v2550 = vunpack.c.l.b16 %v2205
  %v2551 = vunpack.c.h.b16 %v2205
  %v2552 = vunpack.c.l.b16 %v2206
  %v2553 = vunpack.c.h.b16 %v2206
  %v2554 = vunpack.c.l.b16 %v2207
  %v2555 = vunpack.c.h.b16 %v2207
  %v2556 = vunpack.c.l.b16 %v2208
  %v2557 = vunpack.c.h.b16 %v2208
  %v2558 = vunpack.c.l.b16 %v2209
  %v2559 = vunpack.c.h.b16 %v2209
  %v2560 = vunpack.c.l.b16 %v2210
  %v2561 = vunpack.c.h.b16 %v2210
  %v2562 = vunpack.c.l.b16 %v2211
  %v2563 = vunpack.c.h.b16 %v2211
  %v2564 = vunpack.c.l.b16 %v2212
  %v2565 = vunpack.c.h.b16 %v2212
  %v2566 = vunpack.c.l.b16 %v2213
  %v2567 = vunpack.c.h.b16 %v2213
  %v2568 = vunpack.c.l.b16 %v2214
  %v2569 = vunpack.c.h.b16 %v2214
  %v2570 = vunpack.c.l.b16 %v2215
  %v2571 = vunpack.c.h.b16 %v2215
  %v2572 = vunpack.c.l.b16 %v2216
  %v2573 = vunpack.c.h.b16 %v2216
  %v2574 = vunpack.c.l.b16 %v2217
  %v2575 = vunpack.c.h.b16 %v2217
  %v2576 = vunpack.c.l.b16 %v2218
  %v2577 = vunpack.c.h.b16 %v2218
  %v2578 = vunpack.c.l.b16 %v2219
  %v2579 = vunpack.c.h.b16 %v2219
  %v2580 = vunpack.c.l.b16 %v2220
  %v2581 = vunpack.c.h.b16 %v2220
  %v2582 = vunpack.c.l.b16 %v2221
  %v2583 = vunpack.c.h.b16 %v2221
  %v2584 = vunpack.c.l.b16 %v2222
  %v2585 = vunpack.c.h.b16 %v2222
  %v2586 = vunpack.c.l.b16 %v2223
  %v2587 = vunpack.c.h.b16 %v2223
  %v2588 = vunpack.c.l.b16 %v2224
  %v2589 = vunpack.c.h.b16 %v2224
  %v2590 = vunpack.c.l.b16 %v2225
  %v2591 = vunpack.c.h.b16 %v2225
  %v2592 = vunpack.c.l.b16 %v2226
  %v2593 = vunpack.c.h.b16 %v2226
  %v2594 = vunpack.c.l.b16 %v2227
  %v2595 = vunpack.c.h.b16 %v2227
  %v2596 = vunpack.c.l.b16 %v2228
  %v2597 = vunpack.c.h.b16 %v2228
  %v2598 = vunpack.c.l.b16 %v2229
  %v2599 = vunpack.c.h.b16 %v2229
  %v2600 = vunpack.c.l.b16 %v2230
  %v2601 = vunpack.c.h.b16 %v2230
  %v2602 = vunpack.c.l.b16 %v2231
  %v2603 = vunpack.c.h.b16 %v2231
  %v2604 = vunpack.c.l.b16 %v2232
  %v2605 = vunpack.c.h.b16 %v2232
  %v2606 = vunpack.c.l.b16 %v2233
  %v2607 = vunpack.c.h.b16 %v2233
  %v2608 = vunpack.c.l.b16 %v2234
  %v2609 = vunpack.c.h.b16 %v2234
  %v2610 = vunpack.c.l.b16 %v2235
  %v2611 = vunpack.c.h.b16 %v2235
  %v2612 = vunpack.c.l.b16 %v2236
  %v2613 = vunpack.c.h.b16 %v2236
  %v2614 = vunpack.c.l.b16 %v2237
  %v2615 = vunpack.c.h.b16 %v2237
  %v2616 = vunpack.c.l.b16 %v2238
  %v2617 = vunpack.c.h.b16 %v2238
  %v2618 = vunpack.c.l.b16 %v2239
  %v2619 = vunpack.c.h.b16 %v2239
  %v2620 = vunpack.c.l.b16 %v2240
  %v2621 = vunpack.c.h.b16 %v2240
  %v2622 = vunpack.c.l.b16 %v2241
  %v2623 = vunpack.c.h.b16 %v2241
  %v2624 = vunpack.c.l.b16 %v2242
  %v2625 = vunpack.c.h.b16 %v2242
  %v2626 = vunpack.c.l.b16 %v2243
  %v2627 = vunpack.c.h.b16 %v2243
  %v2628 = vpack.c.b16 %v2374, %v2372
  %v2629 = vpack.c.b16 %v2375, %v2373
  %v2630 = vpack.c.b16 %v2378, %v2376
  %v2631 = vpack.c.b16 %v2379, %v2377
  %v2632 = vpack.c.b16 %v2382, %v2380
  %v2633 = vpack.c.b16 %v2383, %v2381
  %v2634 = vpack.c.b16 %v2386, %v2384
  %v2635 = vpack.c.b16 %v2387, %v2385
  %v2636 = vpack.c.b16 %v2390, %v2388
  %v2637 = vpack.c.b16 %v2391, %v2389
  %v2638 = vpack.c.b16 %v2394, %v2392
  %v2639 = vpack.c.b16 %v2395, %v2393
  %v2640 = vpack.c.b16 %v2398, %v2396
  %v2641 = vpack.c.b16 %v2399, %v2397
  %v2642 = vpack.c.b16 %v2402, %v2400
  %v2643 = vpack.c.b16 %v2403, %v2401
  %v2644 = vpack.c.b16 %v2406, %v2404
  %v2645 = vpack.c.b16 %v2407, %v2405
  %v2646 = vpack.c.b16 %v2410, %v2408
  %v2647 = vpack.c.b16 %v2411, %v2409
  %v2648 = vpack.c.b16 %v2414, %v2412
  %v2649 = vpack.c.b16 %v2415, %v2413
  %v2650 = vpack.c.b16 %v2418, %v2416
  %v2651 = vpack.c.b16 %v2419, %v2417
  %v2652 = vpack.c.b16 %v2422, %v2420
  %v2653 = vpack.c.b16 %v2423, %v2421
  %v2654 = vpack.c.b16 %v2426, %v2424
  %v2655 = vpack.c.b16 %v2427, %v2425
  %v2656 = vpack.c.b16 %v2430, %v2428
  %v2657 = vpack.c.b16 %v2431, %v2429
  %v2658 = vpack.c.b16 %v2434, %v2432
  %v2659 = vpack.c.b16 %v2435, %v2433
  %v2660 = vpack.c.b16 %v2438, %v2436
  %v2661 = vpack.c.b16 %v2439, %v2437
  %v2662 = vpack.c.b16 %v2442, %v2440
  %v2663 = vpack.c.b16 %v2443, %v2441
  %v2664 = vpack.c.b16 %v2446, %v2444
  %v2665 = vpack.c.b16 %v2447, %v2445
  %v2666 = vpack.c.b16 %v2450, %v2448
  %v2667 = vpack.c.b16 %v2451, %v2449
  %v2668 = vpack.c.b16 %v2454, %v2452
  %v2669 = vpack.c.b16 %v2455, %v2453
  %v2670 = vpack.c.b16 %v2458, %v2456
  %v2671 = vpack.c.b16 %v2459, %v2457
  %v2672 = vpack.c.b16 %v2462, %v2460
  %v2673 = vpack.c.b16 %v2463, %v2461
  %v2674 = vpack.c.b16 %v2466, %v2464
  %v2675 = vpack.c.b16 %v2467, %v2465
  %v2676 = vpack.c.b16 %v2470, %v2468
  %v2677 = vpack.c.b16 %v2471, %v2469
  %v2678 = vpack.c.b16 %v2474, %v2472
  %v2679 = vpack.c.b16 %v2475, %v2473
  %v2680 = vpack.c.b16 %v2478, %v2476
  %v2681 = vpack.c.b16 %v2479, %v2477
  %v2682 = vpack.c.b16 %v2482, %v2480
  %v2683 = vpack.c.b16 %v2483, %v2481
  %v2684 = vpack.c.b16 %v2486, %v2484
  %v2685 = vpack.c.b16 %v2487, %v2485
  %v2686 = vpack.c.b16 %v2490, %v2488
  %v2687 = vpack.c.b16 %v2491, %v2489
  %v2688 = vpack.c.b16 %v2494, %v2492
  %v2689 = vpack.c.b16 %v2495, %v2493
  %v2690 = vpack.c.b16 %v2498, %v2496
  %v2691 = vpack.c.b16 %v2499, %v2497
  %v2692 = vpack.c.b16 %v2502, %v2500
  %v2693 = vpack.c.b16 %v2503, %v2501
  %v2694 = vpack.c.b16 %v2506, %v2504
  %v2695 = vpack.c.b16 %v2507, %v2505
  %v2696 = vpack.c.b16 %v2510, %v2508
  %v2697 = vpack.c.b16 %v2511, %v2509
  %v2698 = vpack.c.b16 %v2514, %v2512
  %v2699 = vpack.c.b16 %v2515, %v2513
  %v2700 = vpack.c.b16 %v2518, %v2516
  %v2701 = vpack.c.b16 %v2519, %v2517
  %v2702 = vpack.c.b16 %v2522, %v2520
  %v2703 = vpack.c.b16 %v2523, %v2521
  %v2704 = vpack.c.b16 %v2526, %v2524
  %v2705 = vpack.c.b16 %v2527, %v2525
  %v2706 = vpack.c.b16 %v2530, %v2528
  %v2707 = vpack.c.b16 %v2531, %v2529
  %v2708 = vpack.c.b16 %v2534, %v2532
  %v2709 = vpack.c.b16 %v2535, %v2533
  %v2710 = vpack.c.b16 %v2538, %v2536
  %v2711 = vpack.c.b16 %v2539, %v2537
  %v2712 = vpack.c.b16 %v2542, %v2540
  %v2713 = vpack.c.b16 %v2543, %v2541
  %v2714 = vpack.c.b16 %v2546, %v2544
  %v2715 = vpack.c.b16 %v2547, %v2545
  %v2716 = vpack.c.b16 %v2550, %v2548
  %v2717 = vpack.c.b16 %v2551, %v2549
  %v2718 = vpack.c.b16 %v2554, %v2552
  %v2719 = vpack.c.b16 %v2555, %v2553
  %v2720 = vpack.c.b16 %v2558, %v2556
  %v2721 = vpack.c.b16 %v2559, %v2557
  %v2722 = vpack.c.b16 %v2562, %v2560
  %v2723 = vpack.c.b16 %v2563, %v2561
  %v2724 = vpack.c.b16 %v2566, %v2564
  %v2725 = vpack.c.b16 %v2567, %v2565
  %v2726 = vpack.c.b16 %v2570, %v2568
  %v2727 = vpack.c.b16 %v2571, %v2569
  %v2728 = vpack.c.b16 %v2574, %v2572
  %v2729 = vpack.c.b16 %v2575, %v2573
  %v2730 = vpack.c.b16 %v2578, %v2576
  %v2731 = vpack.c.b16 %v2579, %v2577
  %v2732 = vpack.c.b16 %v2582, %v2580
  %v2733 = vpack.c.b16 %v2583, %v2581
  %v2734 = vpack.c.b16 %v2586, %v2584
  %v2735 = vpack.c.b16 %v2587, %v2585
  %v2736 = vpack.c.b16 %v2590, %v2588
  %v2737 = vpack.c.b16 %v2591, %v2589
  %v2738 = vpack.c.b16 %v2594, %v2592
  %v2739 = vpack.c.b16 %v2595, %v2593
  %v2740 = vpack.c.b16 %v2598, %v2596
  %v2741 = vpack.c.b16 %v2599, %v2597
  %v2742 = vpack.c.b16 %v2602, %v2600
  %v2743 = vpack.c.b16 %v2603, %v2601
  %v2744 = vpack.c.b16 %v2606, %v2604
  %v2745 = vpack.c.b16 %v2607, %v2605
  %v2746 = vpack.c.b16 %v2610, %v2608
  %v2747 = vpack.c.b16 %v2611, %v2609
  %v2748 = vpack.c.b16 %v2614, %v2612
  %v2749 = vpack.c.b16 %v2615, %v2613
  %v2750 = vpack.c.b16 %v2618, %v2616
  %v2751 = vpack.c.b16 %v2619, %v2617
  %v2752 = vpack.c.b16 %v2622, %v2620
  %v2753 = vpack.c.b16 %v2623, %v2621
  %v2754 = vpack.c.b16 %v2626, %v2624
  %v2755 = vpack.c.b16 %v2627, %v2625
  %2884 = vmatprep.subr.bf16.mxu0 %v2629
  %2885 = vmatpush1.bf16.msra.mxu0 %v2628
  %2886 = vmatprep.subr.bf16.mxu0 %v2631
  %2887 = vmatpush1.bf16.msra.mxu0 %v2630
  %2888 = vmatprep.subr.bf16.mxu0 %v2633
  %2889 = vmatpush1.bf16.msra.mxu0 %v2632
  %2890 = vmatprep.subr.bf16.mxu0 %v2635
  %2891 = vmatpush1.bf16.msra.mxu0 %v2634
  %2892 = vmatprep.subr.bf16.mxu0 %v2637
  %2893 = vmatpush1.bf16.msra.mxu0 %v2636
  %2894 = vmatprep.subr.bf16.mxu0 %v2639
  %2895 = vmatpush1.bf16.msra.mxu0 %v2638
  %2896 = vmatprep.subr.bf16.mxu0 %v2641
  %2897 = vmatpush1.bf16.msra.mxu0 %v2640
  %2898 = vmatprep.subr.bf16.mxu0 %v2643
  %2899 = vmatpush1.bf16.msra.mxu0 %v2642
  %2900 = vmatprep.subr.bf16.mxu0 %v2645
  %2901 = vmatpush1.bf16.msra.mxu0 %v2644
  %2902 = vmatprep.subr.bf16.mxu0 %v2647
  %2903 = vmatpush1.bf16.msra.mxu0 %v2646
  %2904 = vmatprep.subr.bf16.mxu0 %v2649
  %2905 = vmatpush1.bf16.msra.mxu0 %v2648
  %2906 = vmatprep.subr.bf16.mxu0 %v2651
  %2907 = vmatpush1.bf16.msra.mxu0 %v2650
  %2908 = vmatprep.subr.bf16.mxu0 %v2653
  %2909 = vmatpush1.bf16.msra.mxu0 %v2652
  %2910 = vmatprep.subr.bf16.mxu0 %v2655
  %2911 = vmatpush1.bf16.msra.mxu0 %v2654
  %2912 = vmatprep.subr.bf16.mxu0 %v2657
  %2913 = vmatpush1.bf16.msra.mxu0 %v2656
  %2914 = vmatprep.subr.bf16.mxu0 %v2659
  %2915 = vmatpush1.bf16.msra.mxu0 %v2658
  %2916 = vmatprep.mubr.bf16.mxu0 %v2061
  %2917 = vmatmul.mubr.bf16.gmra.mrb[0].mxu0 %v2060
  %v2918 = vpop.f32.mrb[0].mxu0
  %v2919 = vadd.f32 0.0, %v2918
  %v2920 = vpop.f32.mrb[0].mxu0
  %v2921 = vadd.f32 0.0, %v2920
  %v2922 = vpop.f32.mrb[0].mxu0
  %v2923 = vadd.f32 0.0, %v2922
  %v2924 = vpop.f32.mrb[0].mxu0
  %v2925 = vadd.f32 0.0, %v2924
  %2926 = vmatprep.mubr.bf16.mxu0 %v2069
  %2927 = vmatmul.mubr.bf16.gmra.mrb[0].mxu0 %v2068
  %v2928 = vpop.f32.mrb[0].mxu0
  %v2929 = vadd.f32 0.0, %v2928
  %v2930 = vpop.f32.mrb[0].mxu0
  %v2931 = vadd.f32 0.0, %v2930
  %v2932 = vpop.f32.mrb[0].mxu0
  %v2933 = vadd.f32 0.0, %v2932
  %v2934 = vpop.f32.mrb[0].mxu0
  %v2935 = vadd.f32 0.0, %v2934
  %2936 = vmatprep.mubr.bf16.mxu0 %v2077
  %2937 = vmatmul.mubr.bf16.gmra.mrb[0].mxu0 %v2076
  %v2938 = vpop.f32.mrb[0].mxu0
  %v2939 = vadd.f32 0.0, %v2938
  %v2940 = vpop.f32.mrb[0].mxu0
  %v2941 = vadd.f32 0.0, %v2940
  %v2942 = vpop.f32.mrb[0].mxu0
  %v2943 = vadd.f32 0.0, %v2942
  %v2944 = vpop.f32.mrb[0].mxu0
  %v2945 = vadd.f32 0.0, %v2944
  %2946 = vmatprep.mubr.bf16.mxu0 %v2085
  %2947 = vmatmul.mubr.bf16.gmra.mrb[0].mxu0 %v2084
  %v2948 = vpop.f32.mrb[0].mxu0
  %v2949 = vadd.f32 0.0, %v2948
  %v2950 = vpop.f32.mrb[0].mxu0
  %v2951 = vadd.f32 0.0, %v2950
  %v2952 = vpop.f32.mrb[0].mxu0
  %v2953 = vadd.f32 0.0, %v2952
  %v2954 = vpop.f32.mrb[0].mxu0
  %v2955 = vadd.f32 0.0, %v2954
  %2956 = vmatprep.mubr.bf16.mxu0 %v2093
  %2957 = vmatmul.mubr.bf16.gmra.mrb[0].mxu0 %v2092
  %v2958 = vpop.f32.mrb[0].mxu0
  %v2959 = vadd.f32 0.0, %v2958
  %v2960 = vpop.f32.mrb[0].mxu0
  %v2961 = vadd.f32 0.0, %v2960
  %v2962 = vpop.f32.mrb[0].mxu0
  %v2963 = vadd.f32 0.0, %v2962
  %v2964 = vpop.f32.mrb[0].mxu0
  %v2965 = vadd.f32 0.0, %v2964
  %2966 = vmatprep.mubr.bf16.mxu0 %v2101
  %2967 = vmatmul.mubr.bf16.gmra.mrb[0].mxu0 %v2100
  %v2968 = vpop.f32.mrb[0].mxu0
  %v2969 = vadd.f32 0.0, %v2968
  %v2970 = vpop.f32.mrb[0].mxu0
  %v2971 = vadd.f32 0.0, %v2970
  %v2972 = vpop.f32.mrb[0].mxu0
  %v2973 = vadd.f32 0.0, %v2972
  %v2974 = vpop.f32.mrb[0].mxu0
  %v2975 = vadd.f32 0.0, %v2974
  %2976 = vmatprep.mubr.bf16.mxu0 %v2109
  %2977 = vmatmul.mubr.bf16.gmra.mrb[0].mxu0 %v2108
  %v2978 = vpop.f32.mrb[0].mxu0
  %v2979 = vadd.f32 0.0, %v2978
  %v2980 = vpop.f32.mrb[0].mxu0
  %v2981 = vadd.f32 0.0, %v2980
  %v2982 = vpop.f32.mrb[0].mxu0
  %v2983 = vadd.f32 0.0, %v2982
  %v2984 = vpop.f32.mrb[0].mxu0
  %v2985 = vadd.f32 0.0, %v2984
  %2986 = vdwg.mxu0
  %2987 = vmatprep.subr.bf16.mxu0 %v2661
  %2988 = vmatpush1.bf16.msra.mxu0 %v2660
  %2989 = vmatprep.subr.bf16.mxu0 %v2663
  %2990 = vmatpush1.bf16.msra.mxu0 %v2662
  %2991 = vmatprep.subr.bf16.mxu0 %v2665
  %2992 = vmatpush1.bf16.msra.mxu0 %v2664
  %2993 = vmatprep.subr.bf16.mxu0 %v2667
  %2994 = vmatpush1.bf16.msra.mxu0 %v2666
  %2995 = vmatprep.subr.bf16.mxu0 %v2669
  %2996 = vmatpush1.bf16.msra.mxu0 %v2668
  %2997 = vmatprep.subr.bf16.mxu0 %v2671
  %2998 = vmatpush1.bf16.msra.mxu0 %v2670
  %2999 = vmatprep.subr.bf16.mxu0 %v2673
  %3000 = vmatpush1.bf16.msra.mxu0 %v2672
  %3001 = vmatprep.subr.bf16.mxu0 %v2675
  %3002 = vmatpush1.bf16.msra.mxu0 %v2674
  %3003 = vmatprep.subr.bf16.mxu0 %v2677
  %3004 = vmatpush1.bf16.msra.mxu0 %v2676
  %3005 = vmatprep.subr.bf16.mxu0 %v2679
  %3006 = vmatpush1.bf16.msra.mxu0 %v2678
  %3007 = vmatprep.subr.bf16.mxu0 %v2681
  %3008 = vmatpush1.bf16.msra.mxu0 %v2680
  %3009 = vmatprep.subr.bf16.mxu0 %v2683
  %3010 = vmatpush1.bf16.msra.mxu0 %v2682
  %3011 = vmatprep.subr.bf16.mxu0 %v2685
  %3012 = vmatpush1.bf16.msra.mxu0 %v2684
  %3013 = vmatprep.subr.bf16.mxu0 %v2687
  %3014 = vmatpush1.bf16.msra.mxu0 %v2686
  %3015 = vmatprep.subr.bf16.mxu0 %v2689
  %3016 = vmatpush1.bf16.msra.mxu0 %v2688
  %3017 = vmatprep.subr.bf16.mxu0 %v2691
  %3018 = vmatpush1.bf16.msra.mxu0 %v2690
  %3019 = vmatprep.mubr.bf16.mxu0 %v2063
  %3020 = vmatmul.mubr.bf16.gmra.mrb[0].mxu0 %v2062
  %v3021 = vpop.f32.mrb[0].mxu0
  %v3022 = vadd.f32 %v2919, %v3021
  %v3023 = vpop.f32.mrb[0].mxu0
  %v3024 = vadd.f32 %v2921, %v3023
  %v3025 = vpop.f32.mrb[0].mxu0
  %v3026 = vadd.f32 %v2923, %v3025
  %v3027 = vpop.f32.mrb[0].mxu0
  %v3028 = vadd.f32 %v2925, %v3027
  %3029 = vmatprep.mubr.bf16.mxu0 %v2071
  %3030 = vmatmul.mubr.bf16.gmra.mrb[0].mxu0 %v2070
  %v3031 = vpop.f32.mrb[0].mxu0
  %v3032 = vadd.f32 %v2929, %v3031
  %v3033 = vpop.f32.mrb[0].mxu0
  %v3034 = vadd.f32 %v2931, %v3033
  %v3035 = vpop.f32.mrb[0].mxu0
  %v3036 = vadd.f32 %v2933, %v3035
  %v3037 = vpop.f32.mrb[0].mxu0
  %v3038 = vadd.f32 %v2935, %v3037
  %3039 = vmatprep.mubr.bf16.mxu0 %v2079
  %3040 = vmatmul.mubr.bf16.gmra.mrb[0].mxu0 %v2078
  %v3041 = vpop.f32.mrb[0].mxu0
  %v3042 = vadd.f32 %v2939, %v3041
  %v3043 = vpop.f32.mrb[0].mxu0
  %v3044 = vadd.f32 %v2941, %v3043
  %v3045 = vpop.f32.mrb[0].mxu0
  %v3046 = vadd.f32 %v2943, %v3045
  %v3047 = vpop.f32.mrb[0].mxu0
  %v3048 = vadd.f32 %v2945, %v3047
  %3049 = vmatprep.mubr.bf16.mxu0 %v2087
  %3050 = vmatmul.mubr.bf16.gmra.mrb[0].mxu0 %v2086
  %v3051 = vpop.f32.mrb[0].mxu0
  %v3052 = vadd.f32 %v2949, %v3051
  %v3053 = vpop.f32.mrb[0].mxu0
  %v3054 = vadd.f32 %v2951, %v3053
  %v3055 = vpop.f32.mrb[0].mxu0
  %v3056 = vadd.f32 %v2953, %v3055
  %v3057 = vpop.f32.mrb[0].mxu0
  %v3058 = vadd.f32 %v2955, %v3057
  %3059 = vmatprep.mubr.bf16.mxu0 %v2095
  %3060 = vmatmul.mubr.bf16.gmra.mrb[0].mxu0 %v2094
  %v3061 = vpop.f32.mrb[0].mxu0
  %v3062 = vadd.f32 %v2959, %v3061
  %v3063 = vpop.f32.mrb[0].mxu0
  %v3064 = vadd.f32 %v2961, %v3063
  %v3065 = vpop.f32.mrb[0].mxu0
  %v3066 = vadd.f32 %v2963, %v3065
  %v3067 = vpop.f32.mrb[0].mxu0
  %v3068 = vadd.f32 %v2965, %v3067
  %3069 = vmatprep.mubr.bf16.mxu0 %v2103
  %3070 = vmatmul.mubr.bf16.gmra.mrb[0].mxu0 %v2102
  %v3071 = vpop.f32.mrb[0].mxu0
  %v3072 = vadd.f32 %v2969, %v3071
  %v3073 = vpop.f32.mrb[0].mxu0
  %v3074 = vadd.f32 %v2971, %v3073
  %v3075 = vpop.f32.mrb[0].mxu0
  %v3076 = vadd.f32 %v2973, %v3075
  %v3077 = vpop.f32.mrb[0].mxu0
  %v3078 = vadd.f32 %v2975, %v3077
  %3079 = vmatprep.mubr.bf16.mxu0 %v2111
  %3080 = vmatmul.mubr.bf16.gmra.mrb[0].mxu0 %v2110
  %v3081 = vpop.f32.mrb[0].mxu0
  %v3082 = vadd.f32 %v2979, %v3081
  %v3083 = vpop.f32.mrb[0].mxu0
  %v3084 = vadd.f32 %v2981, %v3083
  %v3085 = vpop.f32.mrb[0].mxu0
  %v3086 = vadd.f32 %v2983, %v3085
  %v3087 = vpop.f32.mrb[0].mxu0
  %v3088 = vadd.f32 %v2985, %v3087
  %3089 = vdwg.mxu0
  %3090 = vmatprep.subr.bf16.mxu0 %v2693
  %3091 = vmatpush1.bf16.msra.mxu0 %v2692
  %3092 = vmatprep.subr.bf16.mxu0 %v2695
  %3093 = vmatpush1.bf16.msra.mxu0 %v2694
  %3094 = vmatprep.subr.bf16.mxu0 %v2697
  %3095 = vmatpush1.bf16.msra.mxu0 %v2696
  %3096 = vmatprep.subr.bf16.mxu0 %v2699
  %3097 = vmatpush1.bf16.msra.mxu0 %v2698
  %3098 = vmatprep.subr.bf16.mxu0 %v2701
  %3099 = vmatpush1.bf16.msra.mxu0 %v2700
  %3100 = vmatprep.subr.bf16.mxu0 %v2703
  %3101 = vmatpush1.bf16.msra.mxu0 %v2702
  %3102 = vmatprep.subr.bf16.mxu0 %v2705
  %3103 = vmatpush1.bf16.msra.mxu0 %v2704
  %3104 = vmatprep.subr.bf16.mxu0 %v2707
  %3105 = vmatpush1.bf16.msra.mxu0 %v2706
  %3106 = vmatprep.subr.bf16.mxu0 %v2709
  %3107 = vmatpush1.bf16.msra.mxu0 %v2708
  %3108 = vmatprep.subr.bf16.mxu0 %v2711
  %3109 = vmatpush1.bf16.msra.mxu0 %v2710
  %3110 = vmatprep.subr.bf16.mxu0 %v2713
  %3111 = vmatpush1.bf16.msra.mxu0 %v2712
  %3112 = vmatprep.subr.bf16.mxu0 %v2715
  %3113 = vmatpush1.bf16.msra.mxu0 %v2714
  %3114 = vmatprep.subr.bf16.mxu0 %v2717
  %3115 = vmatpush1.bf16.msra.mxu0 %v2716
  %3116 = vmatprep.subr.bf16.mxu0 %v2719
  %3117 = vmatpush1.bf16.msra.mxu0 %v2718
  %3118 = vmatprep.subr.bf16.mxu0 %v2721
  %3119 = vmatpush1.bf16.msra.mxu0 %v2720
  %3120 = vmatprep.subr.bf16.mxu0 %v2723
  %3121 = vmatpush1.bf16.msra.mxu0 %v2722
  %3122 = vmatprep.mubr.bf16.mxu0 %v2065
  %3123 = vmatmul.mubr.bf16.gmra.mrb[0].mxu0 %v2064
  %v3124 = vpop.f32.mrb[0].mxu0
  %v3125 = vadd.f32 %v3022, %v3124
  %v3126 = vpop.f32.mrb[0].mxu0
  %v3127 = vadd.f32 %v3024, %v3126
  %v3128 = vpop.f32.mrb[0].mxu0
  %v3129 = vadd.f32 %v3026, %v3128
  %v3130 = vpop.f32.mrb[0].mxu0
  %v3131 = vadd.f32 %v3028, %v3130
  %3132 = vmatprep.mubr.bf16.mxu0 %v2073
  %3133 = vmatmul.mubr.bf16.gmra.mrb[0].mxu0 %v2072
  %v3134 = vpop.f32.mrb[0].mxu0
  %v3135 = vadd.f32 %v3032, %v3134
  %v3136 = vpop.f32.mrb[0].mxu0
  %v3137 = vadd.f32 %v3034, %v3136
  %v3138 = vpop.f32.mrb[0].mxu0
  %v3139 = vadd.f32 %v3036, %v3138
  %v3140 = vpop.f32.mrb[0].mxu0
  %v3141 = vadd.f32 %v3038, %v3140
  %3142 = vmatprep.mubr.bf16.mxu0 %v2081
  %3143 = vmatmul.mubr.bf16.gmra.mrb[0].mxu0 %v2080
  %v3144 = vpop.f32.mrb[0].mxu0
  %v3145 = vadd.f32 %v3042, %v3144
  %v3146 = vpop.f32.mrb[0].mxu0
  %v3147 = vadd.f32 %v3044, %v3146
  %v3148 = vpop.f32.mrb[0].mxu0
  %v3149 = vadd.f32 %v3046, %v3148
  %v3150 = vpop.f32.mrb[0].mxu0
  %v3151 = vadd.f32 %v3048, %v3150
  %3152 = vmatprep.mubr.bf16.mxu0 %v2089
  %3153 = vmatmul.mubr.bf16.gmra.mrb[0].mxu0 %v2088
  %v3154 = vpop.f32.mrb[0].mxu0
  %v3155 = vadd.f32 %v3052, %v3154
  %v3156 = vpop.f32.mrb[0].mxu0
  %v3157 = vadd.f32 %v3054, %v3156
  %v3158 = vpop.f32.mrb[0].mxu0
  %v3159 = vadd.f32 %v3056, %v3158
  %v3160 = vpop.f32.mrb[0].mxu0
  %v3161 = vadd.f32 %v3058, %v3160
  %3162 = vmatprep.mubr.bf16.mxu0 %v2097
  %3163 = vmatmul.mubr.bf16.gmra.mrb[0].mxu0 %v2096
  %v3164 = vpop.f32.mrb[0].mxu0
  %v3165 = vadd.f32 %v3062, %v3164
  %v3166 = vpop.f32.mrb[0].mxu0
  %v3167 = vadd.f32 %v3064, %v3166
  %v3168 = vpop.f32.mrb[0].mxu0
  %v3169 = vadd.f32 %v3066, %v3168
  %v3170 = vpop.f32.mrb[0].mxu0
  %v3171 = vadd.f32 %v3068, %v3170
  %3172 = vmatprep.mubr.bf16.mxu0 %v2105
  %3173 = vmatmul.mubr.bf16.gmra.mrb[0].mxu0 %v2104
  %v3174 = vpop.f32.mrb[0].mxu0
  %v3175 = vadd.f32 %v3072, %v3174
  %v3176 = vpop.f32.mrb[0].mxu0
  %v3177 = vadd.f32 %v3074, %v3176
  %v3178 = vpop.f32.mrb[0].mxu0
  %v3179 = vadd.f32 %v3076, %v3178
  %v3180 = vpop.f32.mrb[0].mxu0
  %v3181 = vadd.f32 %v3078, %v3180
  %3182 = vmatprep.mubr.bf16.mxu0 %v2113
  %3183 = vmatmul.mubr.bf16.gmra.mrb[0].mxu0 %v2112
  %v3184 = vpop.f32.mrb[0].mxu0
  %v3185 = vadd.f32 %v3082, %v3184
  %v3186 = vpop.f32.mrb[0].mxu0
  %v3187 = vadd.f32 %v3084, %v3186
  %v3188 = vpop.f32.mrb[0].mxu0
  %v3189 = vadd.f32 %v3086, %v3188
  %v3190 = vpop.f32.mrb[0].mxu0
  %v3191 = vadd.f32 %v3088, %v3190
  %3192 = vdwg.mxu0
  %3193 = vmatprep.subr.bf16.mxu0 %v2725
  %3194 = vmatpush1.bf16.msra.mxu0 %v2724
  %3195 = vmatprep.subr.bf16.mxu0 %v2727
  %3196 = vmatpush1.bf16.msra.mxu0 %v2726
  %3197 = vmatprep.subr.bf16.mxu0 %v2729
  %3198 = vmatpush1.bf16.msra.mxu0 %v2728
  %3199 = vmatprep.subr.bf16.mxu0 %v2731
  %3200 = vmatpush1.bf16.msra.mxu0 %v2730
  %3201 = vmatprep.subr.bf16.mxu0 %v2733
  %3202 = vmatpush1.bf16.msra.mxu0 %v2732
  %3203 = vmatprep.subr.bf16.mxu0 %v2735
  %3204 = vmatpush1.bf16.msra.mxu0 %v2734
  %3205 = vmatprep.subr.bf16.mxu0 %v2737
  %3206 = vmatpush1.bf16.msra.mxu0 %v2736
  %3207 = vmatprep.subr.bf16.mxu0 %v2739
  %3208 = vmatpush1.bf16.msra.mxu0 %v2738
  %3209 = vmatprep.subr.bf16.mxu0 %v2741
  %3210 = vmatpush1.bf16.msra.mxu0 %v2740
  %3211 = vmatprep.subr.bf16.mxu0 %v2743
  %3212 = vmatpush1.bf16.msra.mxu0 %v2742
  %3213 = vmatprep.subr.bf16.mxu0 %v2745
  %3214 = vmatpush1.bf16.msra.mxu0 %v2744
  %3215 = vmatprep.subr.bf16.mxu0 %v2747
  %3216 = vmatpush1.bf16.msra.mxu0 %v2746
  %3217 = vmatprep.subr.bf16.mxu0 %v2749
  %3218 = vmatpush1.bf16.msra.mxu0 %v2748
  %3219 = vmatprep.subr.bf16.mxu0 %v2751
  %3220 = vmatpush1.bf16.msra.mxu0 %v2750
  %3221 = vmatprep.subr.bf16.mxu0 %v2753
  %3222 = vmatpush1.bf16.msra.mxu0 %v2752
  %3223 = vmatprep.subr.bf16.mxu0 %v2755
  %3224 = vmatpush1.bf16.msra.mxu0 %v2754
  %3225 = vmatprep.mubr.bf16.mxu0 %v2067
  %3226 = vmatmul.mubr.bf16.gmra.mrb[0].mxu0 %v2066
  %v3227 = vpop.f32.mrb[0].mxu0
  %v3228 = vadd.f32 %v3125, %v3227
  %v3229 = vpop.f32.mrb[0].mxu0
  %v3230 = vadd.f32 %v3127, %v3229
  %v3231 = vpop.f32.mrb[0].mxu0
  %v3232 = vadd.f32 %v3129, %v3231
  %v3233 = vpop.f32.mrb[0].mxu0
  %v3234 = vadd.f32 %v3131, %v3233
  %3235 = vmatprep.mubr.bf16.mxu0 %v2075
  %3236 = vmatmul.mubr.bf16.gmra.mrb[0].mxu0 %v2074
  %v3237 = vpop.f32.mrb[0].mxu0
  %v3238 = vadd.f32 %v3135, %v3237
  %v3239 = vpop.f32.mrb[0].mxu0
  %v3240 = vadd.f32 %v3137, %v3239
  %v3241 = vpop.f32.mrb[0].mxu0
  %v3242 = vadd.f32 %v3139, %v3241
  %v3243 = vpop.f32.mrb[0].mxu0
  %v3244 = vadd.f32 %v3141, %v3243
  %3245 = vmatprep.mubr.bf16.mxu0 %v2083
  %3246 = vmatmul.mubr.bf16.gmra.mrb[0].mxu0 %v2082
  %v3247 = vpop.f32.mrb[0].mxu0
  %v3248 = vadd.f32 %v3145, %v3247
  %v3249 = vpop.f32.mrb[0].mxu0
  %v3250 = vadd.f32 %v3147, %v3249
  %v3251 = vpop.f32.mrb[0].mxu0
  %v3252 = vadd.f32 %v3149, %v3251
  %v3253 = vpop.f32.mrb[0].mxu0
  %v3254 = vadd.f32 %v3151, %v3253
  %3255 = vmatprep.mubr.bf16.mxu0 %v2091
  %3256 = vmatmul.mubr.bf16.gmra.mrb[0].mxu0 %v2090
  %v3257 = vpop.f32.mrb[0].mxu0
  %v3258 = vadd.f32 %v3155, %v3257
  %v3259 = vpop.f32.mrb[0].mxu0
  %v3260 = vadd.f32 %v3157, %v3259
  %v3261 = vpop.f32.mrb[0].mxu0
  %v3262 = vadd.f32 %v3159, %v3261
  %v3263 = vpop.f32.mrb[0].mxu0
  %v3264 = vadd.f32 %v3161, %v3263
  %3265 = vmatprep.mubr.bf16.mxu0 %v2099
  %3266 = vmatmul.mubr.bf16.gmra.mrb[0].mxu0 %v2098
  %v3267 = vpop.f32.mrb[0].mxu0
  %v3268 = vadd.f32 %v3165, %v3267
  %v3269 = vpop.f32.mrb[0].mxu0
  %v3270 = vadd.f32 %v3167, %v3269
  %v3271 = vpop.f32.mrb[0].mxu0
  %v3272 = vadd.f32 %v3169, %v3271
  %v3273 = vpop.f32.mrb[0].mxu0
  %v3274 = vadd.f32 %v3171, %v3273
  %3275 = vmatprep.mubr.bf16.mxu0 %v2107
  %3276 = vmatmul.mubr.bf16.gmra.mrb[0].mxu0 %v2106
  %v3277 = vpop.f32.mrb[0].mxu0
  %v3278 = vadd.f32 %v3175, %v3277
  %v3279 = vpop.f32.mrb[0].mxu0
  %v3280 = vadd.f32 %v3177, %v3279
  %v3281 = vpop.f32.mrb[0].mxu0
  %v3282 = vadd.f32 %v3179, %v3281
  %v3283 = vpop.f32.mrb[0].mxu0
  %v3284 = vadd.f32 %v3181, %v3283
  %3285 = vmatprep.mubr.bf16.mxu0 %v2115
  %3286 = vmatmul.mubr.bf16.gmra.mrb[0].mxu0 %v2114
  %v3287 = vpop.f32.mrb[0].mxu0
  %v3288 = vadd.f32 %v3185, %v3287
  %v3289 = vpop.f32.mrb[0].mxu0
  %v3290 = vadd.f32 %v3187, %v3289
  %v3291 = vpop.f32.mrb[0].mxu0
  %v3292 = vadd.f32 %v3189, %v3291
  %v3293 = vpop.f32.mrb[0].mxu0
  %v3294 = vadd.f32 %v3191, %v3293
  %3295 = vdwg.mxu0
  %3296 = vst [vmem:[#allocation4] sm:$0xff] %v3228
  %3297 = vst [vmem:[#allocation4 + $0x8] sm:$0xff] %v3230
  %3298 = vst [vmem:[#allocation4 + $0x10] sm:$0xff] %v3232
  %3299 = vst [vmem:[#allocation4 + $0x18] sm:$0xff] %v3234
  %3300 = vst [vmem:[#allocation4 + $0x20] sm:$0xff] %v3238
  %3301 = vst [vmem:[#allocation4 + $0x28] sm:$0xff] %v3240
  %3302 = vst [vmem:[#allocation4 + $0x30] sm:$0xff] %v3242
  %3303 = vst [vmem:[#allocation4 + $0x38] sm:$0xff] %v3244
  %3304 = vst [vmem:[#allocation4 + $0x40] sm:$0xff] %v3248
  %3305 = vst [vmem:[#allocation4 + $0x48] sm:$0xff] %v3250
  %3306 = vst [vmem:[#allocation4 + $0x50] sm:$0xff] %v3252
  %3307 = vst [vmem:[#allocation4 + $0x58] sm:$0xff] %v3254
  %3308 = vst [vmem:[#allocation4 + $0x60] sm:$0xff] %v3258
  %3309 = vst [vmem:[#allocation4 + $0x68] sm:$0xff] %v3260
  %3310 = vst [vmem:[#allocation4 + $0x70] sm:$0xff] %v3262
  %3311 = vst [vmem:[#allocation4 + $0x78] sm:$0xff] %v3264
  %3312 = vst [vmem:[#allocation4 + $0x80] sm:$0xff] %v3268
  %3313 = vst [vmem:[#allocation4 + $0x88] sm:$0xff] %v3270
  %3314 = vst [vmem:[#allocation4 + $0x90] sm:$0xff] %v3272
  %3315 = vst [vmem:[#allocation4 + $0x98] sm:$0xff] %v3274
  %3316 = vst [vmem:[#allocation4 + $0xa0] sm:$0xff] %v3278
  %3317 = vst [vmem:[#allocation4 + $0xa8] sm:$0xff] %v3280
  %3318 = vst [vmem:[#allocation4 + $0xb0] sm:$0xff] %v3282
  %3319 = vst [vmem:[#allocation4 + $0xb8] sm:$0xff] %v3284
  %3320 = vst [vmem:[#allocation4 + $0xc0] sm:$0xff] %v3288
  %3321 = vst [vmem:[#allocation4 + $0xc8] sm:$0xff] %v3290
  %3322 = vst [vmem:[#allocation4 + $0xd0] sm:$0x7] %v3292
  %3323 = vst [vmem:[#allocation4 + $0xd8] sm:$0x7] %v3294
  %v3324 = vld [vmem:[%s2] sm:$0x1]
  %v3325 = vld [vmem:[#allocation4] sm:$0xff]
  %v3326 = vld [vmem:[#allocation4 + $0x10] sm:$0xff]
  %v3327 = vld [vmem:[#allocation4 + $0x20] sm:$0xff]
  %v3328 = vld [vmem:[#allocation4 + $0x30] sm:$0xff]
  %v3329 = vld [vmem:[#allocation4 + $0x40] sm:$0xff]
  %v3330 = vld [vmem:[#allocation4 + $0x50] sm:$0xff]
  %v3331 = vld [vmem:[#allocation4 + $0x60] sm:$0xff]
  %v3332 = vld [vmem:[#allocation4 + $0x70] sm:$0x7]
  %v3334 = vlaneseq
  %v3335 = vshrl.u32 %v3334, 7
  %v3336 = vsub.s32 0, %v3335
  %v3337 = vrot.slane %v3324, %v3336
  %v3339 = vadd.f32 %v3337, %v3325
  %v3340 = vadd.f32 %v3337, %v3326
  %v3341 = vadd.f32 %v3337, %v3327
  %v3342 = vadd.f32 %v3337, %v3328
  %v3343 = vadd.f32 %v3337, %v3329
  %v3344 = vadd.f32 %v3337, %v3330
  %v3345 = vadd.f32 %v3337, %v3331
  %v3346 = vadd.f32 %v3337, %v3332
  %v3347 = vld [vmem:[#allocation4 + $0x70] sm:$0xff]
  %v3348 = vld [vmem:[#allocation4 + $0x80] sm:$0xff]
  %v3349 = vld [vmem:[#allocation4 + $0x90] sm:$0x7]
  %3358 = vrot.lane.b32.xlu0 %v3327, 64
  %v3359 = vpop.permute.xlu0 %3358
  %3360 = vrot.lane.b32.xlu0 %v3328, 64
  %v3361 = vpop.permute.xlu0 %3360
  %3362 = vrot.lane.b32.xlu0 %v3329, 64
  %v3363 = vpop.permute.xlu0 %3362
  %3364 = vrot.lane.b32.xlu0 %v3330, 64
  %v3365 = vpop.permute.xlu0 %3364
  %3366 = vrot.lane.b32.xlu0 %v3331, 64
  %v3367 = vpop.permute.xlu0 %3366
  %3368 = vrot.lane.b32.xlu0 %v3347, 64
  %v3369 = vpop.permute.xlu0 %3368
  %3370 = vrot.lane.b32.xlu0 %v3348, 64
  %v3371 = vpop.permute.xlu0 %3370
  %3372 = vrot.lane.b32.xlu0 %v3349, 64
  %v3373 = vpop.permute.xlu0 %3372
  %v3382 = vadd.f32 %v3339, %v3359
  %v3383 = vadd.f32 %v3340, %v3361
  %v3384 = vadd.f32 %v3341, %v3363
  %v3385 = vadd.f32 %v3342, %v3365
  %v3386 = vadd.f32 %v3343, %v3367
  %v3387 = vadd.f32 %v3344, %v3369
  %v3388 = vadd.f32 %v3345, %v3371
  %v3389 = vadd.f32 %v3346, %v3373
  %v3390 = vld [vmem:[#allocation4 + $0x48] sm:$0xff]
  %v3391 = vld [vmem:[#allocation4 + $0x58] sm:$0xff]
  %v3392 = vld [vmem:[#allocation4 + $0x68] sm:$0xff]
  %v3393 = vld [vmem:[#allocation4 + $0x78] sm:$0xff]
  %v3394 = vld [vmem:[#allocation4 + $0x88] sm:$0xff]
  %v3395 = vld [vmem:[#allocation4 + $0x98] sm:$0xff]
  %v3396 = vld [vmem:[#allocation4 + $0xa8] sm:$0xff]
  %v3397 = vld [vmem:[#allocation4 + $0xb8] sm:$0x7]
  %v3398 = vadd.f32 %v3382, %v3390
  %v3399 = vadd.f32 %v3383, %v3391
  %v3400 = vadd.f32 %v3384, %v3392
  %v3401 = vadd.f32 %v3385, %v3393
  %v3402 = vadd.f32 %v3386, %v3394
  %v3403 = vadd.f32 %v3387, %v3395
  %v3404 = vadd.f32 %v3388, %v3396
  %v3405 = vadd.f32 %v3389, %v3397
  %v3406 = vld [vmem:[#allocation4 + $0x68] sm:$0xff]
  %v3407 = vld [vmem:[#allocation4 + $0x78] sm:$0xff]
  %v3408 = vld [vmem:[#allocation4 + $0x88] sm:$0xff]
  %v3409 = vld [vmem:[#allocation4 + $0x98] sm:$0xff]
  %v3410 = vld [vmem:[#allocation4 + $0xa8] sm:$0xff]
  %v3411 = vld [vmem:[#allocation4 + $0xb8] sm:$0xff]
  %v3412 = vld [vmem:[#allocation4 + $0xc8] sm:$0xff]
  %v3413 = vld [vmem:[#allocation4 + $0xd8] sm:$0x7]
  %3422 = vrot.lane.b32.xlu0 %v3406, 64
  %v3423 = vpop.permute.xlu0 %3422
  %3424 = vrot.lane.b32.xlu0 %v3407, 64
  %v3425 = vpop.permute.xlu0 %3424
  %3426 = vrot.lane.b32.xlu0 %v3408, 64
  %v3427 = vpop.permute.xlu0 %3426
  %3428 = vrot.lane.b32.xlu0 %v3409, 64
  %v3429 = vpop.permute.xlu0 %3428
  %3430 = vrot.lane.b32.xlu0 %v3410, 64
  %v3431 = vpop.permute.xlu0 %3430
  %3432 = vrot.lane.b32.xlu0 %v3411, 64
  %v3433 = vpop.permute.xlu0 %3432
  %3434 = vrot.lane.b32.xlu0 %v3412, 64
  %v3435 = vpop.permute.xlu0 %3434
  %3436 = vrot.lane.b32.xlu0 %v3413, 64
  %v3437 = vpop.permute.xlu0 %3436
  %v3446 = vadd.f32 %v3398, %v3423
  %v3447 = vadd.f32 %v3399, %v3425
  %v3448 = vadd.f32 %v3400, %v3427
  %v3449 = vadd.f32 %v3401, %v3429
  %v3450 = vadd.f32 %v3402, %v3431
  %v3451 = vadd.f32 %v3403, %v3433
  %v3452 = vadd.f32 %v3404, %v3435
  %v3453 = vadd.f32 %v3405, %v3437
  %s3454 = scalar_lea.vmem [#allocation2], 64
  %3455 = vst.msk [vmem:[%s3454] sm:$0xff] %vm188, %v3446
  %3456 = vst.msk [vmem:[%s3454 + $0x8] sm:$0xff] %vm188, %v3447
  %3457 = vst.msk [vmem:[%s3454 + $0x10] sm:$0xff] %vm188, %v3448
  %3458 = vst.msk [vmem:[%s3454 + $0x18] sm:$0xff] %vm188, %v3449
  %3459 = vst.msk [vmem:[%s3454 + $0x20] sm:$0xff] %vm188, %v3450
  %3460 = vst.msk [vmem:[%s3454 + $0x28] sm:$0xff] %vm188, %v3451
  %3461 = vst.msk [vmem:[%s3454 + $0x30] sm:$0xff] %vm188, %v3452
  %3462 = vst.msk [vmem:[%s3454 + $0x38] sm:$0x7] %vm1767, %v3453
  %v3463 = vsel %vm188, %v3446, 0.0
  %v3464 = vsel %vm188, %v3447, 0.0
  %v3465 = vadd.f32 %v3463, %v3464
  %v3466 = vsel %vm188, %v3448, 0.0
  %v3467 = vadd.f32 %v3465, %v3466
  %v3468 = vsel %vm188, %v3449, 0.0
  %v3469 = vadd.f32 %v3467, %v3468
  %v3470 = vsel %vm188, %v3450, 0.0
  %v3471 = vadd.f32 %v3469, %v3470
  %v3472 = vsel %vm188, %v3451, 0.0
  %v3473 = vadd.f32 %v3471, %v3472
  %v3474 = vsel %vm188, %v3452, 0.0
  %v3475 = vadd.f32 %v3473, %v3474
  %v3476 = vsel %vm1767, %v3453, 0.0
  %v3477 = vadd.f32 %v3475, %v3476
  %v3478 = vrot.slane %v3477, 4
  %v3479 = vadd.f32 %v3477, %v3478
  %v3480 = vrot.slane %v3479, 2
  %v3481 = vadd.f32 %v3479, %v3480
  %v3482 = vrot.slane %v3481, 1
  %v3483 = vadd.f32 %v3481, %v3482
  %v3484 = vadd.f32 %v1790, %v3483
  %v3485 = vmul.f32 %v3446, %v3446
  %v3486 = vmul.f32 %v3447, %v3447
  %v3487 = vmul.f32 %v3448, %v3448
  %v3488 = vmul.f32 %v3449, %v3449
  %v3489 = vmul.f32 %v3450, %v3450
  %v3490 = vmul.f32 %v3451, %v3451
  %v3491 = vmul.f32 %v3452, %v3452
  %v3492 = vmul.f32 %v3453, %v3453
  %v3493 = vsel %vm188, %v3485, 0.0
  %v3494 = vsel %vm188, %v3486, 0.0
  %v3495 = vadd.f32 %v3493, %v3494
  %v3496 = vsel %vm188, %v3487, 0.0
  %v3497 = vadd.f32 %v3495, %v3496
  %v3498 = vsel %vm188, %v3488, 0.0
  %v3499 = vadd.f32 %v3497, %v3498
  %v3500 = vsel %vm188, %v3489, 0.0
  %v3501 = vadd.f32 %v3499, %v3500
  %v3502 = vsel %vm188, %v3490, 0.0
  %v3503 = vadd.f32 %v3501, %v3502
  %v3504 = vsel %vm188, %v3491, 0.0
  %v3505 = vadd.f32 %v3503, %v3504
  %v3506 = vsel %vm1767, %v3492, 0.0
  %v3507 = vadd.f32 %v3505, %v3506
  %v3508 = vrot.slane %v3507, 4
  %v3509 = vadd.f32 %v3507, %v3508
  %v3510 = vrot.slane %v3509, 2
  %v3511 = vadd.f32 %v3509, %v3510
  %v3512 = vrot.slane %v3511, 1
  %v3513 = vadd.f32 %v3511, %v3512
  %v3514 = vadd.f32 %v1820, %v3513
  %v3515 = vld [vmem:[%s3] sm:$0x1]
  %v3516 = vld [vmem:[%s4] sm:$0x1]
  %v3517 = vrcp.pop 118.0
  %v3518 = vmul.f32 %v3484, %v3517
  %v3519 = vmul.f32 %v3514, %v3517
  %v3520 = vmul.f32 %v3518, %v3518
  %v3521 = vsub.f32 %v3519, %v3520
  %v3522 = vmax.f32 %v3521, 0.0
  %v3523 = vadd.f32 %v3522, 1e-05
  %v3524 = vrsqrt.pop %v3523
  %v3525 = vmul.f32 %v3515, %v3524
  %v3526 = vmul.f32 %v3518, %v3525
  %v3527 = vsub.f32 %v3516, %v3526
  %v3528 = vld [vmem:[#allocation2] sm:$0xff]
  %v3529 = vld [vmem:[#allocation2 + $0x8] sm:$0xff]
  %v3530 = vld [vmem:[#allocation2 + $0x10] sm:$0xff]
  %v3531 = vld [vmem:[#allocation2 + $0x18] sm:$0xff]
  %v3532 = vld [vmem:[#allocation2 + $0x20] sm:$0xff]
  %v3533 = vld [vmem:[#allocation2 + $0x28] sm:$0xff]
  %v3534 = vld [vmem:[#allocation2 + $0x30] sm:$0xff]
  %v3535 = vld [vmem:[#allocation2 + $0x38] sm:$0x7]
  %v3537 = vlaneseq
  %v3538 = vshrl.u32 %v3537, 7
  %v3539 = vsub.s32 0, %v3538
  %v3540 = vrot.slane %v3525, %v3539
  %v3542 = vmul.f32 %v3528, %v3540
  %v3543 = vmul.f32 %v3529, %v3540
  %v3544 = vmul.f32 %v3530, %v3540
  %v3545 = vmul.f32 %v3531, %v3540
  %v3546 = vmul.f32 %v3532, %v3540
  %v3547 = vmul.f32 %v3533, %v3540
  %v3548 = vmul.f32 %v3534, %v3540
  %v3549 = vmul.f32 %v3535, %v3540
  %v3551 = vlaneseq
  %v3552 = vshrl.u32 %v3551, 7
  %v3553 = vsub.s32 0, %v3552
  %v3554 = vrot.slane %v3527, %v3553
  %v3556 = vadd.f32 %v3542, %v3554
  %v3557 = vadd.f32 %v3543, %v3554
  %v3558 = vadd.f32 %v3544, %v3554
  %v3559 = vadd.f32 %v3545, %v3554
  %v3560 = vadd.f32 %v3546, %v3554
  %v3561 = vadd.f32 %v3547, %v3554
  %v3562 = vadd.f32 %v3548, %v3554
  %v3563 = vadd.f32 %v3549, %v3554
  %v3564 = vmax.f32 %v3556, 0.0
  %v3565 = vmax.f32 %v3557, 0.0
  %v3566 = vmax.f32 %v3558, 0.0
  %v3567 = vmax.f32 %v3559, 0.0
  %v3568 = vmax.f32 %v3560, 0.0
  %v3569 = vmax.f32 %v3561, 0.0
  %v3570 = vmax.f32 %v3562, 0.0
  %v3571 = vmax.f32 %v3563, 0.0
  %v3580 = vrot.slane %v3564, 6
  %v3581 = vrot.slane %v3565, 6
  %v3582 = vsel %vm116, %v3580, %v3581
  %v3583 = vrot.slane %v3566, 6
  %v3584 = vsel %vm116, %v3581, %v3583
  %v3585 = vrot.slane %v3567, 6
  %v3586 = vsel %vm116, %v3583, %v3585
  %v3587 = vrot.slane %v3568, 6
  %v3588 = vsel %vm116, %v3585, %v3587
  %v3589 = vrot.slane %v3569, 6
  %v3590 = vsel %vm116, %v3587, %v3589
  %v3591 = vrot.slane %v3570, 6
  %v3592 = vsel %vm116, %v3589, %v3591
  %v3593 = vrot.slane %v3571, 6
  %v3594 = vsel %vm116, %v3591, %v3593
  %v3603 = vsel %vm116, 0.0, %v3580
  %v3604 = vrot.slane %v3564, 7
  %v3605 = vrot.slane %v3565, 7
  %v3606 = vsel %vm141, %v3604, %v3605
  %v3607 = vrot.slane %v3566, 7
  %v3608 = vsel %vm141, %v3605, %v3607
  %v3609 = vrot.slane %v3567, 7
  %v3610 = vsel %vm141, %v3607, %v3609
  %v3611 = vrot.slane %v3568, 7
  %v3612 = vsel %vm141, %v3609, %v3611
  %v3613 = vrot.slane %v3569, 7
  %v3614 = vsel %vm141, %v3611, %v3613
  %v3615 = vrot.slane %v3570, 7
  %v3616 = vsel %vm141, %v3613, %v3615
  %v3617 = vrot.slane %v3571, 7
  %v3618 = vsel %vm141, %v3615, %v3617
  %v3621 = vsel %vm141, 0.0, %v3604
  %v3622 = vsel %vm160, %v3618, 0.0
  %3625 = vrot.lane.b32.xlu0 %v3621, 64
  %v3626 = vpop.permute.xlu0 %3625
  %3627 = vrot.lane.b32.xlu0 %v3606, 64
  %v3628 = vpop.permute.xlu0 %3627
  %3629 = vrot.lane.b32.xlu0 %v3608, 64
  %v3630 = vpop.permute.xlu0 %3629
  %3631 = vrot.lane.b32.xlu0 %v3610, 64
  %v3632 = vpop.permute.xlu0 %3631
  %3633 = vrot.lane.b32.xlu0 %v3612, 64
  %v3634 = vpop.permute.xlu0 %3633
  %3635 = vrot.lane.b32.xlu0 %v3614, 64
  %v3636 = vpop.permute.xlu0 %3635
  %3637 = vrot.lane.b32.xlu0 %v3616, 64
  %v3638 = vpop.permute.xlu0 %3637
  %3639 = vrot.lane.b32.xlu0 %v3622, 64
  %v3640 = vpop.permute.xlu0 %3639
  %v3649 = vsel %vm188, %v3603, %v3626
  %v3650 = vsel %vm188, %v3582, %v3628
  %v3651 = vsel %vm188, %v3584, %v3630
  %v3652 = vsel %vm188, %v3586, %v3632
  %v3653 = vsel %vm188, %v3588, %v3634
  %v3654 = vsel %vm188, %v3590, %v3636
  %v3655 = vsel %vm188, %v3592, %v3638
  %v3656 = vsel %vm188, %v3594, %v3640
  %v3657 = vpack.c.bf16 %v3650, %v3649
  %v3658 = vpack.c.bf16 %v3652, %v3651
  %v3659 = vpack.c.bf16 %v3654, %v3653
  %v3660 = vpack.c.bf16 %v3656, %v3655
  %v3665 = vrot.slane %v3657, 5
  %v3666 = vrot.slane %v3658, 5
  %v3667 = vsel %vm205, %v3665, %v3666
  %v3668 = vrot.slane %v3659, 5
  %v3669 = vsel %vm205, %v3666, %v3668
  %v3670 = vrot.slane %v3660, 5
  %v3671 = vsel %vm205, %v3668, %v3670
  %3677 = vst [vmem:[#allocation3 + $0x40] sm:$0xf8] %v3665
  %3678 = vst [vmem:[#allocation3 + $0x80] sm:$0xff] %v3667
  %3679 = vst [vmem:[#allocation3 + $0xc0] sm:$0xff] %v3669
  %3680 = vst [vmem:[#allocation3 + $0x100] sm:$0xff] %v3671
  %v3681 = vld [vmem:[#allocation3 + $0x140] sm:$0x3]
  %v3682 = vsel %vm224, %v3670, %v3681
  %3683 = vst [vmem:[#allocation3 + $0x140] sm:$0x3] %v3682
  %v3684 = vrot.slane %v3657, 6
  %v3685 = vrot.slane %v3658, 6
  %v3686 = vsel %vm222, %v3684, %v3685
  %v3687 = vrot.slane %v3659, 6
  %v3688 = vsel %vm222, %v3685, %v3687
  %v3689 = vrot.slane %v3660, 6
  %v3690 = vsel %vm222, %v3687, %v3689
  %3696 = vst [vmem:[#allocation3 + $0x48] sm:$0xfc] %v3684
  %3697 = vst [vmem:[#allocation3 + $0x88] sm:$0xff] %v3686
  %3698 = vst [vmem:[#allocation3 + $0xc8] sm:$0xff] %v3688
  %3699 = vst [vmem:[#allocation3 + $0x108] sm:$0xff] %v3690
  %v3700 = vld [vmem:[#allocation3 + $0x148] sm:$0x1]
  %v3701 = vsel %vm246, %v3689, %v3700
  %3702 = vst [vmem:[#allocation3 + $0x148] sm:$0x1] %v3701
  %v3703 = vrot.slane %v3657, 7
  %v3704 = vrot.slane %v3658, 7
  %v3705 = vsel %vm244, %v3703, %v3704
  %v3706 = vrot.slane %v3659, 7
  %v3707 = vsel %vm244, %v3704, %v3706
  %v3708 = vrot.slane %v3660, 7
  %v3709 = vsel %vm244, %v3706, %v3708
  %3714 = vst [vmem:[#allocation3 + $0x50] sm:$0xfe] %v3703
  %3715 = vst [vmem:[#allocation3 + $0x90] sm:$0xff] %v3705
  %3716 = vst [vmem:[#allocation3 + $0xd0] sm:$0xff] %v3707
  %v3717 = vld [vmem:[#allocation3 + $0x110] sm:$0xff]
  %v3718 = vsel %vm266, %v3709, %v3717
  %3719 = vst [vmem:[#allocation3 + $0x110] sm:$0xff] %v3718
  %3720 = vst [vmem:[#allocation3 + $0x58] sm:$0xff] %v3657
  %3721 = vst [vmem:[#allocation3 + $0x98] sm:$0xff] %v3658
  %3722 = vst [vmem:[#allocation3 + $0xd8] sm:$0xff] %v3659
  %v3723 = vld [vmem:[#allocation3 + $0x118] sm:$0x7f]
  %v3724 = vsel %vm275, %v3660, %v3723
  %3725 = vst [vmem:[#allocation3 + $0x118] sm:$0x7f] %v3724
  %v3726 = vrot.slane %v3657, 1
  %v3727 = vrot.slane %v3658, 1
  %v3728 = vsel %vm273, %v3726, %v3727
  %v3729 = vrot.slane %v3659, 1
  %v3730 = vsel %vm273, %v3727, %v3729
  %v3731 = vrot.slane %v3660, 1
  %v3732 = vsel %vm273, %v3729, %v3731
  %3738 = vst [vmem:[#allocation3 + $0x20] sm:$0x80] %v3726
  %3739 = vst [vmem:[#allocation3 + $0x60] sm:$0xff] %v3728
  %3740 = vst [vmem:[#allocation3 + $0xa0] sm:$0xff] %v3730
  %3741 = vst [vmem:[#allocation3 + $0xe0] sm:$0xff] %v3732
  %v3742 = vld [vmem:[#allocation3 + $0x120] sm:$0x3f]
  %v3743 = vsel %vm297, %v3731, %v3742
  %3744 = vst [vmem:[#allocation3 + $0x120] sm:$0x3f] %v3743
  %v3745 = vrot.slane %v3657, 2
  %v3746 = vrot.slane %v3658, 2
  %v3747 = vsel %vm295, %v3745, %v3746
  %v3748 = vrot.slane %v3659, 2
  %v3749 = vsel %vm295, %v3746, %v3748
  %v3750 = vrot.slane %v3660, 2
  %v3751 = vsel %vm295, %v3748, %v3750
  %3757 = vst [vmem:[#allocation3 + $0x28] sm:$0xc0] %v3745
  %3758 = vst [vmem:[#allocation3 + $0x68] sm:$0xff] %v3747
  %3759 = vst [vmem:[#allocation3 + $0xa8] sm:$0xff] %v3749
  %3760 = vst [vmem:[#allocation3 + $0xe8] sm:$0xff] %v3751
  %v3761 = vld [vmem:[#allocation3 + $0x128] sm:$0x1f]
  %v3762 = vsel %vm319, %v3750, %v3761
  %3763 = vst [vmem:[#allocation3 + $0x128] sm:$0x1f] %v3762
  %v3764 = vrot.slane %v3657, 3
  %v3765 = vrot.slane %v3658, 3
  %v3766 = vsel %vm317, %v3764, %v3765
  %v3767 = vrot.slane %v3659, 3
  %v3768 = vsel %vm317, %v3765, %v3767
  %v3769 = vrot.slane %v3660, 3
  %v3770 = vsel %vm317, %v3767, %v3769
  %3776 = vst [vmem:[#allocation3 + $0x30] sm:$0xe0] %v3764
  %3777 = vst [vmem:[#allocation3 + $0x70] sm:$0xff] %v3766
  %3778 = vst [vmem:[#allocation3 + $0xb0] sm:$0xff] %v3768
  %3779 = vst [vmem:[#allocation3 + $0xf0] sm:$0xff] %v3770
  %v3780 = vld [vmem:[#allocation3 + $0x130] sm:$0xf]
  %v3781 = vsel %vm341, %v3769, %v3780
  %3782 = vst [vmem:[#allocation3 + $0x130] sm:$0xf] %v3781
  %v3783 = vrot.slane %v3657, 4
  %v3784 = vrot.slane %v3658, 4
  %v3785 = vsel %vm339, %v3783, %v3784
  %v3786 = vrot.slane %v3659, 4
  %v3787 = vsel %vm339, %v3784, %v3786
  %v3788 = vrot.slane %v3660, 4
  %v3789 = vsel %vm339, %v3786, %v3788
  %3795 = vst [vmem:[#allocation3 + $0x38] sm:$0xf0] %v3783
  %3796 = vst [vmem:[#allocation3 + $0x78] sm:$0xff] %v3785
  %3797 = vst [vmem:[#allocation3 + $0xb8] sm:$0xff] %v3787
  %3798 = vst [vmem:[#allocation3 + $0xf8] sm:$0xff] %v3789
  %v3799 = vld [vmem:[#allocation3 + $0x138] sm:$0x7]
  %v3800 = vsel %vm362, %v3788, %v3799
  %3801 = vst [vmem:[#allocation3 + $0x138] sm:$0x7] %v3800
  %v3802 = vld [vmem:[#allocation3] sm:$0xff]
  %v3803 = vld [vmem:[#allocation3 + $0x8] sm:$0xff]
  %v3804 = vld [vmem:[#allocation3 + $0x10] sm:$0xff]
  %v3805 = vld [vmem:[#allocation3 + $0x18] sm:$0xff]
  %v3806 = vld [vmem:[#allocation3 + $0x20] sm:$0xff]
  %v3807 = vld [vmem:[#allocation3 + $0x28] sm:$0xff]
  %v3808 = vld [vmem:[#allocation3 + $0x30] sm:$0xff]
  %v3809 = vld [vmem:[#allocation3 + $0x38] sm:$0xff]
  %v3810 = vld [vmem:[#allocation3 + $0x40] sm:$0xff]
  %v3811 = vld [vmem:[#allocation3 + $0x48] sm:$0xff]
  %v3812 = vld [vmem:[#allocation3 + $0x50] sm:$0xff]
  %v3813 = vld [vmem:[#allocation3 + $0x58] sm:$0xff]
  %v3814 = vld [vmem:[#allocation3 + $0x60] sm:$0xff]
  %v3815 = vld [vmem:[#allocation3 + $0x68] sm:$0xff]
  %v3816 = vld [vmem:[#allocation3 + $0x70] sm:$0xff]
  %v3817 = vld [vmem:[#allocation3 + $0x78] sm:$0xff]
  %v3818 = vld [vmem:[#allocation3 + $0x80] sm:$0xff]
  %v3819 = vld [vmem:[#allocation3 + $0x88] sm:$0xff]
  %v3820 = vld [vmem:[#allocation3 + $0x90] sm:$0xff]
  %v3821 = vld [vmem:[#allocation3 + $0x98] sm:$0xff]
  %v3822 = vld [vmem:[#allocation3 + $0xa0] sm:$0xff]
  %v3823 = vld [vmem:[#allocation3 + $0xa8] sm:$0xff]
  %v3824 = vld [vmem:[#allocation3 + $0xb0] sm:$0xff]
  %v3825 = vld [vmem:[#allocation3 + $0xb8] sm:$0xff]
  %v3826 = vld [vmem:[#allocation3 + $0xc0] sm:$0xff]
  %v3827 = vld [vmem:[#allocation3 + $0xc8] sm:$0xff]
  %v3828 = vld [vmem:[#allocation3 + $0xd0] sm:$0xff]
  %v3829 = vld [vmem:[#allocation3 + $0xd8] sm:$0xff]
  %v3830 = vld [vmem:[#allocation3 + $0xe0] sm:$0xff]
  %v3831 = vld [vmem:[#allocation3 + $0xe8] sm:$0xff]
  %v3832 = vld [vmem:[#allocation3 + $0xf0] sm:$0xff]
  %v3833 = vld [vmem:[#allocation3 + $0xf8] sm:$0xff]
  %v3834 = vld [vmem:[#allocation3 + $0x100] sm:$0xff]
  %v3835 = vld [vmem:[#allocation3 + $0x108] sm:$0xff]
  %v3836 = vld [vmem:[#allocation3 + $0x110] sm:$0xff]
  %v3837 = vld [vmem:[#allocation3 + $0x118] sm:$0xff]
  %v3838 = vld [vmem:[#allocation3 + $0x120] sm:$0xff]
  %v3839 = vld [vmem:[#allocation3 + $0x128] sm:$0xff]
  %v3840 = vld [vmem:[#allocation3 + $0x130] sm:$0xff]
  %v3841 = vld [vmem:[#allocation3 + $0x138] sm:$0xff]
  %v3842 = vld [vmem:[#allocation3 + $0x140] sm:$0xff]
  %v3843 = vld [vmem:[#allocation3 + $0x148] sm:$0xff]
  %v3844 = vld [vmem:[#allocation3 + $0x150] sm:$0xff]
  %v3845 = vld [vmem:[#allocation3 + $0x158] sm:$0xff]
  %v3846 = vld [vmem:[#allocation3 + $0x160] sm:$0xff]
  %v3847 = vld [vmem:[#allocation3 + $0x168] sm:$0xff]
  %v3848 = vld [vmem:[#allocation3 + $0x170] sm:$0xff]
  %v3849 = vld [vmem:[#allocation3 + $0x178] sm:$0xff]
  %v3850 = vld [vmem:[#allocation3 + $0x180] sm:$0x3f]
  %v3851 = vld [vmem:[#allocation3 + $0x188] sm:$0x3f]
  %v3852 = vld [vmem:[#allocation3 + $0x190] sm:$0x3f]
  %v3853 = vld [vmem:[#allocation3 + $0x198] sm:$0x3f]
  %v3854 = vld [vmem:[#allocation3 + $0x1a0] sm:$0x3f]
  %v3855 = vld [vmem:[#allocation3 + $0x1a8] sm:$0x3f]
  %v3856 = vld [vmem:[#allocation3 + $0x1b0] sm:$0x3f]
  %v3857 = vld [vmem:[#allocation3 + $0x1b8] sm:$0x3f]
  %v3858 = vld [vmem:[%s5] sm:$0xff]
  %v3859 = vld [vmem:[%s5 + $0x8] sm:$0xff]
  %v3860 = vld [vmem:[%s5 + $0x10] sm:$0xff]
  %v3861 = vld [vmem:[%s5 + $0x18] sm:$0xff]
  %v3862 = vld [vmem:[%s5 + $0x20] sm:$0xff]
  %v3863 = vld [vmem:[%s5 + $0x28] sm:$0xff]
  %v3864 = vld [vmem:[%s5 + $0x30] sm:$0xff]
  %v3865 = vld [vmem:[%s5 + $0x38] sm:$0xff]
  %v3866 = vld [vmem:[%s5 + $0x40] sm:$0xff]
  %v3867 = vld [vmem:[%s5 + $0x48] sm:$0xff]
  %v3868 = vld [vmem:[%s5 + $0x50] sm:$0xff]
  %v3869 = vld [vmem:[%s5 + $0x58] sm:$0xff]
  %v3870 = vld [vmem:[%s5 + $0x60] sm:$0xff]
  %v3871 = vld [vmem:[%s5 + $0x68] sm:$0xff]
  %v3872 = vld [vmem:[%s5 + $0x70] sm:$0xff]
  %v3873 = vld [vmem:[%s5 + $0x78] sm:$0xff]
  %v3874 = vld [vmem:[%s5 + $0x80] sm:$0xff]
  %v3875 = vld [vmem:[%s5 + $0x88] sm:$0xff]
  %v3876 = vld [vmem:[%s5 + $0x90] sm:$0xff]
  %v3877 = vld [vmem:[%s5 + $0x98] sm:$0xff]
  %v3878 = vld [vmem:[%s5 + $0xa0] sm:$0xff]
  %v3879 = vld [vmem:[%s5 + $0xa8] sm:$0xff]
  %v3880 = vld [vmem:[%s5 + $0xb0] sm:$0xff]
  %v3881 = vld [vmem:[%s5 + $0xb8] sm:$0xff]
  %v3882 = vld [vmem:[%s5 + $0xc0] sm:$0xff]
  %v3883 = vld [vmem:[%s5 + $0xc8] sm:$0xff]
  %v3884 = vld [vmem:[%s5 + $0xd0] sm:$0xff]
  %v3885 = vld [vmem:[%s5 + $0xd8] sm:$0xff]
  %v3886 = vld [vmem:[%s5 + $0xe0] sm:$0xff]
  %v3887 = vld [vmem:[%s5 + $0xe8] sm:$0xff]
  %v3888 = vld [vmem:[%s5 + $0xf0] sm:$0xff]
  %v3889 = vld [vmem:[%s5 + $0xf8] sm:$0xff]
  %v3890 = vld [vmem:[%s5 + $0x100] sm:$0xff]
  %v3891 = vld [vmem:[%s5 + $0x108] sm:$0xff]
  %v3892 = vld [vmem:[%s5 + $0x110] sm:$0xff]
  %v3893 = vld [vmem:[%s5 + $0x118] sm:$0xff]
  %v3894 = vld [vmem:[%s5 + $0x120] sm:$0xff]
  %v3895 = vld [vmem:[%s5 + $0x128] sm:$0xff]
  %v3896 = vld [vmem:[%s5 + $0x130] sm:$0xff]
  %v3897 = vld [vmem:[%s5 + $0x138] sm:$0xff]
  %v3898 = vld [vmem:[%s5 + $0x140] sm:$0xff]
  %v3899 = vld [vmem:[%s5 + $0x148] sm:$0xff]
  %v3900 = vld [vmem:[%s5 + $0x150] sm:$0xff]
  %v3901 = vld [vmem:[%s5 + $0x158] sm:$0xff]
  %v3902 = vld [vmem:[%s5 + $0x160] sm:$0xff]
  %v3903 = vld [vmem:[%s5 + $0x168] sm:$0xff]
  %v3904 = vld [vmem:[%s5 + $0x170] sm:$0xff]
  %v3905 = vld [vmem:[%s5 + $0x178] sm:$0xff]
  %v3906 = vld [vmem:[%s5 + $0x180] sm:$0xff]
  %v3907 = vld [vmem:[%s5 + $0x188] sm:$0xff]
  %v3908 = vld [vmem:[%s5 + $0x190] sm:$0xff]
  %v3909 = vld [vmem:[%s5 + $0x198] sm:$0xff]
  %v3910 = vld [vmem:[%s5 + $0x1a0] sm:$0xff]
  %v3911 = vld [vmem:[%s5 + $0x1a8] sm:$0xff]
  %v3912 = vld [vmem:[%s5 + $0x1b0] sm:$0xff]
  %v3913 = vld [vmem:[%s5 + $0x1b8] sm:$0xff]
  %v3914 = vld [vmem:[%s5 + $0x1c0] sm:$0xff]
  %v3915 = vld [vmem:[%s5 + $0x1c8] sm:$0xff]
  %v3916 = vld [vmem:[%s5 + $0x1d0] sm:$0xff]
  %v3917 = vld [vmem:[%s5 + $0x1d8] sm:$0xff]
  %v3918 = vld [vmem:[%s5 + $0x1e0] sm:$0xff]
  %v3919 = vld [vmem:[%s5 + $0x1e8] sm:$0xff]
  %v3920 = vld [vmem:[%s5 + $0x1f0] sm:$0xff]
  %v3921 = vld [vmem:[%s5 + $0x1f8] sm:$0xff]
  %v3922 = vld [vmem:[%s5 + $0x200] sm:$0xff]
  %v3923 = vld [vmem:[%s5 + $0x208] sm:$0xff]
  %v3924 = vld [vmem:[%s5 + $0x210] sm:$0xff]
  %v3925 = vld [vmem:[%s5 + $0x218] sm:$0xff]
  %v3926 = vld [vmem:[%s5 + $0x220] sm:$0xff]
  %v3927 = vld [vmem:[%s5 + $0x228] sm:$0xff]
  %v3928 = vld [vmem:[%s5 + $0x230] sm:$0xff]
  %v3929 = vld [vmem:[%s5 + $0x238] sm:$0xff]
  %v3930 = vld [vmem:[%s5 + $0x240] sm:$0xff]
  %v3931 = vld [vmem:[%s5 + $0x248] sm:$0xff]
  %v3932 = vld [vmem:[%s5 + $0x250] sm:$0xff]
  %v3933 = vld [vmem:[%s5 + $0x258] sm:$0xff]
  %v3934 = vld [vmem:[%s5 + $0x260] sm:$0xff]
  %v3935 = vld [vmem:[%s5 + $0x268] sm:$0xff]
  %v3936 = vld [vmem:[%s5 + $0x270] sm:$0xff]
  %v3937 = vld [vmem:[%s5 + $0x278] sm:$0xff]
  %v3938 = vld [vmem:[%s5 + $0x280] sm:$0xff]
  %v3939 = vld [vmem:[%s5 + $0x288] sm:$0xff]
  %v3940 = vld [vmem:[%s5 + $0x290] sm:$0xff]
  %v3941 = vld [vmem:[%s5 + $0x298] sm:$0xff]
  %v3942 = vld [vmem:[%s5 + $0x2a0] sm:$0xff]
  %v3943 = vld [vmem:[%s5 + $0x2a8] sm:$0xff]
  %v3944 = vld [vmem:[%s5 + $0x2b0] sm:$0xff]
  %v3945 = vld [vmem:[%s5 + $0x2b8] sm:$0xff]
  %v3946 = vld [vmem:[%s5 + $0x2c0] sm:$0xff]
  %v3947 = vld [vmem:[%s5 + $0x2c8] sm:$0xff]
  %v3948 = vld [vmem:[%s5 + $0x2d0] sm:$0xff]
  %v3949 = vld [vmem:[%s5 + $0x2d8] sm:$0xff]
  %v3950 = vld [vmem:[%s5 + $0x2e0] sm:$0xff]
  %v3951 = vld [vmem:[%s5 + $0x2e8] sm:$0xff]
  %v3952 = vld [vmem:[%s5 + $0x2f0] sm:$0xff]
  %v3953 = vld [vmem:[%s5 + $0x2f8] sm:$0xff]
  %v3954 = vld [vmem:[%s5 + $0x300] sm:$0xff]
  %v3955 = vld [vmem:[%s5 + $0x308] sm:$0xff]
  %v3956 = vld [vmem:[%s5 + $0x310] sm:$0xff]
  %v3957 = vld [vmem:[%s5 + $0x318] sm:$0xff]
  %v3958 = vld [vmem:[%s5 + $0x320] sm:$0xff]
  %v3959 = vld [vmem:[%s5 + $0x328] sm:$0xff]
  %v3960 = vld [vmem:[%s5 + $0x330] sm:$0xff]
  %v3961 = vld [vmem:[%s5 + $0x338] sm:$0xff]
  %v3962 = vld [vmem:[%s5 + $0x340] sm:$0xff]
  %v3963 = vld [vmem:[%s5 + $0x348] sm:$0xff]
  %v3964 = vld [vmem:[%s5 + $0x350] sm:$0xff]
  %v3965 = vld [vmem:[%s5 + $0x358] sm:$0xff]
  %v3966 = vld [vmem:[%s5 + $0x360] sm:$0xff]
  %v3967 = vld [vmem:[%s5 + $0x368] sm:$0xff]
  %v3968 = vld [vmem:[%s5 + $0x370] sm:$0xff]
  %v3969 = vld [vmem:[%s5 + $0x378] sm:$0xff]
  %v3970 = vld [vmem:[%s5 + $0x380] sm:$0xff]
  %v3971 = vld [vmem:[%s5 + $0x388] sm:$0xff]
  %v3972 = vld [vmem:[%s5 + $0x390] sm:$0xff]
  %v3973 = vld [vmem:[%s5 + $0x398] sm:$0xff]
  %v3974 = vld [vmem:[%s5 + $0x3a0] sm:$0xff]
  %v3975 = vld [vmem:[%s5 + $0x3a8] sm:$0xff]
  %v3976 = vld [vmem:[%s5 + $0x3b0] sm:$0xff]
  %v3977 = vld [vmem:[%s5 + $0x3b8] sm:$0xff]
  %v3978 = vld [vmem:[%s5 + $0x3c0] sm:$0xff]
  %v3979 = vld [vmem:[%s5 + $0x3c8] sm:$0xff]
  %v3980 = vld [vmem:[%s5 + $0x3d0] sm:$0xff]
  %v3981 = vld [vmem:[%s5 + $0x3d8] sm:$0xff]
  %v3982 = vld [vmem:[%s5 + $0x3e0] sm:$0xff]
  %v3983 = vld [vmem:[%s5 + $0x3e8] sm:$0xff]
  %v3984 = vld [vmem:[%s5 + $0x3f0] sm:$0xff]
  %v3985 = vld [vmem:[%s5 + $0x3f8] sm:$0xff]
  %v4114 = vunpack.c.l.b16 %v3858
  %v4115 = vunpack.c.h.b16 %v3858
  %v4116 = vunpack.c.l.b16 %v3859
  %v4117 = vunpack.c.h.b16 %v3859
  %v4118 = vunpack.c.l.b16 %v3860
  %v4119 = vunpack.c.h.b16 %v3860
  %v4120 = vunpack.c.l.b16 %v3861
  %v4121 = vunpack.c.h.b16 %v3861
  %v4122 = vunpack.c.l.b16 %v3862
  %v4123 = vunpack.c.h.b16 %v3862
  %v4124 = vunpack.c.l.b16 %v3863
  %v4125 = vunpack.c.h.b16 %v3863
  %v4126 = vunpack.c.l.b16 %v3864
  %v4127 = vunpack.c.h.b16 %v3864
  %v4128 = vunpack.c.l.b16 %v3865
  %v4129 = vunpack.c.h.b16 %v3865
  %v4130 = vunpack.c.l.b16 %v3866
  %v4131 = vunpack.c.h.b16 %v3866
  %v4132 = vunpack.c.l.b16 %v3867
  %v4133 = vunpack.c.h.b16 %v3867
  %v4134 = vunpack.c.l.b16 %v3868
  %v4135 = vunpack.c.h.b16 %v3868
  %v4136 = vunpack.c.l.b16 %v3869
  %v4137 = vunpack.c.h.b16 %v3869
  %v4138 = vunpack.c.l.b16 %v3870
  %v4139 = vunpack.c.h.b16 %v3870
  %v4140 = vunpack.c.l.b16 %v3871
  %v4141 = vunpack.c.h.b16 %v3871
  %v4142 = vunpack.c.l.b16 %v3872
  %v4143 = vunpack.c.h.b16 %v3872
  %v4144 = vunpack.c.l.b16 %v3873
  %v4145 = vunpack.c.h.b16 %v3873
  %v4146 = vunpack.c.l.b16 %v3874
  %v4147 = vunpack.c.h.b16 %v3874
  %v4148 = vunpack.c.l.b16 %v3875
  %v4149 = vunpack.c.h.b16 %v3875
  %v4150 = vunpack.c.l.b16 %v3876
  %v4151 = vunpack.c.h.b16 %v3876
  %v4152 = vunpack.c.l.b16 %v3877
  %v4153 = vunpack.c.h.b16 %v3877
  %v4154 = vunpack.c.l.b16 %v3878
  %v4155 = vunpack.c.h.b16 %v3878
  %v4156 = vunpack.c.l.b16 %v3879
  %v4157 = vunpack.c.h.b16 %v3879
  %v4158 = vunpack.c.l.b16 %v3880
  %v4159 = vunpack.c.h.b16 %v3880
  %v4160 = vunpack.c.l.b16 %v3881
  %v4161 = vunpack.c.h.b16 %v3881
  %v4162 = vunpack.c.l.b16 %v3882
  %v4163 = vunpack.c.h.b16 %v3882
  %v4164 = vunpack.c.l.b16 %v3883
  %v4165 = vunpack.c.h.b16 %v3883
  %v4166 = vunpack.c.l.b16 %v3884
  %v4167 = vunpack.c.h.b16 %v3884
  %v4168 = vunpack.c.l.b16 %v3885
  %v4169 = vunpack.c.h.b16 %v3885
  %v4170 = vunpack.c.l.b16 %v3886
  %v4171 = vunpack.c.h.b16 %v3886
  %v4172 = vunpack.c.l.b16 %v3887
  %v4173 = vunpack.c.h.b16 %v3887
  %v4174 = vunpack.c.l.b16 %v3888
  %v4175 = vunpack.c.h.b16 %v3888
  %v4176 = vunpack.c.l.b16 %v3889
  %v4177 = vunpack.c.h.b16 %v3889
  %v4178 = vunpack.c.l.b16 %v3890
  %v4179 = vunpack.c.h.b16 %v3890
  %v4180 = vunpack.c.l.b16 %v3891
  %v4181 = vunpack.c.h.b16 %v3891
  %v4182 = vunpack.c.l.b16 %v3892
  %v4183 = vunpack.c.h.b16 %v3892
  %v4184 = vunpack.c.l.b16 %v3893
  %v4185 = vunpack.c.h.b16 %v3893
  %v4186 = vunpack.c.l.b16 %v3894
  %v4187 = vunpack.c.h.b16 %v3894
  %v4188 = vunpack.c.l.b16 %v3895
  %v4189 = vunpack.c.h.b16 %v3895
  %v4190 = vunpack.c.l.b16 %v3896
  %v4191 = vunpack.c.h.b16 %v3896
  %v4192 = vunpack.c.l.b16 %v3897
  %v4193 = vunpack.c.h.b16 %v3897
  %v4194 = vunpack.c.l.b16 %v3898
  %v4195 = vunpack.c.h.b16 %v3898
  %v4196 = vunpack.c.l.b16 %v3899
  %v4197 = vunpack.c.h.b16 %v3899
  %v4198 = vunpack.c.l.b16 %v3900
  %v4199 = vunpack.c.h.b16 %v3900
  %v4200 = vunpack.c.l.b16 %v3901
  %v4201 = vunpack.c.h.b16 %v3901
  %v4202 = vunpack.c.l.b16 %v3902
  %v4203 = vunpack.c.h.b16 %v3902
  %v4204 = vunpack.c.l.b16 %v3903
  %v4205 = vunpack.c.h.b16 %v3903
  %v4206 = vunpack.c.l.b16 %v3904
  %v4207 = vunpack.c.h.b16 %v3904
  %v4208 = vunpack.c.l.b16 %v3905
  %v4209 = vunpack.c.h.b16 %v3905
  %v4210 = vunpack.c.l.b16 %v3906
  %v4211 = vunpack.c.h.b16 %v3906
  %v4212 = vunpack.c.l.b16 %v3907
  %v4213 = vunpack.c.h.b16 %v3907
  %v4214 = vunpack.c.l.b16 %v3908
  %v4215 = vunpack.c.h.b16 %v3908
  %v4216 = vunpack.c.l.b16 %v3909
  %v4217 = vunpack.c.h.b16 %v3909
  %v4218 = vunpack.c.l.b16 %v3910
  %v4219 = vunpack.c.h.b16 %v3910
  %v4220 = vunpack.c.l.b16 %v3911
  %v4221 = vunpack.c.h.b16 %v3911
  %v4222 = vunpack.c.l.b16 %v3912
  %v4223 = vunpack.c.h.b16 %v3912
  %v4224 = vunpack.c.l.b16 %v3913
  %v4225 = vunpack.c.h.b16 %v3913
  %v4226 = vunpack.c.l.b16 %v3914
  %v4227 = vunpack.c.h.b16 %v3914
  %v4228 = vunpack.c.l.b16 %v3915
  %v4229 = vunpack.c.h.b16 %v3915
  %v4230 = vunpack.c.l.b16 %v3916
  %v4231 = vunpack.c.h.b16 %v3916
  %v4232 = vunpack.c.l.b16 %v3917
  %v4233 = vunpack.c.h.b16 %v3917
  %v4234 = vunpack.c.l.b16 %v3918
  %v4235 = vunpack.c.h.b16 %v3918
  %v4236 = vunpack.c.l.b16 %v3919
  %v4237 = vunpack.c.h.b16 %v3919
  %v4238 = vunpack.c.l.b16 %v3920
  %v4239 = vunpack.c.h.b16 %v3920
  %v4240 = vunpack.c.l.b16 %v3921
  %v4241 = vunpack.c.h.b16 %v3921
  %v4242 = vunpack.c.l.b16 %v3922
  %v4243 = vunpack.c.h.b16 %v3922
  %v4244 = vunpack.c.l.b16 %v3923
  %v4245 = vunpack.c.h.b16 %v3923
  %v4246 = vunpack.c.l.b16 %v3924
  %v4247 = vunpack.c.h.b16 %v3924
  %v4248 = vunpack.c.l.b16 %v3925
  %v4249 = vunpack.c.h.b16 %v3925
  %v4250 = vunpack.c.l.b16 %v3926
  %v4251 = vunpack.c.h.b16 %v3926
  %v4252 = vunpack.c.l.b16 %v3927
  %v4253 = vunpack.c.h.b16 %v3927
  %v4254 = vunpack.c.l.b16 %v3928
  %v4255 = vunpack.c.h.b16 %v3928
  %v4256 = vunpack.c.l.b16 %v3929
  %v4257 = vunpack.c.h.b16 %v3929
  %v4258 = vunpack.c.l.b16 %v3930
  %v4259 = vunpack.c.h.b16 %v3930
  %v4260 = vunpack.c.l.b16 %v3931
  %v4261 = vunpack.c.h.b16 %v3931
  %v4262 = vunpack.c.l.b16 %v3932
  %v4263 = vunpack.c.h.b16 %v3932
  %v4264 = vunpack.c.l.b16 %v3933
  %v4265 = vunpack.c.h.b16 %v3933
  %v4266 = vunpack.c.l.b16 %v3934
  %v4267 = vunpack.c.h.b16 %v3934
  %v4268 = vunpack.c.l.b16 %v3935
  %v4269 = vunpack.c.h.b16 %v3935
  %v4270 = vunpack.c.l.b16 %v3936
  %v4271 = vunpack.c.h.b16 %v3936
  %v4272 = vunpack.c.l.b16 %v3937
  %v4273 = vunpack.c.h.b16 %v3937
  %v4274 = vunpack.c.l.b16 %v3938
  %v4275 = vunpack.c.h.b16 %v3938
  %v4276 = vunpack.c.l.b16 %v3939
  %v4277 = vunpack.c.h.b16 %v3939
  %v4278 = vunpack.c.l.b16 %v3940
  %v4279 = vunpack.c.h.b16 %v3940
  %v4280 = vunpack.c.l.b16 %v3941
  %v4281 = vunpack.c.h.b16 %v3941
  %v4282 = vunpack.c.l.b16 %v3942
  %v4283 = vunpack.c.h.b16 %v3942
  %v4284 = vunpack.c.l.b16 %v3943
  %v4285 = vunpack.c.h.b16 %v3943
  %v4286 = vunpack.c.l.b16 %v3944
  %v4287 = vunpack.c.h.b16 %v3944
  %v4288 = vunpack.c.l.b16 %v3945
  %v4289 = vunpack.c.h.b16 %v3945
  %v4290 = vunpack.c.l.b16 %v3946
  %v4291 = vunpack.c.h.b16 %v3946
  %v4292 = vunpack.c.l.b16 %v3947
  %v4293 = vunpack.c.h.b16 %v3947
  %v4294 = vunpack.c.l.b16 %v3948
  %v4295 = vunpack.c.h.b16 %v3948
  %v4296 = vunpack.c.l.b16 %v3949
  %v4297 = vunpack.c.h.b16 %v3949
  %v4298 = vunpack.c.l.b16 %v3950
  %v4299 = vunpack.c.h.b16 %v3950
  %v4300 = vunpack.c.l.b16 %v3951
  %v4301 = vunpack.c.h.b16 %v3951
  %v4302 = vunpack.c.l.b16 %v3952
  %v4303 = vunpack.c.h.b16 %v3952
  %v4304 = vunpack.c.l.b16 %v3953
  %v4305 = vunpack.c.h.b16 %v3953
  %v4306 = vunpack.c.l.b16 %v3954
  %v4307 = vunpack.c.h.b16 %v3954
  %v4308 = vunpack.c.l.b16 %v3955
  %v4309 = vunpack.c.h.b16 %v3955
  %v4310 = vunpack.c.l.b16 %v3956
  %v4311 = vunpack.c.h.b16 %v3956
  %v4312 = vunpack.c.l.b16 %v3957
  %v4313 = vunpack.c.h.b16 %v3957
  %v4314 = vunpack.c.l.b16 %v3958
  %v4315 = vunpack.c.h.b16 %v3958
  %v4316 = vunpack.c.l.b16 %v3959
  %v4317 = vunpack.c.h.b16 %v3959
  %v4318 = vunpack.c.l.b16 %v3960
  %v4319 = vunpack.c.h.b16 %v3960
  %v4320 = vunpack.c.l.b16 %v3961
  %v4321 = vunpack.c.h.b16 %v3961
  %v4322 = vunpack.c.l.b16 %v3962
  %v4323 = vunpack.c.h.b16 %v3962
  %v4324 = vunpack.c.l.b16 %v3963
  %v4325 = vunpack.c.h.b16 %v3963
  %v4326 = vunpack.c.l.b16 %v3964
  %v4327 = vunpack.c.h.b16 %v3964
  %v4328 = vunpack.c.l.b16 %v3965
  %v4329 = vunpack.c.h.b16 %v3965
  %v4330 = vunpack.c.l.b16 %v3966
  %v4331 = vunpack.c.h.b16 %v3966
  %v4332 = vunpack.c.l.b16 %v3967
  %v4333 = vunpack.c.h.b16 %v3967
  %v4334 = vunpack.c.l.b16 %v3968
  %v4335 = vunpack.c.h.b16 %v3968
  %v4336 = vunpack.c.l.b16 %v3969
  %v4337 = vunpack.c.h.b16 %v3969
  %v4338 = vunpack.c.l.b16 %v3970
  %v4339 = vunpack.c.h.b16 %v3970
  %v4340 = vunpack.c.l.b16 %v3971
  %v4341 = vunpack.c.h.b16 %v3971
  %v4342 = vunpack.c.l.b16 %v3972
  %v4343 = vunpack.c.h.b16 %v3972
  %v4344 = vunpack.c.l.b16 %v3973
  %v4345 = vunpack.c.h.b16 %v3973
  %v4346 = vunpack.c.l.b16 %v3974
  %v4347 = vunpack.c.h.b16 %v3974
  %v4348 = vunpack.c.l.b16 %v3975
  %v4349 = vunpack.c.h.b16 %v3975
  %v4350 = vunpack.c.l.b16 %v3976
  %v4351 = vunpack.c.h.b16 %v3976
  %v4352 = vunpack.c.l.b16 %v3977
  %v4353 = vunpack.c.h.b16 %v3977
  %v4354 = vunpack.c.l.b16 %v3978
  %v4355 = vunpack.c.h.b16 %v3978
  %v4356 = vunpack.c.l.b16 %v3979
  %v4357 = vunpack.c.h.b16 %v3979
  %v4358 = vunpack.c.l.b16 %v3980
  %v4359 = vunpack.c.h.b16 %v3980
  %v4360 = vunpack.c.l.b16 %v3981
  %v4361 = vunpack.c.h.b16 %v3981
  %v4362 = vunpack.c.l.b16 %v3982
  %v4363 = vunpack.c.h.b16 %v3982
  %v4364 = vunpack.c.l.b16 %v3983
  %v4365 = vunpack.c.h.b16 %v3983
  %v4366 = vunpack.c.l.b16 %v3984
  %v4367 = vunpack.c.h.b16 %v3984
  %v4368 = vunpack.c.l.b16 %v3985
  %v4369 = vunpack.c.h.b16 %v3985
  %v4370 = vpack.c.b16 %v4116, %v4114
  %v4371 = vpack.c.b16 %v4117, %v4115
  %v4372 = vpack.c.b16 %v4120, %v4118
  %v4373 = vpack.c.b16 %v4121, %v4119
  %v4374 = vpack.c.b16 %v4124, %v4122
  %v4375 = vpack.c.b16 %v4125, %v4123
  %v4376 = vpack.c.b16 %v4128, %v4126
  %v4377 = vpack.c.b16 %v4129, %v4127
  %v4378 = vpack.c.b16 %v4132, %v4130
  %v4379 = vpack.c.b16 %v4133, %v4131
  %v4380 = vpack.c.b16 %v4136, %v4134
  %v4381 = vpack.c.b16 %v4137, %v4135
  %v4382 = vpack.c.b16 %v4140, %v4138
  %v4383 = vpack.c.b16 %v4141, %v4139
  %v4384 = vpack.c.b16 %v4144, %v4142
  %v4385 = vpack.c.b16 %v4145, %v4143
  %v4386 = vpack.c.b16 %v4148, %v4146
  %v4387 = vpack.c.b16 %v4149, %v4147
  %v4388 = vpack.c.b16 %v4152, %v4150
  %v4389 = vpack.c.b16 %v4153, %v4151
  %v4390 = vpack.c.b16 %v4156, %v4154
  %v4391 = vpack.c.b16 %v4157, %v4155
  %v4392 = vpack.c.b16 %v4160, %v4158
  %v4393 = vpack.c.b16 %v4161, %v4159
  %v4394 = vpack.c.b16 %v4164, %v4162
  %v4395 = vpack.c.b16 %v4165, %v4163
  %v4396 = vpack.c.b16 %v4168, %v4166
  %v4397 = vpack.c.b16 %v4169, %v4167
  %v4398 = vpack.c.b16 %v4172, %v4170
  %v4399 = vpack.c.b16 %v4173, %v4171
  %v4400 = vpack.c.b16 %v4176, %v4174
  %v4401 = vpack.c.b16 %v4177, %v4175
  %v4402 = vpack.c.b16 %v4180, %v4178
  %v4403 = vpack.c.b16 %v4181, %v4179
  %v4404 = vpack.c.b16 %v4184, %v4182
  %v4405 = vpack.c.b16 %v4185, %v4183
  %v4406 = vpack.c.b16 %v4188, %v4186
  %v4407 = vpack.c.b16 %v4189, %v4187
  %v4408 = vpack.c.b16 %v4192, %v4190
  %v4409 = vpack.c.b16 %v4193, %v4191
  %v4410 = vpack.c.b16 %v4196, %v4194
  %v4411 = vpack.c.b16 %v4197, %v4195
  %v4412 = vpack.c.b16 %v4200, %v4198
  %v4413 = vpack.c.b16 %v4201, %v4199
  %v4414 = vpack.c.b16 %v4204, %v4202
  %v4415 = vpack.c.b16 %v4205, %v4203
  %v4416 = vpack.c.b16 %v4208, %v4206
  %v4417 = vpack.c.b16 %v4209, %v4207
  %v4418 = vpack.c.b16 %v4212, %v4210
  %v4419 = vpack.c.b16 %v4213, %v4211
  %v4420 = vpack.c.b16 %v4216, %v4214
  %v4421 = vpack.c.b16 %v4217, %v4215
  %v4422 = vpack.c.b16 %v4220, %v4218
  %v4423 = vpack.c.b16 %v4221, %v4219
  %v4424 = vpack.c.b16 %v4224, %v4222
  %v4425 = vpack.c.b16 %v4225, %v4223
  %v4426 = vpack.c.b16 %v4228, %v4226
  %v4427 = vpack.c.b16 %v4229, %v4227
  %v4428 = vpack.c.b16 %v4232, %v4230
  %v4429 = vpack.c.b16 %v4233, %v4231
  %v4430 = vpack.c.b16 %v4236, %v4234
  %v4431 = vpack.c.b16 %v4237, %v4235
  %v4432 = vpack.c.b16 %v4240, %v4238
  %v4433 = vpack.c.b16 %v4241, %v4239
  %v4434 = vpack.c.b16 %v4244, %v4242
  %v4435 = vpack.c.b16 %v4245, %v4243
  %v4436 = vpack.c.b16 %v4248, %v4246
  %v4437 = vpack.c.b16 %v4249, %v4247
  %v4438 = vpack.c.b16 %v4252, %v4250
  %v4439 = vpack.c.b16 %v4253, %v4251
  %v4440 = vpack.c.b16 %v4256, %v4254
  %v4441 = vpack.c.b16 %v4257, %v4255
  %v4442 = vpack.c.b16 %v4260, %v4258
  %v4443 = vpack.c.b16 %v4261, %v4259
  %v4444 = vpack.c.b16 %v4264, %v4262
  %v4445 = vpack.c.b16 %v4265, %v4263
  %v4446 = vpack.c.b16 %v4268, %v4266
  %v4447 = vpack.c.b16 %v4269, %v4267
  %v4448 = vpack.c.b16 %v4272, %v4270
  %v4449 = vpack.c.b16 %v4273, %v4271
  %v4450 = vpack.c.b16 %v4276, %v4274
  %v4451 = vpack.c.b16 %v4277, %v4275
  %v4452 = vpack.c.b16 %v4280, %v4278
  %v4453 = vpack.c.b16 %v4281, %v4279
  %v4454 = vpack.c.b16 %v4284, %v4282
  %v4455 = vpack.c.b16 %v4285, %v4283
  %v4456 = vpack.c.b16 %v4288, %v4286
  %v4457 = vpack.c.b16 %v4289, %v4287
  %v4458 = vpack.c.b16 %v4292, %v4290
  %v4459 = vpack.c.b16 %v4293, %v4291
  %v4460 = vpack.c.b16 %v4296, %v4294
  %v4461 = vpack.c.b16 %v4297, %v4295
  %v4462 = vpack.c.b16 %v4300, %v4298
  %v4463 = vpack.c.b16 %v4301, %v4299
  %v4464 = vpack.c.b16 %v4304, %v4302
  %v4465 = vpack.c.b16 %v4305, %v4303
  %v4466 = vpack.c.b16 %v4308, %v4306
  %v4467 = vpack.c.b16 %v4309, %v4307
  %v4468 = vpack.c.b16 %v4312, %v4310
  %v4469 = vpack.c.b16 %v4313, %v4311
  %v4470 = vpack.c.b16 %v4316, %v4314
  %v4471 = vpack.c.b16 %v4317, %v4315
  %v4472 = vpack.c.b16 %v4320, %v4318
  %v4473 = vpack.c.b16 %v4321, %v4319
  %v4474 = vpack.c.b16 %v4324, %v4322
  %v4475 = vpack.c.b16 %v4325, %v4323
  %v4476 = vpack.c.b16 %v4328, %v4326
  %v4477 = vpack.c.b16 %v4329, %v4327
  %v4478 = vpack.c.b16 %v4332, %v4330
  %v4479 = vpack.c.b16 %v4333, %v4331
  %v4480 = vpack.c.b16 %v4336, %v4334
  %v4481 = vpack.c.b16 %v4337, %v4335
  %v4482 = vpack.c.b16 %v4340, %v4338
  %v4483 = vpack.c.b16 %v4341, %v4339
  %v4484 = vpack.c.b16 %v4344, %v4342
  %v4485 = vpack.c.b16 %v4345, %v4343
  %v4486 = vpack.c.b16 %v4348, %v4346
  %v4487 = vpack.c.b16 %v4349, %v4347
  %v4488 = vpack.c.b16 %v4352, %v4350
  %v4489 = vpack.c.b16 %v4353, %v4351
  %v4490 = vpack.c.b16 %v4356, %v4354
  %v4491 = vpack.c.b16 %v4357, %v4355
  %v4492 = vpack.c.b16 %v4360, %v4358
  %v4493 = vpack.c.b16 %v4361, %v4359
  %v4494 = vpack.c.b16 %v4364, %v4362
  %v4495 = vpack.c.b16 %v4365, %v4363
  %v4496 = vpack.c.b16 %v4368, %v4366
  %v4497 = vpack.c.b16 %v4369, %v4367
  %4626 = vmatprep.subr.bf16.mxu0 %v4371
  %4627 = vmatpush1.bf16.msra.mxu0 %v4370
  %4628 = vmatprep.subr.bf16.mxu0 %v4373
  %4629 = vmatpush1.bf16.msra.mxu0 %v4372
  %4630 = vmatprep.subr.bf16.mxu0 %v4375
  %4631 = vmatpush1.bf16.msra.mxu0 %v4374
  %4632 = vmatprep.subr.bf16.mxu0 %v4377
  %4633 = vmatpush1.bf16.msra.mxu0 %v4376
  %4634 = vmatprep.subr.bf16.mxu0 %v4379
  %4635 = vmatpush1.bf16.msra.mxu0 %v4378
  %4636 = vmatprep.subr.bf16.mxu0 %v4381
  %4637 = vmatpush1.bf16.msra.mxu0 %v4380
  %4638 = vmatprep.subr.bf16.mxu0 %v4383
  %4639 = vmatpush1.bf16.msra.mxu0 %v4382
  %4640 = vmatprep.subr.bf16.mxu0 %v4385
  %4641 = vmatpush1.bf16.msra.mxu0 %v4384
  %4642 = vmatprep.subr.bf16.mxu0 %v4387
  %4643 = vmatpush1.bf16.msra.mxu0 %v4386
  %4644 = vmatprep.subr.bf16.mxu0 %v4389
  %4645 = vmatpush1.bf16.msra.mxu0 %v4388
  %4646 = vmatprep.subr.bf16.mxu0 %v4391
  %4647 = vmatpush1.bf16.msra.mxu0 %v4390
  %4648 = vmatprep.subr.bf16.mxu0 %v4393
  %4649 = vmatpush1.bf16.msra.mxu0 %v4392
  %4650 = vmatprep.subr.bf16.mxu0 %v4395
  %4651 = vmatpush1.bf16.msra.mxu0 %v4394
  %4652 = vmatprep.subr.bf16.mxu0 %v4397
  %4653 = vmatpush1.bf16.msra.mxu0 %v4396
  %4654 = vmatprep.subr.bf16.mxu0 %v4399
  %4655 = vmatpush1.bf16.msra.mxu0 %v4398
  %4656 = vmatprep.subr.bf16.mxu0 %v4401
  %4657 = vmatpush1.bf16.msra.mxu0 %v4400
  %4658 = vmatprep.mubr.bf16.mxu0 %v3803
  %4659 = vmatmul.mubr.bf16.gmra.mrb[0].mxu0 %v3802
  %v4660 = vpop.f32.mrb[0].mxu0
  %v4661 = vadd.f32 0.0, %v4660
  %v4662 = vpop.f32.mrb[0].mxu0
  %v4663 = vadd.f32 0.0, %v4662
  %v4664 = vpop.f32.mrb[0].mxu0
  %v4665 = vadd.f32 0.0, %v4664
  %v4666 = vpop.f32.mrb[0].mxu0
  %v4667 = vadd.f32 0.0, %v4666
  %4668 = vmatprep.mubr.bf16.mxu0 %v3811
  %4669 = vmatmul.mubr.bf16.gmra.mrb[0].mxu0 %v3810
  %v4670 = vpop.f32.mrb[0].mxu0
  %v4671 = vadd.f32 0.0, %v4670
  %v4672 = vpop.f32.mrb[0].mxu0
  %v4673 = vadd.f32 0.0, %v4672
  %v4674 = vpop.f32.mrb[0].mxu0
  %v4675 = vadd.f32 0.0, %v4674
  %v4676 = vpop.f32.mrb[0].mxu0
  %v4677 = vadd.f32 0.0, %v4676
  %4678 = vmatprep.mubr.bf16.mxu0 %v3819
  %4679 = vmatmul.mubr.bf16.gmra.mrb[0].mxu0 %v3818
  %v4680 = vpop.f32.mrb[0].mxu0
  %v4681 = vadd.f32 0.0, %v4680
  %v4682 = vpop.f32.mrb[0].mxu0
  %v4683 = vadd.f32 0.0, %v4682
  %v4684 = vpop.f32.mrb[0].mxu0
  %v4685 = vadd.f32 0.0, %v4684
  %v4686 = vpop.f32.mrb[0].mxu0
  %v4687 = vadd.f32 0.0, %v4686
  %4688 = vmatprep.mubr.bf16.mxu0 %v3827
  %4689 = vmatmul.mubr.bf16.gmra.mrb[0].mxu0 %v3826
  %v4690 = vpop.f32.mrb[0].mxu0
  %v4691 = vadd.f32 0.0, %v4690
  %v4692 = vpop.f32.mrb[0].mxu0
  %v4693 = vadd.f32 0.0, %v4692
  %v4694 = vpop.f32.mrb[0].mxu0
  %v4695 = vadd.f32 0.0, %v4694
  %v4696 = vpop.f32.mrb[0].mxu0
  %v4697 = vadd.f32 0.0, %v4696
  %4698 = vmatprep.mubr.bf16.mxu0 %v3835
  %4699 = vmatmul.mubr.bf16.gmra.mrb[0].mxu0 %v3834
  %v4700 = vpop.f32.mrb[0].mxu0
  %v4701 = vadd.f32 0.0, %v4700
  %v4702 = vpop.f32.mrb[0].mxu0
  %v4703 = vadd.f32 0.0, %v4702
  %v4704 = vpop.f32.mrb[0].mxu0
  %v4705 = vadd.f32 0.0, %v4704
  %v4706 = vpop.f32.mrb[0].mxu0
  %v4707 = vadd.f32 0.0, %v4706
  %4708 = vmatprep.mubr.bf16.mxu0 %v3843
  %4709 = vmatmul.mubr.bf16.gmra.mrb[0].mxu0 %v3842
  %v4710 = vpop.f32.mrb[0].mxu0
  %v4711 = vadd.f32 0.0, %v4710
  %v4712 = vpop.f32.mrb[0].mxu0
  %v4713 = vadd.f32 0.0, %v4712
  %v4714 = vpop.f32.mrb[0].mxu0
  %v4715 = vadd.f32 0.0, %v4714
  %v4716 = vpop.f32.mrb[0].mxu0
  %v4717 = vadd.f32 0.0, %v4716
  %4718 = vmatprep.mubr.bf16.mxu0 %v3851
  %4719 = vmatmul.mubr.bf16.gmra.mrb[0].mxu0 %v3850
  %v4720 = vpop.f32.mrb[0].mxu0
  %v4721 = vadd.f32 0.0, %v4720
  %v4722 = vpop.f32.mrb[0].mxu0
  %v4723 = vadd.f32 0.0, %v4722
  %v4724 = vpop.f32.mrb[0].mxu0
  %v4725 = vadd.f32 0.0, %v4724
  %v4726 = vpop.f32.mrb[0].mxu0
  %v4727 = vadd.f32 0.0, %v4726
  %4728 = vdwg.mxu0
  %4729 = vmatprep.subr.bf16.mxu0 %v4403
  %4730 = vmatpush1.bf16.msra.mxu0 %v4402
  %4731 = vmatprep.subr.bf16.mxu0 %v4405
  %4732 = vmatpush1.bf16.msra.mxu0 %v4404
  %4733 = vmatprep.subr.bf16.mxu0 %v4407
  %4734 = vmatpush1.bf16.msra.mxu0 %v4406
  %4735 = vmatprep.subr.bf16.mxu0 %v4409
  %4736 = vmatpush1.bf16.msra.mxu0 %v4408
  %4737 = vmatprep.subr.bf16.mxu0 %v4411
  %4738 = vmatpush1.bf16.msra.mxu0 %v4410
  %4739 = vmatprep.subr.bf16.mxu0 %v4413
  %4740 = vmatpush1.bf16.msra.mxu0 %v4412
  %4741 = vmatprep.subr.bf16.mxu0 %v4415
  %4742 = vmatpush1.bf16.msra.mxu0 %v4414
  %4743 = vmatprep.subr.bf16.mxu0 %v4417
  %4744 = vmatpush1.bf16.msra.mxu0 %v4416
  %4745 = vmatprep.subr.bf16.mxu0 %v4419
  %4746 = vmatpush1.bf16.msra.mxu0 %v4418
  %4747 = vmatprep.subr.bf16.mxu0 %v4421
  %4748 = vmatpush1.bf16.msra.mxu0 %v4420
  %4749 = vmatprep.subr.bf16.mxu0 %v4423
  %4750 = vmatpush1.bf16.msra.mxu0 %v4422
  %4751 = vmatprep.subr.bf16.mxu0 %v4425
  %4752 = vmatpush1.bf16.msra.mxu0 %v4424
  %4753 = vmatprep.subr.bf16.mxu0 %v4427
  %4754 = vmatpush1.bf16.msra.mxu0 %v4426
  %4755 = vmatprep.subr.bf16.mxu0 %v4429
  %4756 = vmatpush1.bf16.msra.mxu0 %v4428
  %4757 = vmatprep.subr.bf16.mxu0 %v4431
  %4758 = vmatpush1.bf16.msra.mxu0 %v4430
  %4759 = vmatprep.subr.bf16.mxu0 %v4433
  %4760 = vmatpush1.bf16.msra.mxu0 %v4432
  %4761 = vmatprep.mubr.bf16.mxu0 %v3805
  %4762 = vmatmul.mubr.bf16.gmra.mrb[0].mxu0 %v3804
  %v4763 = vpop.f32.mrb[0].mxu0
  %v4764 = vadd.f32 %v4661, %v4763
  %v4765 = vpop.f32.mrb[0].mxu0
  %v4766 = vadd.f32 %v4663, %v4765
  %v4767 = vpop.f32.mrb[0].mxu0
  %v4768 = vadd.f32 %v4665, %v4767
  %v4769 = vpop.f32.mrb[0].mxu0
  %v4770 = vadd.f32 %v4667, %v4769
  %4771 = vmatprep.mubr.bf16.mxu0 %v3813
  %4772 = vmatmul.mubr.bf16.gmra.mrb[0].mxu0 %v3812
  %v4773 = vpop.f32.mrb[0].mxu0
  %v4774 = vadd.f32 %v4671, %v4773
  %v4775 = vpop.f32.mrb[0].mxu0
  %v4776 = vadd.f32 %v4673, %v4775
  %v4777 = vpop.f32.mrb[0].mxu0
  %v4778 = vadd.f32 %v4675, %v4777
  %v4779 = vpop.f32.mrb[0].mxu0
  %v4780 = vadd.f32 %v4677, %v4779
  %4781 = vmatprep.mubr.bf16.mxu0 %v3821
  %4782 = vmatmul.mubr.bf16.gmra.mrb[0].mxu0 %v3820
  %v4783 = vpop.f32.mrb[0].mxu0
  %v4784 = vadd.f32 %v4681, %v4783
  %v4785 = vpop.f32.mrb[0].mxu0
  %v4786 = vadd.f32 %v4683, %v4785
  %v4787 = vpop.f32.mrb[0].mxu0
  %v4788 = vadd.f32 %v4685, %v4787
  %v4789 = vpop.f32.mrb[0].mxu0
  %v4790 = vadd.f32 %v4687, %v4789
  %4791 = vmatprep.mubr.bf16.mxu0 %v3829
  %4792 = vmatmul.mubr.bf16.gmra.mrb[0].mxu0 %v3828
  %v4793 = vpop.f32.mrb[0].mxu0
  %v4794 = vadd.f32 %v4691, %v4793
  %v4795 = vpop.f32.mrb[0].mxu0
  %v4796 = vadd.f32 %v4693, %v4795
  %v4797 = vpop.f32.mrb[0].mxu0
  %v4798 = vadd.f32 %v4695, %v4797
  %v4799 = vpop.f32.mrb[0].mxu0
  %v4800 = vadd.f32 %v4697, %v4799
  %4801 = vmatprep.mubr.bf16.mxu0 %v3837
  %4802 = vmatmul.mubr.bf16.gmra.mrb[0].mxu0 %v3836
  %v4803 = vpop.f32.mrb[0].mxu0
  %v4804 = vadd.f32 %v4701, %v4803
  %v4805 = vpop.f32.mrb[0].mxu0
  %v4806 = vadd.f32 %v4703, %v4805
  %v4807 = vpop.f32.mrb[0].mxu0
  %v4808 = vadd.f32 %v4705, %v4807
  %v4809 = vpop.f32.mrb[0].mxu0
  %v4810 = vadd.f32 %v4707, %v4809
  %4811 = vmatprep.mubr.bf16.mxu0 %v3845
  %4812 = vmatmul.mubr.bf16.gmra.mrb[0].mxu0 %v3844
  %v4813 = vpop.f32.mrb[0].mxu0
  %v4814 = vadd.f32 %v4711, %v4813
  %v4815 = vpop.f32.mrb[0].mxu0
  %v4816 = vadd.f32 %v4713, %v4815
  %v4817 = vpop.f32.mrb[0].mxu0
  %v4818 = vadd.f32 %v4715, %v4817
  %v4819 = vpop.f32.mrb[0].mxu0
  %v4820 = vadd.f32 %v4717, %v4819
  %4821 = vmatprep.mubr.bf16.mxu0 %v3853
  %4822 = vmatmul.mubr.bf16.gmra.mrb[0].mxu0 %v3852
  %v4823 = vpop.f32.mrb[0].mxu0
  %v4824 = vadd.f32 %v4721, %v4823
  %v4825 = vpop.f32.mrb[0].mxu0
  %v4826 = vadd.f32 %v4723, %v4825
  %v4827 = vpop.f32.mrb[0].mxu0
  %v4828 = vadd.f32 %v4725, %v4827
  %v4829 = vpop.f32.mrb[0].mxu0
  %v4830 = vadd.f32 %v4727, %v4829
  %4831 = vdwg.mxu0
  %4832 = vmatprep.subr.bf16.mxu0 %v4435
  %4833 = vmatpush1.bf16.msra.mxu0 %v4434
  %4834 = vmatprep.subr.bf16.mxu0 %v4437
  %4835 = vmatpush1.bf16.msra.mxu0 %v4436
  %4836 = vmatprep.subr.bf16.mxu0 %v4439
  %4837 = vmatpush1.bf16.msra.mxu0 %v4438
  %4838 = vmatprep.subr.bf16.mxu0 %v4441
  %4839 = vmatpush1.bf16.msra.mxu0 %v4440
  %4840 = vmatprep.subr.bf16.mxu0 %v4443
  %4841 = vmatpush1.bf16.msra.mxu0 %v4442
  %4842 = vmatprep.subr.bf16.mxu0 %v4445
  %4843 = vmatpush1.bf16.msra.mxu0 %v4444
  %4844 = vmatprep.subr.bf16.mxu0 %v4447
  %4845 = vmatpush1.bf16.msra.mxu0 %v4446
  %4846 = vmatprep.subr.bf16.mxu0 %v4449
  %4847 = vmatpush1.bf16.msra.mxu0 %v4448
  %4848 = vmatprep.subr.bf16.mxu0 %v4451
  %4849 = vmatpush1.bf16.msra.mxu0 %v4450
  %4850 = vmatprep.subr.bf16.mxu0 %v4453
  %4851 = vmatpush1.bf16.msra.mxu0 %v4452
  %4852 = vmatprep.subr.bf16.mxu0 %v4455
  %4853 = vmatpush1.bf16.msra.mxu0 %v4454
  %4854 = vmatprep.subr.bf16.mxu0 %v4457
  %4855 = vmatpush1.bf16.msra.mxu0 %v4456
  %4856 = vmatprep.subr.bf16.mxu0 %v4459
  %4857 = vmatpush1.bf16.msra.mxu0 %v4458
  %4858 = vmatprep.subr.bf16.mxu0 %v4461
  %4859 = vmatpush1.bf16.msra.mxu0 %v4460
  %4860 = vmatprep.subr.bf16.mxu0 %v4463
  %4861 = vmatpush1.bf16.msra.mxu0 %v4462
  %4862 = vmatprep.subr.bf16.mxu0 %v4465
  %4863 = vmatpush1.bf16.msra.mxu0 %v4464
  %4864 = vmatprep.mubr.bf16.mxu0 %v3807
  %4865 = vmatmul.mubr.bf16.gmra.mrb[0].mxu0 %v3806
  %v4866 = vpop.f32.mrb[0].mxu0
  %v4867 = vadd.f32 %v4764, %v4866
  %v4868 = vpop.f32.mrb[0].mxu0
  %v4869 = vadd.f32 %v4766, %v4868
  %v4870 = vpop.f32.mrb[0].mxu0
  %v4871 = vadd.f32 %v4768, %v4870
  %v4872 = vpop.f32.mrb[0].mxu0
  %v4873 = vadd.f32 %v4770, %v4872
  %4874 = vmatprep.mubr.bf16.mxu0 %v3815
  %4875 = vmatmul.mubr.bf16.gmra.mrb[0].mxu0 %v3814
  %v4876 = vpop.f32.mrb[0].mxu0
  %v4877 = vadd.f32 %v4774, %v4876
  %v4878 = vpop.f32.mrb[0].mxu0
  %v4879 = vadd.f32 %v4776, %v4878
  %v4880 = vpop.f32.mrb[0].mxu0
  %v4881 = vadd.f32 %v4778, %v4880
  %v4882 = vpop.f32.mrb[0].mxu0
  %v4883 = vadd.f32 %v4780, %v4882
  %4884 = vmatprep.mubr.bf16.mxu0 %v3823
  %4885 = vmatmul.mubr.bf16.gmra.mrb[0].mxu0 %v3822
  %v4886 = vpop.f32.mrb[0].mxu0
  %v4887 = vadd.f32 %v4784, %v4886
  %v4888 = vpop.f32.mrb[0].mxu0
  %v4889 = vadd.f32 %v4786, %v4888
  %v4890 = vpop.f32.mrb[0].mxu0
  %v4891 = vadd.f32 %v4788, %v4890
  %v4892 = vpop.f32.mrb[0].mxu0
  %v4893 = vadd.f32 %v4790, %v4892
  %4894 = vmatprep.mubr.bf16.mxu0 %v3831
  %4895 = vmatmul.mubr.bf16.gmra.mrb[0].mxu0 %v3830
  %v4896 = vpop.f32.mrb[0].mxu0
  %v4897 = vadd.f32 %v4794, %v4896
  %v4898 = vpop.f32.mrb[0].mxu0
  %v4899 = vadd.f32 %v4796, %v4898
  %v4900 = vpop.f32.mrb[0].mxu0
  %v4901 = vadd.f32 %v4798, %v4900
  %v4902 = vpop.f32.mrb[0].mxu0
  %v4903 = vadd.f32 %v4800, %v4902
  %4904 = vmatprep.mubr.bf16.mxu0 %v3839
  %4905 = vmatmul.mubr.bf16.gmra.mrb[0].mxu0 %v3838
  %v4906 = vpop.f32.mrb[0].mxu0
  %v4907 = vadd.f32 %v4804, %v4906
  %v4908 = vpop.f32.mrb[0].mxu0
  %v4909 = vadd.f32 %v4806, %v4908
  %v4910 = vpop.f32.mrb[0].mxu0
  %v4911 = vadd.f32 %v4808, %v4910
  %v4912 = vpop.f32.mrb[0].mxu0
  %v4913 = vadd.f32 %v4810, %v4912
  %4914 = vmatprep.mubr.bf16.mxu0 %v3847
  %4915 = vmatmul.mubr.bf16.gmra.mrb[0].mxu0 %v3846
  %v4916 = vpop.f32.mrb[0].mxu0
  %v4917 = vadd.f32 %v4814, %v4916
  %v4918 = vpop.f32.mrb[0].mxu0
  %v4919 = vadd.f32 %v4816, %v4918
  %v4920 = vpop.f32.mrb[0].mxu0
  %v4921 = vadd.f32 %v4818, %v4920
  %v4922 = vpop.f32.mrb[0].mxu0
  %v4923 = vadd.f32 %v4820, %v4922
  %4924 = vmatprep.mubr.bf16.mxu0 %v3855
  %4925 = vmatmul.mubr.bf16.gmra.mrb[0].mxu0 %v3854
  %v4926 = vpop.f32.mrb[0].mxu0
  %v4927 = vadd.f32 %v4824, %v4926
  %v4928 = vpop.f32.mrb[0].mxu0
  %v4929 = vadd.f32 %v4826, %v4928
  %v4930 = vpop.f32.mrb[0].mxu0
  %v4931 = vadd.f32 %v4828, %v4930
  %v4932 = vpop.f32.mrb[0].mxu0
  %v4933 = vadd.f32 %v4830, %v4932
  %4934 = vdwg.mxu0
  %4935 = vmatprep.subr.bf16.mxu0 %v4467
  %4936 = vmatpush1.bf16.msra.mxu0 %v4466
  %4937 = vmatprep.subr.bf16.mxu0 %v4469
  %4938 = vmatpush1.bf16.msra.mxu0 %v4468
  %4939 = vmatprep.subr.bf16.mxu0 %v4471
  %4940 = vmatpush1.bf16.msra.mxu0 %v4470
  %4941 = vmatprep.subr.bf16.mxu0 %v4473
  %4942 = vmatpush1.bf16.msra.mxu0 %v4472
  %4943 = vmatprep.subr.bf16.mxu0 %v4475
  %4944 = vmatpush1.bf16.msra.mxu0 %v4474
  %4945 = vmatprep.subr.bf16.mxu0 %v4477
  %4946 = vmatpush1.bf16.msra.mxu0 %v4476
  %4947 = vmatprep.subr.bf16.mxu0 %v4479
  %4948 = vmatpush1.bf16.msra.mxu0 %v4478
  %4949 = vmatprep.subr.bf16.mxu0 %v4481
  %4950 = vmatpush1.bf16.msra.mxu0 %v4480
  %4951 = vmatprep.subr.bf16.mxu0 %v4483
  %4952 = vmatpush1.bf16.msra.mxu0 %v4482
  %4953 = vmatprep.subr.bf16.mxu0 %v4485
  %4954 = vmatpush1.bf16.msra.mxu0 %v4484
  %4955 = vmatprep.subr.bf16.mxu0 %v4487
  %4956 = vmatpush1.bf16.msra.mxu0 %v4486
  %4957 = vmatprep.subr.bf16.mxu0 %v4489
  %4958 = vmatpush1.bf16.msra.mxu0 %v4488
  %4959 = vmatprep.subr.bf16.mxu0 %v4491
  %4960 = vmatpush1.bf16.msra.mxu0 %v4490
  %4961 = vmatprep.subr.bf16.mxu0 %v4493
  %4962 = vmatpush1.bf16.msra.mxu0 %v4492
  %4963 = vmatprep.subr.bf16.mxu0 %v4495
  %4964 = vmatpush1.bf16.msra.mxu0 %v4494
  %4965 = vmatprep.subr.bf16.mxu0 %v4497
  %4966 = vmatpush1.bf16.msra.mxu0 %v4496
  %4967 = vmatprep.mubr.bf16.mxu0 %v3809
  %4968 = vmatmul.mubr.bf16.gmra.mrb[0].mxu0 %v3808
  %v4969 = vpop.f32.mrb[0].mxu0
  %v4970 = vadd.f32 %v4867, %v4969
  %v4971 = vpop.f32.mrb[0].mxu0
  %v4972 = vadd.f32 %v4869, %v4971
  %v4973 = vpop.f32.mrb[0].mxu0
  %v4974 = vadd.f32 %v4871, %v4973
  %v4975 = vpop.f32.mrb[0].mxu0
  %v4976 = vadd.f32 %v4873, %v4975
  %4977 = vmatprep.mubr.bf16.mxu0 %v3817
  %4978 = vmatmul.mubr.bf16.gmra.mrb[0].mxu0 %v3816
  %v4979 = vpop.f32.mrb[0].mxu0
  %v4980 = vadd.f32 %v4877, %v4979
  %v4981 = vpop.f32.mrb[0].mxu0
  %v4982 = vadd.f32 %v4879, %v4981
  %v4983 = vpop.f32.mrb[0].mxu0
  %v4984 = vadd.f32 %v4881, %v4983
  %v4985 = vpop.f32.mrb[0].mxu0
  %v4986 = vadd.f32 %v4883, %v4985
  %4987 = vmatprep.mubr.bf16.mxu0 %v3825
  %4988 = vmatmul.mubr.bf16.gmra.mrb[0].mxu0 %v3824
  %v4989 = vpop.f32.mrb[0].mxu0
  %v4990 = vadd.f32 %v4887, %v4989
  %v4991 = vpop.f32.mrb[0].mxu0
  %v4992 = vadd.f32 %v4889, %v4991
  %v4993 = vpop.f32.mrb[0].mxu0
  %v4994 = vadd.f32 %v4891, %v4993
  %v4995 = vpop.f32.mrb[0].mxu0
  %v4996 = vadd.f32 %v4893, %v4995
  %4997 = vmatprep.mubr.bf16.mxu0 %v3833
  %4998 = vmatmul.mubr.bf16.gmra.mrb[0].mxu0 %v3832
  %v4999 = vpop.f32.mrb[0].mxu0
  %v5000 = vadd.f32 %v4897, %v4999
  %v5001 = vpop.f32.mrb[0].mxu0
  %v5002 = vadd.f32 %v4899, %v5001
  %v5003 = vpop.f32.mrb[0].mxu0
  %v5004 = vadd.f32 %v4901, %v5003
  %v5005 = vpop.f32.mrb[0].mxu0
  %v5006 = vadd.f32 %v4903, %v5005
  %5007 = vmatprep.mubr.bf16.mxu0 %v3841
  %5008 = vmatmul.mubr.bf16.gmra.mrb[0].mxu0 %v3840
  %v5009 = vpop.f32.mrb[0].mxu0
  %v5010 = vadd.f32 %v4907, %v5009
  %v5011 = vpop.f32.mrb[0].mxu0
  %v5012 = vadd.f32 %v4909, %v5011
  %v5013 = vpop.f32.mrb[0].mxu0
  %v5014 = vadd.f32 %v4911, %v5013
  %v5015 = vpop.f32.mrb[0].mxu0
  %v5016 = vadd.f32 %v4913, %v5015
  %5017 = vmatprep.mubr.bf16.mxu0 %v3849
  %5018 = vmatmul.mubr.bf16.gmra.mrb[0].mxu0 %v3848
  %v5019 = vpop.f32.mrb[0].mxu0
  %v5020 = vadd.f32 %v4917, %v5019
  %v5021 = vpop.f32.mrb[0].mxu0
  %v5022 = vadd.f32 %v4919, %v5021
  %v5023 = vpop.f32.mrb[0].mxu0
  %v5024 = vadd.f32 %v4921, %v5023
  %v5025 = vpop.f32.mrb[0].mxu0
  %v5026 = vadd.f32 %v4923, %v5025
  %5027 = vmatprep.mubr.bf16.mxu0 %v3857
  %5028 = vmatmul.mubr.bf16.gmra.mrb[0].mxu0 %v3856
  %v5029 = vpop.f32.mrb[0].mxu0
  %v5030 = vadd.f32 %v4927, %v5029
  %v5031 = vpop.f32.mrb[0].mxu0
  %v5032 = vadd.f32 %v4929, %v5031
  %v5033 = vpop.f32.mrb[0].mxu0
  %v5034 = vadd.f32 %v4931, %v5033
  %v5035 = vpop.f32.mrb[0].mxu0
  %v5036 = vadd.f32 %v4933, %v5035
  %5037 = vdwg.mxu0
  %5038 = vst [vmem:[#allocation4] sm:$0xff] %v4970
  %5039 = vst [vmem:[#allocation4 + $0x8] sm:$0xff] %v4972
  %5040 = vst [vmem:[#allocation4 + $0x10] sm:$0xff] %v4974
  %5041 = vst [vmem:[#allocation4 + $0x18] sm:$0xff] %v4976
  %5042 = vst [vmem:[#allocation4 + $0x20] sm:$0xff] %v4980
  %5043 = vst [vmem:[#allocation4 + $0x28] sm:$0xff] %v4982
  %5044 = vst [vmem:[#allocation4 + $0x30] sm:$0xff] %v4984
  %5045 = vst [vmem:[#allocation4 + $0x38] sm:$0xff] %v4986
  %5046 = vst [vmem:[#allocation4 + $0x40] sm:$0xff] %v4990
  %5047 = vst [vmem:[#allocation4 + $0x48] sm:$0xff] %v4992
  %5048 = vst [vmem:[#allocation4 + $0x50] sm:$0xff] %v4994
  %5049 = vst [vmem:[#allocation4 + $0x58] sm:$0xff] %v4996
  %5050 = vst [vmem:[#allocation4 + $0x60] sm:$0xff] %v5000
  %5051 = vst [vmem:[#allocation4 + $0x68] sm:$0xff] %v5002
  %5052 = vst [vmem:[#allocation4 + $0x70] sm:$0xff] %v5004
  %5053 = vst [vmem:[#allocation4 + $0x78] sm:$0xff] %v5006
  %5054 = vst [vmem:[#allocation4 + $0x80] sm:$0xff] %v5010
  %5055 = vst [vmem:[#allocation4 + $0x88] sm:$0xff] %v5012
  %5056 = vst [vmem:[#allocation4 + $0x90] sm:$0xff] %v5014
  %5057 = vst [vmem:[#allocation4 + $0x98] sm:$0xff] %v5016
  %5058 = vst [vmem:[#allocation4 + $0xa0] sm:$0xff] %v5020
  %5059 = vst [vmem:[#allocation4 + $0xa8] sm:$0xff] %v5022
  %5060 = vst [vmem:[#allocation4 + $0xb0] sm:$0xff] %v5024
  %5061 = vst [vmem:[#allocation4 + $0xb8] sm:$0xff] %v5026
  %5062 = vst [vmem:[#allocation4 + $0xc0] sm:$0xff] %v5030
  %5063 = vst [vmem:[#allocation4 + $0xc8] sm:$0xff] %v5032
  %5064 = vst [vmem:[#allocation4 + $0xd0] sm:$0x7] %v5034
  %5065 = vst [vmem:[#allocation4 + $0xd8] sm:$0x7] %v5036
  %v5066 = vld [vmem:[%s6] sm:$0x1]
  %v5067 = vld [vmem:[#allocation4] sm:$0xff]
  %v5068 = vld [vmem:[#allocation4 + $0x10] sm:$0xff]
  %v5069 = vld [vmem:[#allocation4 + $0x20] sm:$0xff]
  %v5070 = vld [vmem:[#allocation4 + $0x30] sm:$0xff]
  %v5071 = vld [vmem:[#allocation4 + $0x40] sm:$0xff]
  %v5072 = vld [vmem:[#allocation4 + $0x50] sm:$0xff]
  %v5073 = vld [vmem:[#allocation4 + $0x60] sm:$0xff]
  %v5074 = vld [vmem:[#allocation4 + $0x70] sm:$0x7]
  %v5076 = vlaneseq
  %v5077 = vshrl.u32 %v5076, 7
  %v5078 = vsub.s32 0, %v5077
  %v5079 = vrot.slane %v5066, %v5078
  %v5081 = vadd.f32 %v5079, %v5067
  %v5082 = vadd.f32 %v5079, %v5068
  %v5083 = vadd.f32 %v5079, %v5069
  %v5084 = vadd.f32 %v5079, %v5070
  %v5085 = vadd.f32 %v5079, %v5071
  %v5086 = vadd.f32 %v5079, %v5072
  %v5087 = vadd.f32 %v5079, %v5073
  %v5088 = vadd.f32 %v5079, %v5074
  %v5089 = vld [vmem:[#allocation4 + $0x70] sm:$0xff]
  %v5090 = vld [vmem:[#allocation4 + $0x80] sm:$0xff]
  %v5091 = vld [vmem:[#allocation4 + $0x90] sm:$0x7]
  %5100 = vrot.lane.b32.xlu0 %v5069, 64
  %v5101 = vpop.permute.xlu0 %5100
  %5102 = vrot.lane.b32.xlu0 %v5070, 64
  %v5103 = vpop.permute.xlu0 %5102
  %5104 = vrot.lane.b32.xlu0 %v5071, 64
  %v5105 = vpop.permute.xlu0 %5104
  %5106 = vrot.lane.b32.xlu0 %v5072, 64
  %v5107 = vpop.permute.xlu0 %5106
  %5108 = vrot.lane.b32.xlu0 %v5073, 64
  %v5109 = vpop.permute.xlu0 %5108
  %5110 = vrot.lane.b32.xlu0 %v5089, 64
  %v5111 = vpop.permute.xlu0 %5110
  %5112 = vrot.lane.b32.xlu0 %v5090, 64
  %v5113 = vpop.permute.xlu0 %5112
  %5114 = vrot.lane.b32.xlu0 %v5091, 64
  %v5115 = vpop.permute.xlu0 %5114
  %v5124 = vadd.f32 %v5081, %v5101
  %v5125 = vadd.f32 %v5082, %v5103
  %v5126 = vadd.f32 %v5083, %v5105
  %v5127 = vadd.f32 %v5084, %v5107
  %v5128 = vadd.f32 %v5085, %v5109
  %v5129 = vadd.f32 %v5086, %v5111
  %v5130 = vadd.f32 %v5087, %v5113
  %v5131 = vadd.f32 %v5088, %v5115
  %v5132 = vld [vmem:[#allocation4 + $0x48] sm:$0xff]
  %v5133 = vld [vmem:[#allocation4 + $0x58] sm:$0xff]
  %v5134 = vld [vmem:[#allocation4 + $0x68] sm:$0xff]
  %v5135 = vld [vmem:[#allocation4 + $0x78] sm:$0xff]
  %v5136 = vld [vmem:[#allocation4 + $0x88] sm:$0xff]
  %v5137 = vld [vmem:[#allocation4 + $0x98] sm:$0xff]
  %v5138 = vld [vmem:[#allocation4 + $0xa8] sm:$0xff]
  %v5139 = vld [vmem:[#allocation4 + $0xb8] sm:$0x7]
  %v5140 = vadd.f32 %v5124, %v5132
  %v5141 = vadd.f32 %v5125, %v5133
  %v5142 = vadd.f32 %v5126, %v5134
  %v5143 = vadd.f32 %v5127, %v5135
  %v5144 = vadd.f32 %v5128, %v5136
  %v5145 = vadd.f32 %v5129, %v5137
  %v5146 = vadd.f32 %v5130, %v5138
  %v5147 = vadd.f32 %v5131, %v5139
  %v5148 = vld [vmem:[#allocation4 + $0x68] sm:$0xff]
  %v5149 = vld [vmem:[#allocation4 + $0x78] sm:$0xff]
  %v5150 = vld [vmem:[#allocation4 + $0x88] sm:$0xff]
  %v5151 = vld [vmem:[#allocation4 + $0x98] sm:$0xff]
  %v5152 = vld [vmem:[#allocation4 + $0xa8] sm:$0xff]
  %v5153 = vld [vmem:[#allocation4 + $0xb8] sm:$0xff]
  %v5154 = vld [vmem:[#allocation4 + $0xc8] sm:$0xff]
  %v5155 = vld [vmem:[#allocation4 + $0xd8] sm:$0x7]
  %5164 = vrot.lane.b32.xlu0 %v5148, 64
  %v5165 = vpop.permute.xlu0 %5164
  %5166 = vrot.lane.b32.xlu0 %v5149, 64
  %v5167 = vpop.permute.xlu0 %5166
  %5168 = vrot.lane.b32.xlu0 %v5150, 64
  %v5169 = vpop.permute.xlu0 %5168
  %5170 = vrot.lane.b32.xlu0 %v5151, 64
  %v5171 = vpop.permute.xlu0 %5170
  %5172 = vrot.lane.b32.xlu0 %v5152, 64
  %v5173 = vpop.permute.xlu0 %5172
  %5174 = vrot.lane.b32.xlu0 %v5153, 64
  %v5175 = vpop.permute.xlu0 %5174
  %5176 = vrot.lane.b32.xlu0 %v5154, 64
  %v5177 = vpop.permute.xlu0 %5176
  %5178 = vrot.lane.b32.xlu0 %v5155, 64
  %v5179 = vpop.permute.xlu0 %5178
  %v5188 = vadd.f32 %v5140, %v5165
  %v5189 = vadd.f32 %v5141, %v5167
  %v5190 = vadd.f32 %v5142, %v5169
  %v5191 = vadd.f32 %v5143, %v5171
  %v5192 = vadd.f32 %v5144, %v5173
  %v5193 = vadd.f32 %v5145, %v5175
  %v5194 = vadd.f32 %v5146, %v5177
  %v5195 = vadd.f32 %v5147, %v5179
  %5196 = vst.msk [vmem:[#allocation2] sm:$0xff] %vm188, %v5188
  %5197 = vst.msk [vmem:[#allocation2 + $0x8] sm:$0xff] %vm188, %v5189
  %5198 = vst.msk [vmem:[#allocation2 + $0x10] sm:$0xff] %vm188, %v5190
  %5199 = vst.msk [vmem:[#allocation2 + $0x18] sm:$0xff] %vm188, %v5191
  %5200 = vst.msk [vmem:[#allocation2 + $0x20] sm:$0xff] %vm188, %v5192
  %5201 = vst.msk [vmem:[#allocation2 + $0x28] sm:$0xff] %vm188, %v5193
  %5202 = vst.msk [vmem:[#allocation2 + $0x30] sm:$0xff] %vm188, %v5194
  %5203 = vst.msk [vmem:[#allocation2 + $0x38] sm:$0x7] %vm1767, %v5195
  %v5204 = vsel %vm188, %v5188, 0.0
  %v5205 = vsel %vm188, %v5189, 0.0
  %v5206 = vadd.f32 %v5204, %v5205
  %v5207 = vsel %vm188, %v5190, 0.0
  %v5208 = vadd.f32 %v5206, %v5207
  %v5209 = vsel %vm188, %v5191, 0.0
  %v5210 = vadd.f32 %v5208, %v5209
  %v5211 = vsel %vm188, %v5192, 0.0
  %v5212 = vadd.f32 %v5210, %v5211
  %v5213 = vsel %vm188, %v5193, 0.0
  %v5214 = vadd.f32 %v5212, %v5213
  %v5215 = vsel %vm188, %v5194, 0.0
  %v5216 = vadd.f32 %v5214, %v5215
  %v5217 = vsel %vm1767, %v5195, 0.0
  %v5218 = vadd.f32 %v5216, %v5217
  %v5219 = vrot.slane %v5218, 4
  %v5220 = vadd.f32 %v5218, %v5219
  %v5221 = vrot.slane %v5220, 2
  %v5222 = vadd.f32 %v5220, %v5221
  %v5223 = vrot.slane %v5222, 1
  %v5224 = vadd.f32 %v5222, %v5223
  %v5225 = vadd.f32 %v5224, 0.0
  %v5226 = vmul.f32 %v5188, %v5188
  %v5227 = vmul.f32 %v5189, %v5189
  %v5228 = vmul.f32 %v5190, %v5190
  %v5229 = vmul.f32 %v5191, %v5191
  %v5230 = vmul.f32 %v5192, %v5192
  %v5231 = vmul.f32 %v5193, %v5193
  %v5232 = vmul.f32 %v5194, %v5194
  %v5233 = vmul.f32 %v5195, %v5195
  %v5234 = vsel %vm188, %v5226, 0.0
  %v5235 = vsel %vm188, %v5227, 0.0
  %v5236 = vadd.f32 %v5234, %v5235
  %v5237 = vsel %vm188, %v5228, 0.0
  %v5238 = vadd.f32 %v5236, %v5237
  %v5239 = vsel %vm188, %v5229, 0.0
  %v5240 = vadd.f32 %v5238, %v5239
  %v5241 = vsel %vm188, %v5230, 0.0
  %v5242 = vadd.f32 %v5240, %v5241
  %v5243 = vsel %vm188, %v5231, 0.0
  %v5244 = vadd.f32 %v5242, %v5243
  %v5245 = vsel %vm188, %v5232, 0.0
  %v5246 = vadd.f32 %v5244, %v5245
  %v5247 = vsel %vm1767, %v5233, 0.0
  %v5248 = vadd.f32 %v5246, %v5247
  %v5249 = vrot.slane %v5248, 4
  %v5250 = vadd.f32 %v5248, %v5249
  %v5251 = vrot.slane %v5250, 2
  %v5252 = vadd.f32 %v5250, %v5251
  %v5253 = vrot.slane %v5252, 1
  %v5254 = vadd.f32 %v5252, %v5253
  %v5255 = vadd.f32 %v5254, 0.0
  %v5256 = vld [vmem:[%s3454] sm:$0xff]
  %v5257 = vld [vmem:[%s3454 + $0x8] sm:$0xff]
  %v5258 = vld [vmem:[%s3454 + $0x10] sm:$0xff]
  %v5259 = vld [vmem:[%s3454 + $0x18] sm:$0xff]
  %v5260 = vld [vmem:[%s3454 + $0x20] sm:$0xff]
  %v5261 = vld [vmem:[%s3454 + $0x28] sm:$0xff]
  %v5262 = vld [vmem:[%s3454 + $0x30] sm:$0xff]
  %v5263 = vld [vmem:[%s3454 + $0x38] sm:$0x7]
  %v5264 = vmul.f32 %v5256, %v3540
  %v5265 = vmul.f32 %v5257, %v3540
  %v5266 = vmul.f32 %v5258, %v3540
  %v5267 = vmul.f32 %v5259, %v3540
  %v5268 = vmul.f32 %v5260, %v3540
  %v5269 = vmul.f32 %v5261, %v3540
  %v5270 = vmul.f32 %v5262, %v3540
  %v5271 = vmul.f32 %v5263, %v3540
  %v5272 = vadd.f32 %v5264, %v3554
  %v5273 = vadd.f32 %v5265, %v3554
  %v5274 = vadd.f32 %v5266, %v3554
  %v5275 = vadd.f32 %v5267, %v3554
  %v5276 = vadd.f32 %v5268, %v3554
  %v5277 = vadd.f32 %v5269, %v3554
  %v5278 = vadd.f32 %v5270, %v3554
  %v5279 = vadd.f32 %v5271, %v3554
  %v5280 = vmax.f32 %v5272, 0.0
  %v5281 = vmax.f32 %v5273, 0.0
  %v5282 = vmax.f32 %v5274, 0.0
  %v5283 = vmax.f32 %v5275, 0.0
  %v5284 = vmax.f32 %v5276, 0.0
  %v5285 = vmax.f32 %v5277, 0.0
  %v5286 = vmax.f32 %v5278, 0.0
  %v5287 = vmax.f32 %v5279, 0.0
  %v5296 = vrot.slane %v5280, 6
  %v5297 = vrot.slane %v5281, 6
  %v5298 = vsel %vm116, %v5296, %v5297
  %v5299 = vrot.slane %v5282, 6
  %v5300 = vsel %vm116, %v5297, %v5299
  %v5301 = vrot.slane %v5283, 6
  %v5302 = vsel %vm116, %v5299, %v5301
  %v5303 = vrot.slane %v5284, 6
  %v5304 = vsel %vm116, %v5301, %v5303
  %v5305 = vrot.slane %v5285, 6
  %v5306 = vsel %vm116, %v5303, %v5305
  %v5307 = vrot.slane %v5286, 6
  %v5308 = vsel %vm116, %v5305, %v5307
  %v5309 = vrot.slane %v5287, 6
  %v5310 = vsel %vm116, %v5307, %v5309
  %v5319 = vsel %vm116, 0.0, %v5296
  %v5320 = vrot.slane %v5280, 7
  %v5321 = vrot.slane %v5281, 7
  %v5322 = vsel %vm141, %v5320, %v5321
  %v5323 = vrot.slane %v5282, 7
  %v5324 = vsel %vm141, %v5321, %v5323
  %v5325 = vrot.slane %v5283, 7
  %v5326 = vsel %vm141, %v5323, %v5325
  %v5327 = vrot.slane %v5284, 7
  %v5328 = vsel %vm141, %v5325, %v5327
  %v5329 = vrot.slane %v5285, 7
  %v5330 = vsel %vm141, %v5327, %v5329
  %v5331 = vrot.slane %v5286, 7
  %v5332 = vsel %vm141, %v5329, %v5331
  %v5333 = vrot.slane %v5287, 7
  %v5334 = vsel %vm141, %v5331, %v5333
  %v5337 = vsel %vm141, 0.0, %v5320
  %v5338 = vsel %vm160, %v5334, 0.0
  %5341 = vrot.lane.b32.xlu0 %v5337, 64
  %v5342 = vpop.permute.xlu0 %5341
  %5343 = vrot.lane.b32.xlu0 %v5322, 64
  %v5344 = vpop.permute.xlu0 %5343
  %5345 = vrot.lane.b32.xlu0 %v5324, 64
  %v5346 = vpop.permute.xlu0 %5345
  %5347 = vrot.lane.b32.xlu0 %v5326, 64
  %v5348 = vpop.permute.xlu0 %5347
  %5349 = vrot.lane.b32.xlu0 %v5328, 64
  %v5350 = vpop.permute.xlu0 %5349
  %5351 = vrot.lane.b32.xlu0 %v5330, 64
  %v5352 = vpop.permute.xlu0 %5351
  %5353 = vrot.lane.b32.xlu0 %v5332, 64
  %v5354 = vpop.permute.xlu0 %5353
  %5355 = vrot.lane.b32.xlu0 %v5338, 64
  %v5356 = vpop.permute.xlu0 %5355
  %v5365 = vsel %vm188, %v5319, %v5342
  %v5366 = vsel %vm188, %v5298, %v5344
  %v5367 = vsel %vm188, %v5300, %v5346
  %v5368 = vsel %vm188, %v5302, %v5348
  %v5369 = vsel %vm188, %v5304, %v5350
  %v5370 = vsel %vm188, %v5306, %v5352
  %v5371 = vsel %vm188, %v5308, %v5354
  %v5372 = vsel %vm188, %v5310, %v5356
  %v5373 = vpack.c.bf16 %v5366, %v5365
  %v5374 = vpack.c.bf16 %v5368, %v5367
  %v5375 = vpack.c.bf16 %v5370, %v5369
  %v5376 = vpack.c.bf16 %v5372, %v5371
  %v5381 = vrot.slane %v5373, 5
  %v5382 = vrot.slane %v5374, 5
  %v5383 = vsel %vm205, %v5381, %v5382
  %v5384 = vrot.slane %v5375, 5
  %v5385 = vsel %vm205, %v5382, %v5384
  %v5386 = vrot.slane %v5376, 5
  %v5387 = vsel %vm205, %v5384, %v5386
  %5393 = vst [vmem:[#allocation3 + $0x40] sm:$0xf8] %v5381
  %5394 = vst [vmem:[#allocation3 + $0x80] sm:$0xff] %v5383
  %5395 = vst [vmem:[#allocation3 + $0xc0] sm:$0xff] %v5385
  %5396 = vst [vmem:[#allocation3 + $0x100] sm:$0xff] %v5387
  %v5397 = vld [vmem:[#allocation3 + $0x140] sm:$0x3]
  %v5398 = vsel %vm224, %v5386, %v5397
  %5399 = vst [vmem:[#allocation3 + $0x140] sm:$0x3] %v5398
  %v5400 = vrot.slane %v5373, 6
  %v5401 = vrot.slane %v5374, 6
  %v5402 = vsel %vm222, %v5400, %v5401
  %v5403 = vrot.slane %v5375, 6
  %v5404 = vsel %vm222, %v5401, %v5403
  %v5405 = vrot.slane %v5376, 6
  %v5406 = vsel %vm222, %v5403, %v5405
  %5412 = vst [vmem:[#allocation3 + $0x48] sm:$0xfc] %v5400
  %5413 = vst [vmem:[#allocation3 + $0x88] sm:$0xff] %v5402
  %5414 = vst [vmem:[#allocation3 + $0xc8] sm:$0xff] %v5404
  %5415 = vst [vmem:[#allocation3 + $0x108] sm:$0xff] %v5406
  %v5416 = vld [vmem:[#allocation3 + $0x148] sm:$0x1]
  %v5417 = vsel %vm246, %v5405, %v5416
  %5418 = vst [vmem:[#allocation3 + $0x148] sm:$0x1] %v5417
  %v5419 = vrot.slane %v5373, 7
  %v5420 = vrot.slane %v5374, 7
  %v5421 = vsel %vm244, %v5419, %v5420
  %v5422 = vrot.slane %v5375, 7
  %v5423 = vsel %vm244, %v5420, %v5422
  %v5424 = vrot.slane %v5376, 7
  %v5425 = vsel %vm244, %v5422, %v5424
  %5430 = vst [vmem:[#allocation3 + $0x50] sm:$0xfe] %v5419
  %5431 = vst [vmem:[#allocation3 + $0x90] sm:$0xff] %v5421
  %5432 = vst [vmem:[#allocation3 + $0xd0] sm:$0xff] %v5423
  %v5433 = vld [vmem:[#allocation3 + $0x110] sm:$0xff]
  %v5434 = vsel %vm266, %v5425, %v5433
  %5435 = vst [vmem:[#allocation3 + $0x110] sm:$0xff] %v5434
  %5436 = vst [vmem:[#allocation3 + $0x58] sm:$0xff] %v5373
  %5437 = vst [vmem:[#allocation3 + $0x98] sm:$0xff] %v5374
  %5438 = vst [vmem:[#allocation3 + $0xd8] sm:$0xff] %v5375
  %v5439 = vld [vmem:[#allocation3 + $0x118] sm:$0x7f]
  %v5440 = vsel %vm275, %v5376, %v5439
  %5441 = vst [vmem:[#allocation3 + $0x118] sm:$0x7f] %v5440
  %v5442 = vrot.slane %v5373, 1
  %v5443 = vrot.slane %v5374, 1
  %v5444 = vsel %vm273, %v5442, %v5443
  %v5445 = vrot.slane %v5375, 1
  %v5446 = vsel %vm273, %v5443, %v5445
  %v5447 = vrot.slane %v5376, 1
  %v5448 = vsel %vm273, %v5445, %v5447
  %5454 = vst [vmem:[#allocation3 + $0x20] sm:$0x80] %v5442
  %5455 = vst [vmem:[#allocation3 + $0x60] sm:$0xff] %v5444
  %5456 = vst [vmem:[#allocation3 + $0xa0] sm:$0xff] %v5446
  %5457 = vst [vmem:[#allocation3 + $0xe0] sm:$0xff] %v5448
  %v5458 = vld [vmem:[#allocation3 + $0x120] sm:$0x3f]
  %v5459 = vsel %vm297, %v5447, %v5458
  %5460 = vst [vmem:[#allocation3 + $0x120] sm:$0x3f] %v5459
  %v5461 = vrot.slane %v5373, 2
  %v5462 = vrot.slane %v5374, 2
  %v5463 = vsel %vm295, %v5461, %v5462
  %v5464 = vrot.slane %v5375, 2
  %v5465 = vsel %vm295, %v5462, %v5464
  %v5466 = vrot.slane %v5376, 2
  %v5467 = vsel %vm295, %v5464, %v5466
  %5473 = vst [vmem:[#allocation3 + $0x28] sm:$0xc0] %v5461
  %5474 = vst [vmem:[#allocation3 + $0x68] sm:$0xff] %v5463
  %5475 = vst [vmem:[#allocation3 + $0xa8] sm:$0xff] %v5465
  %5476 = vst [vmem:[#allocation3 + $0xe8] sm:$0xff] %v5467
  %v5477 = vld [vmem:[#allocation3 + $0x128] sm:$0x1f]
  %v5478 = vsel %vm319, %v5466, %v5477
  %5479 = vst [vmem:[#allocation3 + $0x128] sm:$0x1f] %v5478
  %v5480 = vrot.slane %v5373, 3
  %v5481 = vrot.slane %v5374, 3
  %v5482 = vsel %vm317, %v5480, %v5481
  %v5483 = vrot.slane %v5375, 3
  %v5484 = vsel %vm317, %v5481, %v5483
  %v5485 = vrot.slane %v5376, 3
  %v5486 = vsel %vm317, %v5483, %v5485
  %5492 = vst [vmem:[#allocation3 + $0x30] sm:$0xe0] %v5480
  %5493 = vst [vmem:[#allocation3 + $0x70] sm:$0xff] %v5482
  %5494 = vst [vmem:[#allocation3 + $0xb0] sm:$0xff] %v5484
  %5495 = vst [vmem:[#allocation3 + $0xf0] sm:$0xff] %v5486
  %v5496 = vld [vmem:[#allocation3 + $0x130] sm:$0xf]
  %v5497 = vsel %vm341, %v5485, %v5496
  %5498 = vst [vmem:[#allocation3 + $0x130] sm:$0xf] %v5497
  %v5499 = vrot.slane %v5373, 4
  %v5500 = vrot.slane %v5374, 4
  %v5501 = vsel %vm339, %v5499, %v5500
  %v5502 = vrot.slane %v5375, 4
  %v5503 = vsel %vm339, %v5500, %v5502
  %v5504 = vrot.slane %v5376, 4
  %v5505 = vsel %vm339, %v5502, %v5504
  %5511 = vst [vmem:[#allocation3 + $0x38] sm:$0xf0] %v5499
  %5512 = vst [vmem:[#allocation3 + $0x78] sm:$0xff] %v5501
  %5513 = vst [vmem:[#allocation3 + $0xb8] sm:$0xff] %v5503
  %5514 = vst [vmem:[#allocation3 + $0xf8] sm:$0xff] %v5505
  %v5515 = vld [vmem:[#allocation3 + $0x138] sm:$0x7]
  %v5516 = vsel %vm362, %v5504, %v5515
  %5517 = vst [vmem:[#allocation3 + $0x138] sm:$0x7] %v5516
  %v5518 = vld [vmem:[#allocation3] sm:$0xff]
  %v5519 = vld [vmem:[#allocation3 + $0x8] sm:$0xff]
  %v5520 = vld [vmem:[#allocation3 + $0x10] sm:$0xff]
  %v5521 = vld [vmem:[#allocation3 + $0x18] sm:$0xff]
  %v5522 = vld [vmem:[#allocation3 + $0x20] sm:$0xff]
  %v5523 = vld [vmem:[#allocation3 + $0x28] sm:$0xff]
  %v5524 = vld [vmem:[#allocation3 + $0x30] sm:$0xff]
  %v5525 = vld [vmem:[#allocation3 + $0x38] sm:$0xff]
  %v5526 = vld [vmem:[#allocation3 + $0x40] sm:$0xff]
  %v5527 = vld [vmem:[#allocation3 + $0x48] sm:$0xff]
  %v5528 = vld [vmem:[#allocation3 + $0x50] sm:$0xff]
  %v5529 = vld [vmem:[#allocation3 + $0x58] sm:$0xff]
  %v5530 = vld [vmem:[#allocation3 + $0x60] sm:$0xff]
  %v5531 = vld [vmem:[#allocation3 + $0x68] sm:$0xff]
  %v5532 = vld [vmem:[#allocation3 + $0x70] sm:$0xff]
  %v5533 = vld [vmem:[#allocation3 + $0x78] sm:$0xff]
  %v5534 = vld [vmem:[#allocation3 + $0x80] sm:$0xff]
  %v5535 = vld [vmem:[#allocation3 + $0x88] sm:$0xff]
  %v5536 = vld [vmem:[#allocation3 + $0x90] sm:$0xff]
  %v5537 = vld [vmem:[#allocation3 + $0x98] sm:$0xff]
  %v5538 = vld [vmem:[#allocation3 + $0xa0] sm:$0xff]
  %v5539 = vld [vmem:[#allocation3 + $0xa8] sm:$0xff]
  %v5540 = vld [vmem:[#allocation3 + $0xb0] sm:$0xff]
  %v5541 = vld [vmem:[#allocation3 + $0xb8] sm:$0xff]
  %v5542 = vld [vmem:[#allocation3 + $0xc0] sm:$0xff]
  %v5543 = vld [vmem:[#allocation3 + $0xc8] sm:$0xff]
  %v5544 = vld [vmem:[#allocation3 + $0xd0] sm:$0xff]
  %v5545 = vld [vmem:[#allocation3 + $0xd8] sm:$0xff]
  %v5546 = vld [vmem:[#allocation3 + $0xe0] sm:$0xff]
  %v5547 = vld [vmem:[#allocation3 + $0xe8] sm:$0xff]
  %v5548 = vld [vmem:[#allocation3 + $0xf0] sm:$0xff]
  %v5549 = vld [vmem:[#allocation3 + $0xf8] sm:$0xff]
  %v5550 = vld [vmem:[#allocation3 + $0x100] sm:$0xff]
  %v5551 = vld [vmem:[#allocation3 + $0x108] sm:$0xff]
  %v5552 = vld [vmem:[#allocation3 + $0x110] sm:$0xff]
  %v5553 = vld [vmem:[#allocation3 + $0x118] sm:$0xff]
  %v5554 = vld [vmem:[#allocation3 + $0x120] sm:$0xff]
  %v5555 = vld [vmem:[#allocation3 + $0x128] sm:$0xff]
  %v5556 = vld [vmem:[#allocation3 + $0x130] sm:$0xff]
  %v5557 = vld [vmem:[#allocation3 + $0x138] sm:$0xff]
  %v5558 = vld [vmem:[#allocation3 + $0x140] sm:$0xff]
  %v5559 = vld [vmem:[#allocation3 + $0x148] sm:$0xff]
  %v5560 = vld [vmem:[#allocation3 + $0x150] sm:$0xff]
  %v5561 = vld [vmem:[#allocation3 + $0x158] sm:$0xff]
  %v5562 = vld [vmem:[#allocation3 + $0x160] sm:$0xff]
  %v5563 = vld [vmem:[#allocation3 + $0x168] sm:$0xff]
  %v5564 = vld [vmem:[#allocation3 + $0x170] sm:$0xff]
  %v5565 = vld [vmem:[#allocation3 + $0x178] sm:$0xff]
  %v5566 = vld [vmem:[#allocation3 + $0x180] sm:$0x3f]
  %v5567 = vld [vmem:[#allocation3 + $0x188] sm:$0x3f]
  %v5568 = vld [vmem:[#allocation3 + $0x190] sm:$0x3f]
  %v5569 = vld [vmem:[#allocation3 + $0x198] sm:$0x3f]
  %v5570 = vld [vmem:[#allocation3 + $0x1a0] sm:$0x3f]
  %v5571 = vld [vmem:[#allocation3 + $0x1a8] sm:$0x3f]
  %v5572 = vld [vmem:[#allocation3 + $0x1b0] sm:$0x3f]
  %v5573 = vld [vmem:[#allocation3 + $0x1b8] sm:$0x3f]
  %v5574 = vld [vmem:[%s5] sm:$0xff]
  %v5575 = vld [vmem:[%s5 + $0x8] sm:$0xff]
  %v5576 = vld [vmem:[%s5 + $0x10] sm:$0xff]
  %v5577 = vld [vmem:[%s5 + $0x18] sm:$0xff]
  %v5578 = vld [vmem:[%s5 + $0x20] sm:$0xff]
  %v5579 = vld [vmem:[%s5 + $0x28] sm:$0xff]
  %v5580 = vld [vmem:[%s5 + $0x30] sm:$0xff]
  %v5581 = vld [vmem:[%s5 + $0x38] sm:$0xff]
  %v5582 = vld [vmem:[%s5 + $0x40] sm:$0xff]
  %v5583 = vld [vmem:[%s5 + $0x48] sm:$0xff]
  %v5584 = vld [vmem:[%s5 + $0x50] sm:$0xff]
  %v5585 = vld [vmem:[%s5 + $0x58] sm:$0xff]
  %v5586 = vld [vmem:[%s5 + $0x60] sm:$0xff]
  %v5587 = vld [vmem:[%s5 + $0x68] sm:$0xff]
  %v5588 = vld [vmem:[%s5 + $0x70] sm:$0xff]
  %v5589 = vld [vmem:[%s5 + $0x78] sm:$0xff]
  %v5590 = vld [vmem:[%s5 + $0x80] sm:$0xff]
  %v5591 = vld [vmem:[%s5 + $0x88] sm:$0xff]
  %v5592 = vld [vmem:[%s5 + $0x90] sm:$0xff]
  %v5593 = vld [vmem:[%s5 + $0x98] sm:$0xff]
  %v5594 = vld [vmem:[%s5 + $0xa0] sm:$0xff]
  %v5595 = vld [vmem:[%s5 + $0xa8] sm:$0xff]
  %v5596 = vld [vmem:[%s5 + $0xb0] sm:$0xff]
  %v5597 = vld [vmem:[%s5 + $0xb8] sm:$0xff]
  %v5598 = vld [vmem:[%s5 + $0xc0] sm:$0xff]
  %v5599 = vld [vmem:[%s5 + $0xc8] sm:$0xff]
  %v5600 = vld [vmem:[%s5 + $0xd0] sm:$0xff]
  %v5601 = vld [vmem:[%s5 + $0xd8] sm:$0xff]
  %v5602 = vld [vmem:[%s5 + $0xe0] sm:$0xff]
  %v5603 = vld [vmem:[%s5 + $0xe8] sm:$0xff]
  %v5604 = vld [vmem:[%s5 + $0xf0] sm:$0xff]
  %v5605 = vld [vmem:[%s5 + $0xf8] sm:$0xff]
  %v5606 = vld [vmem:[%s5 + $0x100] sm:$0xff]
  %v5607 = vld [vmem:[%s5 + $0x108] sm:$0xff]
  %v5608 = vld [vmem:[%s5 + $0x110] sm:$0xff]
  %v5609 = vld [vmem:[%s5 + $0x118] sm:$0xff]
  %v5610 = vld [vmem:[%s5 + $0x120] sm:$0xff]
  %v5611 = vld [vmem:[%s5 + $0x128] sm:$0xff]
  %v5612 = vld [vmem:[%s5 + $0x130] sm:$0xff]
  %v5613 = vld [vmem:[%s5 + $0x138] sm:$0xff]
  %v5614 = vld [vmem:[%s5 + $0x140] sm:$0xff]
  %v5615 = vld [vmem:[%s5 + $0x148] sm:$0xff]
  %v5616 = vld [vmem:[%s5 + $0x150] sm:$0xff]
  %v5617 = vld [vmem:[%s5 + $0x158] sm:$0xff]
  %v5618 = vld [vmem:[%s5 + $0x160] sm:$0xff]
  %v5619 = vld [vmem:[%s5 + $0x168] sm:$0xff]
  %v5620 = vld [vmem:[%s5 + $0x170] sm:$0xff]
  %v5621 = vld [vmem:[%s5 + $0x178] sm:$0xff]
  %v5622 = vld [vmem:[%s5 + $0x180] sm:$0xff]
  %v5623 = vld [vmem:[%s5 + $0x188] sm:$0xff]
  %v5624 = vld [vmem:[%s5 + $0x190] sm:$0xff]
  %v5625 = vld [vmem:[%s5 + $0x198] sm:$0xff]
  %v5626 = vld [vmem:[%s5 + $0x1a0] sm:$0xff]
  %v5627 = vld [vmem:[%s5 + $0x1a8] sm:$0xff]
  %v5628 = vld [vmem:[%s5 + $0x1b0] sm:$0xff]
  %v5629 = vld [vmem:[%s5 + $0x1b8] sm:$0xff]
  %v5630 = vld [vmem:[%s5 + $0x1c0] sm:$0xff]
  %v5631 = vld [vmem:[%s5 + $0x1c8] sm:$0xff]
  %v5632 = vld [vmem:[%s5 + $0x1d0] sm:$0xff]
  %v5633 = vld [vmem:[%s5 + $0x1d8] sm:$0xff]
  %v5634 = vld [vmem:[%s5 + $0x1e0] sm:$0xff]
  %v5635 = vld [vmem:[%s5 + $0x1e8] sm:$0xff]
  %v5636 = vld [vmem:[%s5 + $0x1f0] sm:$0xff]
  %v5637 = vld [vmem:[%s5 + $0x1f8] sm:$0xff]
  %v5638 = vld [vmem:[%s5 + $0x200] sm:$0xff]
  %v5639 = vld [vmem:[%s5 + $0x208] sm:$0xff]
  %v5640 = vld [vmem:[%s5 + $0x210] sm:$0xff]
  %v5641 = vld [vmem:[%s5 + $0x218] sm:$0xff]
  %v5642 = vld [vmem:[%s5 + $0x220] sm:$0xff]
  %v5643 = vld [vmem:[%s5 + $0x228] sm:$0xff]
  %v5644 = vld [vmem:[%s5 + $0x230] sm:$0xff]
  %v5645 = vld [vmem:[%s5 + $0x238] sm:$0xff]
  %v5646 = vld [vmem:[%s5 + $0x240] sm:$0xff]
  %v5647 = vld [vmem:[%s5 + $0x248] sm:$0xff]
  %v5648 = vld [vmem:[%s5 + $0x250] sm:$0xff]
  %v5649 = vld [vmem:[%s5 + $0x258] sm:$0xff]
  %v5650 = vld [vmem:[%s5 + $0x260] sm:$0xff]
  %v5651 = vld [vmem:[%s5 + $0x268] sm:$0xff]
  %v5652 = vld [vmem:[%s5 + $0x270] sm:$0xff]
  %v5653 = vld [vmem:[%s5 + $0x278] sm:$0xff]
  %v5654 = vld [vmem:[%s5 + $0x280] sm:$0xff]
  %v5655 = vld [vmem:[%s5 + $0x288] sm:$0xff]
  %v5656 = vld [vmem:[%s5 + $0x290] sm:$0xff]
  %v5657 = vld [vmem:[%s5 + $0x298] sm:$0xff]
  %v5658 = vld [vmem:[%s5 + $0x2a0] sm:$0xff]
  %v5659 = vld [vmem:[%s5 + $0x2a8] sm:$0xff]
  %v5660 = vld [vmem:[%s5 + $0x2b0] sm:$0xff]
  %v5661 = vld [vmem:[%s5 + $0x2b8] sm:$0xff]
  %v5662 = vld [vmem:[%s5 + $0x2c0] sm:$0xff]
  %v5663 = vld [vmem:[%s5 + $0x2c8] sm:$0xff]
  %v5664 = vld [vmem:[%s5 + $0x2d0] sm:$0xff]
  %v5665 = vld [vmem:[%s5 + $0x2d8] sm:$0xff]
  %v5666 = vld [vmem:[%s5 + $0x2e0] sm:$0xff]
  %v5667 = vld [vmem:[%s5 + $0x2e8] sm:$0xff]
  %v5668 = vld [vmem:[%s5 + $0x2f0] sm:$0xff]
  %v5669 = vld [vmem:[%s5 + $0x2f8] sm:$0xff]
  %v5670 = vld [vmem:[%s5 + $0x300] sm:$0xff]
  %v5671 = vld [vmem:[%s5 + $0x308] sm:$0xff]
  %v5672 = vld [vmem:[%s5 + $0x310] sm:$0xff]
  %v5673 = vld [vmem:[%s5 + $0x318] sm:$0xff]
  %v5674 = vld [vmem:[%s5 + $0x320] sm:$0xff]
  %v5675 = vld [vmem:[%s5 + $0x328] sm:$0xff]
  %v5676 = vld [vmem:[%s5 + $0x330] sm:$0xff]
  %v5677 = vld [vmem:[%s5 + $0x338] sm:$0xff]
  %v5678 = vld [vmem:[%s5 + $0x340] sm:$0xff]
  %v5679 = vld [vmem:[%s5 + $0x348] sm:$0xff]
  %v5680 = vld [vmem:[%s5 + $0x350] sm:$0xff]
  %v5681 = vld [vmem:[%s5 + $0x358] sm:$0xff]
  %v5682 = vld [vmem:[%s5 + $0x360] sm:$0xff]
  %v5683 = vld [vmem:[%s5 + $0x368] sm:$0xff]
  %v5684 = vld [vmem:[%s5 + $0x370] sm:$0xff]
  %v5685 = vld [vmem:[%s5 + $0x378] sm:$0xff]
  %v5686 = vld [vmem:[%s5 + $0x380] sm:$0xff]
  %v5687 = vld [vmem:[%s5 + $0x388] sm:$0xff]
  %v5688 = vld [vmem:[%s5 + $0x390] sm:$0xff]
  %v5689 = vld [vmem:[%s5 + $0x398] sm:$0xff]
  %v5690 = vld [vmem:[%s5 + $0x3a0] sm:$0xff]
  %v5691 = vld [vmem:[%s5 + $0x3a8] sm:$0xff]
  %v5692 = vld [vmem:[%s5 + $0x3b0] sm:$0xff]
  %v5693 = vld [vmem:[%s5 + $0x3b8] sm:$0xff]
  %v5694 = vld [vmem:[%s5 + $0x3c0] sm:$0xff]
  %v5695 = vld [vmem:[%s5 + $0x3c8] sm:$0xff]
  %v5696 = vld [vmem:[%s5 + $0x3d0] sm:$0xff]
  %v5697 = vld [vmem:[%s5 + $0x3d8] sm:$0xff]
  %v5698 = vld [vmem:[%s5 + $0x3e0] sm:$0xff]
  %v5699 = vld [vmem:[%s5 + $0x3e8] sm:$0xff]
  %v5700 = vld [vmem:[%s5 + $0x3f0] sm:$0xff]
  %v5701 = vld [vmem:[%s5 + $0x3f8] sm:$0xff]
  %v5830 = vunpack.c.l.b16 %v5574
  %v5831 = vunpack.c.h.b16 %v5574
  %v5832 = vunpack.c.l.b16 %v5575
  %v5833 = vunpack.c.h.b16 %v5575
  %v5834 = vunpack.c.l.b16 %v5576
  %v5835 = vunpack.c.h.b16 %v5576
  %v5836 = vunpack.c.l.b16 %v5577
  %v5837 = vunpack.c.h.b16 %v5577
  %v5838 = vunpack.c.l.b16 %v5578
  %v5839 = vunpack.c.h.b16 %v5578
  %v5840 = vunpack.c.l.b16 %v5579
  %v5841 = vunpack.c.h.b16 %v5579
  %v5842 = vunpack.c.l.b16 %v5580
  %v5843 = vunpack.c.h.b16 %v5580
  %v5844 = vunpack.c.l.b16 %v5581
  %v5845 = vunpack.c.h.b16 %v5581
  %v5846 = vunpack.c.l.b16 %v5582
  %v5847 = vunpack.c.h.b16 %v5582
  %v5848 = vunpack.c.l.b16 %v5583
  %v5849 = vunpack.c.h.b16 %v5583
  %v5850 = vunpack.c.l.b16 %v5584
  %v5851 = vunpack.c.h.b16 %v5584
  %v5852 = vunpack.c.l.b16 %v5585
  %v5853 = vunpack.c.h.b16 %v5585
  %v5854 = vunpack.c.l.b16 %v5586
  %v5855 = vunpack.c.h.b16 %v5586
  %v5856 = vunpack.c.l.b16 %v5587
  %v5857 = vunpack.c.h.b16 %v5587
  %v5858 = vunpack.c.l.b16 %v5588
  %v5859 = vunpack.c.h.b16 %v5588
  %v5860 = vunpack.c.l.b16 %v5589
  %v5861 = vunpack.c.h.b16 %v5589
  %v5862 = vunpack.c.l.b16 %v5590
  %v5863 = vunpack.c.h.b16 %v5590
  %v5864 = vunpack.c.l.b16 %v5591
  %v5865 = vunpack.c.h.b16 %v5591
  %v5866 = vunpack.c.l.b16 %v5592
  %v5867 = vunpack.c.h.b16 %v5592
  %v5868 = vunpack.c.l.b16 %v5593
  %v5869 = vunpack.c.h.b16 %v5593
  %v5870 = vunpack.c.l.b16 %v5594
  %v5871 = vunpack.c.h.b16 %v5594
  %v5872 = vunpack.c.l.b16 %v5595
  %v5873 = vunpack.c.h.b16 %v5595
  %v5874 = vunpack.c.l.b16 %v5596
  %v5875 = vunpack.c.h.b16 %v5596
  %v5876 = vunpack.c.l.b16 %v5597
  %v5877 = vunpack.c.h.b16 %v5597
  %v5878 = vunpack.c.l.b16 %v5598
  %v5879 = vunpack.c.h.b16 %v5598
  %v5880 = vunpack.c.l.b16 %v5599
  %v5881 = vunpack.c.h.b16 %v5599
  %v5882 = vunpack.c.l.b16 %v5600
  %v5883 = vunpack.c.h.b16 %v5600
  %v5884 = vunpack.c.l.b16 %v5601
  %v5885 = vunpack.c.h.b16 %v5601
  %v5886 = vunpack.c.l.b16 %v5602
  %v5887 = vunpack.c.h.b16 %v5602
  %v5888 = vunpack.c.l.b16 %v5603
  %v5889 = vunpack.c.h.b16 %v5603
  %v5890 = vunpack.c.l.b16 %v5604
  %v5891 = vunpack.c.h.b16 %v5604
  %v5892 = vunpack.c.l.b16 %v5605
  %v5893 = vunpack.c.h.b16 %v5605
  %v5894 = vunpack.c.l.b16 %v5606
  %v5895 = vunpack.c.h.b16 %v5606
  %v5896 = vunpack.c.l.b16 %v5607
  %v5897 = vunpack.c.h.b16 %v5607
  %v5898 = vunpack.c.l.b16 %v5608
  %v5899 = vunpack.c.h.b16 %v5608
  %v5900 = vunpack.c.l.b16 %v5609
  %v5901 = vunpack.c.h.b16 %v5609
  %v5902 = vunpack.c.l.b16 %v5610
  %v5903 = vunpack.c.h.b16 %v5610
  %v5904 = vunpack.c.l.b16 %v5611
  %v5905 = vunpack.c.h.b16 %v5611
  %v5906 = vunpack.c.l.b16 %v5612
  %v5907 = vunpack.c.h.b16 %v5612
  %v5908 = vunpack.c.l.b16 %v5613
  %v5909 = vunpack.c.h.b16 %v5613
  %v5910 = vunpack.c.l.b16 %v5614
  %v5911 = vunpack.c.h.b16 %v5614
  %v5912 = vunpack.c.l.b16 %v5615
  %v5913 = vunpack.c.h.b16 %v5615
  %v5914 = vunpack.c.l.b16 %v5616
  %v5915 = vunpack.c.h.b16 %v5616
  %v5916 = vunpack.c.l.b16 %v5617
  %v5917 = vunpack.c.h.b16 %v5617
  %v5918 = vunpack.c.l.b16 %v5618
  %v5919 = vunpack.c.h.b16 %v5618
  %v5920 = vunpack.c.l.b16 %v5619
  %v5921 = vunpack.c.h.b16 %v5619
  %v5922 = vunpack.c.l.b16 %v5620
  %v5923 = vunpack.c.h.b16 %v5620
  %v5924 = vunpack.c.l.b16 %v5621
  %v5925 = vunpack.c.h.b16 %v5621
  %v5926 = vunpack.c.l.b16 %v5622
  %v5927 = vunpack.c.h.b16 %v5622
  %v5928 = vunpack.c.l.b16 %v5623
  %v5929 = vunpack.c.h.b16 %v5623
  %v5930 = vunpack.c.l.b16 %v5624
  %v5931 = vunpack.c.h.b16 %v5624
  %v5932 = vunpack.c.l.b16 %v5625
  %v5933 = vunpack.c.h.b16 %v5625
  %v5934 = vunpack.c.l.b16 %v5626
  %v5935 = vunpack.c.h.b16 %v5626
  %v5936 = vunpack.c.l.b16 %v5627
  %v5937 = vunpack.c.h.b16 %v5627
  %v5938 = vunpack.c.l.b16 %v5628
  %v5939 = vunpack.c.h.b16 %v5628
  %v5940 = vunpack.c.l.b16 %v5629
  %v5941 = vunpack.c.h.b16 %v5629
  %v5942 = vunpack.c.l.b16 %v5630
  %v5943 = vunpack.c.h.b16 %v5630
  %v5944 = vunpack.c.l.b16 %v5631
  %v5945 = vunpack.c.h.b16 %v5631
  %v5946 = vunpack.c.l.b16 %v5632
  %v5947 = vunpack.c.h.b16 %v5632
  %v5948 = vunpack.c.l.b16 %v5633
  %v5949 = vunpack.c.h.b16 %v5633
  %v5950 = vunpack.c.l.b16 %v5634
  %v5951 = vunpack.c.h.b16 %v5634
  %v5952 = vunpack.c.l.b16 %v5635
  %v5953 = vunpack.c.h.b16 %v5635
  %v5954 = vunpack.c.l.b16 %v5636
  %v5955 = vunpack.c.h.b16 %v5636
  %v5956 = vunpack.c.l.b16 %v5637
  %v5957 = vunpack.c.h.b16 %v5637
  %v5958 = vunpack.c.l.b16 %v5638
  %v5959 = vunpack.c.h.b16 %v5638
  %v5960 = vunpack.c.l.b16 %v5639
  %v5961 = vunpack.c.h.b16 %v5639
  %v5962 = vunpack.c.l.b16 %v5640
  %v5963 = vunpack.c.h.b16 %v5640
  %v5964 = vunpack.c.l.b16 %v5641
  %v5965 = vunpack.c.h.b16 %v5641
  %v5966 = vunpack.c.l.b16 %v5642
  %v5967 = vunpack.c.h.b16 %v5642
  %v5968 = vunpack.c.l.b16 %v5643
  %v5969 = vunpack.c.h.b16 %v5643
  %v5970 = vunpack.c.l.b16 %v5644
  %v5971 = vunpack.c.h.b16 %v5644
  %v5972 = vunpack.c.l.b16 %v5645
  %v5973 = vunpack.c.h.b16 %v5645
  %v5974 = vunpack.c.l.b16 %v5646
  %v5975 = vunpack.c.h.b16 %v5646
  %v5976 = vunpack.c.l.b16 %v5647
  %v5977 = vunpack.c.h.b16 %v5647
  %v5978 = vunpack.c.l.b16 %v5648
  %v5979 = vunpack.c.h.b16 %v5648
  %v5980 = vunpack.c.l.b16 %v5649
  %v5981 = vunpack.c.h.b16 %v5649
  %v5982 = vunpack.c.l.b16 %v5650
  %v5983 = vunpack.c.h.b16 %v5650
  %v5984 = vunpack.c.l.b16 %v5651
  %v5985 = vunpack.c.h.b16 %v5651
  %v5986 = vunpack.c.l.b16 %v5652
  %v5987 = vunpack.c.h.b16 %v5652
  %v5988 = vunpack.c.l.b16 %v5653
  %v5989 = vunpack.c.h.b16 %v5653
  %v5990 = vunpack.c.l.b16 %v5654
  %v5991 = vunpack.c.h.b16 %v5654
  %v5992 = vunpack.c.l.b16 %v5655
  %v5993 = vunpack.c.h.b16 %v5655
  %v5994 = vunpack.c.l.b16 %v5656
  %v5995 = vunpack.c.h.b16 %v5656
  %v5996 = vunpack.c.l.b16 %v5657
  %v5997 = vunpack.c.h.b16 %v5657
  %v5998 = vunpack.c.l.b16 %v5658
  %v5999 = vunpack.c.h.b16 %v5658
  %v6000 = vunpack.c.l.b16 %v5659
  %v6001 = vunpack.c.h.b16 %v5659
  %v6002 = vunpack.c.l.b16 %v5660
  %v6003 = vunpack.c.h.b16 %v5660
  %v6004 = vunpack.c.l.b16 %v5661
  %v6005 = vunpack.c.h.b16 %v5661
  %v6006 = vunpack.c.l.b16 %v5662
  %v6007 = vunpack.c.h.b16 %v5662
  %v6008 = vunpack.c.l.b16 %v5663
  %v6009 = vunpack.c.h.b16 %v5663
  %v6010 = vunpack.c.l.b16 %v5664
  %v6011 = vunpack.c.h.b16 %v5664
  %v6012 = vunpack.c.l.b16 %v5665
  %v6013 = vunpack.c.h.b16 %v5665
  %v6014 = vunpack.c.l.b16 %v5666
  %v6015 = vunpack.c.h.b16 %v5666
  %v6016 = vunpack.c.l.b16 %v5667
  %v6017 = vunpack.c.h.b16 %v5667
  %v6018 = vunpack.c.l.b16 %v5668
  %v6019 = vunpack.c.h.b16 %v5668
  %v6020 = vunpack.c.l.b16 %v5669
  %v6021 = vunpack.c.h.b16 %v5669
  %v6022 = vunpack.c.l.b16 %v5670
  %v6023 = vunpack.c.h.b16 %v5670
  %v6024 = vunpack.c.l.b16 %v5671
  %v6025 = vunpack.c.h.b16 %v5671
  %v6026 = vunpack.c.l.b16 %v5672
  %v6027 = vunpack.c.h.b16 %v5672
  %v6028 = vunpack.c.l.b16 %v5673
  %v6029 = vunpack.c.h.b16 %v5673
  %v6030 = vunpack.c.l.b16 %v5674
  %v6031 = vunpack.c.h.b16 %v5674
  %v6032 = vunpack.c.l.b16 %v5675
  %v6033 = vunpack.c.h.b16 %v5675
  %v6034 = vunpack.c.l.b16 %v5676
  %v6035 = vunpack.c.h.b16 %v5676
  %v6036 = vunpack.c.l.b16 %v5677
  %v6037 = vunpack.c.h.b16 %v5677
  %v6038 = vunpack.c.l.b16 %v5678
  %v6039 = vunpack.c.h.b16 %v5678
  %v6040 = vunpack.c.l.b16 %v5679
  %v6041 = vunpack.c.h.b16 %v5679
  %v6042 = vunpack.c.l.b16 %v5680
  %v6043 = vunpack.c.h.b16 %v5680
  %v6044 = vunpack.c.l.b16 %v5681
  %v6045 = vunpack.c.h.b16 %v5681
  %v6046 = vunpack.c.l.b16 %v5682
  %v6047 = vunpack.c.h.b16 %v5682
  %v6048 = vunpack.c.l.b16 %v5683
  %v6049 = vunpack.c.h.b16 %v5683
  %v6050 = vunpack.c.l.b16 %v5684
  %v6051 = vunpack.c.h.b16 %v5684
  %v6052 = vunpack.c.l.b16 %v5685
  %v6053 = vunpack.c.h.b16 %v5685
  %v6054 = vunpack.c.l.b16 %v5686
  %v6055 = vunpack.c.h.b16 %v5686
  %v6056 = vunpack.c.l.b16 %v5687
  %v6057 = vunpack.c.h.b16 %v5687
  %v6058 = vunpack.c.l.b16 %v5688
  %v6059 = vunpack.c.h.b16 %v5688
  %v6060 = vunpack.c.l.b16 %v5689
  %v6061 = vunpack.c.h.b16 %v5689
  %v6062 = vunpack.c.l.b16 %v5690
  %v6063 = vunpack.c.h.b16 %v5690
  %v6064 = vunpack.c.l.b16 %v5691
  %v6065 = vunpack.c.h.b16 %v5691
  %v6066 = vunpack.c.l.b16 %v5692
  %v6067 = vunpack.c.h.b16 %v5692
  %v6068 = vunpack.c.l.b16 %v5693
  %v6069 = vunpack.c.h.b16 %v5693
  %v6070 = vunpack.c.l.b16 %v5694
  %v6071 = vunpack.c.h.b16 %v5694
  %v6072 = vunpack.c.l.b16 %v5695
  %v6073 = vunpack.c.h.b16 %v5695
  %v6074 = vunpack.c.l.b16 %v5696
  %v6075 = vunpack.c.h.b16 %v5696
  %v6076 = vunpack.c.l.b16 %v5697
  %v6077 = vunpack.c.h.b16 %v5697
  %v6078 = vunpack.c.l.b16 %v5698
  %v6079 = vunpack.c.h.b16 %v5698
  %v6080 = vunpack.c.l.b16 %v5699
  %v6081 = vunpack.c.h.b16 %v5699
  %v6082 = vunpack.c.l.b16 %v5700
  %v6083 = vunpack.c.h.b16 %v5700
  %v6084 = vunpack.c.l.b16 %v5701
  %v6085 = vunpack.c.h.b16 %v5701
  %v6086 = vpack.c.b16 %v5832, %v5830
  %v6087 = vpack.c.b16 %v5833, %v5831
  %v6088 = vpack.c.b16 %v5836, %v5834
  %v6089 = vpack.c.b16 %v5837, %v5835
  %v6090 = vpack.c.b16 %v5840, %v5838
  %v6091 = vpack.c.b16 %v5841, %v5839
  %v6092 = vpack.c.b16 %v5844, %v5842
  %v6093 = vpack.c.b16 %v5845, %v5843
  %v6094 = vpack.c.b16 %v5848, %v5846
  %v6095 = vpack.c.b16 %v5849, %v5847
  %v6096 = vpack.c.b16 %v5852, %v5850
  %v6097 = vpack.c.b16 %v5853, %v5851
  %v6098 = vpack.c.b16 %v5856, %v5854
  %v6099 = vpack.c.b16 %v5857, %v5855
  %v6100 = vpack.c.b16 %v5860, %v5858
  %v6101 = vpack.c.b16 %v5861, %v5859
  %v6102 = vpack.c.b16 %v5864, %v5862
  %v6103 = vpack.c.b16 %v5865, %v5863
  %v6104 = vpack.c.b16 %v5868, %v5866
  %v6105 = vpack.c.b16 %v5869, %v5867
  %v6106 = vpack.c.b16 %v5872, %v5870
  %v6107 = vpack.c.b16 %v5873, %v5871
  %v6108 = vpack.c.b16 %v5876, %v5874
  %v6109 = vpack.c.b16 %v5877, %v5875
  %v6110 = vpack.c.b16 %v5880, %v5878
  %v6111 = vpack.c.b16 %v5881, %v5879
  %v6112 = vpack.c.b16 %v5884, %v5882
  %v6113 = vpack.c.b16 %v5885, %v5883
  %v6114 = vpack.c.b16 %v5888, %v5886
  %v6115 = vpack.c.b16 %v5889, %v5887
  %v6116 = vpack.c.b16 %v5892, %v5890
  %v6117 = vpack.c.b16 %v5893, %v5891
  %v6118 = vpack.c.b16 %v5896, %v5894
  %v6119 = vpack.c.b16 %v5897, %v5895
  %v6120 = vpack.c.b16 %v5900, %v5898
  %v6121 = vpack.c.b16 %v5901, %v5899
  %v6122 = vpack.c.b16 %v5904, %v5902
  %v6123 = vpack.c.b16 %v5905, %v5903
  %v6124 = vpack.c.b16 %v5908, %v5906
  %v6125 = vpack.c.b16 %v5909, %v5907
  %v6126 = vpack.c.b16 %v5912, %v5910
  %v6127 = vpack.c.b16 %v5913, %v5911
  %v6128 = vpack.c.b16 %v5916, %v5914
  %v6129 = vpack.c.b16 %v5917, %v5915
  %v6130 = vpack.c.b16 %v5920, %v5918
  %v6131 = vpack.c.b16 %v5921, %v5919
  %v6132 = vpack.c.b16 %v5924, %v5922
  %v6133 = vpack.c.b16 %v5925, %v5923
  %v6134 = vpack.c.b16 %v5928, %v5926
  %v6135 = vpack.c.b16 %v5929, %v5927
  %v6136 = vpack.c.b16 %v5932, %v5930
  %v6137 = vpack.c.b16 %v5933, %v5931
  %v6138 = vpack.c.b16 %v5936, %v5934
  %v6139 = vpack.c.b16 %v5937, %v5935
  %v6140 = vpack.c.b16 %v5940, %v5938
  %v6141 = vpack.c.b16 %v5941, %v5939
  %v6142 = vpack.c.b16 %v5944, %v5942
  %v6143 = vpack.c.b16 %v5945, %v5943
  %v6144 = vpack.c.b16 %v5948, %v5946
  %v6145 = vpack.c.b16 %v5949, %v5947
  %v6146 = vpack.c.b16 %v5952, %v5950
  %v6147 = vpack.c.b16 %v5953, %v5951
  %v6148 = vpack.c.b16 %v5956, %v5954
  %v6149 = vpack.c.b16 %v5957, %v5955
  %v6150 = vpack.c.b16 %v5960, %v5958
  %v6151 = vpack.c.b16 %v5961, %v5959
  %v6152 = vpack.c.b16 %v5964, %v5962
  %v6153 = vpack.c.b16 %v5965, %v5963
  %v6154 = vpack.c.b16 %v5968, %v5966
  %v6155 = vpack.c.b16 %v5969, %v5967
  %v6156 = vpack.c.b16 %v5972, %v5970
  %v6157 = vpack.c.b16 %v5973, %v5971
  %v6158 = vpack.c.b16 %v5976, %v5974
  %v6159 = vpack.c.b16 %v5977, %v5975
  %v6160 = vpack.c.b16 %v5980, %v5978
  %v6161 = vpack.c.b16 %v5981, %v5979
  %v6162 = vpack.c.b16 %v5984, %v5982
  %v6163 = vpack.c.b16 %v5985, %v5983
  %v6164 = vpack.c.b16 %v5988, %v5986
  %v6165 = vpack.c.b16 %v5989, %v5987
  %v6166 = vpack.c.b16 %v5992, %v5990
  %v6167 = vpack.c.b16 %v5993, %v5991
  %v6168 = vpack.c.b16 %v5996, %v5994
  %v6169 = vpack.c.b16 %v5997, %v5995
  %v6170 = vpack.c.b16 %v6000, %v5998
  %v6171 = vpack.c.b16 %v6001, %v5999
  %v6172 = vpack.c.b16 %v6004, %v6002
  %v6173 = vpack.c.b16 %v6005, %v6003
  %v6174 = vpack.c.b16 %v6008, %v6006
  %v6175 = vpack.c.b16 %v6009, %v6007
  %v6176 = vpack.c.b16 %v6012, %v6010
  %v6177 = vpack.c.b16 %v6013, %v6011
  %v6178 = vpack.c.b16 %v6016, %v6014
  %v6179 = vpack.c.b16 %v6017, %v6015
  %v6180 = vpack.c.b16 %v6020, %v6018
  %v6181 = vpack.c.b16 %v6021, %v6019
  %v6182 = vpack.c.b16 %v6024, %v6022
  %v6183 = vpack.c.b16 %v6025, %v6023
  %v6184 = vpack.c.b16 %v6028, %v6026
  %v6185 = vpack.c.b16 %v6029, %v6027
  %v6186 = vpack.c.b16 %v6032, %v6030
  %v6187 = vpack.c.b16 %v6033, %v6031
  %v6188 = vpack.c.b16 %v6036, %v6034
  %v6189 = vpack.c.b16 %v6037, %v6035
  %v6190 = vpack.c.b16 %v6040, %v6038
  %v6191 = vpack.c.b16 %v6041, %v6039
  %v6192 = vpack.c.b16 %v6044, %v6042
  %v6193 = vpack.c.b16 %v6045, %v6043
  %v6194 = vpack.c.b16 %v6048, %v6046
  %v6195 = vpack.c.b16 %v6049, %v6047
  %v6196 = vpack.c.b16 %v6052, %v6050
  %v6197 = vpack.c.b16 %v6053, %v6051
  %v6198 = vpack.c.b16 %v6056, %v6054
  %v6199 = vpack.c.b16 %v6057, %v6055
  %v6200 = vpack.c.b16 %v6060, %v6058
  %v6201 = vpack.c.b16 %v6061, %v6059
  %v6202 = vpack.c.b16 %v6064, %v6062
  %v6203 = vpack.c.b16 %v6065, %v6063
  %v6204 = vpack.c.b16 %v6068, %v6066
  %v6205 = vpack.c.b16 %v6069, %v6067
  %v6206 = vpack.c.b16 %v6072, %v6070
  %v6207 = vpack.c.b16 %v6073, %v6071
  %v6208 = vpack.c.b16 %v6076, %v6074
  %v6209 = vpack.c.b16 %v6077, %v6075
  %v6210 = vpack.c.b16 %v6080, %v6078
  %v6211 = vpack.c.b16 %v6081, %v6079
  %v6212 = vpack.c.b16 %v6084, %v6082
  %v6213 = vpack.c.b16 %v6085, %v6083
  %6342 = vmatprep.subr.bf16.mxu0 %v6087
  %6343 = vmatpush1.bf16.msra.mxu0 %v6086
  %6344 = vmatprep.subr.bf16.mxu0 %v6089
  %6345 = vmatpush1.bf16.msra.mxu0 %v6088
  %6346 = vmatprep.subr.bf16.mxu0 %v6091
  %6347 = vmatpush1.bf16.msra.mxu0 %v6090
  %6348 = vmatprep.subr.bf16.mxu0 %v6093
  %6349 = vmatpush1.bf16.msra.mxu0 %v6092
  %6350 = vmatprep.subr.bf16.mxu0 %v6095
  %6351 = vmatpush1.bf16.msra.mxu0 %v6094
  %6352 = vmatprep.subr.bf16.mxu0 %v6097
  %6353 = vmatpush1.bf16.msra.mxu0 %v6096
  %6354 = vmatprep.subr.bf16.mxu0 %v6099
  %6355 = vmatpush1.bf16.msra.mxu0 %v6098
  %6356 = vmatprep.subr.bf16.mxu0 %v6101
  %6357 = vmatpush1.bf16.msra.mxu0 %v6100
  %6358 = vmatprep.subr.bf16.mxu0 %v6103
  %6359 = vmatpush1.bf16.msra.mxu0 %v6102
  %6360 = vmatprep.subr.bf16.mxu0 %v6105
  %6361 = vmatpush1.bf16.msra.mxu0 %v6104
  %6362 = vmatprep.subr.bf16.mxu0 %v6107
  %6363 = vmatpush1.bf16.msra.mxu0 %v6106
  %6364 = vmatprep.subr.bf16.mxu0 %v6109
  %6365 = vmatpush1.bf16.msra.mxu0 %v6108
  %6366 = vmatprep.subr.bf16.mxu0 %v6111
  %6367 = vmatpush1.bf16.msra.mxu0 %v6110
  %6368 = vmatprep.subr.bf16.mxu0 %v6113
  %6369 = vmatpush1.bf16.msra.mxu0 %v6112
  %6370 = vmatprep.subr.bf16.mxu0 %v6115
  %6371 = vmatpush1.bf16.msra.mxu0 %v6114
  %6372 = vmatprep.subr.bf16.mxu0 %v6117
  %6373 = vmatpush1.bf16.msra.mxu0 %v6116
  %6374 = vmatprep.mubr.bf16.mxu0 %v5519
  %6375 = vmatmul.mubr.bf16.gmra.mrb[0].mxu0 %v5518
  %v6376 = vpop.f32.mrb[0].mxu0
  %v6377 = vadd.f32 0.0, %v6376
  %v6378 = vpop.f32.mrb[0].mxu0
  %v6379 = vadd.f32 0.0, %v6378
  %v6380 = vpop.f32.mrb[0].mxu0
  %v6381 = vadd.f32 0.0, %v6380
  %v6382 = vpop.f32.mrb[0].mxu0
  %v6383 = vadd.f32 0.0, %v6382
  %6384 = vmatprep.mubr.bf16.mxu0 %v5527
  %6385 = vmatmul.mubr.bf16.gmra.mrb[0].mxu0 %v5526
  %v6386 = vpop.f32.mrb[0].mxu0
  %v6387 = vadd.f32 0.0, %v6386
  %v6388 = vpop.f32.mrb[0].mxu0
  %v6389 = vadd.f32 0.0, %v6388
  %v6390 = vpop.f32.mrb[0].mxu0
  %v6391 = vadd.f32 0.0, %v6390
  %v6392 = vpop.f32.mrb[0].mxu0
  %v6393 = vadd.f32 0.0, %v6392
  %6394 = vmatprep.mubr.bf16.mxu0 %v5535
  %6395 = vmatmul.mubr.bf16.gmra.mrb[0].mxu0 %v5534
  %v6396 = vpop.f32.mrb[0].mxu0
  %v6397 = vadd.f32 0.0, %v6396
  %v6398 = vpop.f32.mrb[0].mxu0
  %v6399 = vadd.f32 0.0, %v6398
  %v6400 = vpop.f32.mrb[0].mxu0
  %v6401 = vadd.f32 0.0, %v6400
  %v6402 = vpop.f32.mrb[0].mxu0
  %v6403 = vadd.f32 0.0, %v6402
  %6404 = vmatprep.mubr.bf16.mxu0 %v5543
  %6405 = vmatmul.mubr.bf16.gmra.mrb[0].mxu0 %v5542
  %v6406 = vpop.f32.mrb[0].mxu0
  %v6407 = vadd.f32 0.0, %v6406
  %v6408 = vpop.f32.mrb[0].mxu0
  %v6409 = vadd.f32 0.0, %v6408
  %v6410 = vpop.f32.mrb[0].mxu0
  %v6411 = vadd.f32 0.0, %v6410
  %v6412 = vpop.f32.mrb[0].mxu0
  %v6413 = vadd.f32 0.0, %v6412
  %6414 = vmatprep.mubr.bf16.mxu0 %v5551
  %6415 = vmatmul.mubr.bf16.gmra.mrb[0].mxu0 %v5550
  %v6416 = vpop.f32.mrb[0].mxu0
  %v6417 = vadd.f32 0.0, %v6416
  %v6418 = vpop.f32.mrb[0].mxu0
  %v6419 = vadd.f32 0.0, %v6418
  %v6420 = vpop.f32.mrb[0].mxu0
  %v6421 = vadd.f32 0.0, %v6420
  %v6422 = vpop.f32.mrb[0].mxu0
  %v6423 = vadd.f32 0.0, %v6422
  %6424 = vmatprep.mubr.bf16.mxu0 %v5559
  %6425 = vmatmul.mubr.bf16.gmra.mrb[0].mxu0 %v5558
  %v6426 = vpop.f32.mrb[0].mxu0
  %v6427 = vadd.f32 0.0, %v6426
  %v6428 = vpop.f32.mrb[0].mxu0
  %v6429 = vadd.f32 0.0, %v6428
  %v6430 = vpop.f32.mrb[0].mxu0
  %v6431 = vadd.f32 0.0, %v6430
  %v6432 = vpop.f32.mrb[0].mxu0
  %v6433 = vadd.f32 0.0, %v6432
  %6434 = vmatprep.mubr.bf16.mxu0 %v5567
  %6435 = vmatmul.mubr.bf16.gmra.mrb[0].mxu0 %v5566
  %v6436 = vpop.f32.mrb[0].mxu0
  %v6437 = vadd.f32 0.0, %v6436
  %v6438 = vpop.f32.mrb[0].mxu0
  %v6439 = vadd.f32 0.0, %v6438
  %v6440 = vpop.f32.mrb[0].mxu0
  %v6441 = vadd.f32 0.0, %v6440
  %v6442 = vpop.f32.mrb[0].mxu0
  %v6443 = vadd.f32 0.0, %v6442
  %6444 = vdwg.mxu0
  %6445 = vmatprep.subr.bf16.mxu0 %v6119
  %6446 = vmatpush1.bf16.msra.mxu0 %v6118
  %6447 = vmatprep.subr.bf16.mxu0 %v6121
  %6448 = vmatpush1.bf16.msra.mxu0 %v6120
  %6449 = vmatprep.subr.bf16.mxu0 %v6123
  %6450 = vmatpush1.bf16.msra.mxu0 %v6122
  %6451 = vmatprep.subr.bf16.mxu0 %v6125
  %6452 = vmatpush1.bf16.msra.mxu0 %v6124
  %6453 = vmatprep.subr.bf16.mxu0 %v6127
  %6454 = vmatpush1.bf16.msra.mxu0 %v6126
  %6455 = vmatprep.subr.bf16.mxu0 %v6129
  %6456 = vmatpush1.bf16.msra.mxu0 %v6128
  %6457 = vmatprep.subr.bf16.mxu0 %v6131
  %6458 = vmatpush1.bf16.msra.mxu0 %v6130
  %6459 = vmatprep.subr.bf16.mxu0 %v6133
  %6460 = vmatpush1.bf16.msra.mxu0 %v6132
  %6461 = vmatprep.subr.bf16.mxu0 %v6135
  %6462 = vmatpush1.bf16.msra.mxu0 %v6134
  %6463 = vmatprep.subr.bf16.mxu0 %v6137
  %6464 = vmatpush1.bf16.msra.mxu0 %v6136
  %6465 = vmatprep.subr.bf16.mxu0 %v6139
  %6466 = vmatpush1.bf16.msra.mxu0 %v6138
  %6467 = vmatprep.subr.bf16.mxu0 %v6141
  %6468 = vmatpush1.bf16.msra.mxu0 %v6140
  %6469 = vmatprep.subr.bf16.mxu0 %v6143
  %6470 = vmatpush1.bf16.msra.mxu0 %v6142
  %6471 = vmatprep.subr.bf16.mxu0 %v6145
  %6472 = vmatpush1.bf16.msra.mxu0 %v6144
  %6473 = vmatprep.subr.bf16.mxu0 %v6147
  %6474 = vmatpush1.bf16.msra.mxu0 %v6146
  %6475 = vmatprep.subr.bf16.mxu0 %v6149
  %6476 = vmatpush1.bf16.msra.mxu0 %v6148
  %6477 = vmatprep.mubr.bf16.mxu0 %v5521
  %6478 = vmatmul.mubr.bf16.gmra.mrb[0].mxu0 %v5520
  %v6479 = vpop.f32.mrb[0].mxu0
  %v6480 = vadd.f32 %v6377, %v6479
  %v6481 = vpop.f32.mrb[0].mxu0
  %v6482 = vadd.f32 %v6379, %v6481
  %v6483 = vpop.f32.mrb[0].mxu0
  %v6484 = vadd.f32 %v6381, %v6483
  %v6485 = vpop.f32.mrb[0].mxu0
  %v6486 = vadd.f32 %v6383, %v6485
  %6487 = vmatprep.mubr.bf16.mxu0 %v5529
  %6488 = vmatmul.mubr.bf16.gmra.mrb[0].mxu0 %v5528
  %v6489 = vpop.f32.mrb[0].mxu0
  %v6490 = vadd.f32 %v6387, %v6489
  %v6491 = vpop.f32.mrb[0].mxu0
  %v6492 = vadd.f32 %v6389, %v6491
  %v6493 = vpop.f32.mrb[0].mxu0
  %v6494 = vadd.f32 %v6391, %v6493
  %v6495 = vpop.f32.mrb[0].mxu0
  %v6496 = vadd.f32 %v6393, %v6495
  %6497 = vmatprep.mubr.bf16.mxu0 %v5537
  %6498 = vmatmul.mubr.bf16.gmra.mrb[0].mxu0 %v5536
  %v6499 = vpop.f32.mrb[0].mxu0
  %v6500 = vadd.f32 %v6397, %v6499
  %v6501 = vpop.f32.mrb[0].mxu0
  %v6502 = vadd.f32 %v6399, %v6501
  %v6503 = vpop.f32.mrb[0].mxu0
  %v6504 = vadd.f32 %v6401, %v6503
  %v6505 = vpop.f32.mrb[0].mxu0
  %v6506 = vadd.f32 %v6403, %v6505
  %6507 = vmatprep.mubr.bf16.mxu0 %v5545
  %6508 = vmatmul.mubr.bf16.gmra.mrb[0].mxu0 %v5544
  %v6509 = vpop.f32.mrb[0].mxu0
  %v6510 = vadd.f32 %v6407, %v6509
  %v6511 = vpop.f32.mrb[0].mxu0
  %v6512 = vadd.f32 %v6409, %v6511
  %v6513 = vpop.f32.mrb[0].mxu0
  %v6514 = vadd.f32 %v6411, %v6513
  %v6515 = vpop.f32.mrb[0].mxu0
  %v6516 = vadd.f32 %v6413, %v6515
  %6517 = vmatprep.mubr.bf16.mxu0 %v5553
  %6518 = vmatmul.mubr.bf16.gmra.mrb[0].mxu0 %v5552
  %v6519 = vpop.f32.mrb[0].mxu0
  %v6520 = vadd.f32 %v6417, %v6519
  %v6521 = vpop.f32.mrb[0].mxu0
  %v6522 = vadd.f32 %v6419, %v6521
  %v6523 = vpop.f32.mrb[0].mxu0
  %v6524 = vadd.f32 %v6421, %v6523
  %v6525 = vpop.f32.mrb[0].mxu0
  %v6526 = vadd.f32 %v6423, %v6525
  %6527 = vmatprep.mubr.bf16.mxu0 %v5561
  %6528 = vmatmul.mubr.bf16.gmra.mrb[0].mxu0 %v5560
  %v6529 = vpop.f32.mrb[0].mxu0
  %v6530 = vadd.f32 %v6427, %v6529
  %v6531 = vpop.f32.mrb[0].mxu0
  %v6532 = vadd.f32 %v6429, %v6531
  %v6533 = vpop.f32.mrb[0].mxu0
  %v6534 = vadd.f32 %v6431, %v6533
  %v6535 = vpop.f32.mrb[0].mxu0
  %v6536 = vadd.f32 %v6433, %v6535
  %6537 = vmatprep.mubr.bf16.mxu0 %v5569
  %6538 = vmatmul.mubr.bf16.gmra.mrb[0].mxu0 %v5568
  %v6539 = vpop.f32.mrb[0].mxu0
  %v6540 = vadd.f32 %v6437, %v6539
  %v6541 = vpop.f32.mrb[0].mxu0
  %v6542 = vadd.f32 %v6439, %v6541
  %v6543 = vpop.f32.mrb[0].mxu0
  %v6544 = vadd.f32 %v6441, %v6543
  %v6545 = vpop.f32.mrb[0].mxu0
  %v6546 = vadd.f32 %v6443, %v6545
  %6547 = vdwg.mxu0
  %6548 = vmatprep.subr.bf16.mxu0 %v6151
  %6549 = vmatpush1.bf16.msra.mxu0 %v6150
  %6550 = vmatprep.subr.bf16.mxu0 %v6153
  %6551 = vmatpush1.bf16.msra.mxu0 %v6152
  %6552 = vmatprep.subr.bf16.mxu0 %v6155
  %6553 = vmatpush1.bf16.msra.mxu0 %v6154
  %6554 = vmatprep.subr.bf16.mxu0 %v6157
  %6555 = vmatpush1.bf16.msra.mxu0 %v6156
  %6556 = vmatprep.subr.bf16.mxu0 %v6159
  %6557 = vmatpush1.bf16.msra.mxu0 %v6158
  %6558 = vmatprep.subr.bf16.mxu0 %v6161
  %6559 = vmatpush1.bf16.msra.mxu0 %v6160
  %6560 = vmatprep.subr.bf16.mxu0 %v6163
  %6561 = vmatpush1.bf16.msra.mxu0 %v6162
  %6562 = vmatprep.subr.bf16.mxu0 %v6165
  %6563 = vmatpush1.bf16.msra.mxu0 %v6164
  %6564 = vmatprep.subr.bf16.mxu0 %v6167
  %6565 = vmatpush1.bf16.msra.mxu0 %v6166
  %6566 = vmatprep.subr.bf16.mxu0 %v6169
  %6567 = vmatpush1.bf16.msra.mxu0 %v6168
  %6568 = vmatprep.subr.bf16.mxu0 %v6171
  %6569 = vmatpush1.bf16.msra.mxu0 %v6170
  %6570 = vmatprep.subr.bf16.mxu0 %v6173
  %6571 = vmatpush1.bf16.msra.mxu0 %v6172
  %6572 = vmatprep.subr.bf16.mxu0 %v6175
  %6573 = vmatpush1.bf16.msra.mxu0 %v6174
  %6574 = vmatprep.subr.bf16.mxu0 %v6177
  %6575 = vmatpush1.bf16.msra.mxu0 %v6176
  %6576 = vmatprep.subr.bf16.mxu0 %v6179
  %6577 = vmatpush1.bf16.msra.mxu0 %v6178
  %6578 = vmatprep.subr.bf16.mxu0 %v6181
  %6579 = vmatpush1.bf16.msra.mxu0 %v6180
  %6580 = vmatprep.mubr.bf16.mxu0 %v5523
  %6581 = vmatmul.mubr.bf16.gmra.mrb[0].mxu0 %v5522
  %v6582 = vpop.f32.mrb[0].mxu0
  %v6583 = vadd.f32 %v6480, %v6582
  %v6584 = vpop.f32.mrb[0].mxu0
  %v6585 = vadd.f32 %v6482, %v6584
  %v6586 = vpop.f32.mrb[0].mxu0
  %v6587 = vadd.f32 %v6484, %v6586
  %v6588 = vpop.f32.mrb[0].mxu0
  %v6589 = vadd.f32 %v6486, %v6588
  %6590 = vmatprep.mubr.bf16.mxu0 %v5531
  %6591 = vmatmul.mubr.bf16.gmra.mrb[0].mxu0 %v5530
  %v6592 = vpop.f32.mrb[0].mxu0
  %v6593 = vadd.f32 %v6490, %v6592
  %v6594 = vpop.f32.mrb[0].mxu0
  %v6595 = vadd.f32 %v6492, %v6594
  %v6596 = vpop.f32.mrb[0].mxu0
  %v6597 = vadd.f32 %v6494, %v6596
  %v6598 = vpop.f32.mrb[0].mxu0
  %v6599 = vadd.f32 %v6496, %v6598
  %6600 = vmatprep.mubr.bf16.mxu0 %v5539
  %6601 = vmatmul.mubr.bf16.gmra.mrb[0].mxu0 %v5538
  %v6602 = vpop.f32.mrb[0].mxu0
  %v6603 = vadd.f32 %v6500, %v6602
  %v6604 = vpop.f32.mrb[0].mxu0
  %v6605 = vadd.f32 %v6502, %v6604
  %v6606 = vpop.f32.mrb[0].mxu0
  %v6607 = vadd.f32 %v6504, %v6606
  %v6608 = vpop.f32.mrb[0].mxu0
  %v6609 = vadd.f32 %v6506, %v6608
  %6610 = vmatprep.mubr.bf16.mxu0 %v5547
  %6611 = vmatmul.mubr.bf16.gmra.mrb[0].mxu0 %v5546
  %v6612 = vpop.f32.mrb[0].mxu0
  %v6613 = vadd.f32 %v6510, %v6612
  %v6614 = vpop.f32.mrb[0].mxu0
  %v6615 = vadd.f32 %v6512, %v6614
  %v6616 = vpop.f32.mrb[0].mxu0
  %v6617 = vadd.f32 %v6514, %v6616
  %v6618 = vpop.f32.mrb[0].mxu0
  %v6619 = vadd.f32 %v6516, %v6618
  %6620 = vmatprep.mubr.bf16.mxu0 %v5555
  %6621 = vmatmul.mubr.bf16.gmra.mrb[0].mxu0 %v5554
  %v6622 = vpop.f32.mrb[0].mxu0
  %v6623 = vadd.f32 %v6520, %v6622
  %v6624 = vpop.f32.mrb[0].mxu0
  %v6625 = vadd.f32 %v6522, %v6624
  %v6626 = vpop.f32.mrb[0].mxu0
  %v6627 = vadd.f32 %v6524, %v6626
  %v6628 = vpop.f32.mrb[0].mxu0
  %v6629 = vadd.f32 %v6526, %v6628
  %6630 = vmatprep.mubr.bf16.mxu0 %v5563
  %6631 = vmatmul.mubr.bf16.gmra.mrb[0].mxu0 %v5562
  %v6632 = vpop.f32.mrb[0].mxu0
  %v6633 = vadd.f32 %v6530, %v6632
  %v6634 = vpop.f32.mrb[0].mxu0
  %v6635 = vadd.f32 %v6532, %v6634
  %v6636 = vpop.f32.mrb[0].mxu0
  %v6637 = vadd.f32 %v6534, %v6636
  %v6638 = vpop.f32.mrb[0].mxu0
  %v6639 = vadd.f32 %v6536, %v6638
  %6640 = vmatprep.mubr.bf16.mxu0 %v5571
  %6641 = vmatmul.mubr.bf16.gmra.mrb[0].mxu0 %v5570
  %v6642 = vpop.f32.mrb[0].mxu0
  %v6643 = vadd.f32 %v6540, %v6642
  %v6644 = vpop.f32.mrb[0].mxu0
  %v6645 = vadd.f32 %v6542, %v6644
  %v6646 = vpop.f32.mrb[0].mxu0
  %v6647 = vadd.f32 %v6544, %v6646
  %v6648 = vpop.f32.mrb[0].mxu0
  %v6649 = vadd.f32 %v6546, %v6648
  %6650 = vdwg.mxu0
  %6651 = vmatprep.subr.bf16.mxu0 %v6183
  %6652 = vmatpush1.bf16.msra.mxu0 %v6182
  %6653 = vmatprep.subr.bf16.mxu0 %v6185
  %6654 = vmatpush1.bf16.msra.mxu0 %v6184
  %6655 = vmatprep.subr.bf16.mxu0 %v6187
  %6656 = vmatpush1.bf16.msra.mxu0 %v6186
  %6657 = vmatprep.subr.bf16.mxu0 %v6189
  %6658 = vmatpush1.bf16.msra.mxu0 %v6188
  %6659 = vmatprep.subr.bf16.mxu0 %v6191
  %6660 = vmatpush1.bf16.msra.mxu0 %v6190
  %6661 = vmatprep.subr.bf16.mxu0 %v6193
  %6662 = vmatpush1.bf16.msra.mxu0 %v6192
  %6663 = vmatprep.subr.bf16.mxu0 %v6195
  %6664 = vmatpush1.bf16.msra.mxu0 %v6194
  %6665 = vmatprep.subr.bf16.mxu0 %v6197
  %6666 = vmatpush1.bf16.msra.mxu0 %v6196
  %6667 = vmatprep.subr.bf16.mxu0 %v6199
  %6668 = vmatpush1.bf16.msra.mxu0 %v6198
  %6669 = vmatprep.subr.bf16.mxu0 %v6201
  %6670 = vmatpush1.bf16.msra.mxu0 %v6200
  %6671 = vmatprep.subr.bf16.mxu0 %v6203
  %6672 = vmatpush1.bf16.msra.mxu0 %v6202
  %6673 = vmatprep.subr.bf16.mxu0 %v6205
  %6674 = vmatpush1.bf16.msra.mxu0 %v6204
  %6675 = vmatprep.subr.bf16.mxu0 %v6207
  %6676 = vmatpush1.bf16.msra.mxu0 %v6206
  %6677 = vmatprep.subr.bf16.mxu0 %v6209
  %6678 = vmatpush1.bf16.msra.mxu0 %v6208
  %6679 = vmatprep.subr.bf16.mxu0 %v6211
  %6680 = vmatpush1.bf16.msra.mxu0 %v6210
  %6681 = vmatprep.subr.bf16.mxu0 %v6213
  %6682 = vmatpush1.bf16.msra.mxu0 %v6212
  %6683 = vmatprep.mubr.bf16.mxu0 %v5525
  %6684 = vmatmul.mubr.bf16.gmra.mrb[0].mxu0 %v5524
  %v6685 = vpop.f32.mrb[0].mxu0
  %v6686 = vadd.f32 %v6583, %v6685
  %v6687 = vpop.f32.mrb[0].mxu0
  %v6688 = vadd.f32 %v6585, %v6687
  %v6689 = vpop.f32.mrb[0].mxu0
  %v6690 = vadd.f32 %v6587, %v6689
  %v6691 = vpop.f32.mrb[0].mxu0
  %v6692 = vadd.f32 %v6589, %v6691
  %6693 = vmatprep.mubr.bf16.mxu0 %v5533
  %6694 = vmatmul.mubr.bf16.gmra.mrb[0].mxu0 %v5532
  %v6695 = vpop.f32.mrb[0].mxu0
  %v6696 = vadd.f32 %v6593, %v6695
  %v6697 = vpop.f32.mrb[0].mxu0
  %v6698 = vadd.f32 %v6595, %v6697
  %v6699 = vpop.f32.mrb[0].mxu0
  %v6700 = vadd.f32 %v6597, %v6699
  %v6701 = vpop.f32.mrb[0].mxu0
  %v6702 = vadd.f32 %v6599, %v6701
  %6703 = vmatprep.mubr.bf16.mxu0 %v5541
  %6704 = vmatmul.mubr.bf16.gmra.mrb[0].mxu0 %v5540
  %v6705 = vpop.f32.mrb[0].mxu0
  %v6706 = vadd.f32 %v6603, %v6705
  %v6707 = vpop.f32.mrb[0].mxu0
  %v6708 = vadd.f32 %v6605, %v6707
  %v6709 = vpop.f32.mrb[0].mxu0
  %v6710 = vadd.f32 %v6607, %v6709
  %v6711 = vpop.f32.mrb[0].mxu0
  %v6712 = vadd.f32 %v6609, %v6711
  %6713 = vmatprep.mubr.bf16.mxu0 %v5549
  %6714 = vmatmul.mubr.bf16.gmra.mrb[0].mxu0 %v5548
  %v6715 = vpop.f32.mrb[0].mxu0
  %v6716 = vadd.f32 %v6613, %v6715
  %v6717 = vpop.f32.mrb[0].mxu0
  %v6718 = vadd.f32 %v6615, %v6717
  %v6719 = vpop.f32.mrb[0].mxu0
  %v6720 = vadd.f32 %v6617, %v6719
  %v6721 = vpop.f32.mrb[0].mxu0
  %v6722 = vadd.f32 %v6619, %v6721
  %6723 = vmatprep.mubr.bf16.mxu0 %v5557
  %6724 = vmatmul.mubr.bf16.gmra.mrb[0].mxu0 %v5556
  %v6725 = vpop.f32.mrb[0].mxu0
  %v6726 = vadd.f32 %v6623, %v6725
  %v6727 = vpop.f32.mrb[0].mxu0
  %v6728 = vadd.f32 %v6625, %v6727
  %v6729 = vpop.f32.mrb[0].mxu0
  %v6730 = vadd.f32 %v6627, %v6729
  %v6731 = vpop.f32.mrb[0].mxu0
  %v6732 = vadd.f32 %v6629, %v6731
  %6733 = vmatprep.mubr.bf16.mxu0 %v5565
  %6734 = vmatmul.mubr.bf16.gmra.mrb[0].mxu0 %v5564
  %v6735 = vpop.f32.mrb[0].mxu0
  %v6736 = vadd.f32 %v6633, %v6735
  %v6737 = vpop.f32.mrb[0].mxu0
  %v6738 = vadd.f32 %v6635, %v6737
  %v6739 = vpop.f32.mrb[0].mxu0
  %v6740 = vadd.f32 %v6637, %v6739
  %v6741 = vpop.f32.mrb[0].mxu0
  %v6742 = vadd.f32 %v6639, %v6741
  %6743 = vmatprep.mubr.bf16.mxu0 %v5573
  %6744 = vmatmul.mubr.bf16.gmra.mrb[0].mxu0 %v5572
  %v6745 = vpop.f32.mrb[0].mxu0
  %v6746 = vadd.f32 %v6643, %v6745
  %v6747 = vpop.f32.mrb[0].mxu0
  %v6748 = vadd.f32 %v6645, %v6747
  %v6749 = vpop.f32.mrb[0].mxu0
  %v6750 = vadd.f32 %v6647, %v6749
  %v6751 = vpop.f32.mrb[0].mxu0
  %v6752 = vadd.f32 %v6649, %v6751
  %6753 = vdwg.mxu0
  %6754 = vst [vmem:[#allocation4] sm:$0xff] %v6686
  %6755 = vst [vmem:[#allocation4 + $0x8] sm:$0xff] %v6688
  %6756 = vst [vmem:[#allocation4 + $0x10] sm:$0xff] %v6690
  %6757 = vst [vmem:[#allocation4 + $0x18] sm:$0xff] %v6692
  %6758 = vst [vmem:[#allocation4 + $0x20] sm:$0xff] %v6696
  %6759 = vst [vmem:[#allocation4 + $0x28] sm:$0xff] %v6698
  %6760 = vst [vmem:[#allocation4 + $0x30] sm:$0xff] %v6700
  %6761 = vst [vmem:[#allocation4 + $0x38] sm:$0xff] %v6702
  %6762 = vst [vmem:[#allocation4 + $0x40] sm:$0xff] %v6706
  %6763 = vst [vmem:[#allocation4 + $0x48] sm:$0xff] %v6708
  %6764 = vst [vmem:[#allocation4 + $0x50] sm:$0xff] %v6710
  %6765 = vst [vmem:[#allocation4 + $0x58] sm:$0xff] %v6712
  %6766 = vst [vmem:[#allocation4 + $0x60] sm:$0xff] %v6716
  %6767 = vst [vmem:[#allocation4 + $0x68] sm:$0xff] %v6718
  %6768 = vst [vmem:[#allocation4 + $0x70] sm:$0xff] %v6720
  %6769 = vst [vmem:[#allocation4 + $0x78] sm:$0xff] %v6722
  %6770 = vst [vmem:[#allocation4 + $0x80] sm:$0xff] %v6726
  %6771 = vst [vmem:[#allocation4 + $0x88] sm:$0xff] %v6728
  %6772 = vst [vmem:[#allocation4 + $0x90] sm:$0xff] %v6730
  %6773 = vst [vmem:[#allocation4 + $0x98] sm:$0xff] %v6732
  %6774 = vst [vmem:[#allocation4 + $0xa0] sm:$0xff] %v6736
  %6775 = vst [vmem:[#allocation4 + $0xa8] sm:$0xff] %v6738
  %6776 = vst [vmem:[#allocation4 + $0xb0] sm:$0xff] %v6740
  %6777 = vst [vmem:[#allocation4 + $0xb8] sm:$0xff] %v6742
  %6778 = vst [vmem:[#allocation4 + $0xc0] sm:$0xff] %v6746
  %6779 = vst [vmem:[#allocation4 + $0xc8] sm:$0xff] %v6748
  %6780 = vst [vmem:[#allocation4 + $0xd0] sm:$0x7] %v6750
  %6781 = vst [vmem:[#allocation4 + $0xd8] sm:$0x7] %v6752
  %v6782 = vld [vmem:[%s6] sm:$0x1]
  %v6783 = vld [vmem:[#allocation4] sm:$0xff]
  %v6784 = vld [vmem:[#allocation4 + $0x10] sm:$0xff]
  %v6785 = vld [vmem:[#allocation4 + $0x20] sm:$0xff]
  %v6786 = vld [vmem:[#allocation4 + $0x30] sm:$0xff]
  %v6787 = vld [vmem:[#allocation4 + $0x40] sm:$0xff]
  %v6788 = vld [vmem:[#allocation4 + $0x50] sm:$0xff]
  %v6789 = vld [vmem:[#allocation4 + $0x60] sm:$0xff]
  %v6790 = vld [vmem:[#allocation4 + $0x70] sm:$0x7]
  %v6792 = vlaneseq
  %v6793 = vshrl.u32 %v6792, 7
  %v6794 = vsub.s32 0, %v6793
  %v6795 = vrot.slane %v6782, %v6794
  %v6797 = vadd.f32 %v6795, %v6783
  %v6798 = vadd.f32 %v6795, %v6784
  %v6799 = vadd.f32 %v6795, %v6785
  %v6800 = vadd.f32 %v6795, %v6786
  %v6801 = vadd.f32 %v6795, %v6787
  %v6802 = vadd.f32 %v6795, %v6788
  %v6803 = vadd.f32 %v6795, %v6789
  %v6804 = vadd.f32 %v6795, %v6790
  %v6805 = vld [vmem:[#allocation4 + $0x70] sm:$0xff]
  %v6806 = vld [vmem:[#allocation4 + $0x80] sm:$0xff]
  %v6807 = vld [vmem:[#allocation4 + $0x90] sm:$0x7]
  %6816 = vrot.lane.b32.xlu0 %v6785, 64
  %v6817 = vpop.permute.xlu0 %6816
  %6818 = vrot.lane.b32.xlu0 %v6786, 64
  %v6819 = vpop.permute.xlu0 %6818
  %6820 = vrot.lane.b32.xlu0 %v6787, 64
  %v6821 = vpop.permute.xlu0 %6820
  %6822 = vrot.lane.b32.xlu0 %v6788, 64
  %v6823 = vpop.permute.xlu0 %6822
  %6824 = vrot.lane.b32.xlu0 %v6789, 64
  %v6825 = vpop.permute.xlu0 %6824
  %6826 = vrot.lane.b32.xlu0 %v6805, 64
  %v6827 = vpop.permute.xlu0 %6826
  %6828 = vrot.lane.b32.xlu0 %v6806, 64
  %v6829 = vpop.permute.xlu0 %6828
  %6830 = vrot.lane.b32.xlu0 %v6807, 64
  %v6831 = vpop.permute.xlu0 %6830
  %v6840 = vadd.f32 %v6797, %v6817
  %v6841 = vadd.f32 %v6798, %v6819
  %v6842 = vadd.f32 %v6799, %v6821
  %v6843 = vadd.f32 %v6800, %v6823
  %v6844 = vadd.f32 %v6801, %v6825
  %v6845 = vadd.f32 %v6802, %v6827
  %v6846 = vadd.f32 %v6803, %v6829
  %v6847 = vadd.f32 %v6804, %v6831
  %v6848 = vld [vmem:[#allocation4 + $0x48] sm:$0xff]
  %v6849 = vld [vmem:[#allocation4 + $0x58] sm:$0xff]
  %v6850 = vld [vmem:[#allocation4 + $0x68] sm:$0xff]
  %v6851 = vld [vmem:[#allocation4 + $0x78] sm:$0xff]
  %v6852 = vld [vmem:[#allocation4 + $0x88] sm:$0xff]
  %v6853 = vld [vmem:[#allocation4 + $0x98] sm:$0xff]
  %v6854 = vld [vmem:[#allocation4 + $0xa8] sm:$0xff]
  %v6855 = vld [vmem:[#allocation4 + $0xb8] sm:$0x7]
  %v6856 = vadd.f32 %v6840, %v6848
  %v6857 = vadd.f32 %v6841, %v6849
  %v6858 = vadd.f32 %v6842, %v6850
  %v6859 = vadd.f32 %v6843, %v6851
  %v6860 = vadd.f32 %v6844, %v6852
  %v6861 = vadd.f32 %v6845, %v6853
  %v6862 = vadd.f32 %v6846, %v6854
  %v6863 = vadd.f32 %v6847, %v6855
  %v6864 = vld [vmem:[#allocation4 + $0x68] sm:$0xff]
  %v6865 = vld [vmem:[#allocation4 + $0x78] sm:$0xff]
  %v6866 = vld [vmem:[#allocation4 + $0x88] sm:$0xff]
  %v6867 = vld [vmem:[#allocation4 + $0x98] sm:$0xff]
  %v6868 = vld [vmem:[#allocation4 + $0xa8] sm:$0xff]
  %v6869 = vld [vmem:[#allocation4 + $0xb8] sm:$0xff]
  %v6870 = vld [vmem:[#allocation4 + $0xc8] sm:$0xff]
  %v6871 = vld [vmem:[#allocation4 + $0xd8] sm:$0x7]
  %6880 = vrot.lane.b32.xlu0 %v6864, 64
  %v6881 = vpop.permute.xlu0 %6880
  %6882 = vrot.lane.b32.xlu0 %v6865, 64
  %v6883 = vpop.permute.xlu0 %6882
  %6884 = vrot.lane.b32.xlu0 %v6866, 64
  %v6885 = vpop.permute.xlu0 %6884
  %6886 = vrot.lane.b32.xlu0 %v6867, 64
  %v6887 = vpop.permute.xlu0 %6886
  %6888 = vrot.lane.b32.xlu0 %v6868, 64
  %v6889 = vpop.permute.xlu0 %6888
  %6890 = vrot.lane.b32.xlu0 %v6869, 64
  %v6891 = vpop.permute.xlu0 %6890
  %6892 = vrot.lane.b32.xlu0 %v6870, 64
  %v6893 = vpop.permute.xlu0 %6892
  %6894 = vrot.lane.b32.xlu0 %v6871, 64
  %v6895 = vpop.permute.xlu0 %6894
  %v6904 = vadd.f32 %v6856, %v6881
  %v6905 = vadd.f32 %v6857, %v6883
  %v6906 = vadd.f32 %v6858, %v6885
  %v6907 = vadd.f32 %v6859, %v6887
  %v6908 = vadd.f32 %v6860, %v6889
  %v6909 = vadd.f32 %v6861, %v6891
  %v6910 = vadd.f32 %v6862, %v6893
  %v6911 = vadd.f32 %v6863, %v6895
  %6912 = vst.msk [vmem:[%s3454] sm:$0xff] %vm188, %v6904
  %6913 = vst.msk [vmem:[%s3454 + $0x8] sm:$0xff] %vm188, %v6905
  %6914 = vst.msk [vmem:[%s3454 + $0x10] sm:$0xff] %vm188, %v6906
  %6915 = vst.msk [vmem:[%s3454 + $0x18] sm:$0xff] %vm188, %v6907
  %6916 = vst.msk [vmem:[%s3454 + $0x20] sm:$0xff] %vm188, %v6908
  %6917 = vst.msk [vmem:[%s3454 + $0x28] sm:$0xff] %vm188, %v6909
  %6918 = vst.msk [vmem:[%s3454 + $0x30] sm:$0xff] %vm188, %v6910
  %6919 = vst.msk [vmem:[%s3454 + $0x38] sm:$0x7] %vm1767, %v6911
  %v6920 = vsel %vm188, %v6904, 0.0
  %v6921 = vsel %vm188, %v6905, 0.0
  %v6922 = vadd.f32 %v6920, %v6921
  %v6923 = vsel %vm188, %v6906, 0.0
  %v6924 = vadd.f32 %v6922, %v6923
  %v6925 = vsel %vm188, %v6907, 0.0
  %v6926 = vadd.f32 %v6924, %v6925
  %v6927 = vsel %vm188, %v6908, 0.0
  %v6928 = vadd.f32 %v6926, %v6927
  %v6929 = vsel %vm188, %v6909, 0.0
  %v6930 = vadd.f32 %v6928, %v6929
  %v6931 = vsel %vm188, %v6910, 0.0
  %v6932 = vadd.f32 %v6930, %v6931
  %v6933 = vsel %vm1767, %v6911, 0.0
  %v6934 = vadd.f32 %v6932, %v6933
  %v6935 = vrot.slane %v6934, 4
  %v6936 = vadd.f32 %v6934, %v6935
  %v6937 = vrot.slane %v6936, 2
  %v6938 = vadd.f32 %v6936, %v6937
  %v6939 = vrot.slane %v6938, 1
  %v6940 = vadd.f32 %v6938, %v6939
  %v6941 = vadd.f32 %v5225, %v6940
  %v6942 = vmul.f32 %v6904, %v6904
  %v6943 = vmul.f32 %v6905, %v6905
  %v6944 = vmul.f32 %v6906, %v6906
  %v6945 = vmul.f32 %v6907, %v6907
  %v6946 = vmul.f32 %v6908, %v6908
  %v6947 = vmul.f32 %v6909, %v6909
  %v6948 = vmul.f32 %v6910, %v6910
  %v6949 = vmul.f32 %v6911, %v6911
  %v6950 = vsel %vm188, %v6942, 0.0
  %v6951 = vsel %vm188, %v6943, 0.0
  %v6952 = vadd.f32 %v6950, %v6951
  %v6953 = vsel %vm188, %v6944, 0.0
  %v6954 = vadd.f32 %v6952, %v6953
  %v6955 = vsel %vm188, %v6945, 0.0
  %v6956 = vadd.f32 %v6954, %v6955
  %v6957 = vsel %vm188, %v6946, 0.0
  %v6958 = vadd.f32 %v6956, %v6957
  %v6959 = vsel %vm188, %v6947, 0.0
  %v6960 = vadd.f32 %v6958, %v6959
  %v6961 = vsel %vm188, %v6948, 0.0
  %v6962 = vadd.f32 %v6960, %v6961
  %v6963 = vsel %vm1767, %v6949, 0.0
  %v6964 = vadd.f32 %v6962, %v6963
  %v6965 = vrot.slane %v6964, 4
  %v6966 = vadd.f32 %v6964, %v6965
  %v6967 = vrot.slane %v6966, 2
  %v6968 = vadd.f32 %v6966, %v6967
  %v6969 = vrot.slane %v6968, 1
  %v6970 = vadd.f32 %v6968, %v6969
  %v6971 = vadd.f32 %v5255, %v6970
  %v6972 = vld [vmem:[%s7] sm:$0x1]
  %v6973 = vld [vmem:[%s8] sm:$0x1]
  %v6974 = vmul.f32 %v6941, %v3517
  %v6975 = vmul.f32 %v6971, %v3517
  %v6976 = vmul.f32 %v6974, %v6974
  %v6977 = vsub.f32 %v6975, %v6976
  %v6978 = vmax.f32 %v6977, 0.0
  %v6979 = vadd.f32 %v6978, 1e-05
  %v6980 = vrsqrt.pop %v6979
  %v6981 = vmul.f32 %v6972, %v6980
  %v6982 = vmul.f32 %v6974, %v6981
  %v6983 = vsub.f32 %v6973, %v6982
  %v6984 = vld [vmem:[#allocation2] sm:$0xff]
  %v6985 = vld [vmem:[#allocation2 + $0x8] sm:$0xff]
  %v6986 = vld [vmem:[#allocation2 + $0x10] sm:$0xff]
  %v6987 = vld [vmem:[#allocation2 + $0x18] sm:$0xff]
  %v6988 = vld [vmem:[#allocation2 + $0x20] sm:$0xff]
  %v6989 = vld [vmem:[#allocation2 + $0x28] sm:$0xff]
  %v6990 = vld [vmem:[#allocation2 + $0x30] sm:$0xff]
  %v6991 = vld [vmem:[#allocation2 + $0x38] sm:$0x7]
  %v6993 = vlaneseq
  %v6994 = vshrl.u32 %v6993, 7
  %v6995 = vsub.s32 0, %v6994
  %v6996 = vrot.slane %v6981, %v6995
  %v6998 = vmul.f32 %v6984, %v6996
  %v6999 = vmul.f32 %v6985, %v6996
  %v7000 = vmul.f32 %v6986, %v6996
  %v7001 = vmul.f32 %v6987, %v6996
  %v7002 = vmul.f32 %v6988, %v6996
  %v7003 = vmul.f32 %v6989, %v6996
  %v7004 = vmul.f32 %v6990, %v6996
  %v7005 = vmul.f32 %v6991, %v6996
  %v7007 = vlaneseq
  %v7008 = vshrl.u32 %v7007, 7
  %v7009 = vsub.s32 0, %v7008
  %v7010 = vrot.slane %v6983, %v7009
  %v7012 = vadd.f32 %v6998, %v7010
  %v7013 = vadd.f32 %v6999, %v7010
  %v7014 = vadd.f32 %v7000, %v7010
  %v7015 = vadd.f32 %v7001, %v7010
  %v7016 = vadd.f32 %v7002, %v7010
  %v7017 = vadd.f32 %v7003, %v7010
  %v7018 = vadd.f32 %v7004, %v7010
  %v7019 = vadd.f32 %v7005, %v7010
  %v7020 = vmax.f32 %v7012, 0.0
  %v7021 = vmax.f32 %v7013, 0.0
  %v7022 = vmax.f32 %v7014, 0.0
  %v7023 = vmax.f32 %v7015, 0.0
  %v7024 = vmax.f32 %v7016, 0.0
  %v7025 = vmax.f32 %v7017, 0.0
  %v7026 = vmax.f32 %v7018, 0.0
  %v7027 = vmax.f32 %v7019, 0.0
  %v7028 = vld [vmem:[%s0] sm:$0xff]
  %v7029 = vld [vmem:[%s0 + $0x8] sm:$0xff]
  %v7030 = vld [vmem:[%s0 + $0x10] sm:$0xff]
  %v7031 = vld [vmem:[%s0 + $0x18] sm:$0xff]
  %v7032 = vld [vmem:[%s0 + $0x20] sm:$0xff]
  %v7033 = vld [vmem:[%s0 + $0x28] sm:$0xff]
  %v7034 = vld [vmem:[%s0 + $0x30] sm:$0xff]
  %v7035 = vld [vmem:[%s0 + $0x38] sm:$0x7]
  %v7036 = vadd.f32 %v7020, %v7028
  %v7037 = vadd.f32 %v7021, %v7029
  %v7038 = vadd.f32 %v7022, %v7030
  %v7039 = vadd.f32 %v7023, %v7031
  %v7040 = vadd.f32 %v7024, %v7032
  %v7041 = vadd.f32 %v7025, %v7033
  %v7042 = vadd.f32 %v7026, %v7034
  %v7043 = vadd.f32 %v7027, %v7035
  %7044 = vst.msk [vmem:[%s9] sm:$0xff] %vm188, %v7036
  %7045 = vst.msk [vmem:[%s9 + $0x8] sm:$0xff] %vm188, %v7037
  %7046 = vst.msk [vmem:[%s9 + $0x10] sm:$0xff] %vm188, %v7038
  %7047 = vst.msk [vmem:[%s9 + $0x18] sm:$0xff] %vm188, %v7039
  %7048 = vst.msk [vmem:[%s9 + $0x20] sm:$0xff] %vm188, %v7040
  %7049 = vst.msk [vmem:[%s9 + $0x28] sm:$0xff] %vm188, %v7041
  %7050 = vst.msk [vmem:[%s9 + $0x30] sm:$0xff] %vm188, %v7042
  %7051 = vst.msk [vmem:[%s9 + $0x38] sm:$0x7] %vm1767, %v7043
  %v7052 = vld [vmem:[%s3454] sm:$0xff]
  %v7053 = vld [vmem:[%s3454 + $0x8] sm:$0xff]
  %v7054 = vld [vmem:[%s3454 + $0x10] sm:$0xff]
  %v7055 = vld [vmem:[%s3454 + $0x18] sm:$0xff]
  %v7056 = vld [vmem:[%s3454 + $0x20] sm:$0xff]
  %v7057 = vld [vmem:[%s3454 + $0x28] sm:$0xff]
  %v7058 = vld [vmem:[%s3454 + $0x30] sm:$0xff]
  %v7059 = vld [vmem:[%s3454 + $0x38] sm:$0x7]
  %v7060 = vmul.f32 %v7052, %v6996
  %v7061 = vmul.f32 %v7053, %v6996
  %v7062 = vmul.f32 %v7054, %v6996
  %v7063 = vmul.f32 %v7055, %v6996
  %v7064 = vmul.f32 %v7056, %v6996
  %v7065 = vmul.f32 %v7057, %v6996
  %v7066 = vmul.f32 %v7058, %v6996
  %v7067 = vmul.f32 %v7059, %v6996
  %v7068 = vadd.f32 %v7060, %v7010
  %v7069 = vadd.f32 %v7061, %v7010
  %v7070 = vadd.f32 %v7062, %v7010
  %v7071 = vadd.f32 %v7063, %v7010
  %v7072 = vadd.f32 %v7064, %v7010
  %v7073 = vadd.f32 %v7065, %v7010
  %v7074 = vadd.f32 %v7066, %v7010
  %v7075 = vadd.f32 %v7067, %v7010
  %v7076 = vmax.f32 %v7068, 0.0
  %v7077 = vmax.f32 %v7069, 0.0
  %v7078 = vmax.f32 %v7070, 0.0
  %v7079 = vmax.f32 %v7071, 0.0
  %v7080 = vmax.f32 %v7072, 0.0
  %v7081 = vmax.f32 %v7073, 0.0
  %v7082 = vmax.f32 %v7074, 0.0
  %v7083 = vmax.f32 %v7075, 0.0
  %v7084 = vld [vmem:[%s1821] sm:$0xff]
  %v7085 = vld [vmem:[%s1821 + $0x8] sm:$0xff]
  %v7086 = vld [vmem:[%s1821 + $0x10] sm:$0xff]
  %v7087 = vld [vmem:[%s1821 + $0x18] sm:$0xff]
  %v7088 = vld [vmem:[%s1821 + $0x20] sm:$0xff]
  %v7089 = vld [vmem:[%s1821 + $0x28] sm:$0xff]
  %v7090 = vld [vmem:[%s1821 + $0x30] sm:$0xff]
  %v7091 = vld [vmem:[%s1821 + $0x38] sm:$0x7]
  %v7092 = vadd.f32 %v7076, %v7084
  %v7093 = vadd.f32 %v7077, %v7085
  %v7094 = vadd.f32 %v7078, %v7086
  %v7095 = vadd.f32 %v7079, %v7087
  %v7096 = vadd.f32 %v7080, %v7088
  %v7097 = vadd.f32 %v7081, %v7089
  %v7098 = vadd.f32 %v7082, %v7090
  %v7099 = vadd.f32 %v7083, %v7091
  %s7100 = scalar_lea.vmem %s9, 64
  %7101 = vst.msk [vmem:[%s7100] sm:$0xff] %vm188, %v7092
  %7102 = vst.msk [vmem:[%s7100 + $0x8] sm:$0xff] %vm188, %v7093
  %7103 = vst.msk [vmem:[%s7100 + $0x10] sm:$0xff] %vm188, %v7094
  %7104 = vst.msk [vmem:[%s7100 + $0x18] sm:$0xff] %vm188, %v7095
  %7105 = vst.msk [vmem:[%s7100 + $0x20] sm:$0xff] %vm188, %v7096
  %7106 = vst.msk [vmem:[%s7100 + $0x28] sm:$0xff] %vm188, %v7097
  %7107 = vst.msk [vmem:[%s7100 + $0x30] sm:$0xff] %vm188, %v7098
  %7108 = vst.msk [vmem:[%s7100 + $0x38] sm:$0x7] %vm1767, %v7099
  // Predicated region
  $region38: #{kan_res_wide_x2.10} parent=0 // pred_check
    _
  $region39: #{kan_res_wide_x2.10} parent=0 // pred_check_branch
    %7110 = sbr.rel (0) target = $region41
  $region40: #{kan_res_wide_x2.10} parent=0 // pred_region
    _
  $region41: #{kan_res_wide_x2.10} parent=0 // pred_fallthru
    _
  // Predicated region
  $region42: #{kan_res_wide_x2.10} parent=0 // pred_check
    _
  $region43: #{kan_res_wide_x2.10} parent=0 // pred_check_branch
    %7112 = sbr.rel (0) target = $region45
  $region44: #{kan_res_wide_x2.10} parent=0 // pred_region
    _
  $region45: #{kan_res_wide_x2.10} parent=0 // pred_fallthru
    _

</llo_original>
